<compile_context>
chip_gen: v5e
topology: v5e:2x2
jax: 0.10.0
libtpu: 0.0.40
codegen_flags: <defaults>
</compile_context>

<pallas_src>
import jax
import jax.numpy as jnp
import numpy as np
from jax import lax
from jax.experimental import pallas as pl
from jax.experimental.pallas import tpu as pltpu

jax.config.update("jax_default_matmul_precision", "highest")

# Model hyperparameters (match the PyTorch module defaults).
INPUT_SIZE = 1
HIDDEN = 16
NUM_LAYERS = 1
SEQ_LEN = 101
FC_IN = HIDDEN * 2 * NUM_LAYERS * 2   # 64
FC_OUT = SEQ_LEN                      # 101
OUT_PAD = 128                         # lane-dense padded FC output rows
MAX_BT = 256                          # max batch-tile (lane) width per grid step


def _autoencoder_kernel(
    x_ref,                                   # (T, BT) time-major input, batch on lanes
    ef_wih, ef_whh, ef_bih, ef_bhh,          # encoder GRU, forward direction
    eb_wih, eb_whh, eb_bih, eb_bhh,          # encoder GRU, reverse direction
    df_wih, df_whh, df_bih, df_bhh,          # decoder GRU, forward direction
    db_wih, db_whh, db_bih, db_bhh,          # decoder GRU, reverse direction
    fc_w, fc_b,                              # Linear, rows padded to OUT_PAD
    out_ref,                                 # (OUT_PAD, BT)
    gif_ref, gib_ref,                        # scratch: (T, 3H, BT) input gates
):
    T = x_ref.shape[0]
    BT = x_ref.shape[1]
    H = HIDDEN
    G = 3 * H

    # ---- hoisted input-gate precompute (input size == 1): a single -------
    # ---- vectorized VPU pass, entirely off the serial recurrence. --------
    xe = x_ref[...][:, None, :]                                   # (T, 1, BT)
    gif_ref[...] = xe * ef_wih[...][None, :, :] + ef_bih[...][None, :, :]
    gib_ref[...] = xe * eb_wih[...][None, :, :] + eb_bih[...][None, :, :]

    ef_whh_v = ef_whh[...]                                        # (3H, H)
    eb_whh_v = eb_whh[...]
    ef_bhh_b = jnp.broadcast_to(ef_bhh[...], (G, BT))             # hoisted broadcasts
    eb_bhh_b = jnp.broadcast_to(eb_bhh[...], (G, BT))

    def gates(gi, gh, h_prev):
        # gi/gh: (3H, BT); gate slices are sublane slices at multiples of 8.
        r = jax.nn.sigmoid(gi[:H] + gh[:H])
        z = jax.nn.sigmoid(gi[H:2 * H] + gh[H:2 * H])
        n = jnp.tanh(gi[2 * H:] + r * gh[2 * H:])
        return (1.0 - z) * n + z * h_prev

    def enc_step(t_f, t_b, h_f, h_b):
        # Both directions each iteration: two independent chains interleave,
        # so one direction's MXU/EUP latency hides under the other's VPU work.
        gh_f = jnp.dot(ef_whh_v, h_f, preferred_element_type=jnp.float32) + ef_bhh_b
        gh_b = jnp.dot(eb_whh_v, h_b, preferred_element_type=jnp.float32) + eb_bhh_b
        h_f = gates(gif_ref[t_f], gh_f, h_f)
        h_b = gates(gib_ref[t_b], gh_b, h_b)
        return h_f, h_b

    h0 = jnp.zeros((H, BT), jnp.float32)

    def two_steps(u, carry):                 # manual unroll-by-2 of the scan
        h_f, h_b = carry
        t0 = 2 * u
        h_f, h_b = enc_step(t0, T - 1 - t0, h_f, h_b)
        h_f, h_b = enc_step(t0 + 1, T - 2 - t0, h_f, h_b)
        return h_f, h_b

    h_f, h_b = lax.fori_loop(0, T // 2, two_steps, (h0, h0))
    if T % 2 == 1:                           # static tail step (T = 101 is odd)
        h_f, h_b = enc_step(T - 1, 0, h_f, h_b)

    # ---- decoder: bidirectional GRU over the length-2 sequence [h_f, h_b] ----
    def dec_cell(x_in, h_prev, wih, bih, whh, bhh):
        gi = jnp.dot(wih[...], x_in, preferred_element_type=jnp.float32) + bih[...]
        gh = jnp.dot(whh[...], h_prev, preferred_element_type=jnp.float32) + bhh[...]
        return gates(gi, gh, h_prev)

    h1f = dec_cell(h_f, h0, df_wih, df_bih, df_whh, df_bhh)
    h2f = dec_cell(h_b, h1f, df_wih, df_bih, df_whh, df_bhh)
    hb1 = dec_cell(h_b, h0, db_wih, db_bih, db_whh, db_bhh)
    hb0 = dec_cell(h_f, hb1, db_wih, db_bih, db_whh, db_bhh)

    # decoder output (B, 2, 2H) flattened per row -> [t0_fwd, t0_bwd, t1_fwd, t1_bwd]
    dec_flat = jnp.concatenate([h1f, hb0, h2f, hb1], axis=0)      # (4H, BT)

    out_t = jnp.tanh(
        jnp.dot(fc_w[...], dec_flat, preferred_element_type=jnp.float32) + fc_b[...])
    out_ref[...] = out_t.astype(out_ref.dtype)


def lstm_autoencoder_forward(x, kernel_params):
    """x: anything reshapeable to (-1, SEQ_LEN) float32 (mirrors view(-1, 101, 1))."""
    x = jnp.asarray(x, jnp.float32).reshape(-1, SEQ_LEN)
    B = x.shape[0]

    if B <= MAX_BT:
        BT = max(8, ((B + 7) // 8) * 8)      # single block, lane dim == full dim
        BP = BT
    else:
        BT = MAX_BT                          # gridded: lane tile multiple of 128
        BP = ((B + BT - 1) // BT) * BT

    # Time-major, batch on the lane axis, padded rows are zero (discarded later).
    x_tm = jnp.zeros((SEQ_LEN, BP), jnp.float32).at[:, :B].set(x.T)

    kp = kernel_params
    weights = (
        kp["enc_f"]["wih"], kp["enc_f"]["whh"], kp["enc_f"]["bih"], kp["enc_f"]["bhh"],
        kp["enc_b"]["wih"], kp["enc_b"]["whh"], kp["enc_b"]["bih"], kp["enc_b"]["bhh"],
        kp["dec_f"]["wih"], kp["dec_f"]["whh"], kp["dec_f"]["bih"], kp["dec_f"]["bhh"],
        kp["dec_b"]["wih"], kp["dec_b"]["whh"], kp["dec_b"]["bih"], kp["dec_b"]["bhh"],
        kp["fc_w"], kp["fc_b"],
    )

    x_spec = pl.BlockSpec((SEQ_LEN, BT), lambda b: (0, b))
    w_specs = [pl.BlockSpec(w.shape, lambda b: (0, 0)) for w in weights]
    out_spec = pl.BlockSpec((OUT_PAD, BT), lambda b: (0, b))

    out_t = pl.pallas_call(
        _autoencoder_kernel,
        out_shape=jax.ShapeDtypeStruct((OUT_PAD, BP), jnp.float32),
        grid_spec=pltpu.PrefetchScalarGridSpec(
            num_scalar_prefetch=0,
            grid=(BP // BT,),
            in_specs=[x_spec] + w_specs,
            out_specs=out_spec,
            scratch_shapes=[pltpu.VMEM((SEQ_LEN, 3 * HIDDEN, BT), jnp.float32),
                            pltpu.VMEM((SEQ_LEN, 3 * HIDDEN, BT), jnp.float32)]),
        compiler_params=pltpu.CompilerParams(
            dimension_semantics=("parallel",),
            vmem_limit_bytes=32 * 1024 * 1024),
    )(x_tm, *weights)

    out = out_t.T[:B, :FC_OUT]               # (B, 101)
    return out[0] if B == 1 else out         # mimic torch .squeeze()


def init_params(key):
    """Deterministic synthetic parameters (PyTorch GRU/Linear shapes)."""
    kscale = 1.0 / float(np.sqrt(HIDDEN))

    def uni(k, shape):
        return jax.random.uniform(k, shape, jnp.float32, minval=-kscale, maxval=kscale)

    names = ["enc_f", "enc_b", "dec_f", "dec_b"]
    in_dims = {"enc_f": INPUT_SIZE, "enc_b": INPUT_SIZE, "dec_f": HIDDEN, "dec_b": HIDDEN}
    keys = jax.random.split(key, 4 * 4 + 2)

    torch_p = {}
    i = 0
    for name in names:
        torch_p[name] = dict(
            wih=uni(keys[i + 0], (3 * HIDDEN, in_dims[name])),
            whh=uni(keys[i + 1], (3 * HIDDEN, HIDDEN)),
            bih=uni(keys[i + 2], (3 * HIDDEN,)),
            bhh=uni(keys[i + 3], (3 * HIDDEN,)),
        )
        i += 4
    torch_p["fc_w"] = uni(keys[i], (FC_OUT, FC_IN)); i += 1
    torch_p["fc_b"] = uni(keys[i], (FC_OUT,))

    # Kernel packing: column-major ("feature on sublanes") layout -> PyTorch
    # weight matrices are used as-is (they left-multiply the (H, BT) state);
    # biases become (3H, 1) columns; FC is row-padded to OUT_PAD for a
    # lane-dense output store.
    kernel_p = {}
    for name in names:
        p = torch_p[name]
        kernel_p[name] = dict(
            wih=p["wih"],                        # (3H, in)
            whh=p["whh"],                        # (3H, H)
            bih=p["bih"].reshape(-1, 1),         # (3H, 1)
            bhh=p["bhh"].reshape(-1, 1),         # (3H, 1)
        )
    kernel_p["fc_w"] = jnp.zeros((OUT_PAD, FC_IN), jnp.float32).at[:FC_OUT].set(
        torch_p["fc_w"])
    kernel_p["fc_b"] = jnp.zeros((OUT_PAD, 1), jnp.float32).at[:FC_OUT, 0].set(
        torch_p["fc_b"])
    return torch_p, kernel_p


def reference_forward(x, tp):
    """Pure-JAX reference with PyTorch GRU semantics (silent sanity check)."""
    x = jnp.asarray(x, jnp.float32).reshape(-1, SEQ_LEN, 1)
    B = x.shape[0]
    H = HIDDEN

    def cell(x_t, h, p):
        gi = x_t @ p["wih"].T + p["bih"]
        gh = h @ p["whh"].T + p["bhh"]
        r = jax.nn.sigmoid(gi[:, :H] + gh[:, :H])
        z = jax.nn.sigmoid(gi[:, H:2 * H] + gh[:, H:2 * H])
        n = jnp.tanh(gi[:, 2 * H:] + r * gh[:, 2 * H:])
        return (1.0 - z) * n + z * h

    def run_dir(seq, p):                      # seq: (T, B, in)
        def body(h, x_t):
            return cell(x_t, h, p), None
        h_last, _ = lax.scan(body, jnp.zeros((B, H), jnp.float32), seq)
        return h_last

    seq = jnp.transpose(x, (1, 0, 2))
    h_f = run_dir(seq, tp["enc_f"])
    h_b = run_dir(seq[::-1], tp["enc_b"])

    z0 = jnp.zeros((B, H), jnp.float32)
    h1f = cell(h_f, z0, tp["dec_f"]); h2f = cell(h_b, h1f, tp["dec_f"])
    hb1 = cell(h_b, z0, tp["dec_b"]); hb0 = cell(h_f, hb1, tp["dec_b"])
    dec_flat = jnp.concatenate([h1f, hb0, h2f, hb1], axis=1)
    out = jnp.tanh(dec_flat @ tp["fc_w"].T + tp["fc_b"])
    return out[0] if B == 1 else out


if __name__ == "__main__":
    key = jax.random.PRNGKey(0)
    pkey, xkey = jax.random.split(key)
    torch_params, kernel_params = init_params(pkey)

    B = 2
    x = jax.random.normal(xkey, (B, SEQ_LEN), jnp.float32)

    out = lstm_autoencoder_forward(x, kernel_params)
    out = jax.block_until_ready(out)

    ref = reference_forward(x, torch_params)
    np.testing.assert_allclose(np.asarray(out), np.asarray(ref), atol=5e-3, rtol=5e-3)

    print("KERNEL_OK")
</pallas_src>

<mosaic_0001>
module attributes {stable_mosaic.version = 11 : i64} {
  func.func @_autoencoder_kernel(%arg0: i32, %arg1: memref<101x8xf32, #tpu.memory_space<vmem>>, %arg2: memref<48x1xf32, #tpu.memory_space<vmem>>, %arg3: memref<48x16xf32, #tpu.memory_space<vmem>>, %arg4: memref<48x1xf32, #tpu.memory_space<vmem>>, %arg5: memref<48x1xf32, #tpu.memory_space<vmem>>, %arg6: memref<48x1xf32, #tpu.memory_space<vmem>>, %arg7: memref<48x16xf32, #tpu.memory_space<vmem>>, %arg8: memref<48x1xf32, #tpu.memory_space<vmem>>, %arg9: memref<48x1xf32, #tpu.memory_space<vmem>>, %arg10: memref<48x16xf32, #tpu.memory_space<vmem>>, %arg11: memref<48x16xf32, #tpu.memory_space<vmem>>, %arg12: memref<48x1xf32, #tpu.memory_space<vmem>>, %arg13: memref<48x1xf32, #tpu.memory_space<vmem>>, %arg14: memref<48x16xf32, #tpu.memory_space<vmem>>, %arg15: memref<48x16xf32, #tpu.memory_space<vmem>>, %arg16: memref<48x1xf32, #tpu.memory_space<vmem>>, %arg17: memref<48x1xf32, #tpu.memory_space<vmem>>, %arg18: memref<128x64xf32, #tpu.memory_space<vmem>>, %arg19: memref<128x1xf32, #tpu.memory_space<vmem>>, %arg20: memref<128x8xf32, #tpu.memory_space<vmem>>, %arg21: memref<101x48x8xf32, #tpu.memory_space<vmem>>, %arg22: memref<101x48x8xf32, #tpu.memory_space<vmem>>) attributes {dimension_semantics = [#tpu.dimension_semantics<parallel>], iteration_bounds = array<i64: 1>, scalar_prefetch = 0 : i64, scratch_operands = 2 : i64, tpu.core_type = #tpu.core_type<tc>, window_params = [{transform_indices = @transform_0, window_bounds = array<i64: 101, 8>}, {pipeline_mode = #tpu.pipeline_mode<synchronous>, transform_indices = @transform_1, window_bounds = array<i64: 48, 1>}, {pipeline_mode = #tpu.pipeline_mode<synchronous>, transform_indices = @transform_2, window_bounds = array<i64: 48, 16>}, {pipeline_mode = #tpu.pipeline_mode<synchronous>, transform_indices = @transform_3, window_bounds = array<i64: 48, 1>}, {pipeline_mode = #tpu.pipeline_mode<synchronous>, transform_indices = @transform_4, window_bounds = array<i64: 48, 1>}, {pipeline_mode = #tpu.pipeline_mode<synchronous>, transform_indices = @transform_5, window_bounds = array<i64: 48, 1>}, {pipeline_mode = #tpu.pipeline_mode<synchronous>, transform_indices = @transform_6, window_bounds = array<i64: 48, 16>}, {pipeline_mode = #tpu.pipeline_mode<synchronous>, transform_indices = @transform_7, window_bounds = array<i64: 48, 1>}, {pipeline_mode = #tpu.pipeline_mode<synchronous>, transform_indices = @transform_8, window_bounds = array<i64: 48, 1>}, {pipeline_mode = #tpu.pipeline_mode<synchronous>, transform_indices = @transform_9, window_bounds = array<i64: 48, 16>}, {pipeline_mode = #tpu.pipeline_mode<synchronous>, transform_indices = @transform_10, window_bounds = array<i64: 48, 16>}, {pipeline_mode = #tpu.pipeline_mode<synchronous>, transform_indices = @transform_11, window_bounds = array<i64: 48, 1>}, {pipeline_mode = #tpu.pipeline_mode<synchronous>, transform_indices = @transform_12, window_bounds = array<i64: 48, 1>}, {pipeline_mode = #tpu.pipeline_mode<synchronous>, transform_indices = @transform_13, window_bounds = array<i64: 48, 16>}, {pipeline_mode = #tpu.pipeline_mode<synchronous>, transform_indices = @transform_14, window_bounds = array<i64: 48, 16>}, {pipeline_mode = #tpu.pipeline_mode<synchronous>, transform_indices = @transform_15, window_bounds = array<i64: 48, 1>}, {pipeline_mode = #tpu.pipeline_mode<synchronous>, transform_indices = @transform_16, window_bounds = array<i64: 48, 1>}, {pipeline_mode = #tpu.pipeline_mode<synchronous>, transform_indices = @transform_17, window_bounds = array<i64: 128, 64>}, {pipeline_mode = #tpu.pipeline_mode<synchronous>, transform_indices = @transform_18, window_bounds = array<i64: 128, 1>}, {transform_indices = @transform_19, window_bounds = array<i64: 128, 8>}]} {
    %c0 = arith.constant 0 : index
    %c0_0 = arith.constant 0 : index
    %0 = vector.load %arg1[%c0, %c0_0] : memref<101x8xf32, #tpu.memory_space<vmem>>, vector<101x8xf32>
    %1 = vector.shape_cast %0 : vector<101x8xf32> to vector<101x1x8xf32>
    %c0_1 = arith.constant 0 : index
    %c0_2 = arith.constant 0 : index
    %2 = vector.load %arg2[%c0_1, %c0_2] : memref<48x1xf32, #tpu.memory_space<vmem>>, vector<48x1xf32>
    %3 = vector.shape_cast %2 : vector<48x1xf32> to vector<1x48x1xf32>
    %4 = vector.broadcast %1 : vector<101x1x8xf32> to vector<101x48x8xf32>
    %5 = vector.broadcast %3 : vector<1x48x1xf32> to vector<101x48x8xf32>
    %6 = arith.mulf %4, %5 : vector<101x48x8xf32>
    %c0_3 = arith.constant 0 : index
    %c0_4 = arith.constant 0 : index
    %7 = vector.load %arg4[%c0_3, %c0_4] : memref<48x1xf32, #tpu.memory_space<vmem>>, vector<48x1xf32>
    %8 = vector.shape_cast %7 : vector<48x1xf32> to vector<1x48x1xf32>
    %9 = vector.broadcast %8 : vector<1x48x1xf32> to vector<101x48x8xf32>
    %10 = arith.addf %6, %9 : vector<101x48x8xf32>
    %c0_5 = arith.constant 0 : index
    %c0_6 = arith.constant 0 : index
    %c0_7 = arith.constant 0 : index
    %11 = vector.load %arg21[%c0_5, %c0_6, %c0_7] : memref<101x48x8xf32, #tpu.memory_space<vmem>>, vector<101x48x8xf32>
    tpu.vector_store %arg21[%c0_5, %c0_6, %c0_7], %10 {strides = array<i32>} : memref<101x48x8xf32, #tpu.memory_space<vmem>>, vector<101x48x8xf32>,
    %c0_8 = arith.constant 0 : index
    %c0_9 = arith.constant 0 : index
    %12 = vector.load %arg6[%c0_8, %c0_9] : memref<48x1xf32, #tpu.memory_space<vmem>>, vector<48x1xf32>
    %13 = vector.shape_cast %12 : vector<48x1xf32> to vector<1x48x1xf32>
    %14 = vector.broadcast %1 : vector<101x1x8xf32> to vector<101x48x8xf32>
    %15 = vector.broadcast %13 : vector<1x48x1xf32> to vector<101x48x8xf32>
    %16 = arith.mulf %14, %15 : vector<101x48x8xf32>
    %c0_10 = arith.constant 0 : index
    %c0_11 = arith.constant 0 : index
    %17 = vector.load %arg8[%c0_10, %c0_11] : memref<48x1xf32, #tpu.memory_space<vmem>>, vector<48x1xf32>
    %18 = vector.shape_cast %17 : vector<48x1xf32> to vector<1x48x1xf32>
    %19 = vector.broadcast %18 : vector<1x48x1xf32> to vector<101x48x8xf32>
    %20 = arith.addf %16, %19 : vector<101x48x8xf32>
    %c0_12 = arith.constant 0 : index
    %c0_13 = arith.constant 0 : index
    %c0_14 = arith.constant 0 : index
    %21 = vector.load %arg22[%c0_12, %c0_13, %c0_14] : memref<101x48x8xf32, #tpu.memory_space<vmem>>, vector<101x48x8xf32>
    tpu.vector_store %arg22[%c0_12, %c0_13, %c0_14], %20 {strides = array<i32>} : memref<101x48x8xf32, #tpu.memory_space<vmem>>, vector<101x48x8xf32>,
    %c0_15 = arith.constant 0 : index
    %c0_16 = arith.constant 0 : index
    %22 = vector.load %arg3[%c0_15, %c0_16] : memref<48x16xf32, #tpu.memory_space<vmem>>, vector<48x16xf32>
    %c0_17 = arith.constant 0 : index
    %c0_18 = arith.constant 0 : index
    %23 = vector.load %arg7[%c0_17, %c0_18] : memref<48x16xf32, #tpu.memory_space<vmem>>, vector<48x16xf32>
    %c0_19 = arith.constant 0 : index
    %c0_20 = arith.constant 0 : index
    %24 = vector.load %arg5[%c0_19, %c0_20] : memref<48x1xf32, #tpu.memory_space<vmem>>, vector<48x1xf32>
    %25 = vector.shape_cast %24 : vector<48x1xf32> to vector<48x1xf32>
    %26 = vector.broadcast %25 : vector<48x1xf32> to vector<48x8xf32>
    %c0_21 = arith.constant 0 : index
    %c0_22 = arith.constant 0 : index
    %27 = vector.load %arg9[%c0_21, %c0_22] : memref<48x1xf32, #tpu.memory_space<vmem>>, vector<48x1xf32>
    %28 = vector.shape_cast %27 : vector<48x1xf32> to vector<48x1xf32>
    %29 = vector.broadcast %28 : vector<48x1xf32> to vector<48x8xf32>
    %cst = arith.constant 0.000000e+00 : f32
    %30 = vector.broadcast %cst : f32 to vector<16x8xf32>
    %c0_i32 = arith.constant 0 : i32
    %c50_i32 = arith.constant 50 : i32
    %31 = arith.addi %c0_i32, %c50_i32 : i32
    %c1_i32 = arith.constant 1 : i32
    %32:2 = scf.for %arg23 = %c0_i32 to %31 step %c1_i32 iter_args(%arg24 = %30, %arg25 = %30) -> (vector<16x8xf32>, vector<16x8xf32>)  : i32 {
      %c2_i32 = arith.constant 2 : i32
      %245 = arith.muli %c2_i32, %arg23 : i32
      %c100_i32 = arith.constant 100 : i32
      %246 = arith.subi %c100_i32, %245 : i32
      %cst_96 = arith.constant dense<0.000000e+00> : vector<48x8xf32>
      %247 = tpu.matmul %22, %arg24, %cst_96 {dimension_numbers = #tpu.dot_dimension_numbers<[1], [0], [0], [1], [0, 0, 1, 1], [], []>, precision = #tpu.contract_precision<fp32>} : vector<48x16xf32>, vector<16x8xf32>, vector<48x8xf32> -> vector<48x8xf32>
      %248 = arith.addf %247, %26 : vector<48x8xf32>
      %cst_97 = arith.constant dense<0.000000e+00> : vector<48x8xf32>
      %249 = tpu.matmul %23, %arg25, %cst_97 {dimension_numbers = #tpu.dot_dimension_numbers<[1], [0], [0], [1], [0, 0, 1, 1], [], []>, precision = #tpu.contract_precision<fp32>} : vector<48x16xf32>, vector<16x8xf32>, vector<48x8xf32> -> vector<48x8xf32>
      %250 = arith.addf %249, %29 : vector<48x8xf32>
      %251 = arith.index_cast %245 : i32 to index
      %c0_98 = arith.constant 0 : index
      %c0_99 = arith.constant 0 : index
      %252 = vector.load %arg21[%251, %c0_98, %c0_99] : memref<101x48x8xf32, #tpu.memory_space<vmem>>, vector<1x48x8xf32>
      %253 = vector.shape_cast %252 : vector<1x48x8xf32> to vector<48x8xf32>
      %254 = vector.extract_strided_slice %253 {offsets = [0, 0], sizes = [16, 8], strides = [1, 1]} : vector<48x8xf32> to vector<16x8xf32>
      %255 = vector.extract_strided_slice %248 {offsets = [0, 0], sizes = [16, 8], strides = [1, 1]} : vector<48x8xf32> to vector<16x8xf32>
      %256 = arith.addf %254, %255 : vector<16x8xf32>
      %257 = arith.negf %256 : vector<16x8xf32>
      %258 = math.exp %257 : vector<16x8xf32>
      %cst_100 = arith.constant 1.000000e+00 : f32
      %259 = vector.broadcast %cst_100 : f32 to vector<16x8xf32>
      %260 = arith.addf %259, %258 : vector<16x8xf32>
      %261 = arith.divf %259, %260 : vector<16x8xf32>
      %262 = vector.extract_strided_slice %253 {offsets = [16, 0], sizes = [16, 8], strides = [1, 1]} : vector<48x8xf32> to vector<16x8xf32>
      %263 = vector.extract_strided_slice %248 {offsets = [16, 0], sizes = [16, 8], strides = [1, 1]} : vector<48x8xf32> to vector<16x8xf32>
      %264 = arith.addf %262, %263 : vector<16x8xf32>
      %265 = arith.negf %264 : vector<16x8xf32>
      %266 = math.exp %265 : vector<16x8xf32>
      %cst_101 = arith.constant 1.000000e+00 : f32
      %267 = vector.broadcast %cst_101 : f32 to vector<16x8xf32>
      %268 = arith.addf %267, %266 : vector<16x8xf32>
      %269 = arith.divf %267, %268 : vector<16x8xf32>
      %270 = vector.extract_strided_slice %253 {offsets = [32, 0], sizes = [16, 8], strides = [1, 1]} : vector<48x8xf32> to vector<16x8xf32>
      %271 = vector.extract_strided_slice %248 {offsets = [32, 0], sizes = [16, 8], strides = [1, 1]} : vector<48x8xf32> to vector<16x8xf32>
      %272 = arith.mulf %261, %271 : vector<16x8xf32>
      %273 = arith.addf %270, %272 : vector<16x8xf32>
      %274 = math.tanh %273 : vector<16x8xf32>
      %cst_102 = arith.constant 1.000000e+00 : f32
      %275 = vector.broadcast %cst_102 : f32 to vector<16x8xf32>
      %276 = arith.subf %275, %269 : vector<16x8xf32>
      %277 = arith.mulf %276, %274 : vector<16x8xf32>
      %278 = arith.mulf %269, %arg24 : vector<16x8xf32>
      %279 = arith.addf %277, %278 : vector<16x8xf32>
      %280 = arith.index_cast %246 : i32 to index
      %c0_103 = arith.constant 0 : index
      %c0_104 = arith.constant 0 : index
      %281 = vector.load %arg22[%280, %c0_103, %c0_104] : memref<101x48x8xf32, #tpu.memory_space<vmem>>, vector<1x48x8xf32>
      %282 = vector.shape_cast %281 : vector<1x48x8xf32> to vector<48x8xf32>
      %283 = vector.extract_strided_slice %282 {offsets = [0, 0], sizes = [16, 8], strides = [1, 1]} : vector<48x8xf32> to vector<16x8xf32>
      %284 = vector.extract_strided_slice %250 {offsets = [0, 0], sizes = [16, 8], strides = [1, 1]} : vector<48x8xf32> to vector<16x8xf32>
      %285 = arith.addf %283, %284 : vector<16x8xf32>
      %286 = arith.negf %285 : vector<16x8xf32>
      %287 = math.exp %286 : vector<16x8xf32>
      %cst_105 = arith.constant 1.000000e+00 : f32
      %288 = vector.broadcast %cst_105 : f32 to vector<16x8xf32>
      %289 = arith.addf %288, %287 : vector<16x8xf32>
      %290 = arith.divf %288, %289 : vector<16x8xf32>
      %291 = vector.extract_strided_slice %282 {offsets = [16, 0], sizes = [16, 8], strides = [1, 1]} : vector<48x8xf32> to vector<16x8xf32>
      %292 = vector.extract_strided_slice %250 {offsets = [16, 0], sizes = [16, 8], strides = [1, 1]} : vector<48x8xf32> to vector<16x8xf32>
      %293 = arith.addf %291, %292 : vector<16x8xf32>
      %294 = arith.negf %293 : vector<16x8xf32>
      %295 = math.exp %294 : vector<16x8xf32>
      %cst_106 = arith.constant 1.000000e+00 : f32
      %296 = vector.broadcast %cst_106 : f32 to vector<16x8xf32>
      %297 = arith.addf %296, %295 : vector<16x8xf32>
      %298 = arith.divf %296, %297 : vector<16x8xf32>
      %299 = vector.extract_strided_slice %282 {offsets = [32, 0], sizes = [16, 8], strides = [1, 1]} : vector<48x8xf32> to vector<16x8xf32>
      %300 = vector.extract_strided_slice %250 {offsets = [32, 0], sizes = [16, 8], strides = [1, 1]} : vector<48x8xf32> to vector<16x8xf32>
      %301 = arith.mulf %290, %300 : vector<16x8xf32>
      %302 = arith.addf %299, %301 : vector<16x8xf32>
      %303 = math.tanh %302 : vector<16x8xf32>
      %cst_107 = arith.constant 1.000000e+00 : f32
      %304 = vector.broadcast %cst_107 : f32 to vector<16x8xf32>
      %305 = arith.subf %304, %298 : vector<16x8xf32>
      %306 = arith.mulf %305, %303 : vector<16x8xf32>
      %307 = arith.mulf %298, %arg25 : vector<16x8xf32>
      %308 = arith.addf %306, %307 : vector<16x8xf32>
      %c1_i32_108 = arith.constant 1 : i32
      %309 = arith.addi %245, %c1_i32_108 : i32
      %c99_i32 = arith.constant 99 : i32
      %310 = arith.subi %c99_i32, %245 : i32
      %cst_109 = arith.constant dense<0.000000e+00> : vector<48x8xf32>
      %311 = tpu.matmul %22, %279, %cst_109 {dimension_numbers = #tpu.dot_dimension_numbers<[1], [0], [0], [1], [0, 0, 1, 1], [], []>, precision = #tpu.contract_precision<fp32>} : vector<48x16xf32>, vector<16x8xf32>, vector<48x8xf32> -> vector<48x8xf32>
      %312 = arith.addf %311, %26 : vector<48x8xf32>
      %cst_110 = arith.constant dense<0.000000e+00> : vector<48x8xf32>
      %313 = tpu.matmul %23, %308, %cst_110 {dimension_numbers = #tpu.dot_dimension_numbers<[1], [0], [0], [1], [0, 0, 1, 1], [], []>, precision = #tpu.contract_precision<fp32>} : vector<48x16xf32>, vector<16x8xf32>, vector<48x8xf32> -> vector<48x8xf32>
      %314 = arith.addf %313, %29 : vector<48x8xf32>
      %315 = arith.index_cast %309 : i32 to index
      %c0_111 = arith.constant 0 : index
      %c0_112 = arith.constant 0 : index
      %316 = vector.load %arg21[%315, %c0_111, %c0_112] : memref<101x48x8xf32, #tpu.memory_space<vmem>>, vector<1x48x8xf32>
      %317 = vector.shape_cast %316 : vector<1x48x8xf32> to vector<48x8xf32>
      %318 = vector.extract_strided_slice %317 {offsets = [0, 0], sizes = [16, 8], strides = [1, 1]} : vector<48x8xf32> to vector<16x8xf32>
      %319 = vector.extract_strided_slice %312 {offsets = [0, 0], sizes = [16, 8], strides = [1, 1]} : vector<48x8xf32> to vector<16x8xf32>
      %320 = arith.addf %318, %319 : vector<16x8xf32>
      %321 = arith.negf %320 : vector<16x8xf32>
      %322 = math.exp %321 : vector<16x8xf32>
      %cst_113 = arith.constant 1.000000e+00 : f32
      %323 = vector.broadcast %cst_113 : f32 to vector<16x8xf32>
      %324 = arith.addf %323, %322 : vector<16x8xf32>
      %325 = arith.divf %323, %324 : vector<16x8xf32>
      %326 = vector.extract_strided_slice %317 {offsets = [16, 0], sizes = [16, 8], strides = [1, 1]} : vector<48x8xf32> to vector<16x8xf32>
      %327 = vector.extract_strided_slice %312 {offsets = [16, 0], sizes = [16, 8], strides = [1, 1]} : vector<48x8xf32> to vector<16x8xf32>
      %328 = arith.addf %326, %327 : vector<16x8xf32>
      %329 = arith.negf %328 : vector<16x8xf32>
      %330 = math.exp %329 : vector<16x8xf32>
      %cst_114 = arith.constant 1.000000e+00 : f32
      %331 = vector.broadcast %cst_114 : f32 to vector<16x8xf32>
      %332 = arith.addf %331, %330 : vector<16x8xf32>
      %333 = arith.divf %331, %332 : vector<16x8xf32>
      %334 = vector.extract_strided_slice %317 {offsets = [32, 0], sizes = [16, 8], strides = [1, 1]} : vector<48x8xf32> to vector<16x8xf32>
      %335 = vector.extract_strided_slice %312 {offsets = [32, 0], sizes = [16, 8], strides = [1, 1]} : vector<48x8xf32> to vector<16x8xf32>
      %336 = arith.mulf %325, %335 : vector<16x8xf32>
      %337 = arith.addf %334, %336 : vector<16x8xf32>
      %338 = math.tanh %337 : vector<16x8xf32>
      %cst_115 = arith.constant 1.000000e+00 : f32
      %339 = vector.broadcast %cst_115 : f32 to vector<16x8xf32>
      %340 = arith.subf %339, %333 : vector<16x8xf32>
      %341 = arith.mulf %340, %338 : vector<16x8xf32>
      %342 = arith.mulf %333, %279 : vector<16x8xf32>
      %343 = arith.addf %341, %342 : vector<16x8xf32>
      %344 = arith.index_cast %310 : i32 to index
      %c0_116 = arith.constant 0 : index
      %c0_117 = arith.constant 0 : index
      %345 = vector.load %arg22[%344, %c0_116, %c0_117] : memref<101x48x8xf32, #tpu.memory_space<vmem>>, vector<1x48x8xf32>
      %346 = vector.shape_cast %345 : vector<1x48x8xf32> to vector<48x8xf32>
      %347 = vector.extract_strided_slice %346 {offsets = [0, 0], sizes = [16, 8], strides = [1, 1]} : vector<48x8xf32> to vector<16x8xf32>
      %348 = vector.extract_strided_slice %314 {offsets = [0, 0], sizes = [16, 8], strides = [1, 1]} : vector<48x8xf32> to vector<16x8xf32>
      %349 = arith.addf %347, %348 : vector<16x8xf32>
      %350 = arith.negf %349 : vector<16x8xf32>
      %351 = math.exp %350 : vector<16x8xf32>
      %cst_118 = arith.constant 1.000000e+00 : f32
      %352 = vector.broadcast %cst_118 : f32 to vector<16x8xf32>
      %353 = arith.addf %352, %351 : vector<16x8xf32>
      %354 = arith.divf %352, %353 : vector<16x8xf32>
      %355 = vector.extract_strided_slice %346 {offsets = [16, 0], sizes = [16, 8], strides = [1, 1]} : vector<48x8xf32> to vector<16x8xf32>
      %356 = vector.extract_strided_slice %314 {offsets = [16, 0], sizes = [16, 8], strides = [1, 1]} : vector<48x8xf32> to vector<16x8xf32>
      %357 = arith.addf %355, %356 : vector<16x8xf32>
      %358 = arith.negf %357 : vector<16x8xf32>
      %359 = math.exp %358 : vector<16x8xf32>
      %cst_119 = arith.constant 1.000000e+00 : f32
      %360 = vector.broadcast %cst_119 : f32 to vector<16x8xf32>
      %361 = arith.addf %360, %359 : vector<16x8xf32>
      %362 = arith.divf %360, %361 : vector<16x8xf32>
      %363 = vector.extract_strided_slice %346 {offsets = [32, 0], sizes = [16, 8], strides = [1, 1]} : vector<48x8xf32> to vector<16x8xf32>
      %364 = vector.extract_strided_slice %314 {offsets = [32, 0], sizes = [16, 8], strides = [1, 1]} : vector<48x8xf32> to vector<16x8xf32>
      %365 = arith.mulf %354, %364 : vector<16x8xf32>
      %366 = arith.addf %363, %365 : vector<16x8xf32>
      %367 = math.tanh %366 : vector<16x8xf32>
      %cst_120 = arith.constant 1.000000e+00 : f32
      %368 = vector.broadcast %cst_120 : f32 to vector<16x8xf32>
      %369 = arith.subf %368, %362 : vector<16x8xf32>
      %370 = arith.mulf %369, %367 : vector<16x8xf32>
      %371 = arith.mulf %362, %308 : vector<16x8xf32>
      %372 = arith.addf %370, %371 : vector<16x8xf32>
      scf.yield %343, %372 : vector<16x8xf32>, vector<16x8xf32>
    }
    %c50_i32_23 = arith.constant 50 : i32
    %cst_24 = arith.constant dense<0.000000e+00> : vector<48x8xf32>
    %33 = tpu.matmul %22, %32#0, %cst_24 {dimension_numbers = #tpu.dot_dimension_numbers<[1], [0], [0], [1], [0, 0, 1, 1], [], []>, precision = #tpu.contract_precision<fp32>} : vector<48x16xf32>, vector<16x8xf32>, vector<48x8xf32> -> vector<48x8xf32>
    %34 = arith.addf %33, %26 : vector<48x8xf32>
    %cst_25 = arith.constant dense<0.000000e+00> : vector<48x8xf32>
    %35 = tpu.matmul %23, %32#1, %cst_25 {dimension_numbers = #tpu.dot_dimension_numbers<[1], [0], [0], [1], [0, 0, 1, 1], [], []>, precision = #tpu.contract_precision<fp32>} : vector<48x16xf32>, vector<16x8xf32>, vector<48x8xf32> -> vector<48x8xf32>
    %36 = arith.addf %35, %29 : vector<48x8xf32>
    %c100 = arith.constant 100 : index
    %c0_26 = arith.constant 0 : index
    %c0_27 = arith.constant 0 : index
    %37 = vector.load %arg21[%c100, %c0_26, %c0_27] : memref<101x48x8xf32, #tpu.memory_space<vmem>>, vector<1x48x8xf32>
    %38 = vector.shape_cast %37 : vector<1x48x8xf32> to vector<48x8xf32>
    %39 = vector.extract_strided_slice %38 {offsets = [0, 0], sizes = [16, 8], strides = [1, 1]} : vector<48x8xf32> to vector<16x8xf32>
    %40 = vector.extract_strided_slice %34 {offsets = [0, 0], sizes = [16, 8], strides = [1, 1]} : vector<48x8xf32> to vector<16x8xf32>
    %41 = arith.addf %39, %40 : vector<16x8xf32>
    %42 = arith.negf %41 : vector<16x8xf32>
    %43 = math.exp %42 : vector<16x8xf32>
    %cst_28 = arith.constant 1.000000e+00 : f32
    %44 = vector.broadcast %cst_28 : f32 to vector<16x8xf32>
    %45 = arith.addf %44, %43 : vector<16x8xf32>
    %46 = arith.divf %44, %45 : vector<16x8xf32>
    %47 = vector.extract_strided_slice %38 {offsets = [16, 0], sizes = [16, 8], strides = [1, 1]} : vector<48x8xf32> to vector<16x8xf32>
    %48 = vector.extract_strided_slice %34 {offsets = [16, 0], sizes = [16, 8], strides = [1, 1]} : vector<48x8xf32> to vector<16x8xf32>
    %49 = arith.addf %47, %48 : vector<16x8xf32>
    %50 = arith.negf %49 : vector<16x8xf32>
    %51 = math.exp %50 : vector<16x8xf32>
    %cst_29 = arith.constant 1.000000e+00 : f32
    %52 = vector.broadcast %cst_29 : f32 to vector<16x8xf32>
    %53 = arith.addf %52, %51 : vector<16x8xf32>
    %54 = arith.divf %52, %53 : vector<16x8xf32>
    %55 = vector.extract_strided_slice %38 {offsets = [32, 0], sizes = [16, 8], strides = [1, 1]} : vector<48x8xf32> to vector<16x8xf32>
    %56 = vector.extract_strided_slice %34 {offsets = [32, 0], sizes = [16, 8], strides = [1, 1]} : vector<48x8xf32> to vector<16x8xf32>
    %57 = arith.mulf %46, %56 : vector<16x8xf32>
    %58 = arith.addf %55, %57 : vector<16x8xf32>
    %59 = math.tanh %58 : vector<16x8xf32>
    %cst_30 = arith.constant 1.000000e+00 : f32
    %60 = vector.broadcast %cst_30 : f32 to vector<16x8xf32>
    %61 = arith.subf %60, %54 : vector<16x8xf32>
    %62 = arith.mulf %61, %59 : vector<16x8xf32>
    %63 = arith.mulf %54, %32#0 : vector<16x8xf32>
    %64 = arith.addf %62, %63 : vector<16x8xf32>
    %c0_31 = arith.constant 0 : index
    %c0_32 = arith.constant 0 : index
    %c0_33 = arith.constant 0 : index
    %65 = vector.load %arg22[%c0_31, %c0_32, %c0_33] : memref<101x48x8xf32, #tpu.memory_space<vmem>>, vector<1x48x8xf32>
    %66 = vector.shape_cast %65 : vector<1x48x8xf32> to vector<48x8xf32>
    %67 = vector.extract_strided_slice %66 {offsets = [0, 0], sizes = [16, 8], strides = [1, 1]} : vector<48x8xf32> to vector<16x8xf32>
    %68 = vector.extract_strided_slice %36 {offsets = [0, 0], sizes = [16, 8], strides = [1, 1]} : vector<48x8xf32> to vector<16x8xf32>
    %69 = arith.addf %67, %68 : vector<16x8xf32>
    %70 = arith.negf %69 : vector<16x8xf32>
    %71 = math.exp %70 : vector<16x8xf32>
    %cst_34 = arith.constant 1.000000e+00 : f32
    %72 = vector.broadcast %cst_34 : f32 to vector<16x8xf32>
    %73 = arith.addf %72, %71 : vector<16x8xf32>
    %74 = arith.divf %72, %73 : vector<16x8xf32>
    %75 = vector.extract_strided_slice %66 {offsets = [16, 0], sizes = [16, 8], strides = [1, 1]} : vector<48x8xf32> to vector<16x8xf32>
    %76 = vector.extract_strided_slice %36 {offsets = [16, 0], sizes = [16, 8], strides = [1, 1]} : vector<48x8xf32> to vector<16x8xf32>
    %77 = arith.addf %75, %76 : vector<16x8xf32>
    %78 = arith.negf %77 : vector<16x8xf32>
    %79 = math.exp %78 : vector<16x8xf32>
    %cst_35 = arith.constant 1.000000e+00 : f32
    %80 = vector.broadcast %cst_35 : f32 to vector<16x8xf32>
    %81 = arith.addf %80, %79 : vector<16x8xf32>
    %82 = arith.divf %80, %81 : vector<16x8xf32>
    %83 = vector.extract_strided_slice %66 {offsets = [32, 0], sizes = [16, 8], strides = [1, 1]} : vector<48x8xf32> to vector<16x8xf32>
    %84 = vector.extract_strided_slice %36 {offsets = [32, 0], sizes = [16, 8], strides = [1, 1]} : vector<48x8xf32> to vector<16x8xf32>
    %85 = arith.mulf %74, %84 : vector<16x8xf32>
    %86 = arith.addf %83, %85 : vector<16x8xf32>
    %87 = math.tanh %86 : vector<16x8xf32>
    %cst_36 = arith.constant 1.000000e+00 : f32
    %88 = vector.broadcast %cst_36 : f32 to vector<16x8xf32>
    %89 = arith.subf %88, %82 : vector<16x8xf32>
    %90 = arith.mulf %89, %87 : vector<16x8xf32>
    %91 = arith.mulf %82, %32#1 : vector<16x8xf32>
    %92 = arith.addf %90, %91 : vector<16x8xf32>
    %c0_37 = arith.constant 0 : index
    %c0_38 = arith.constant 0 : index
    %93 = vector.load %arg10[%c0_37, %c0_38] : memref<48x16xf32, #tpu.memory_space<vmem>>, vector<48x16xf32>
    %cst_39 = arith.constant dense<0.000000e+00> : vector<48x8xf32>
    %94 = tpu.matmul %93, %64, %cst_39 {dimension_numbers = #tpu.dot_dimension_numbers<[1], [0], [0], [1], [0, 0, 1, 1], [], []>, precision = #tpu.contract_precision<fp32>} : vector<48x16xf32>, vector<16x8xf32>, vector<48x8xf32> -> vector<48x8xf32>
    %c0_40 = arith.constant 0 : index
    %c0_41 = arith.constant 0 : index
    %95 = vector.load %arg12[%c0_40, %c0_41] : memref<48x1xf32, #tpu.memory_space<vmem>>, vector<48x1xf32>
    %96 = vector.broadcast %95 : vector<48x1xf32> to vector<48x8xf32>
    %97 = arith.addf %94, %96 : vector<48x8xf32>
    %c0_42 = arith.constant 0 : index
    %c0_43 = arith.constant 0 : index
    %98 = vector.load %arg11[%c0_42, %c0_43] : memref<48x16xf32, #tpu.memory_space<vmem>>, vector<48x16xf32>
    %cst_44 = arith.constant dense<0.000000e+00> : vector<48x8xf32>
    %99 = tpu.matmul %98, %30, %cst_44 {dimension_numbers = #tpu.dot_dimension_numbers<[1], [0], [0], [1], [0, 0, 1, 1], [], []>, precision = #tpu.contract_precision<fp32>} : vector<48x16xf32>, vector<16x8xf32>, vector<48x8xf32> -> vector<48x8xf32>
    %c0_45 = arith.constant 0 : index
    %c0_46 = arith.constant 0 : index
    %100 = vector.load %arg13[%c0_45, %c0_46] : memref<48x1xf32, #tpu.memory_space<vmem>>, vector<48x1xf32>
    %101 = vector.broadcast %100 : vector<48x1xf32> to vector<48x8xf32>
    %102 = arith.addf %99, %101 : vector<48x8xf32>
    %103 = vector.extract_strided_slice %97 {offsets = [0, 0], sizes = [16, 8], strides = [1, 1]} : vector<48x8xf32> to vector<16x8xf32>
    %104 = vector.extract_strided_slice %102 {offsets = [0, 0], sizes = [16, 8], strides = [1, 1]} : vector<48x8xf32> to vector<16x8xf32>
    %105 = arith.addf %103, %104 : vector<16x8xf32>
    %106 = arith.negf %105 : vector<16x8xf32>
    %107 = math.exp %106 : vector<16x8xf32>
    %cst_47 = arith.constant 1.000000e+00 : f32
    %108 = vector.broadcast %cst_47 : f32 to vector<16x8xf32>
    %109 = arith.addf %108, %107 : vector<16x8xf32>
    %110 = arith.divf %108, %109 : vector<16x8xf32>
    %111 = vector.extract_strided_slice %97 {offsets = [16, 0], sizes = [16, 8], strides = [1, 1]} : vector<48x8xf32> to vector<16x8xf32>
    %112 = vector.extract_strided_slice %102 {offsets = [16, 0], sizes = [16, 8], strides = [1, 1]} : vector<48x8xf32> to vector<16x8xf32>
    %113 = arith.addf %111, %112 : vector<16x8xf32>
    %114 = arith.negf %113 : vector<16x8xf32>
    %115 = math.exp %114 : vector<16x8xf32>
    %cst_48 = arith.constant 1.000000e+00 : f32
    %116 = vector.broadcast %cst_48 : f32 to vector<16x8xf32>
    %117 = arith.addf %116, %115 : vector<16x8xf32>
    %118 = arith.divf %116, %117 : vector<16x8xf32>
    %119 = vector.extract_strided_slice %97 {offsets = [32, 0], sizes = [16, 8], strides = [1, 1]} : vector<48x8xf32> to vector<16x8xf32>
    %120 = vector.extract_strided_slice %102 {offsets = [32, 0], sizes = [16, 8], strides = [1, 1]} : vector<48x8xf32> to vector<16x8xf32>
    %121 = arith.mulf %110, %120 : vector<16x8xf32>
    %122 = arith.addf %119, %121 : vector<16x8xf32>
    %123 = math.tanh %122 : vector<16x8xf32>
    %cst_49 = arith.constant 1.000000e+00 : f32
    %124 = vector.broadcast %cst_49 : f32 to vector<16x8xf32>
    %125 = arith.subf %124, %118 : vector<16x8xf32>
    %126 = arith.mulf %125, %123 : vector<16x8xf32>
    %127 = arith.mulf %118, %30 : vector<16x8xf32>
    %128 = arith.addf %126, %127 : vector<16x8xf32>
    %c0_50 = arith.constant 0 : index
    %c0_51 = arith.constant 0 : index
    %129 = vector.load %arg10[%c0_50, %c0_51] : memref<48x16xf32, #tpu.memory_space<vmem>>, vector<48x16xf32>
    %cst_52 = arith.constant dense<0.000000e+00> : vector<48x8xf32>
    %130 = tpu.matmul %129, %92, %cst_52 {dimension_numbers = #tpu.dot_dimension_numbers<[1], [0], [0], [1], [0, 0, 1, 1], [], []>, precision = #tpu.contract_precision<fp32>} : vector<48x16xf32>, vector<16x8xf32>, vector<48x8xf32> -> vector<48x8xf32>
    %c0_53 = arith.constant 0 : index
    %c0_54 = arith.constant 0 : index
    %131 = vector.load %arg12[%c0_53, %c0_54] : memref<48x1xf32, #tpu.memory_space<vmem>>, vector<48x1xf32>
    %132 = vector.broadcast %131 : vector<48x1xf32> to vector<48x8xf32>
    %133 = arith.addf %130, %132 : vector<48x8xf32>
    %c0_55 = arith.constant 0 : index
    %c0_56 = arith.constant 0 : index
    %134 = vector.load %arg11[%c0_55, %c0_56] : memref<48x16xf32, #tpu.memory_space<vmem>>, vector<48x16xf32>
    %cst_57 = arith.constant dense<0.000000e+00> : vector<48x8xf32>
    %135 = tpu.matmul %134, %128, %cst_57 {dimension_numbers = #tpu.dot_dimension_numbers<[1], [0], [0], [1], [0, 0, 1, 1], [], []>, precision = #tpu.contract_precision<fp32>} : vector<48x16xf32>, vector<16x8xf32>, vector<48x8xf32> -> vector<48x8xf32>
    %c0_58 = arith.constant 0 : index
    %c0_59 = arith.constant 0 : index
    %136 = vector.load %arg13[%c0_58, %c0_59] : memref<48x1xf32, #tpu.memory_space<vmem>>, vector<48x1xf32>
    %137 = vector.broadcast %136 : vector<48x1xf32> to vector<48x8xf32>
    %138 = arith.addf %135, %137 : vector<48x8xf32>
    %139 = vector.extract_strided_slice %133 {offsets = [0, 0], sizes = [16, 8], strides = [1, 1]} : vector<48x8xf32> to vector<16x8xf32>
    %140 = vector.extract_strided_slice %138 {offsets = [0, 0], sizes = [16, 8], strides = [1, 1]} : vector<48x8xf32> to vector<16x8xf32>
    %141 = arith.addf %139, %140 : vector<16x8xf32>
    %142 = arith.negf %141 : vector<16x8xf32>
    %143 = math.exp %142 : vector<16x8xf32>
    %cst_60 = arith.constant 1.000000e+00 : f32
    %144 = vector.broadcast %cst_60 : f32 to vector<16x8xf32>
    %145 = arith.addf %144, %143 : vector<16x8xf32>
    %146 = arith.divf %144, %145 : vector<16x8xf32>
    %147 = vector.extract_strided_slice %133 {offsets = [16, 0], sizes = [16, 8], strides = [1, 1]} : vector<48x8xf32> to vector<16x8xf32>
    %148 = vector.extract_strided_slice %138 {offsets = [16, 0], sizes = [16, 8], strides = [1, 1]} : vector<48x8xf32> to vector<16x8xf32>
    %149 = arith.addf %147, %148 : vector<16x8xf32>
    %150 = arith.negf %149 : vector<16x8xf32>
    %151 = math.exp %150 : vector<16x8xf32>
    %cst_61 = arith.constant 1.000000e+00 : f32
    %152 = vector.broadcast %cst_61 : f32 to vector<16x8xf32>
    %153 = arith.addf %152, %151 : vector<16x8xf32>
    %154 = arith.divf %152, %153 : vector<16x8xf32>
    %155 = vector.extract_strided_slice %133 {offsets = [32, 0], sizes = [16, 8], strides = [1, 1]} : vector<48x8xf32> to vector<16x8xf32>
    %156 = vector.extract_strided_slice %138 {offsets = [32, 0], sizes = [16, 8], strides = [1, 1]} : vector<48x8xf32> to vector<16x8xf32>
    %157 = arith.mulf %146, %156 : vector<16x8xf32>
    %158 = arith.addf %155, %157 : vector<16x8xf32>
    %159 = math.tanh %158 : vector<16x8xf32>
    %cst_62 = arith.constant 1.000000e+00 : f32
    %160 = vector.broadcast %cst_62 : f32 to vector<16x8xf32>
    %161 = arith.subf %160, %154 : vector<16x8xf32>
    %162 = arith.mulf %161, %159 : vector<16x8xf32>
    %163 = arith.mulf %154, %128 : vector<16x8xf32>
    %164 = arith.addf %162, %163 : vector<16x8xf32>
    %c0_63 = arith.constant 0 : index
    %c0_64 = arith.constant 0 : index
    %165 = vector.load %arg14[%c0_63, %c0_64] : memref<48x16xf32, #tpu.memory_space<vmem>>, vector<48x16xf32>
    %cst_65 = arith.constant dense<0.000000e+00> : vector<48x8xf32>
    %166 = tpu.matmul %165, %92, %cst_65 {dimension_numbers = #tpu.dot_dimension_numbers<[1], [0], [0], [1], [0, 0, 1, 1], [], []>, precision = #tpu.contract_precision<fp32>} : vector<48x16xf32>, vector<16x8xf32>, vector<48x8xf32> -> vector<48x8xf32>
    %c0_66 = arith.constant 0 : index
    %c0_67 = arith.constant 0 : index
    %167 = vector.load %arg16[%c0_66, %c0_67] : memref<48x1xf32, #tpu.memory_space<vmem>>, vector<48x1xf32>
    %168 = vector.broadcast %167 : vector<48x1xf32> to vector<48x8xf32>
    %169 = arith.addf %166, %168 : vector<48x8xf32>
    %c0_68 = arith.constant 0 : index
    %c0_69 = arith.constant 0 : index
    %170 = vector.load %arg15[%c0_68, %c0_69] : memref<48x16xf32, #tpu.memory_space<vmem>>, vector<48x16xf32>
    %cst_70 = arith.constant dense<0.000000e+00> : vector<48x8xf32>
    %171 = tpu.matmul %170, %30, %cst_70 {dimension_numbers = #tpu.dot_dimension_numbers<[1], [0], [0], [1], [0, 0, 1, 1], [], []>, precision = #tpu.contract_precision<fp32>} : vector<48x16xf32>, vector<16x8xf32>, vector<48x8xf32> -> vector<48x8xf32>
    %c0_71 = arith.constant 0 : index
    %c0_72 = arith.constant 0 : index
    %172 = vector.load %arg17[%c0_71, %c0_72] : memref<48x1xf32, #tpu.memory_space<vmem>>, vector<48x1xf32>
    %173 = vector.broadcast %172 : vector<48x1xf32> to vector<48x8xf32>
    %174 = arith.addf %171, %173 : vector<48x8xf32>
    %175 = vector.extract_strided_slice %169 {offsets = [0, 0], sizes = [16, 8], strides = [1, 1]} : vector<48x8xf32> to vector<16x8xf32>
    %176 = vector.extract_strided_slice %174 {offsets = [0, 0], sizes = [16, 8], strides = [1, 1]} : vector<48x8xf32> to vector<16x8xf32>
    %177 = arith.addf %175, %176 : vector<16x8xf32>
    %178 = arith.negf %177 : vector<16x8xf32>
    %179 = math.exp %178 : vector<16x8xf32>
    %cst_73 = arith.constant 1.000000e+00 : f32
    %180 = vector.broadcast %cst_73 : f32 to vector<16x8xf32>
    %181 = arith.addf %180, %179 : vector<16x8xf32>
    %182 = arith.divf %180, %181 : vector<16x8xf32>
    %183 = vector.extract_strided_slice %169 {offsets = [16, 0], sizes = [16, 8], strides = [1, 1]} : vector<48x8xf32> to vector<16x8xf32>
    %184 = vector.extract_strided_slice %174 {offsets = [16, 0], sizes = [16, 8], strides = [1, 1]} : vector<48x8xf32> to vector<16x8xf32>
    %185 = arith.addf %183, %184 : vector<16x8xf32>
    %186 = arith.negf %185 : vector<16x8xf32>
    %187 = math.exp %186 : vector<16x8xf32>
    %cst_74 = arith.constant 1.000000e+00 : f32
    %188 = vector.broadcast %cst_74 : f32 to vector<16x8xf32>
    %189 = arith.addf %188, %187 : vector<16x8xf32>
    %190 = arith.divf %188, %189 : vector<16x8xf32>
    %191 = vector.extract_strided_slice %169 {offsets = [32, 0], sizes = [16, 8], strides = [1, 1]} : vector<48x8xf32> to vector<16x8xf32>
    %192 = vector.extract_strided_slice %174 {offsets = [32, 0], sizes = [16, 8], strides = [1, 1]} : vector<48x8xf32> to vector<16x8xf32>
    %193 = arith.mulf %182, %192 : vector<16x8xf32>
    %194 = arith.addf %191, %193 : vector<16x8xf32>
    %195 = math.tanh %194 : vector<16x8xf32>
    %cst_75 = arith.constant 1.000000e+00 : f32
    %196 = vector.broadcast %cst_75 : f32 to vector<16x8xf32>
    %197 = arith.subf %196, %190 : vector<16x8xf32>
    %198 = arith.mulf %197, %195 : vector<16x8xf32>
    %199 = arith.mulf %190, %30 : vector<16x8xf32>
    %200 = arith.addf %198, %199 : vector<16x8xf32>
    %c0_76 = arith.constant 0 : index
    %c0_77 = arith.constant 0 : index
    %201 = vector.load %arg14[%c0_76, %c0_77] : memref<48x16xf32, #tpu.memory_space<vmem>>, vector<48x16xf32>
    %cst_78 = arith.constant dense<0.000000e+00> : vector<48x8xf32>
    %202 = tpu.matmul %201, %64, %cst_78 {dimension_numbers = #tpu.dot_dimension_numbers<[1], [0], [0], [1], [0, 0, 1, 1], [], []>, precision = #tpu.contract_precision<fp32>} : vector<48x16xf32>, vector<16x8xf32>, vector<48x8xf32> -> vector<48x8xf32>
    %c0_79 = arith.constant 0 : index
    %c0_80 = arith.constant 0 : index
    %203 = vector.load %arg16[%c0_79, %c0_80] : memref<48x1xf32, #tpu.memory_space<vmem>>, vector<48x1xf32>
    %204 = vector.broadcast %203 : vector<48x1xf32> to vector<48x8xf32>
    %205 = arith.addf %202, %204 : vector<48x8xf32>
    %c0_81 = arith.constant 0 : index
    %c0_82 = arith.constant 0 : index
    %206 = vector.load %arg15[%c0_81, %c0_82] : memref<48x16xf32, #tpu.memory_space<vmem>>, vector<48x16xf32>
    %cst_83 = arith.constant dense<0.000000e+00> : vector<48x8xf32>
    %207 = tpu.matmul %206, %200, %cst_83 {dimension_numbers = #tpu.dot_dimension_numbers<[1], [0], [0], [1], [0, 0, 1, 1], [], []>, precision = #tpu.contract_precision<fp32>} : vector<48x16xf32>, vector<16x8xf32>, vector<48x8xf32> -> vector<48x8xf32>
    %c0_84 = arith.constant 0 : index
    %c0_85 = arith.constant 0 : index
    %208 = vector.load %arg17[%c0_84, %c0_85] : memref<48x1xf32, #tpu.memory_space<vmem>>, vector<48x1xf32>
    %209 = vector.broadcast %208 : vector<48x1xf32> to vector<48x8xf32>
    %210 = arith.addf %207, %209 : vector<48x8xf32>
    %211 = vector.extract_strided_slice %205 {offsets = [0, 0], sizes = [16, 8], strides = [1, 1]} : vector<48x8xf32> to vector<16x8xf32>
    %212 = vector.extract_strided_slice %210 {offsets = [0, 0], sizes = [16, 8], strides = [1, 1]} : vector<48x8xf32> to vector<16x8xf32>
    %213 = arith.addf %211, %212 : vector<16x8xf32>
    %214 = arith.negf %213 : vector<16x8xf32>
    %215 = math.exp %214 : vector<16x8xf32>
    %cst_86 = arith.constant 1.000000e+00 : f32
    %216 = vector.broadcast %cst_86 : f32 to vector<16x8xf32>
    %217 = arith.addf %216, %215 : vector<16x8xf32>
    %218 = arith.divf %216, %217 : vector<16x8xf32>
    %219 = vector.extract_strided_slice %205 {offsets = [16, 0], sizes = [16, 8], strides = [1, 1]} : vector<48x8xf32> to vector<16x8xf32>
    %220 = vector.extract_strided_slice %210 {offsets = [16, 0], sizes = [16, 8], strides = [1, 1]} : vector<48x8xf32> to vector<16x8xf32>
    %221 = arith.addf %219, %220 : vector<16x8xf32>
    %222 = arith.negf %221 : vector<16x8xf32>
    %223 = math.exp %222 : vector<16x8xf32>
    %cst_87 = arith.constant 1.000000e+00 : f32
    %224 = vector.broadcast %cst_87 : f32 to vector<16x8xf32>
    %225 = arith.addf %224, %223 : vector<16x8xf32>
    %226 = arith.divf %224, %225 : vector<16x8xf32>
    %227 = vector.extract_strided_slice %205 {offsets = [32, 0], sizes = [16, 8], strides = [1, 1]} : vector<48x8xf32> to vector<16x8xf32>
    %228 = vector.extract_strided_slice %210 {offsets = [32, 0], sizes = [16, 8], strides = [1, 1]} : vector<48x8xf32> to vector<16x8xf32>
    %229 = arith.mulf %218, %228 : vector<16x8xf32>
    %230 = arith.addf %227, %229 : vector<16x8xf32>
    %231 = math.tanh %230 : vector<16x8xf32>
    %cst_88 = arith.constant 1.000000e+00 : f32
    %232 = vector.broadcast %cst_88 : f32 to vector<16x8xf32>
    %233 = arith.subf %232, %226 : vector<16x8xf32>
    %234 = arith.mulf %233, %231 : vector<16x8xf32>
    %235 = arith.mulf %226, %200 : vector<16x8xf32>
    %236 = arith.addf %234, %235 : vector<16x8xf32>
    %237 = tpu.concatenate %128, %236, %164, %200 in 0 : vector<16x8xf32>, vector<16x8xf32>, vector<16x8xf32>, vector<16x8xf32> -> vector<64x8xf32>
    %c0_89 = arith.constant 0 : index
    %c0_90 = arith.constant 0 : index
    %238 = vector.load %arg18[%c0_89, %c0_90] : memref<128x64xf32, #tpu.memory_space<vmem>>, vector<128x64xf32>
    %cst_91 = arith.constant dense<0.000000e+00> : vector<128x8xf32>
    %239 = tpu.matmul %238, %237, %cst_91 {dimension_numbers = #tpu.dot_dimension_numbers<[1], [0], [0], [1], [0, 0, 1, 1], [], []>, precision = #tpu.contract_precision<fp32>} : vector<128x64xf32>, vector<64x8xf32>, vector<128x8xf32> -> vector<128x8xf32>
    %c0_92 = arith.constant 0 : index
    %c0_93 = arith.constant 0 : index
    %240 = vector.load %arg19[%c0_92, %c0_93] : memref<128x1xf32, #tpu.memory_space<vmem>>, vector<128x1xf32>
    %241 = vector.broadcast %240 : vector<128x1xf32> to vector<128x8xf32>
    %242 = arith.addf %239, %241 : vector<128x8xf32>
    %243 = math.tanh %242 : vector<128x8xf32>
    %c0_94 = arith.constant 0 : index
    %c0_95 = arith.constant 0 : index
    %244 = vector.load %arg20[%c0_94, %c0_95] : memref<128x8xf32, #tpu.memory_space<vmem>>, vector<128x8xf32>
    tpu.vector_store %arg20[%c0_94, %c0_95], %243 {strides = array<i32>} : memref<128x8xf32, #tpu.memory_space<vmem>>, vector<128x8xf32>,
    return
  }
  func.func @transform_0(%arg0: i32) -> (i32, i32) {
    %c0_i32 = arith.constant 0 : i32
    %c0_i32_0 = arith.constant 0 : i32
    return %c0_i32, %arg0 : i32, i32
  }
  func.func @transform_1(%arg0: i32) -> (i32, i32) {
    %c0_i32 = arith.constant 0 : i32
    %c0_i32_0 = arith.constant 0 : i32
    %c0_i32_1 = arith.constant 0 : i32
    return %c0_i32, %c0_i32_0 : i32, i32
  }
  func.func @transform_2(%arg0: i32) -> (i32, i32) {
    %c0_i32 = arith.constant 0 : i32
    %c0_i32_0 = arith.constant 0 : i32
    %c0_i32_1 = arith.constant 0 : i32
    return %c0_i32, %c0_i32_0 : i32, i32
  }
  func.func @transform_3(%arg0: i32) -> (i32, i32) {
    %c0_i32 = arith.constant 0 : i32
    %c0_i32_0 = arith.constant 0 : i32
    %c0_i32_1 = arith.constant 0 : i32
    return %c0_i32, %c0_i32_0 : i32, i32
  }
  func.func @transform_4(%arg0: i32) -> (i32, i32) {
    %c0_i32 = arith.constant 0 : i32
    %c0_i32_0 = arith.constant 0 : i32
    %c0_i32_1 = arith.constant 0 : i32
    return %c0_i32, %c0_i32_0 : i32, i32
  }
  func.func @transform_5(%arg0: i32) -> (i32, i32) {
    %c0_i32 = arith.constant 0 : i32
    %c0_i32_0 = arith.constant 0 : i32
    %c0_i32_1 = arith.constant 0 : i32
    return %c0_i32, %c0_i32_0 : i32, i32
  }
  func.func @transform_6(%arg0: i32) -> (i32, i32) {
    %c0_i32 = arith.constant 0 : i32
    %c0_i32_0 = arith.constant 0 : i32
    %c0_i32_1 = arith.constant 0 : i32
    return %c0_i32, %c0_i32_0 : i32, i32
  }
  func.func @transform_7(%arg0: i32) -> (i32, i32) {
    %c0_i32 = arith.constant 0 : i32
    %c0_i32_0 = arith.constant 0 : i32
    %c0_i32_1 = arith.constant 0 : i32
    return %c0_i32, %c0_i32_0 : i32, i32
  }
  func.func @transform_8(%arg0: i32) -> (i32, i32) {
    %c0_i32 = arith.constant 0 : i32
    %c0_i32_0 = arith.constant 0 : i32
    %c0_i32_1 = arith.constant 0 : i32
    return %c0_i32, %c0_i32_0 : i32, i32
  }
  func.func @transform_9(%arg0: i32) -> (i32, i32) {
    %c0_i32 = arith.constant 0 : i32
    %c0_i32_0 = arith.constant 0 : i32
    %c0_i32_1 = arith.constant 0 : i32
    return %c0_i32, %c0_i32_0 : i32, i32
  }
  func.func @transform_10(%arg0: i32) -> (i32, i32) {
    %c0_i32 = arith.constant 0 : i32
    %c0_i32_0 = arith.constant 0 : i32
    %c0_i32_1 = arith.constant 0 : i32
    return %c0_i32, %c0_i32_0 : i32, i32
  }
  func.func @transform_11(%arg0: i32) -> (i32, i32) {
    %c0_i32 = arith.constant 0 : i32
    %c0_i32_0 = arith.constant 0 : i32
    %c0_i32_1 = arith.constant 0 : i32
    return %c0_i32, %c0_i32_0 : i32, i32
  }
  func.func @transform_12(%arg0: i32) -> (i32, i32) {
    %c0_i32 = arith.constant 0 : i32
    %c0_i32_0 = arith.constant 0 : i32
    %c0_i32_1 = arith.constant 0 : i32
    return %c0_i32, %c0_i32_0 : i32, i32
  }
  func.func @transform_13(%arg0: i32) -> (i32, i32) {
    %c0_i32 = arith.constant 0 : i32
    %c0_i32_0 = arith.constant 0 : i32
    %c0_i32_1 = arith.constant 0 : i32
    return %c0_i32, %c0_i32_0 : i32, i32
  }
  func.func @transform_14(%arg0: i32) -> (i32, i32) {
    %c0_i32 = arith.constant 0 : i32
    %c0_i32_0 = arith.constant 0 : i32
    %c0_i32_1 = arith.constant 0 : i32
    return %c0_i32, %c0_i32_0 : i32, i32
  }
  func.func @transform_15(%arg0: i32) -> (i32, i32) {
    %c0_i32 = arith.constant 0 : i32
    %c0_i32_0 = arith.constant 0 : i32
    %c0_i32_1 = arith.constant 0 : i32
    return %c0_i32, %c0_i32_0 : i32, i32
  }
  func.func @transform_16(%arg0: i32) -> (i32, i32) {
    %c0_i32 = arith.constant 0 : i32
    %c0_i32_0 = arith.constant 0 : i32
    %c0_i32_1 = arith.constant 0 : i32
    return %c0_i32, %c0_i32_0 : i32, i32
  }
  func.func @transform_17(%arg0: i32) -> (i32, i32) {
    %c0_i32 = arith.constant 0 : i32
    %c0_i32_0 = arith.constant 0 : i32
    %c0_i32_1 = arith.constant 0 : i32
    return %c0_i32, %c0_i32_0 : i32, i32
  }
  func.func @transform_18(%arg0: i32) -> (i32, i32) {
    %c0_i32 = arith.constant 0 : i32
    %c0_i32_0 = arith.constant 0 : i32
    %c0_i32_1 = arith.constant 0 : i32
    return %c0_i32, %c0_i32_0 : i32, i32
  }
  func.func @transform_19(%arg0: i32) -> (i32, i32) {
    %c0_i32 = arith.constant 0 : i32
    %c0_i32_0 = arith.constant 0 : i32
    return %c0_i32, %arg0 : i32, i32
  }
}

</mosaic_0001>

<llo_original>
// kernel: tpu_custom_call.1
$region0: #{tpu_custom_call.1}
  #allocation0 [shape = 'u32[]', space=smem, size = 0x4, offset = 0x4, fixed_abs, tag = 'smem constant byte address 0x4 - core index']
  #allocation1 [shape = 'u32[72,128]{1,0:T(1,128)}', space=vmem, size = 0x9000, scoped, tag = 'internal scratch']
  #allocation2 [shape = 'f32[101,48,8]{2,1,0:T(8,128)}', space=vmem, size = 0x25e000, scoped, tag = 'scratch operand']
  #allocation3 [shape = 'f32[101,48,8]{2,1,0:T(8,128)}', space=vmem, size = 0x25e000, scoped, tag = 'scratch operand']
  %s0 = inlined_call_operand.vmem [shape: f32[101,8], index: 0, kind: input, shape index: {}]
  %s1 = inlined_call_operand.vmem [shape: f32[48,1], index: 1, kind: input, shape index: {}]
  %s2 = inlined_call_operand.vmem [shape: f32[48,16], index: 2, kind: input, shape index: {}]
  %s3 = inlined_call_operand.vmem [shape: f32[48,1], index: 3, kind: input, shape index: {}]
  %s4 = inlined_call_operand.vmem [shape: f32[48,1], index: 4, kind: input, shape index: {}]
  %s5 = inlined_call_operand.vmem [shape: f32[48,1], index: 5, kind: input, shape index: {}]
  %s6 = inlined_call_operand.vmem [shape: f32[48,16], index: 6, kind: input, shape index: {}]
  %s7 = inlined_call_operand.vmem [shape: f32[48,1], index: 7, kind: input, shape index: {}]
  %s8 = inlined_call_operand.vmem [shape: f32[48,1], index: 8, kind: input, shape index: {}]
  %s9 = inlined_call_operand.vmem [shape: f32[48,16], index: 9, kind: input, shape index: {}]
  %s10 = inlined_call_operand.vmem [shape: f32[48,16], index: 10, kind: input, shape index: {}]
  %s11 = inlined_call_operand.vmem [shape: f32[48,1], index: 11, kind: input, shape index: {}]
  %s12 = inlined_call_operand.vmem [shape: f32[48,1], index: 12, kind: input, shape index: {}]
  %s13 = inlined_call_operand.vmem [shape: f32[48,16], index: 13, kind: input, shape index: {}]
  %s14 = inlined_call_operand.vmem [shape: f32[48,16], index: 14, kind: input, shape index: {}]
  %s15 = inlined_call_operand.vmem [shape: f32[48,1], index: 15, kind: input, shape index: {}]
  %s16 = inlined_call_operand.vmem [shape: f32[48,1], index: 16, kind: input, shape index: {}]
  %s17 = inlined_call_operand.vmem [shape: f32[128,64], index: 17, kind: input, shape index: {}]
  %s18 = inlined_call_operand.vmem [shape: f32[128,1], index: 18, kind: input, shape index: {}]
  %s19 = inlined_call_operand.vmem [shape: f32[128,8], index: 19, kind: output, shape index: {}]
  %s20 = sld [smem:[#allocation0]]
  $region93: #{tpu_custom_call.1} parent=0
    _
  %s22 = ssub.s32 1, %s20
  %s23 = scalar_select 0, %s22, %s20
  // Predicated region
  $region2: #{tpu_custom_call.1} parent=0 // pred_check
    _
  $region3: #{tpu_custom_call.1} parent=0 // pred_check_branch
    %25 = sbr.rel (0) target = $region5
  $region4: #{tpu_custom_call.1} parent=0 // pred_region
    _
  $region5: #{tpu_custom_call.1} parent=0 // pred_fallthru
    _
  // Predicated region
  $region6: #{tpu_custom_call.1} parent=0 // pred_check
    _
  $region7: #{tpu_custom_call.1} parent=0 // pred_check_branch
    %27 = sbr.rel (0) target = $region9
  $region8: #{tpu_custom_call.1} parent=0 // pred_region
    _
  $region9: #{tpu_custom_call.1} parent=0 // pred_fallthru
    _
  // Predicated region
  $region10: #{tpu_custom_call.1} parent=0 // pred_check
    _
  $region11: #{tpu_custom_call.1} parent=0 // pred_check_branch
    %29 = sbr.rel (0) target = $region13
  $region12: #{tpu_custom_call.1} parent=0 // pred_region
    _
  $region13: #{tpu_custom_call.1} parent=0 // pred_fallthru
    _
  // Predicated region
  $region14: #{tpu_custom_call.1} parent=0 // pred_check
    _
  $region15: #{tpu_custom_call.1} parent=0 // pred_check_branch
    %31 = sbr.rel (0) target = $region17
  $region16: #{tpu_custom_call.1} parent=0 // pred_region
    _
  $region17: #{tpu_custom_call.1} parent=0 // pred_fallthru
    _
  // Predicated region
  $region18: #{tpu_custom_call.1} parent=0 // pred_check
    _
  $region19: #{tpu_custom_call.1} parent=0 // pred_check_branch
    %33 = sbr.rel (0) target = $region21
  $region20: #{tpu_custom_call.1} parent=0 // pred_region
    _
  $region21: #{tpu_custom_call.1} parent=0 // pred_fallthru
    _
  // Predicated region
  $region22: #{tpu_custom_call.1} parent=0 // pred_check
    _
  $region23: #{tpu_custom_call.1} parent=0 // pred_check_branch
    %35 = sbr.rel (0) target = $region25
  $region24: #{tpu_custom_call.1} parent=0 // pred_region
    _
  $region25: #{tpu_custom_call.1} parent=0 // pred_fallthru
    _
  // Predicated region
  $region26: #{tpu_custom_call.1} parent=0 // pred_check
    _
  $region27: #{tpu_custom_call.1} parent=0 // pred_check_branch
    %37 = sbr.rel (0) target = $region29
  $region28: #{tpu_custom_call.1} parent=0 // pred_region
    _
  $region29: #{tpu_custom_call.1} parent=0 // pred_fallthru
    _
  // Predicated region
  $region30: #{tpu_custom_call.1} parent=0 // pred_check
    _
  $region31: #{tpu_custom_call.1} parent=0 // pred_check_branch
    %39 = sbr.rel (0) target = $region33
  $region32: #{tpu_custom_call.1} parent=0 // pred_region
    _
  $region33: #{tpu_custom_call.1} parent=0 // pred_fallthru
    _
  // Predicated region
  $region34: #{tpu_custom_call.1} parent=0 // pred_check
    _
  $region35: #{tpu_custom_call.1} parent=0 // pred_check_branch
    %41 = sbr.rel (0) target = $region37
  $region36: #{tpu_custom_call.1} parent=0 // pred_region
    _
  $region37: #{tpu_custom_call.1} parent=0 // pred_fallthru
    _
  // Predicated region
  $region38: #{tpu_custom_call.1} parent=0 // pred_check
    _
  $region39: #{tpu_custom_call.1} parent=0 // pred_check_branch
    %43 = sbr.rel (0) target = $region41
  $region40: #{tpu_custom_call.1} parent=0 // pred_region
    _
  $region41: #{tpu_custom_call.1} parent=0 // pred_fallthru
    _
  // Predicated region
  $region42: #{tpu_custom_call.1} parent=0 // pred_check
    _
  $region43: #{tpu_custom_call.1} parent=0 // pred_check_branch
    %45 = sbr.rel (0) target = $region45
  $region44: #{tpu_custom_call.1} parent=0 // pred_region
    _
  $region45: #{tpu_custom_call.1} parent=0 // pred_fallthru
    _
  // Predicated region
  $region46: #{tpu_custom_call.1} parent=0 // pred_check
    _
  $region47: #{tpu_custom_call.1} parent=0 // pred_check_branch
    %47 = sbr.rel (0) target = $region49
  $region48: #{tpu_custom_call.1} parent=0 // pred_region
    _
  $region49: #{tpu_custom_call.1} parent=0 // pred_fallthru
    _
  // Predicated region
  $region50: #{tpu_custom_call.1} parent=0 // pred_check
    _
  $region51: #{tpu_custom_call.1} parent=0 // pred_check_branch
    %49 = sbr.rel (0) target = $region53
  $region52: #{tpu_custom_call.1} parent=0 // pred_region
    _
  $region53: #{tpu_custom_call.1} parent=0 // pred_fallthru
    _
  // Predicated region
  $region54: #{tpu_custom_call.1} parent=0 // pred_check
    _
  $region55: #{tpu_custom_call.1} parent=0 // pred_check_branch
    %51 = sbr.rel (0) target = $region57
  $region56: #{tpu_custom_call.1} parent=0 // pred_region
    _
  $region57: #{tpu_custom_call.1} parent=0 // pred_fallthru
    _
  // Predicated region
  $region58: #{tpu_custom_call.1} parent=0 // pred_check
    _
  $region59: #{tpu_custom_call.1} parent=0 // pred_check_branch
    %53 = sbr.rel (0) target = $region61
  $region60: #{tpu_custom_call.1} parent=0 // pred_region
    _
  $region61: #{tpu_custom_call.1} parent=0 // pred_fallthru
    _
  // Predicated region
  $region62: #{tpu_custom_call.1} parent=0 // pred_check
    _
  $region63: #{tpu_custom_call.1} parent=0 // pred_check_branch
    %55 = sbr.rel (0) target = $region65
  $region64: #{tpu_custom_call.1} parent=0 // pred_region
    _
  $region65: #{tpu_custom_call.1} parent=0 // pred_fallthru
    _
  // Predicated region
  $region66: #{tpu_custom_call.1} parent=0 // pred_check
    _
  $region67: #{tpu_custom_call.1} parent=0 // pred_check_branch
    %57 = sbr.rel (0) target = $region69
  $region68: #{tpu_custom_call.1} parent=0 // pred_region
    _
  $region69: #{tpu_custom_call.1} parent=0 // pred_fallthru
    _
  // Predicated region
  $region70: #{tpu_custom_call.1} parent=0 // pred_check
    _
  $region71: #{tpu_custom_call.1} parent=0 // pred_check_branch
    %59 = sbr.rel (0) target = $region73
  $region72: #{tpu_custom_call.1} parent=0 // pred_region
    _
  $region73: #{tpu_custom_call.1} parent=0 // pred_fallthru
    _
  // Predicated region
  $region74: #{tpu_custom_call.1} parent=0 // pred_check
    _
  $region75: #{tpu_custom_call.1} parent=0 // pred_check_branch
    %61 = sbr.rel (0) target = $region77
  $region76: #{tpu_custom_call.1} parent=0 // pred_region
    _
  $region77: #{tpu_custom_call.1} parent=0 // pred_fallthru
    _
  %v62 = vld [vmem:[%s0] sm:$0xff]
  %v63 = vld [vmem:[%s0 + $0x8] sm:$0xff]
  %v64 = vld [vmem:[%s0 + $0x10] sm:$0xff]
  %v65 = vld [vmem:[%s0 + $0x18] sm:$0xff]
  %v66 = vld [vmem:[%s0 + $0x20] sm:$0xff]
  %v67 = vld [vmem:[%s0 + $0x28] sm:$0xff]
  %v68 = vld [vmem:[%s0 + $0x30] sm:$0xff]
  %v69 = vld [vmem:[%s0 + $0x38] sm:$0xff]
  %v70 = vld [vmem:[%s0 + $0x40] sm:$0xff]
  %v71 = vld [vmem:[%s0 + $0x48] sm:$0xff]
  %v72 = vld [vmem:[%s0 + $0x50] sm:$0xff]
  %v73 = vld [vmem:[%s0 + $0x58] sm:$0xff]
  %v74 = vld [vmem:[%s0 + $0x60] sm:$0x1f]
  %v88 = vrot.slane %v62, 1
  %v89 = vrot.slane %v62, 2
  %v90 = vrot.slane %v62, 3
  %v91 = vrot.slane %v62, 4
  %v92 = vrot.slane %v62, 5
  %v93 = vrot.slane %v62, 6
  %v94 = vrot.slane %v62, 7
  %v95 = vrot.slane %v63, 1
  %v96 = vrot.slane %v63, 2
  %v97 = vrot.slane %v63, 3
  %v98 = vrot.slane %v63, 4
  %v99 = vrot.slane %v63, 5
  %v100 = vrot.slane %v63, 6
  %v101 = vrot.slane %v63, 7
  %v102 = vrot.slane %v64, 1
  %v103 = vrot.slane %v64, 2
  %v104 = vrot.slane %v64, 3
  %v105 = vrot.slane %v64, 4
  %v106 = vrot.slane %v64, 5
  %v107 = vrot.slane %v64, 6
  %v108 = vrot.slane %v64, 7
  %v109 = vrot.slane %v65, 1
  %v110 = vrot.slane %v65, 2
  %v111 = vrot.slane %v65, 3
  %v112 = vrot.slane %v65, 4
  %v113 = vrot.slane %v65, 5
  %v114 = vrot.slane %v65, 6
  %v115 = vrot.slane %v65, 7
  %v116 = vrot.slane %v66, 1
  %v117 = vrot.slane %v66, 2
  %v118 = vrot.slane %v66, 3
  %v119 = vrot.slane %v66, 4
  %v120 = vrot.slane %v66, 5
  %v121 = vrot.slane %v66, 6
  %v122 = vrot.slane %v66, 7
  %v123 = vrot.slane %v67, 1
  %v124 = vrot.slane %v67, 2
  %v125 = vrot.slane %v67, 3
  %v126 = vrot.slane %v67, 4
  %v127 = vrot.slane %v67, 5
  %v128 = vrot.slane %v67, 6
  %v129 = vrot.slane %v67, 7
  %v130 = vrot.slane %v68, 1
  %v131 = vrot.slane %v68, 2
  %v132 = vrot.slane %v68, 3
  %v133 = vrot.slane %v68, 4
  %v134 = vrot.slane %v68, 5
  %v135 = vrot.slane %v68, 6
  %v136 = vrot.slane %v68, 7
  %v137 = vrot.slane %v69, 1
  %v138 = vrot.slane %v69, 2
  %v139 = vrot.slane %v69, 3
  %v140 = vrot.slane %v69, 4
  %v141 = vrot.slane %v69, 5
  %v142 = vrot.slane %v69, 6
  %v143 = vrot.slane %v69, 7
  %v144 = vrot.slane %v70, 1
  %v145 = vrot.slane %v70, 2
  %v146 = vrot.slane %v70, 3
  %v147 = vrot.slane %v70, 4
  %v148 = vrot.slane %v70, 5
  %v149 = vrot.slane %v70, 6
  %v150 = vrot.slane %v70, 7
  %v151 = vrot.slane %v71, 1
  %v152 = vrot.slane %v71, 2
  %v153 = vrot.slane %v71, 3
  %v154 = vrot.slane %v71, 4
  %v155 = vrot.slane %v71, 5
  %v156 = vrot.slane %v71, 6
  %v157 = vrot.slane %v71, 7
  %v158 = vrot.slane %v72, 1
  %v159 = vrot.slane %v72, 2
  %v160 = vrot.slane %v72, 3
  %v161 = vrot.slane %v72, 4
  %v162 = vrot.slane %v72, 5
  %v163 = vrot.slane %v72, 6
  %v164 = vrot.slane %v72, 7
  %v165 = vrot.slane %v73, 1
  %v166 = vrot.slane %v73, 2
  %v167 = vrot.slane %v73, 3
  %v168 = vrot.slane %v73, 4
  %v169 = vrot.slane %v73, 5
  %v170 = vrot.slane %v73, 6
  %v171 = vrot.slane %v73, 7
  %v172 = vrot.slane %v74, 1
  %v173 = vrot.slane %v74, 2
  %v174 = vrot.slane %v74, 3
  %v175 = vrot.slane %v74, 4
  %v176 = vld [vmem:[%s1] sm:$0xff]
  %v177 = vld [vmem:[%s1 + $0x8] sm:$0xff]
  %v178 = vld [vmem:[%s1 + $0x10] sm:$0xff]
  %v179 = vld [vmem:[%s1 + $0x18] sm:$0xff]
  %v180 = vld [vmem:[%s1 + $0x20] sm:$0xff]
  %v181 = vld [vmem:[%s1 + $0x28] sm:$0xff]
  %v182 = vperm.slane %v62, 0
  %v183 = vperm.slane %v88, 0
  %v184 = vperm.slane %v89, 0
  %v185 = vperm.slane %v90, 0
  %v186 = vperm.slane %v91, 0
  %v187 = vperm.slane %v92, 0
  %v188 = vperm.slane %v93, 0
  %v189 = vperm.slane %v94, 0
  %v190 = vperm.slane %v63, 0
  %v191 = vperm.slane %v95, 0
  %v192 = vperm.slane %v96, 0
  %v193 = vperm.slane %v97, 0
  %v194 = vperm.slane %v98, 0
  %v195 = vperm.slane %v99, 0
  %v196 = vperm.slane %v100, 0
  %v197 = vperm.slane %v101, 0
  %v198 = vperm.slane %v64, 0
  %v199 = vperm.slane %v102, 0
  %v200 = vperm.slane %v103, 0
  %v201 = vperm.slane %v104, 0
  %v202 = vperm.slane %v105, 0
  %v203 = vperm.slane %v106, 0
  %v204 = vperm.slane %v107, 0
  %v205 = vperm.slane %v108, 0
  %v206 = vperm.slane %v65, 0
  %v207 = vperm.slane %v109, 0
  %v208 = vperm.slane %v110, 0
  %v209 = vperm.slane %v111, 0
  %v210 = vperm.slane %v112, 0
  %v211 = vperm.slane %v113, 0
  %v212 = vperm.slane %v114, 0
  %v213 = vperm.slane %v115, 0
  %v214 = vperm.slane %v66, 0
  %v215 = vperm.slane %v116, 0
  %v216 = vperm.slane %v117, 0
  %v217 = vperm.slane %v118, 0
  %v218 = vperm.slane %v119, 0
  %v219 = vperm.slane %v120, 0
  %v220 = vperm.slane %v121, 0
  %v221 = vperm.slane %v122, 0
  %v222 = vperm.slane %v67, 0
  %v223 = vperm.slane %v123, 0
  %v224 = vperm.slane %v124, 0
  %v225 = vperm.slane %v125, 0
  %v226 = vperm.slane %v126, 0
  %v227 = vperm.slane %v127, 0
  %v228 = vperm.slane %v128, 0
  %v229 = vperm.slane %v129, 0
  %v230 = vperm.slane %v68, 0
  %v231 = vperm.slane %v130, 0
  %v232 = vperm.slane %v131, 0
  %v233 = vperm.slane %v132, 0
  %v234 = vperm.slane %v133, 0
  %v235 = vperm.slane %v134, 0
  %v236 = vperm.slane %v135, 0
  %v237 = vperm.slane %v136, 0
  %v238 = vperm.slane %v69, 0
  %v239 = vperm.slane %v137, 0
  %v240 = vperm.slane %v138, 0
  %v241 = vperm.slane %v139, 0
  %v242 = vperm.slane %v140, 0
  %v243 = vperm.slane %v141, 0
  %v244 = vperm.slane %v142, 0
  %v245 = vperm.slane %v143, 0
  %v246 = vperm.slane %v70, 0
  %v247 = vperm.slane %v144, 0
  %v248 = vperm.slane %v145, 0
  %v249 = vperm.slane %v146, 0
  %v250 = vperm.slane %v147, 0
  %v251 = vperm.slane %v148, 0
  %v252 = vperm.slane %v149, 0
  %v253 = vperm.slane %v150, 0
  %v254 = vperm.slane %v71, 0
  %v255 = vperm.slane %v151, 0
  %v256 = vperm.slane %v152, 0
  %v257 = vperm.slane %v153, 0
  %v258 = vperm.slane %v154, 0
  %v259 = vperm.slane %v155, 0
  %v260 = vperm.slane %v156, 0
  %v261 = vperm.slane %v157, 0
  %v262 = vperm.slane %v72, 0
  %v263 = vperm.slane %v158, 0
  %v264 = vperm.slane %v159, 0
  %v265 = vperm.slane %v160, 0
  %v266 = vperm.slane %v161, 0
  %v267 = vperm.slane %v162, 0
  %v268 = vperm.slane %v163, 0
  %v269 = vperm.slane %v164, 0
  %v270 = vperm.slane %v73, 0
  %v271 = vperm.slane %v165, 0
  %v272 = vperm.slane %v166, 0
  %v273 = vperm.slane %v167, 0
  %v274 = vperm.slane %v168, 0
  %v275 = vperm.slane %v169, 0
  %v276 = vperm.slane %v170, 0
  %v277 = vperm.slane %v171, 0
  %v278 = vperm.slane %v74, 0
  %v279 = vperm.slane %v172, 0
  %v280 = vperm.slane %v173, 0
  %v281 = vperm.slane %v174, 0
  %v282 = vperm.slane %v175, 0
  %385 = vset.pattern.permute.xlu0 0
  %386 = vperm.xlu0 %385, %v176
  %v387 = vpop.permute.xlu0 %386
  %390 = vset.pattern.permute.xlu0 0
  %391 = vperm.xlu0 %390, %v177
  %v392 = vpop.permute.xlu0 %391
  %395 = vset.pattern.permute.xlu0 0
  %396 = vperm.xlu0 %395, %v178
  %v397 = vpop.permute.xlu0 %396
  %400 = vset.pattern.permute.xlu0 0
  %401 = vperm.xlu0 %400, %v179
  %v402 = vpop.permute.xlu0 %401
  %405 = vset.pattern.permute.xlu0 0
  %406 = vperm.xlu0 %405, %v180
  %v407 = vpop.permute.xlu0 %406
  %410 = vset.pattern.permute.xlu0 0
  %411 = vperm.xlu0 %410, %v181
  %v412 = vpop.permute.xlu0 %411
  %v414 = vmul.f32 %v182, %v387
  %v415 = vmul.f32 %v182, %v392
  %v416 = vmul.f32 %v182, %v397
  %v417 = vmul.f32 %v182, %v402
  %v418 = vmul.f32 %v182, %v407
  %v419 = vmul.f32 %v182, %v412
  %v420 = vmul.f32 %v183, %v387
  %v421 = vmul.f32 %v183, %v392
  %v422 = vmul.f32 %v183, %v397
  %v423 = vmul.f32 %v183, %v402
  %v424 = vmul.f32 %v183, %v407
  %v425 = vmul.f32 %v183, %v412
  %v426 = vmul.f32 %v184, %v387
  %v427 = vmul.f32 %v184, %v392
  %v428 = vmul.f32 %v184, %v397
  %v429 = vmul.f32 %v184, %v402
  %v430 = vmul.f32 %v184, %v407
  %v431 = vmul.f32 %v184, %v412
  %v432 = vmul.f32 %v185, %v387
  %v433 = vmul.f32 %v185, %v392
  %v434 = vmul.f32 %v185, %v397
  %v435 = vmul.f32 %v185, %v402
  %v436 = vmul.f32 %v185, %v407
  %v437 = vmul.f32 %v185, %v412
  %v438 = vmul.f32 %v186, %v387
  %v439 = vmul.f32 %v186, %v392
  %v440 = vmul.f32 %v186, %v397
  %v441 = vmul.f32 %v186, %v402
  %v442 = vmul.f32 %v186, %v407
  %v443 = vmul.f32 %v186, %v412
  %v444 = vmul.f32 %v187, %v387
  %v445 = vmul.f32 %v187, %v392
  %v446 = vmul.f32 %v187, %v397
  %v447 = vmul.f32 %v187, %v402
  %v448 = vmul.f32 %v187, %v407
  %v449 = vmul.f32 %v187, %v412
  %v450 = vmul.f32 %v188, %v387
  %v451 = vmul.f32 %v188, %v392
  %v452 = vmul.f32 %v188, %v397
  %v453 = vmul.f32 %v188, %v402
  %v454 = vmul.f32 %v188, %v407
  %v455 = vmul.f32 %v188, %v412
  %v456 = vmul.f32 %v189, %v387
  %v457 = vmul.f32 %v189, %v392
  %v458 = vmul.f32 %v189, %v397
  %v459 = vmul.f32 %v189, %v402
  %v460 = vmul.f32 %v189, %v407
  %v461 = vmul.f32 %v189, %v412
  %v462 = vmul.f32 %v190, %v387
  %v463 = vmul.f32 %v190, %v392
  %v464 = vmul.f32 %v190, %v397
  %v465 = vmul.f32 %v190, %v402
  %v466 = vmul.f32 %v190, %v407
  %v467 = vmul.f32 %v190, %v412
  %v468 = vmul.f32 %v191, %v387
  %v469 = vmul.f32 %v191, %v392
  %v470 = vmul.f32 %v191, %v397
  %v471 = vmul.f32 %v191, %v402
  %v472 = vmul.f32 %v191, %v407
  %v473 = vmul.f32 %v191, %v412
  %v474 = vmul.f32 %v192, %v387
  %v475 = vmul.f32 %v192, %v392
  %v476 = vmul.f32 %v192, %v397
  %v477 = vmul.f32 %v192, %v402
  %v478 = vmul.f32 %v192, %v407
  %v479 = vmul.f32 %v192, %v412
  %v480 = vmul.f32 %v193, %v387
  %v481 = vmul.f32 %v193, %v392
  %v482 = vmul.f32 %v193, %v397
  %v483 = vmul.f32 %v193, %v402
  %v484 = vmul.f32 %v193, %v407
  %v485 = vmul.f32 %v193, %v412
  %v486 = vmul.f32 %v194, %v387
  %v487 = vmul.f32 %v194, %v392
  %v488 = vmul.f32 %v194, %v397
  %v489 = vmul.f32 %v194, %v402
  %v490 = vmul.f32 %v194, %v407
  %v491 = vmul.f32 %v194, %v412
  %v492 = vmul.f32 %v195, %v387
  %v493 = vmul.f32 %v195, %v392
  %v494 = vmul.f32 %v195, %v397
  %v495 = vmul.f32 %v195, %v402
  %v496 = vmul.f32 %v195, %v407
  %v497 = vmul.f32 %v195, %v412
  %v498 = vmul.f32 %v196, %v387
  %v499 = vmul.f32 %v196, %v392
  %v500 = vmul.f32 %v196, %v397
  %v501 = vmul.f32 %v196, %v402
  %v502 = vmul.f32 %v196, %v407
  %v503 = vmul.f32 %v196, %v412
  %v504 = vmul.f32 %v197, %v387
  %v505 = vmul.f32 %v197, %v392
  %v506 = vmul.f32 %v197, %v397
  %v507 = vmul.f32 %v197, %v402
  %v508 = vmul.f32 %v197, %v407
  %v509 = vmul.f32 %v197, %v412
  %v510 = vmul.f32 %v198, %v387
  %v511 = vmul.f32 %v198, %v392
  %v512 = vmul.f32 %v198, %v397
  %v513 = vmul.f32 %v198, %v402
  %v514 = vmul.f32 %v198, %v407
  %v515 = vmul.f32 %v198, %v412
  %v516 = vmul.f32 %v199, %v387
  %v517 = vmul.f32 %v199, %v392
  %v518 = vmul.f32 %v199, %v397
  %v519 = vmul.f32 %v199, %v402
  %v520 = vmul.f32 %v199, %v407
  %v521 = vmul.f32 %v199, %v412
  %v522 = vmul.f32 %v200, %v387
  %v523 = vmul.f32 %v200, %v392
  %v524 = vmul.f32 %v200, %v397
  %v525 = vmul.f32 %v200, %v402
  %v526 = vmul.f32 %v200, %v407
  %v527 = vmul.f32 %v200, %v412
  %v528 = vmul.f32 %v201, %v387
  %v529 = vmul.f32 %v201, %v392
  %v530 = vmul.f32 %v201, %v397
  %v531 = vmul.f32 %v201, %v402
  %v532 = vmul.f32 %v201, %v407
  %v533 = vmul.f32 %v201, %v412
  %v534 = vmul.f32 %v202, %v387
  %v535 = vmul.f32 %v202, %v392
  %v536 = vmul.f32 %v202, %v397
  %v537 = vmul.f32 %v202, %v402
  %v538 = vmul.f32 %v202, %v407
  %v539 = vmul.f32 %v202, %v412
  %v540 = vmul.f32 %v203, %v387
  %v541 = vmul.f32 %v203, %v392
  %v542 = vmul.f32 %v203, %v397
  %v543 = vmul.f32 %v203, %v402
  %v544 = vmul.f32 %v203, %v407
  %v545 = vmul.f32 %v203, %v412
  %v546 = vmul.f32 %v204, %v387
  %v547 = vmul.f32 %v204, %v392
  %v548 = vmul.f32 %v204, %v397
  %v549 = vmul.f32 %v204, %v402
  %v550 = vmul.f32 %v204, %v407
  %v551 = vmul.f32 %v204, %v412
  %v552 = vmul.f32 %v205, %v387
  %v553 = vmul.f32 %v205, %v392
  %v554 = vmul.f32 %v205, %v397
  %v555 = vmul.f32 %v205, %v402
  %v556 = vmul.f32 %v205, %v407
  %v557 = vmul.f32 %v205, %v412
  %v558 = vmul.f32 %v206, %v387
  %v559 = vmul.f32 %v206, %v392
  %v560 = vmul.f32 %v206, %v397
  %v561 = vmul.f32 %v206, %v402
  %v562 = vmul.f32 %v206, %v407
  %v563 = vmul.f32 %v206, %v412
  %v564 = vmul.f32 %v207, %v387
  %v565 = vmul.f32 %v207, %v392
  %v566 = vmul.f32 %v207, %v397
  %v567 = vmul.f32 %v207, %v402
  %v568 = vmul.f32 %v207, %v407
  %v569 = vmul.f32 %v207, %v412
  %v570 = vmul.f32 %v208, %v387
  %v571 = vmul.f32 %v208, %v392
  %v572 = vmul.f32 %v208, %v397
  %v573 = vmul.f32 %v208, %v402
  %v574 = vmul.f32 %v208, %v407
  %v575 = vmul.f32 %v208, %v412
  %v576 = vmul.f32 %v209, %v387
  %v577 = vmul.f32 %v209, %v392
  %v578 = vmul.f32 %v209, %v397
  %v579 = vmul.f32 %v209, %v402
  %v580 = vmul.f32 %v209, %v407
  %v581 = vmul.f32 %v209, %v412
  %v582 = vmul.f32 %v210, %v387
  %v583 = vmul.f32 %v210, %v392
  %v584 = vmul.f32 %v210, %v397
  %v585 = vmul.f32 %v210, %v402
  %v586 = vmul.f32 %v210, %v407
  %v587 = vmul.f32 %v210, %v412
  %v588 = vmul.f32 %v211, %v387
  %v589 = vmul.f32 %v211, %v392
  %v590 = vmul.f32 %v211, %v397
  %v591 = vmul.f32 %v211, %v402
  %v592 = vmul.f32 %v211, %v407
  %v593 = vmul.f32 %v211, %v412
  %v594 = vmul.f32 %v212, %v387
  %v595 = vmul.f32 %v212, %v392
  %v596 = vmul.f32 %v212, %v397
  %v597 = vmul.f32 %v212, %v402
  %v598 = vmul.f32 %v212, %v407
  %v599 = vmul.f32 %v212, %v412
  %v600 = vmul.f32 %v213, %v387
  %v601 = vmul.f32 %v213, %v392
  %v602 = vmul.f32 %v213, %v397
  %v603 = vmul.f32 %v213, %v402
  %v604 = vmul.f32 %v213, %v407
  %v605 = vmul.f32 %v213, %v412
  %v606 = vmul.f32 %v214, %v387
  %v607 = vmul.f32 %v214, %v392
  %v608 = vmul.f32 %v214, %v397
  %v609 = vmul.f32 %v214, %v402
  %v610 = vmul.f32 %v214, %v407
  %v611 = vmul.f32 %v214, %v412
  %v612 = vmul.f32 %v215, %v387
  %v613 = vmul.f32 %v215, %v392
  %v614 = vmul.f32 %v215, %v397
  %v615 = vmul.f32 %v215, %v402
  %v616 = vmul.f32 %v215, %v407
  %v617 = vmul.f32 %v215, %v412
  %v618 = vmul.f32 %v216, %v387
  %v619 = vmul.f32 %v216, %v392
  %v620 = vmul.f32 %v216, %v397
  %v621 = vmul.f32 %v216, %v402
  %v622 = vmul.f32 %v216, %v407
  %v623 = vmul.f32 %v216, %v412
  %v624 = vmul.f32 %v217, %v387
  %v625 = vmul.f32 %v217, %v392
  %v626 = vmul.f32 %v217, %v397
  %v627 = vmul.f32 %v217, %v402
  %v628 = vmul.f32 %v217, %v407
  %v629 = vmul.f32 %v217, %v412
  %v630 = vmul.f32 %v218, %v387
  %v631 = vmul.f32 %v218, %v392
  %v632 = vmul.f32 %v218, %v397
  %v633 = vmul.f32 %v218, %v402
  %v634 = vmul.f32 %v218, %v407
  %v635 = vmul.f32 %v218, %v412
  %v636 = vmul.f32 %v219, %v387
  %v637 = vmul.f32 %v219, %v392
  %v638 = vmul.f32 %v219, %v397
  %v639 = vmul.f32 %v219, %v402
  %v640 = vmul.f32 %v219, %v407
  %v641 = vmul.f32 %v219, %v412
  %v642 = vmul.f32 %v220, %v387
  %v643 = vmul.f32 %v220, %v392
  %v644 = vmul.f32 %v220, %v397
  %v645 = vmul.f32 %v220, %v402
  %v646 = vmul.f32 %v220, %v407
  %v647 = vmul.f32 %v220, %v412
  %v648 = vmul.f32 %v221, %v387
  %v649 = vmul.f32 %v221, %v392
  %v650 = vmul.f32 %v221, %v397
  %v651 = vmul.f32 %v221, %v402
  %v652 = vmul.f32 %v221, %v407
  %v653 = vmul.f32 %v221, %v412
  %v654 = vmul.f32 %v222, %v387
  %v655 = vmul.f32 %v222, %v392
  %v656 = vmul.f32 %v222, %v397
  %v657 = vmul.f32 %v222, %v402
  %v658 = vmul.f32 %v222, %v407
  %v659 = vmul.f32 %v222, %v412
  %v660 = vmul.f32 %v223, %v387
  %v661 = vmul.f32 %v223, %v392
  %v662 = vmul.f32 %v223, %v397
  %v663 = vmul.f32 %v223, %v402
  %v664 = vmul.f32 %v223, %v407
  %v665 = vmul.f32 %v223, %v412
  %v666 = vmul.f32 %v224, %v387
  %v667 = vmul.f32 %v224, %v392
  %v668 = vmul.f32 %v224, %v397
  %v669 = vmul.f32 %v224, %v402
  %v670 = vmul.f32 %v224, %v407
  %v671 = vmul.f32 %v224, %v412
  %v672 = vmul.f32 %v225, %v387
  %v673 = vmul.f32 %v225, %v392
  %v674 = vmul.f32 %v225, %v397
  %v675 = vmul.f32 %v225, %v402
  %v676 = vmul.f32 %v225, %v407
  %v677 = vmul.f32 %v225, %v412
  %v678 = vmul.f32 %v226, %v387
  %v679 = vmul.f32 %v226, %v392
  %v680 = vmul.f32 %v226, %v397
  %v681 = vmul.f32 %v226, %v402
  %v682 = vmul.f32 %v226, %v407
  %v683 = vmul.f32 %v226, %v412
  %v684 = vmul.f32 %v227, %v387
  %v685 = vmul.f32 %v227, %v392
  %v686 = vmul.f32 %v227, %v397
  %v687 = vmul.f32 %v227, %v402
  %v688 = vmul.f32 %v227, %v407
  %v689 = vmul.f32 %v227, %v412
  %v690 = vmul.f32 %v228, %v387
  %v691 = vmul.f32 %v228, %v392
  %v692 = vmul.f32 %v228, %v397
  %v693 = vmul.f32 %v228, %v402
  %v694 = vmul.f32 %v228, %v407
  %v695 = vmul.f32 %v228, %v412
  %v696 = vmul.f32 %v229, %v387
  %v697 = vmul.f32 %v229, %v392
  %v698 = vmul.f32 %v229, %v397
  %v699 = vmul.f32 %v229, %v402
  %v700 = vmul.f32 %v229, %v407
  %v701 = vmul.f32 %v229, %v412
  %v702 = vmul.f32 %v230, %v387
  %v703 = vmul.f32 %v230, %v392
  %v704 = vmul.f32 %v230, %v397
  %v705 = vmul.f32 %v230, %v402
  %v706 = vmul.f32 %v230, %v407
  %v707 = vmul.f32 %v230, %v412
  %v708 = vmul.f32 %v231, %v387
  %v709 = vmul.f32 %v231, %v392
  %v710 = vmul.f32 %v231, %v397
  %v711 = vmul.f32 %v231, %v402
  %v712 = vmul.f32 %v231, %v407
  %v713 = vmul.f32 %v231, %v412
  %v714 = vmul.f32 %v232, %v387
  %v715 = vmul.f32 %v232, %v392
  %v716 = vmul.f32 %v232, %v397
  %v717 = vmul.f32 %v232, %v402
  %v718 = vmul.f32 %v232, %v407
  %v719 = vmul.f32 %v232, %v412
  %v720 = vmul.f32 %v233, %v387
  %v721 = vmul.f32 %v233, %v392
  %v722 = vmul.f32 %v233, %v397
  %v723 = vmul.f32 %v233, %v402
  %v724 = vmul.f32 %v233, %v407
  %v725 = vmul.f32 %v233, %v412
  %v726 = vmul.f32 %v234, %v387
  %v727 = vmul.f32 %v234, %v392
  %v728 = vmul.f32 %v234, %v397
  %v729 = vmul.f32 %v234, %v402
  %v730 = vmul.f32 %v234, %v407
  %v731 = vmul.f32 %v234, %v412
  %v732 = vmul.f32 %v235, %v387
  %v733 = vmul.f32 %v235, %v392
  %v734 = vmul.f32 %v235, %v397
  %v735 = vmul.f32 %v235, %v402
  %v736 = vmul.f32 %v235, %v407
  %v737 = vmul.f32 %v235, %v412
  %v738 = vmul.f32 %v236, %v387
  %v739 = vmul.f32 %v236, %v392
  %v740 = vmul.f32 %v236, %v397
  %v741 = vmul.f32 %v236, %v402
  %v742 = vmul.f32 %v236, %v407
  %v743 = vmul.f32 %v236, %v412
  %v744 = vmul.f32 %v237, %v387
  %v745 = vmul.f32 %v237, %v392
  %v746 = vmul.f32 %v237, %v397
  %v747 = vmul.f32 %v237, %v402
  %v748 = vmul.f32 %v237, %v407
  %v749 = vmul.f32 %v237, %v412
  %v750 = vmul.f32 %v238, %v387
  %v751 = vmul.f32 %v238, %v392
  %v752 = vmul.f32 %v238, %v397
  %v753 = vmul.f32 %v238, %v402
  %v754 = vmul.f32 %v238, %v407
  %v755 = vmul.f32 %v238, %v412
  %v756 = vmul.f32 %v239, %v387
  %v757 = vmul.f32 %v239, %v392
  %v758 = vmul.f32 %v239, %v397
  %v759 = vmul.f32 %v239, %v402
  %v760 = vmul.f32 %v239, %v407
  %v761 = vmul.f32 %v239, %v412
  %v762 = vmul.f32 %v240, %v387
  %v763 = vmul.f32 %v240, %v392
  %v764 = vmul.f32 %v240, %v397
  %v765 = vmul.f32 %v240, %v402
  %v766 = vmul.f32 %v240, %v407
  %v767 = vmul.f32 %v240, %v412
  %v768 = vmul.f32 %v241, %v387
  %v769 = vmul.f32 %v241, %v392
  %v770 = vmul.f32 %v241, %v397
  %v771 = vmul.f32 %v241, %v402
  %v772 = vmul.f32 %v241, %v407
  %v773 = vmul.f32 %v241, %v412
  %v774 = vmul.f32 %v242, %v387
  %v775 = vmul.f32 %v242, %v392
  %v776 = vmul.f32 %v242, %v397
  %v777 = vmul.f32 %v242, %v402
  %v778 = vmul.f32 %v242, %v407
  %v779 = vmul.f32 %v242, %v412
  %v780 = vmul.f32 %v243, %v387
  %v781 = vmul.f32 %v243, %v392
  %v782 = vmul.f32 %v243, %v397
  %v783 = vmul.f32 %v243, %v402
  %v784 = vmul.f32 %v243, %v407
  %v785 = vmul.f32 %v243, %v412
  %v786 = vmul.f32 %v244, %v387
  %v787 = vmul.f32 %v244, %v392
  %v788 = vmul.f32 %v244, %v397
  %v789 = vmul.f32 %v244, %v402
  %v790 = vmul.f32 %v244, %v407
  %v791 = vmul.f32 %v244, %v412
  %v792 = vmul.f32 %v245, %v387
  %v793 = vmul.f32 %v245, %v392
  %v794 = vmul.f32 %v245, %v397
  %v795 = vmul.f32 %v245, %v402
  %v796 = vmul.f32 %v245, %v407
  %v797 = vmul.f32 %v245, %v412
  %v798 = vmul.f32 %v246, %v387
  %v799 = vmul.f32 %v246, %v392
  %v800 = vmul.f32 %v246, %v397
  %v801 = vmul.f32 %v246, %v402
  %v802 = vmul.f32 %v246, %v407
  %v803 = vmul.f32 %v246, %v412
  %v804 = vmul.f32 %v247, %v387
  %v805 = vmul.f32 %v247, %v392
  %v806 = vmul.f32 %v247, %v397
  %v807 = vmul.f32 %v247, %v402
  %v808 = vmul.f32 %v247, %v407
  %v809 = vmul.f32 %v247, %v412
  %v810 = vmul.f32 %v248, %v387
  %v811 = vmul.f32 %v248, %v392
  %v812 = vmul.f32 %v248, %v397
  %v813 = vmul.f32 %v248, %v402
  %v814 = vmul.f32 %v248, %v407
  %v815 = vmul.f32 %v248, %v412
  %v816 = vmul.f32 %v249, %v387
  %v817 = vmul.f32 %v249, %v392
  %v818 = vmul.f32 %v249, %v397
  %v819 = vmul.f32 %v249, %v402
  %v820 = vmul.f32 %v249, %v407
  %v821 = vmul.f32 %v249, %v412
  %v822 = vmul.f32 %v250, %v387
  %v823 = vmul.f32 %v250, %v392
  %v824 = vmul.f32 %v250, %v397
  %v825 = vmul.f32 %v250, %v402
  %v826 = vmul.f32 %v250, %v407
  %v827 = vmul.f32 %v250, %v412
  %v828 = vmul.f32 %v251, %v387
  %v829 = vmul.f32 %v251, %v392
  %v830 = vmul.f32 %v251, %v397
  %v831 = vmul.f32 %v251, %v402
  %v832 = vmul.f32 %v251, %v407
  %v833 = vmul.f32 %v251, %v412
  %v834 = vmul.f32 %v252, %v387
  %v835 = vmul.f32 %v252, %v392
  %v836 = vmul.f32 %v252, %v397
  %v837 = vmul.f32 %v252, %v402
  %v838 = vmul.f32 %v252, %v407
  %v839 = vmul.f32 %v252, %v412
  %v840 = vmul.f32 %v253, %v387
  %v841 = vmul.f32 %v253, %v392
  %v842 = vmul.f32 %v253, %v397
  %v843 = vmul.f32 %v253, %v402
  %v844 = vmul.f32 %v253, %v407
  %v845 = vmul.f32 %v253, %v412
  %v846 = vmul.f32 %v254, %v387
  %v847 = vmul.f32 %v254, %v392
  %v848 = vmul.f32 %v254, %v397
  %v849 = vmul.f32 %v254, %v402
  %v850 = vmul.f32 %v254, %v407
  %v851 = vmul.f32 %v254, %v412
  %v852 = vmul.f32 %v255, %v387
  %v853 = vmul.f32 %v255, %v392
  %v854 = vmul.f32 %v255, %v397
  %v855 = vmul.f32 %v255, %v402
  %v856 = vmul.f32 %v255, %v407
  %v857 = vmul.f32 %v255, %v412
  %v858 = vmul.f32 %v256, %v387
  %v859 = vmul.f32 %v256, %v392
  %v860 = vmul.f32 %v256, %v397
  %v861 = vmul.f32 %v256, %v402
  %v862 = vmul.f32 %v256, %v407
  %v863 = vmul.f32 %v256, %v412
  %v864 = vmul.f32 %v257, %v387
  %v865 = vmul.f32 %v257, %v392
  %v866 = vmul.f32 %v257, %v397
  %v867 = vmul.f32 %v257, %v402
  %v868 = vmul.f32 %v257, %v407
  %v869 = vmul.f32 %v257, %v412
  %v870 = vmul.f32 %v258, %v387
  %v871 = vmul.f32 %v258, %v392
  %v872 = vmul.f32 %v258, %v397
  %v873 = vmul.f32 %v258, %v402
  %v874 = vmul.f32 %v258, %v407
  %v875 = vmul.f32 %v258, %v412
  %v876 = vmul.f32 %v259, %v387
  %v877 = vmul.f32 %v259, %v392
  %v878 = vmul.f32 %v259, %v397
  %v879 = vmul.f32 %v259, %v402
  %v880 = vmul.f32 %v259, %v407
  %v881 = vmul.f32 %v259, %v412
  %v882 = vmul.f32 %v260, %v387
  %v883 = vmul.f32 %v260, %v392
  %v884 = vmul.f32 %v260, %v397
  %v885 = vmul.f32 %v260, %v402
  %v886 = vmul.f32 %v260, %v407
  %v887 = vmul.f32 %v260, %v412
  %v888 = vmul.f32 %v261, %v387
  %v889 = vmul.f32 %v261, %v392
  %v890 = vmul.f32 %v261, %v397
  %v891 = vmul.f32 %v261, %v402
  %v892 = vmul.f32 %v261, %v407
  %v893 = vmul.f32 %v261, %v412
  %v894 = vmul.f32 %v262, %v387
  %v895 = vmul.f32 %v262, %v392
  %v896 = vmul.f32 %v262, %v397
  %v897 = vmul.f32 %v262, %v402
  %v898 = vmul.f32 %v262, %v407
  %v899 = vmul.f32 %v262, %v412
  %v900 = vmul.f32 %v263, %v387
  %v901 = vmul.f32 %v263, %v392
  %v902 = vmul.f32 %v263, %v397
  %v903 = vmul.f32 %v263, %v402
  %v904 = vmul.f32 %v263, %v407
  %v905 = vmul.f32 %v263, %v412
  %v906 = vmul.f32 %v264, %v387
  %v907 = vmul.f32 %v264, %v392
  %v908 = vmul.f32 %v264, %v397
  %v909 = vmul.f32 %v264, %v402
  %v910 = vmul.f32 %v264, %v407
  %v911 = vmul.f32 %v264, %v412
  %v912 = vmul.f32 %v265, %v387
  %v913 = vmul.f32 %v265, %v392
  %v914 = vmul.f32 %v265, %v397
  %v915 = vmul.f32 %v265, %v402
  %v916 = vmul.f32 %v265, %v407
  %v917 = vmul.f32 %v265, %v412
  %v918 = vmul.f32 %v266, %v387
  %v919 = vmul.f32 %v266, %v392
  %v920 = vmul.f32 %v266, %v397
  %v921 = vmul.f32 %v266, %v402
  %v922 = vmul.f32 %v266, %v407
  %v923 = vmul.f32 %v266, %v412
  %v924 = vmul.f32 %v267, %v387
  %v925 = vmul.f32 %v267, %v392
  %v926 = vmul.f32 %v267, %v397
  %v927 = vmul.f32 %v267, %v402
  %v928 = vmul.f32 %v267, %v407
  %v929 = vmul.f32 %v267, %v412
  %v930 = vmul.f32 %v268, %v387
  %v931 = vmul.f32 %v268, %v392
  %v932 = vmul.f32 %v268, %v397
  %v933 = vmul.f32 %v268, %v402
  %v934 = vmul.f32 %v268, %v407
  %v935 = vmul.f32 %v268, %v412
  %v936 = vmul.f32 %v269, %v387
  %v937 = vmul.f32 %v269, %v392
  %v938 = vmul.f32 %v269, %v397
  %v939 = vmul.f32 %v269, %v402
  %v940 = vmul.f32 %v269, %v407
  %v941 = vmul.f32 %v269, %v412
  %v942 = vmul.f32 %v270, %v387
  %v943 = vmul.f32 %v270, %v392
  %v944 = vmul.f32 %v270, %v397
  %v945 = vmul.f32 %v270, %v402
  %v946 = vmul.f32 %v270, %v407
  %v947 = vmul.f32 %v270, %v412
  %v948 = vmul.f32 %v271, %v387
  %v949 = vmul.f32 %v271, %v392
  %v950 = vmul.f32 %v271, %v397
  %v951 = vmul.f32 %v271, %v402
  %v952 = vmul.f32 %v271, %v407
  %v953 = vmul.f32 %v271, %v412
  %v954 = vmul.f32 %v272, %v387
  %v955 = vmul.f32 %v272, %v392
  %v956 = vmul.f32 %v272, %v397
  %v957 = vmul.f32 %v272, %v402
  %v958 = vmul.f32 %v272, %v407
  %v959 = vmul.f32 %v272, %v412
  %v960 = vmul.f32 %v273, %v387
  %v961 = vmul.f32 %v273, %v392
  %v962 = vmul.f32 %v273, %v397
  %v963 = vmul.f32 %v273, %v402
  %v964 = vmul.f32 %v273, %v407
  %v965 = vmul.f32 %v273, %v412
  %v966 = vmul.f32 %v274, %v387
  %v967 = vmul.f32 %v274, %v392
  %v968 = vmul.f32 %v274, %v397
  %v969 = vmul.f32 %v274, %v402
  %v970 = vmul.f32 %v274, %v407
  %v971 = vmul.f32 %v274, %v412
  %v972 = vmul.f32 %v275, %v387
  %v973 = vmul.f32 %v275, %v392
  %v974 = vmul.f32 %v275, %v397
  %v975 = vmul.f32 %v275, %v402
  %v976 = vmul.f32 %v275, %v407
  %v977 = vmul.f32 %v275, %v412
  %v978 = vmul.f32 %v276, %v387
  %v979 = vmul.f32 %v276, %v392
  %v980 = vmul.f32 %v276, %v397
  %v981 = vmul.f32 %v276, %v402
  %v982 = vmul.f32 %v276, %v407
  %v983 = vmul.f32 %v276, %v412
  %v984 = vmul.f32 %v277, %v387
  %v985 = vmul.f32 %v277, %v392
  %v986 = vmul.f32 %v277, %v397
  %v987 = vmul.f32 %v277, %v402
  %v988 = vmul.f32 %v277, %v407
  %v989 = vmul.f32 %v277, %v412
  %v990 = vmul.f32 %v278, %v387
  %v991 = vmul.f32 %v278, %v392
  %v992 = vmul.f32 %v278, %v397
  %v993 = vmul.f32 %v278, %v402
  %v994 = vmul.f32 %v278, %v407
  %v995 = vmul.f32 %v278, %v412
  %v996 = vmul.f32 %v279, %v387
  %v997 = vmul.f32 %v279, %v392
  %v998 = vmul.f32 %v279, %v397
  %v999 = vmul.f32 %v279, %v402
  %v1000 = vmul.f32 %v279, %v407
  %v1001 = vmul.f32 %v279, %v412
  %v1002 = vmul.f32 %v280, %v387
  %v1003 = vmul.f32 %v280, %v392
  %v1004 = vmul.f32 %v280, %v397
  %v1005 = vmul.f32 %v280, %v402
  %v1006 = vmul.f32 %v280, %v407
  %v1007 = vmul.f32 %v280, %v412
  %v1008 = vmul.f32 %v281, %v387
  %v1009 = vmul.f32 %v281, %v392
  %v1010 = vmul.f32 %v281, %v397
  %v1011 = vmul.f32 %v281, %v402
  %v1012 = vmul.f32 %v281, %v407
  %v1013 = vmul.f32 %v281, %v412
  %v1014 = vmul.f32 %v282, %v387
  %v1015 = vmul.f32 %v282, %v392
  %v1016 = vmul.f32 %v282, %v397
  %v1017 = vmul.f32 %v282, %v402
  %v1018 = vmul.f32 %v282, %v407
  %v1019 = vmul.f32 %v282, %v412
  %v1020 = vld [vmem:[%s3] sm:$0xff]
  %v1021 = vld [vmem:[%s3 + $0x8] sm:$0xff]
  %v1022 = vld [vmem:[%s3 + $0x10] sm:$0xff]
  %v1023 = vld [vmem:[%s3 + $0x18] sm:$0xff]
  %v1024 = vld [vmem:[%s3 + $0x20] sm:$0xff]
  %v1025 = vld [vmem:[%s3 + $0x28] sm:$0xff]
  %1027 = vset.pattern.permute.xlu0 0
  %1028 = vperm.xlu0 %1027, %v1020
  %v1029 = vpop.permute.xlu0 %1028
  %1032 = vset.pattern.permute.xlu0 0
  %1033 = vperm.xlu0 %1032, %v1021
  %v1034 = vpop.permute.xlu0 %1033
  %1037 = vset.pattern.permute.xlu0 0
  %1038 = vperm.xlu0 %1037, %v1022
  %v1039 = vpop.permute.xlu0 %1038
  %1042 = vset.pattern.permute.xlu0 0
  %1043 = vperm.xlu0 %1042, %v1023
  %v1044 = vpop.permute.xlu0 %1043
  %1047 = vset.pattern.permute.xlu0 0
  %1048 = vperm.xlu0 %1047, %v1024
  %v1049 = vpop.permute.xlu0 %1048
  %1052 = vset.pattern.permute.xlu0 0
  %1053 = vperm.xlu0 %1052, %v1025
  %v1054 = vpop.permute.xlu0 %1053
  %v1056 = vadd.f32 %v414, %v1029
  %v1057 = vadd.f32 %v415, %v1034
  %v1058 = vadd.f32 %v416, %v1039
  %v1059 = vadd.f32 %v417, %v1044
  %v1060 = vadd.f32 %v418, %v1049
  %v1061 = vadd.f32 %v419, %v1054
  %v1062 = vadd.f32 %v420, %v1029
  %v1063 = vadd.f32 %v421, %v1034
  %v1064 = vadd.f32 %v422, %v1039
  %v1065 = vadd.f32 %v423, %v1044
  %v1066 = vadd.f32 %v424, %v1049
  %v1067 = vadd.f32 %v425, %v1054
  %v1068 = vadd.f32 %v426, %v1029
  %v1069 = vadd.f32 %v427, %v1034
  %v1070 = vadd.f32 %v428, %v1039
  %v1071 = vadd.f32 %v429, %v1044
  %v1072 = vadd.f32 %v430, %v1049
  %v1073 = vadd.f32 %v431, %v1054
  %v1074 = vadd.f32 %v432, %v1029
  %v1075 = vadd.f32 %v433, %v1034
  %v1076 = vadd.f32 %v434, %v1039
  %v1077 = vadd.f32 %v435, %v1044
  %v1078 = vadd.f32 %v436, %v1049
  %v1079 = vadd.f32 %v437, %v1054
  %v1080 = vadd.f32 %v438, %v1029
  %v1081 = vadd.f32 %v439, %v1034
  %v1082 = vadd.f32 %v440, %v1039
  %v1083 = vadd.f32 %v441, %v1044
  %v1084 = vadd.f32 %v442, %v1049
  %v1085 = vadd.f32 %v443, %v1054
  %v1086 = vadd.f32 %v444, %v1029
  %v1087 = vadd.f32 %v445, %v1034
  %v1088 = vadd.f32 %v446, %v1039
  %v1089 = vadd.f32 %v447, %v1044
  %v1090 = vadd.f32 %v448, %v1049
  %v1091 = vadd.f32 %v449, %v1054
  %v1092 = vadd.f32 %v450, %v1029
  %v1093 = vadd.f32 %v451, %v1034
  %v1094 = vadd.f32 %v452, %v1039
  %v1095 = vadd.f32 %v453, %v1044
  %v1096 = vadd.f32 %v454, %v1049
  %v1097 = vadd.f32 %v455, %v1054
  %v1098 = vadd.f32 %v456, %v1029
  %v1099 = vadd.f32 %v457, %v1034
  %v1100 = vadd.f32 %v458, %v1039
  %v1101 = vadd.f32 %v459, %v1044
  %v1102 = vadd.f32 %v460, %v1049
  %v1103 = vadd.f32 %v461, %v1054
  %v1104 = vadd.f32 %v462, %v1029
  %v1105 = vadd.f32 %v463, %v1034
  %v1106 = vadd.f32 %v464, %v1039
  %v1107 = vadd.f32 %v465, %v1044
  %v1108 = vadd.f32 %v466, %v1049
  %v1109 = vadd.f32 %v467, %v1054
  %v1110 = vadd.f32 %v468, %v1029
  %v1111 = vadd.f32 %v469, %v1034
  %v1112 = vadd.f32 %v470, %v1039
  %v1113 = vadd.f32 %v471, %v1044
  %v1114 = vadd.f32 %v472, %v1049
  %v1115 = vadd.f32 %v473, %v1054
  %v1116 = vadd.f32 %v474, %v1029
  %v1117 = vadd.f32 %v475, %v1034
  %v1118 = vadd.f32 %v476, %v1039
  %v1119 = vadd.f32 %v477, %v1044
  %v1120 = vadd.f32 %v478, %v1049
  %v1121 = vadd.f32 %v479, %v1054
  %v1122 = vadd.f32 %v480, %v1029
  %v1123 = vadd.f32 %v481, %v1034
  %v1124 = vadd.f32 %v482, %v1039
  %v1125 = vadd.f32 %v483, %v1044
  %v1126 = vadd.f32 %v484, %v1049
  %v1127 = vadd.f32 %v485, %v1054
  %v1128 = vadd.f32 %v486, %v1029
  %v1129 = vadd.f32 %v487, %v1034
  %v1130 = vadd.f32 %v488, %v1039
  %v1131 = vadd.f32 %v489, %v1044
  %v1132 = vadd.f32 %v490, %v1049
  %v1133 = vadd.f32 %v491, %v1054
  %v1134 = vadd.f32 %v492, %v1029
  %v1135 = vadd.f32 %v493, %v1034
  %v1136 = vadd.f32 %v494, %v1039
  %v1137 = vadd.f32 %v495, %v1044
  %v1138 = vadd.f32 %v496, %v1049
  %v1139 = vadd.f32 %v497, %v1054
  %v1140 = vadd.f32 %v498, %v1029
  %v1141 = vadd.f32 %v499, %v1034
  %v1142 = vadd.f32 %v500, %v1039
  %v1143 = vadd.f32 %v501, %v1044
  %v1144 = vadd.f32 %v502, %v1049
  %v1145 = vadd.f32 %v503, %v1054
  %v1146 = vadd.f32 %v504, %v1029
  %v1147 = vadd.f32 %v505, %v1034
  %v1148 = vadd.f32 %v506, %v1039
  %v1149 = vadd.f32 %v507, %v1044
  %v1150 = vadd.f32 %v508, %v1049
  %v1151 = vadd.f32 %v509, %v1054
  %v1152 = vadd.f32 %v510, %v1029
  %v1153 = vadd.f32 %v511, %v1034
  %v1154 = vadd.f32 %v512, %v1039
  %v1155 = vadd.f32 %v513, %v1044
  %v1156 = vadd.f32 %v514, %v1049
  %v1157 = vadd.f32 %v515, %v1054
  %v1158 = vadd.f32 %v516, %v1029
  %v1159 = vadd.f32 %v517, %v1034
  %v1160 = vadd.f32 %v518, %v1039
  %v1161 = vadd.f32 %v519, %v1044
  %v1162 = vadd.f32 %v520, %v1049
  %v1163 = vadd.f32 %v521, %v1054
  %v1164 = vadd.f32 %v522, %v1029
  %v1165 = vadd.f32 %v523, %v1034
  %v1166 = vadd.f32 %v524, %v1039
  %v1167 = vadd.f32 %v525, %v1044
  %v1168 = vadd.f32 %v526, %v1049
  %v1169 = vadd.f32 %v527, %v1054
  %v1170 = vadd.f32 %v528, %v1029
  %v1171 = vadd.f32 %v529, %v1034
  %v1172 = vadd.f32 %v530, %v1039
  %v1173 = vadd.f32 %v531, %v1044
  %v1174 = vadd.f32 %v532, %v1049
  %v1175 = vadd.f32 %v533, %v1054
  %v1176 = vadd.f32 %v534, %v1029
  %v1177 = vadd.f32 %v535, %v1034
  %v1178 = vadd.f32 %v536, %v1039
  %v1179 = vadd.f32 %v537, %v1044
  %v1180 = vadd.f32 %v538, %v1049
  %v1181 = vadd.f32 %v539, %v1054
  %v1182 = vadd.f32 %v540, %v1029
  %v1183 = vadd.f32 %v541, %v1034
  %v1184 = vadd.f32 %v542, %v1039
  %v1185 = vadd.f32 %v543, %v1044
  %v1186 = vadd.f32 %v544, %v1049
  %v1187 = vadd.f32 %v545, %v1054
  %v1188 = vadd.f32 %v546, %v1029
  %v1189 = vadd.f32 %v547, %v1034
  %v1190 = vadd.f32 %v548, %v1039
  %v1191 = vadd.f32 %v549, %v1044
  %v1192 = vadd.f32 %v550, %v1049
  %v1193 = vadd.f32 %v551, %v1054
  %v1194 = vadd.f32 %v552, %v1029
  %v1195 = vadd.f32 %v553, %v1034
  %v1196 = vadd.f32 %v554, %v1039
  %v1197 = vadd.f32 %v555, %v1044
  %v1198 = vadd.f32 %v556, %v1049
  %v1199 = vadd.f32 %v557, %v1054
  %v1200 = vadd.f32 %v558, %v1029
  %v1201 = vadd.f32 %v559, %v1034
  %v1202 = vadd.f32 %v560, %v1039
  %v1203 = vadd.f32 %v561, %v1044
  %v1204 = vadd.f32 %v562, %v1049
  %v1205 = vadd.f32 %v563, %v1054
  %v1206 = vadd.f32 %v564, %v1029
  %v1207 = vadd.f32 %v565, %v1034
  %v1208 = vadd.f32 %v566, %v1039
  %v1209 = vadd.f32 %v567, %v1044
  %v1210 = vadd.f32 %v568, %v1049
  %v1211 = vadd.f32 %v569, %v1054
  %v1212 = vadd.f32 %v570, %v1029
  %v1213 = vadd.f32 %v571, %v1034
  %v1214 = vadd.f32 %v572, %v1039
  %v1215 = vadd.f32 %v573, %v1044
  %v1216 = vadd.f32 %v574, %v1049
  %v1217 = vadd.f32 %v575, %v1054
  %v1218 = vadd.f32 %v576, %v1029
  %v1219 = vadd.f32 %v577, %v1034
  %v1220 = vadd.f32 %v578, %v1039
  %v1221 = vadd.f32 %v579, %v1044
  %v1222 = vadd.f32 %v580, %v1049
  %v1223 = vadd.f32 %v581, %v1054
  %v1224 = vadd.f32 %v582, %v1029
  %v1225 = vadd.f32 %v583, %v1034
  %v1226 = vadd.f32 %v584, %v1039
  %v1227 = vadd.f32 %v585, %v1044
  %v1228 = vadd.f32 %v586, %v1049
  %v1229 = vadd.f32 %v587, %v1054
  %v1230 = vadd.f32 %v588, %v1029
  %v1231 = vadd.f32 %v589, %v1034
  %v1232 = vadd.f32 %v590, %v1039
  %v1233 = vadd.f32 %v591, %v1044
  %v1234 = vadd.f32 %v592, %v1049
  %v1235 = vadd.f32 %v593, %v1054
  %v1236 = vadd.f32 %v594, %v1029
  %v1237 = vadd.f32 %v595, %v1034
  %v1238 = vadd.f32 %v596, %v1039
  %v1239 = vadd.f32 %v597, %v1044
  %v1240 = vadd.f32 %v598, %v1049
  %v1241 = vadd.f32 %v599, %v1054
  %v1242 = vadd.f32 %v600, %v1029
  %v1243 = vadd.f32 %v601, %v1034
  %v1244 = vadd.f32 %v602, %v1039
  %v1245 = vadd.f32 %v603, %v1044
  %v1246 = vadd.f32 %v604, %v1049
  %v1247 = vadd.f32 %v605, %v1054
  %v1248 = vadd.f32 %v606, %v1029
  %v1249 = vadd.f32 %v607, %v1034
  %v1250 = vadd.f32 %v608, %v1039
  %v1251 = vadd.f32 %v609, %v1044
  %v1252 = vadd.f32 %v610, %v1049
  %v1253 = vadd.f32 %v611, %v1054
  %v1254 = vadd.f32 %v612, %v1029
  %v1255 = vadd.f32 %v613, %v1034
  %v1256 = vadd.f32 %v614, %v1039
  %v1257 = vadd.f32 %v615, %v1044
  %v1258 = vadd.f32 %v616, %v1049
  %v1259 = vadd.f32 %v617, %v1054
  %v1260 = vadd.f32 %v618, %v1029
  %v1261 = vadd.f32 %v619, %v1034
  %v1262 = vadd.f32 %v620, %v1039
  %v1263 = vadd.f32 %v621, %v1044
  %v1264 = vadd.f32 %v622, %v1049
  %v1265 = vadd.f32 %v623, %v1054
  %v1266 = vadd.f32 %v624, %v1029
  %v1267 = vadd.f32 %v625, %v1034
  %v1268 = vadd.f32 %v626, %v1039
  %v1269 = vadd.f32 %v627, %v1044
  %v1270 = vadd.f32 %v628, %v1049
  %v1271 = vadd.f32 %v629, %v1054
  %v1272 = vadd.f32 %v630, %v1029
  %v1273 = vadd.f32 %v631, %v1034
  %v1274 = vadd.f32 %v632, %v1039
  %v1275 = vadd.f32 %v633, %v1044
  %v1276 = vadd.f32 %v634, %v1049
  %v1277 = vadd.f32 %v635, %v1054
  %v1278 = vadd.f32 %v636, %v1029
  %v1279 = vadd.f32 %v637, %v1034
  %v1280 = vadd.f32 %v638, %v1039
  %v1281 = vadd.f32 %v639, %v1044
  %v1282 = vadd.f32 %v640, %v1049
  %v1283 = vadd.f32 %v641, %v1054
  %v1284 = vadd.f32 %v642, %v1029
  %v1285 = vadd.f32 %v643, %v1034
  %v1286 = vadd.f32 %v644, %v1039
  %v1287 = vadd.f32 %v645, %v1044
  %v1288 = vadd.f32 %v646, %v1049
  %v1289 = vadd.f32 %v647, %v1054
  %v1290 = vadd.f32 %v648, %v1029
  %v1291 = vadd.f32 %v649, %v1034
  %v1292 = vadd.f32 %v650, %v1039
  %v1293 = vadd.f32 %v651, %v1044
  %v1294 = vadd.f32 %v652, %v1049
  %v1295 = vadd.f32 %v653, %v1054
  %v1296 = vadd.f32 %v654, %v1029
  %v1297 = vadd.f32 %v655, %v1034
  %v1298 = vadd.f32 %v656, %v1039
  %v1299 = vadd.f32 %v657, %v1044
  %v1300 = vadd.f32 %v658, %v1049
  %v1301 = vadd.f32 %v659, %v1054
  %v1302 = vadd.f32 %v660, %v1029
  %v1303 = vadd.f32 %v661, %v1034
  %v1304 = vadd.f32 %v662, %v1039
  %v1305 = vadd.f32 %v663, %v1044
  %v1306 = vadd.f32 %v664, %v1049
  %v1307 = vadd.f32 %v665, %v1054
  %v1308 = vadd.f32 %v666, %v1029
  %v1309 = vadd.f32 %v667, %v1034
  %v1310 = vadd.f32 %v668, %v1039
  %v1311 = vadd.f32 %v669, %v1044
  %v1312 = vadd.f32 %v670, %v1049
  %v1313 = vadd.f32 %v671, %v1054
  %v1314 = vadd.f32 %v672, %v1029
  %v1315 = vadd.f32 %v673, %v1034
  %v1316 = vadd.f32 %v674, %v1039
  %v1317 = vadd.f32 %v675, %v1044
  %v1318 = vadd.f32 %v676, %v1049
  %v1319 = vadd.f32 %v677, %v1054
  %v1320 = vadd.f32 %v678, %v1029
  %v1321 = vadd.f32 %v679, %v1034
  %v1322 = vadd.f32 %v680, %v1039
  %v1323 = vadd.f32 %v681, %v1044
  %v1324 = vadd.f32 %v682, %v1049
  %v1325 = vadd.f32 %v683, %v1054
  %v1326 = vadd.f32 %v684, %v1029
  %v1327 = vadd.f32 %v685, %v1034
  %v1328 = vadd.f32 %v686, %v1039
  %v1329 = vadd.f32 %v687, %v1044
  %v1330 = vadd.f32 %v688, %v1049
  %v1331 = vadd.f32 %v689, %v1054
  %v1332 = vadd.f32 %v690, %v1029
  %v1333 = vadd.f32 %v691, %v1034
  %v1334 = vadd.f32 %v692, %v1039
  %v1335 = vadd.f32 %v693, %v1044
  %v1336 = vadd.f32 %v694, %v1049
  %v1337 = vadd.f32 %v695, %v1054
  %v1338 = vadd.f32 %v696, %v1029
  %v1339 = vadd.f32 %v697, %v1034
  %v1340 = vadd.f32 %v698, %v1039
  %v1341 = vadd.f32 %v699, %v1044
  %v1342 = vadd.f32 %v700, %v1049
  %v1343 = vadd.f32 %v701, %v1054
  %v1344 = vadd.f32 %v702, %v1029
  %v1345 = vadd.f32 %v703, %v1034
  %v1346 = vadd.f32 %v704, %v1039
  %v1347 = vadd.f32 %v705, %v1044
  %v1348 = vadd.f32 %v706, %v1049
  %v1349 = vadd.f32 %v707, %v1054
  %v1350 = vadd.f32 %v708, %v1029
  %v1351 = vadd.f32 %v709, %v1034
  %v1352 = vadd.f32 %v710, %v1039
  %v1353 = vadd.f32 %v711, %v1044
  %v1354 = vadd.f32 %v712, %v1049
  %v1355 = vadd.f32 %v713, %v1054
  %v1356 = vadd.f32 %v714, %v1029
  %v1357 = vadd.f32 %v715, %v1034
  %v1358 = vadd.f32 %v716, %v1039
  %v1359 = vadd.f32 %v717, %v1044
  %v1360 = vadd.f32 %v718, %v1049
  %v1361 = vadd.f32 %v719, %v1054
  %v1362 = vadd.f32 %v720, %v1029
  %v1363 = vadd.f32 %v721, %v1034
  %v1364 = vadd.f32 %v722, %v1039
  %v1365 = vadd.f32 %v723, %v1044
  %v1366 = vadd.f32 %v724, %v1049
  %v1367 = vadd.f32 %v725, %v1054
  %v1368 = vadd.f32 %v726, %v1029
  %v1369 = vadd.f32 %v727, %v1034
  %v1370 = vadd.f32 %v728, %v1039
  %v1371 = vadd.f32 %v729, %v1044
  %v1372 = vadd.f32 %v730, %v1049
  %v1373 = vadd.f32 %v731, %v1054
  %v1374 = vadd.f32 %v732, %v1029
  %v1375 = vadd.f32 %v733, %v1034
  %v1376 = vadd.f32 %v734, %v1039
  %v1377 = vadd.f32 %v735, %v1044
  %v1378 = vadd.f32 %v736, %v1049
  %v1379 = vadd.f32 %v737, %v1054
  %v1380 = vadd.f32 %v738, %v1029
  %v1381 = vadd.f32 %v739, %v1034
  %v1382 = vadd.f32 %v740, %v1039
  %v1383 = vadd.f32 %v741, %v1044
  %v1384 = vadd.f32 %v742, %v1049
  %v1385 = vadd.f32 %v743, %v1054
  %v1386 = vadd.f32 %v744, %v1029
  %v1387 = vadd.f32 %v745, %v1034
  %v1388 = vadd.f32 %v746, %v1039
  %v1389 = vadd.f32 %v747, %v1044
  %v1390 = vadd.f32 %v748, %v1049
  %v1391 = vadd.f32 %v749, %v1054
  %v1392 = vadd.f32 %v750, %v1029
  %v1393 = vadd.f32 %v751, %v1034
  %v1394 = vadd.f32 %v752, %v1039
  %v1395 = vadd.f32 %v753, %v1044
  %v1396 = vadd.f32 %v754, %v1049
  %v1397 = vadd.f32 %v755, %v1054
  %v1398 = vadd.f32 %v756, %v1029
  %v1399 = vadd.f32 %v757, %v1034
  %v1400 = vadd.f32 %v758, %v1039
  %v1401 = vadd.f32 %v759, %v1044
  %v1402 = vadd.f32 %v760, %v1049
  %v1403 = vadd.f32 %v761, %v1054
  %v1404 = vadd.f32 %v762, %v1029
  %v1405 = vadd.f32 %v763, %v1034
  %v1406 = vadd.f32 %v764, %v1039
  %v1407 = vadd.f32 %v765, %v1044
  %v1408 = vadd.f32 %v766, %v1049
  %v1409 = vadd.f32 %v767, %v1054
  %v1410 = vadd.f32 %v768, %v1029
  %v1411 = vadd.f32 %v769, %v1034
  %v1412 = vadd.f32 %v770, %v1039
  %v1413 = vadd.f32 %v771, %v1044
  %v1414 = vadd.f32 %v772, %v1049
  %v1415 = vadd.f32 %v773, %v1054
  %v1416 = vadd.f32 %v774, %v1029
  %v1417 = vadd.f32 %v775, %v1034
  %v1418 = vadd.f32 %v776, %v1039
  %v1419 = vadd.f32 %v777, %v1044
  %v1420 = vadd.f32 %v778, %v1049
  %v1421 = vadd.f32 %v779, %v1054
  %v1422 = vadd.f32 %v780, %v1029
  %v1423 = vadd.f32 %v781, %v1034
  %v1424 = vadd.f32 %v782, %v1039
  %v1425 = vadd.f32 %v783, %v1044
  %v1426 = vadd.f32 %v784, %v1049
  %v1427 = vadd.f32 %v785, %v1054
  %v1428 = vadd.f32 %v786, %v1029
  %v1429 = vadd.f32 %v787, %v1034
  %v1430 = vadd.f32 %v788, %v1039
  %v1431 = vadd.f32 %v789, %v1044
  %v1432 = vadd.f32 %v790, %v1049
  %v1433 = vadd.f32 %v791, %v1054
  %v1434 = vadd.f32 %v792, %v1029
  %v1435 = vadd.f32 %v793, %v1034
  %v1436 = vadd.f32 %v794, %v1039
  %v1437 = vadd.f32 %v795, %v1044
  %v1438 = vadd.f32 %v796, %v1049
  %v1439 = vadd.f32 %v797, %v1054
  %v1440 = vadd.f32 %v798, %v1029
  %v1441 = vadd.f32 %v799, %v1034
  %v1442 = vadd.f32 %v800, %v1039
  %v1443 = vadd.f32 %v801, %v1044
  %v1444 = vadd.f32 %v802, %v1049
  %v1445 = vadd.f32 %v803, %v1054
  %v1446 = vadd.f32 %v804, %v1029
  %v1447 = vadd.f32 %v805, %v1034
  %v1448 = vadd.f32 %v806, %v1039
  %v1449 = vadd.f32 %v807, %v1044
  %v1450 = vadd.f32 %v808, %v1049
  %v1451 = vadd.f32 %v809, %v1054
  %v1452 = vadd.f32 %v810, %v1029
  %v1453 = vadd.f32 %v811, %v1034
  %v1454 = vadd.f32 %v812, %v1039
  %v1455 = vadd.f32 %v813, %v1044
  %v1456 = vadd.f32 %v814, %v1049
  %v1457 = vadd.f32 %v815, %v1054
  %v1458 = vadd.f32 %v816, %v1029
  %v1459 = vadd.f32 %v817, %v1034
  %v1460 = vadd.f32 %v818, %v1039
  %v1461 = vadd.f32 %v819, %v1044
  %v1462 = vadd.f32 %v820, %v1049
  %v1463 = vadd.f32 %v821, %v1054
  %v1464 = vadd.f32 %v822, %v1029
  %v1465 = vadd.f32 %v823, %v1034
  %v1466 = vadd.f32 %v824, %v1039
  %v1467 = vadd.f32 %v825, %v1044
  %v1468 = vadd.f32 %v826, %v1049
  %v1469 = vadd.f32 %v827, %v1054
  %v1470 = vadd.f32 %v828, %v1029
  %v1471 = vadd.f32 %v829, %v1034
  %v1472 = vadd.f32 %v830, %v1039
  %v1473 = vadd.f32 %v831, %v1044
  %v1474 = vadd.f32 %v832, %v1049
  %v1475 = vadd.f32 %v833, %v1054
  %v1476 = vadd.f32 %v834, %v1029
  %v1477 = vadd.f32 %v835, %v1034
  %v1478 = vadd.f32 %v836, %v1039
  %v1479 = vadd.f32 %v837, %v1044
  %v1480 = vadd.f32 %v838, %v1049
  %v1481 = vadd.f32 %v839, %v1054
  %v1482 = vadd.f32 %v840, %v1029
  %v1483 = vadd.f32 %v841, %v1034
  %v1484 = vadd.f32 %v842, %v1039
  %v1485 = vadd.f32 %v843, %v1044
  %v1486 = vadd.f32 %v844, %v1049
  %v1487 = vadd.f32 %v845, %v1054
  %v1488 = vadd.f32 %v846, %v1029
  %v1489 = vadd.f32 %v847, %v1034
  %v1490 = vadd.f32 %v848, %v1039
  %v1491 = vadd.f32 %v849, %v1044
  %v1492 = vadd.f32 %v850, %v1049
  %v1493 = vadd.f32 %v851, %v1054
  %v1494 = vadd.f32 %v852, %v1029
  %v1495 = vadd.f32 %v853, %v1034
  %v1496 = vadd.f32 %v854, %v1039
  %v1497 = vadd.f32 %v855, %v1044
  %v1498 = vadd.f32 %v856, %v1049
  %v1499 = vadd.f32 %v857, %v1054
  %v1500 = vadd.f32 %v858, %v1029
  %v1501 = vadd.f32 %v859, %v1034
  %v1502 = vadd.f32 %v860, %v1039
  %v1503 = vadd.f32 %v861, %v1044
  %v1504 = vadd.f32 %v862, %v1049
  %v1505 = vadd.f32 %v863, %v1054
  %v1506 = vadd.f32 %v864, %v1029
  %v1507 = vadd.f32 %v865, %v1034
  %v1508 = vadd.f32 %v866, %v1039
  %v1509 = vadd.f32 %v867, %v1044
  %v1510 = vadd.f32 %v868, %v1049
  %v1511 = vadd.f32 %v869, %v1054
  %v1512 = vadd.f32 %v870, %v1029
  %v1513 = vadd.f32 %v871, %v1034
  %v1514 = vadd.f32 %v872, %v1039
  %v1515 = vadd.f32 %v873, %v1044
  %v1516 = vadd.f32 %v874, %v1049
  %v1517 = vadd.f32 %v875, %v1054
  %v1518 = vadd.f32 %v876, %v1029
  %v1519 = vadd.f32 %v877, %v1034
  %v1520 = vadd.f32 %v878, %v1039
  %v1521 = vadd.f32 %v879, %v1044
  %v1522 = vadd.f32 %v880, %v1049
  %v1523 = vadd.f32 %v881, %v1054
  %v1524 = vadd.f32 %v882, %v1029
  %v1525 = vadd.f32 %v883, %v1034
  %v1526 = vadd.f32 %v884, %v1039
  %v1527 = vadd.f32 %v885, %v1044
  %v1528 = vadd.f32 %v886, %v1049
  %v1529 = vadd.f32 %v887, %v1054
  %v1530 = vadd.f32 %v888, %v1029
  %v1531 = vadd.f32 %v889, %v1034
  %v1532 = vadd.f32 %v890, %v1039
  %v1533 = vadd.f32 %v891, %v1044
  %v1534 = vadd.f32 %v892, %v1049
  %v1535 = vadd.f32 %v893, %v1054
  %v1536 = vadd.f32 %v894, %v1029
  %v1537 = vadd.f32 %v895, %v1034
  %v1538 = vadd.f32 %v896, %v1039
  %v1539 = vadd.f32 %v897, %v1044
  %v1540 = vadd.f32 %v898, %v1049
  %v1541 = vadd.f32 %v899, %v1054
  %v1542 = vadd.f32 %v900, %v1029
  %v1543 = vadd.f32 %v901, %v1034
  %v1544 = vadd.f32 %v902, %v1039
  %v1545 = vadd.f32 %v903, %v1044
  %v1546 = vadd.f32 %v904, %v1049
  %v1547 = vadd.f32 %v905, %v1054
  %v1548 = vadd.f32 %v906, %v1029
  %v1549 = vadd.f32 %v907, %v1034
  %v1550 = vadd.f32 %v908, %v1039
  %v1551 = vadd.f32 %v909, %v1044
  %v1552 = vadd.f32 %v910, %v1049
  %v1553 = vadd.f32 %v911, %v1054
  %v1554 = vadd.f32 %v912, %v1029
  %v1555 = vadd.f32 %v913, %v1034
  %v1556 = vadd.f32 %v914, %v1039
  %v1557 = vadd.f32 %v915, %v1044
  %v1558 = vadd.f32 %v916, %v1049
  %v1559 = vadd.f32 %v917, %v1054
  %v1560 = vadd.f32 %v918, %v1029
  %v1561 = vadd.f32 %v919, %v1034
  %v1562 = vadd.f32 %v920, %v1039
  %v1563 = vadd.f32 %v921, %v1044
  %v1564 = vadd.f32 %v922, %v1049
  %v1565 = vadd.f32 %v923, %v1054
  %v1566 = vadd.f32 %v924, %v1029
  %v1567 = vadd.f32 %v925, %v1034
  %v1568 = vadd.f32 %v926, %v1039
  %v1569 = vadd.f32 %v927, %v1044
  %v1570 = vadd.f32 %v928, %v1049
  %v1571 = vadd.f32 %v929, %v1054
  %v1572 = vadd.f32 %v930, %v1029
  %v1573 = vadd.f32 %v931, %v1034
  %v1574 = vadd.f32 %v932, %v1039
  %v1575 = vadd.f32 %v933, %v1044
  %v1576 = vadd.f32 %v934, %v1049
  %v1577 = vadd.f32 %v935, %v1054
  %v1578 = vadd.f32 %v936, %v1029
  %v1579 = vadd.f32 %v937, %v1034
  %v1580 = vadd.f32 %v938, %v1039
  %v1581 = vadd.f32 %v939, %v1044
  %v1582 = vadd.f32 %v940, %v1049
  %v1583 = vadd.f32 %v941, %v1054
  %v1584 = vadd.f32 %v942, %v1029
  %v1585 = vadd.f32 %v943, %v1034
  %v1586 = vadd.f32 %v944, %v1039
  %v1587 = vadd.f32 %v945, %v1044
  %v1588 = vadd.f32 %v946, %v1049
  %v1589 = vadd.f32 %v947, %v1054
  %v1590 = vadd.f32 %v948, %v1029
  %v1591 = vadd.f32 %v949, %v1034
  %v1592 = vadd.f32 %v950, %v1039
  %v1593 = vadd.f32 %v951, %v1044
  %v1594 = vadd.f32 %v952, %v1049
  %v1595 = vadd.f32 %v953, %v1054
  %v1596 = vadd.f32 %v954, %v1029
  %v1597 = vadd.f32 %v955, %v1034
  %v1598 = vadd.f32 %v956, %v1039
  %v1599 = vadd.f32 %v957, %v1044
  %v1600 = vadd.f32 %v958, %v1049
  %v1601 = vadd.f32 %v959, %v1054
  %v1602 = vadd.f32 %v960, %v1029
  %v1603 = vadd.f32 %v961, %v1034
  %v1604 = vadd.f32 %v962, %v1039
  %v1605 = vadd.f32 %v963, %v1044
  %v1606 = vadd.f32 %v964, %v1049
  %v1607 = vadd.f32 %v965, %v1054
  %v1608 = vadd.f32 %v966, %v1029
  %v1609 = vadd.f32 %v967, %v1034
  %v1610 = vadd.f32 %v968, %v1039
  %v1611 = vadd.f32 %v969, %v1044
  %v1612 = vadd.f32 %v970, %v1049
  %v1613 = vadd.f32 %v971, %v1054
  %v1614 = vadd.f32 %v972, %v1029
  %v1615 = vadd.f32 %v973, %v1034
  %v1616 = vadd.f32 %v974, %v1039
  %v1617 = vadd.f32 %v975, %v1044
  %v1618 = vadd.f32 %v976, %v1049
  %v1619 = vadd.f32 %v977, %v1054
  %v1620 = vadd.f32 %v978, %v1029
  %v1621 = vadd.f32 %v979, %v1034
  %v1622 = vadd.f32 %v980, %v1039
  %v1623 = vadd.f32 %v981, %v1044
  %v1624 = vadd.f32 %v982, %v1049
  %v1625 = vadd.f32 %v983, %v1054
  %v1626 = vadd.f32 %v984, %v1029
  %v1627 = vadd.f32 %v985, %v1034
  %v1628 = vadd.f32 %v986, %v1039
  %v1629 = vadd.f32 %v987, %v1044
  %v1630 = vadd.f32 %v988, %v1049
  %v1631 = vadd.f32 %v989, %v1054
  %v1632 = vadd.f32 %v990, %v1029
  %v1633 = vadd.f32 %v991, %v1034
  %v1634 = vadd.f32 %v992, %v1039
  %v1635 = vadd.f32 %v993, %v1044
  %v1636 = vadd.f32 %v994, %v1049
  %v1637 = vadd.f32 %v995, %v1054
  %v1638 = vadd.f32 %v996, %v1029
  %v1639 = vadd.f32 %v997, %v1034
  %v1640 = vadd.f32 %v998, %v1039
  %v1641 = vadd.f32 %v999, %v1044
  %v1642 = vadd.f32 %v1000, %v1049
  %v1643 = vadd.f32 %v1001, %v1054
  %v1644 = vadd.f32 %v1002, %v1029
  %v1645 = vadd.f32 %v1003, %v1034
  %v1646 = vadd.f32 %v1004, %v1039
  %v1647 = vadd.f32 %v1005, %v1044
  %v1648 = vadd.f32 %v1006, %v1049
  %v1649 = vadd.f32 %v1007, %v1054
  %v1650 = vadd.f32 %v1008, %v1029
  %v1651 = vadd.f32 %v1009, %v1034
  %v1652 = vadd.f32 %v1010, %v1039
  %v1653 = vadd.f32 %v1011, %v1044
  %v1654 = vadd.f32 %v1012, %v1049
  %v1655 = vadd.f32 %v1013, %v1054
  %v1656 = vadd.f32 %v1014, %v1029
  %v1657 = vadd.f32 %v1015, %v1034
  %v1658 = vadd.f32 %v1016, %v1039
  %v1659 = vadd.f32 %v1017, %v1044
  %v1660 = vadd.f32 %v1018, %v1049
  %v1661 = vadd.f32 %v1019, %v1054
  %vm1662 = vcmask 64512
  %1663 = vst.msk [vmem:[#allocation2] sm:$0xff] %vm1662, %v1056
  %1664 = vst.msk [vmem:[#allocation2 + $0x8] sm:$0xff] %vm1662, %v1057
  %1665 = vst.msk [vmem:[#allocation2 + $0x10] sm:$0xff] %vm1662, %v1058
  %1666 = vst.msk [vmem:[#allocation2 + $0x18] sm:$0xff] %vm1662, %v1059
  %1667 = vst.msk [vmem:[#allocation2 + $0x20] sm:$0xff] %vm1662, %v1060
  %1668 = vst.msk [vmem:[#allocation2 + $0x28] sm:$0xff] %vm1662, %v1061
  %1669 = vst.msk [vmem:[#allocation2 + $0x30] sm:$0xff] %vm1662, %v1062
  %1670 = vst.msk [vmem:[#allocation2 + $0x38] sm:$0xff] %vm1662, %v1063
  %1671 = vst.msk [vmem:[#allocation2 + $0x40] sm:$0xff] %vm1662, %v1064
  %1672 = vst.msk [vmem:[#allocation2 + $0x48] sm:$0xff] %vm1662, %v1065
  %1673 = vst.msk [vmem:[#allocation2 + $0x50] sm:$0xff] %vm1662, %v1066
  %1674 = vst.msk [vmem:[#allocation2 + $0x58] sm:$0xff] %vm1662, %v1067
  %1675 = vst.msk [vmem:[#allocation2 + $0x60] sm:$0xff] %vm1662, %v1068
  %1676 = vst.msk [vmem:[#allocation2 + $0x68] sm:$0xff] %vm1662, %v1069
  %1677 = vst.msk [vmem:[#allocation2 + $0x70] sm:$0xff] %vm1662, %v1070
  %1678 = vst.msk [vmem:[#allocation2 + $0x78] sm:$0xff] %vm1662, %v1071
  %1679 = vst.msk [vmem:[#allocation2 + $0x80] sm:$0xff] %vm1662, %v1072
  %1680 = vst.msk [vmem:[#allocation2 + $0x88] sm:$0xff] %vm1662, %v1073
  %1681 = vst.msk [vmem:[#allocation2 + $0x90] sm:$0xff] %vm1662, %v1074
  %1682 = vst.msk [vmem:[#allocation2 + $0x98] sm:$0xff] %vm1662, %v1075
  %1683 = vst.msk [vmem:[#allocation2 + $0xa0] sm:$0xff] %vm1662, %v1076
  %1684 = vst.msk [vmem:[#allocation2 + $0xa8] sm:$0xff] %vm1662, %v1077
  %1685 = vst.msk [vmem:[#allocation2 + $0xb0] sm:$0xff] %vm1662, %v1078
  %1686 = vst.msk [vmem:[#allocation2 + $0xb8] sm:$0xff] %vm1662, %v1079
  %1687 = vst.msk [vmem:[#allocation2 + $0xc0] sm:$0xff] %vm1662, %v1080
  %1688 = vst.msk [vmem:[#allocation2 + $0xc8] sm:$0xff] %vm1662, %v1081
  %1689 = vst.msk [vmem:[#allocation2 + $0xd0] sm:$0xff] %vm1662, %v1082
  %1690 = vst.msk [vmem:[#allocation2 + $0xd8] sm:$0xff] %vm1662, %v1083
  %1691 = vst.msk [vmem:[#allocation2 + $0xe0] sm:$0xff] %vm1662, %v1084
  %1692 = vst.msk [vmem:[#allocation2 + $0xe8] sm:$0xff] %vm1662, %v1085
  %1693 = vst.msk [vmem:[#allocation2 + $0xf0] sm:$0xff] %vm1662, %v1086
  %1694 = vst.msk [vmem:[#allocation2 + $0xf8] sm:$0xff] %vm1662, %v1087
  %1695 = vst.msk [vmem:[#allocation2 + $0x100] sm:$0xff] %vm1662, %v1088
  %1696 = vst.msk [vmem:[#allocation2 + $0x108] sm:$0xff] %vm1662, %v1089
  %1697 = vst.msk [vmem:[#allocation2 + $0x110] sm:$0xff] %vm1662, %v1090
  %1698 = vst.msk [vmem:[#allocation2 + $0x118] sm:$0xff] %vm1662, %v1091
  %1699 = vst.msk [vmem:[#allocation2 + $0x120] sm:$0xff] %vm1662, %v1092
  %1700 = vst.msk [vmem:[#allocation2 + $0x128] sm:$0xff] %vm1662, %v1093
  %1701 = vst.msk [vmem:[#allocation2 + $0x130] sm:$0xff] %vm1662, %v1094
  %1702 = vst.msk [vmem:[#allocation2 + $0x138] sm:$0xff] %vm1662, %v1095
  %1703 = vst.msk [vmem:[#allocation2 + $0x140] sm:$0xff] %vm1662, %v1096
  %1704 = vst.msk [vmem:[#allocation2 + $0x148] sm:$0xff] %vm1662, %v1097
  %1705 = vst.msk [vmem:[#allocation2 + $0x150] sm:$0xff] %vm1662, %v1098
  %1706 = vst.msk [vmem:[#allocation2 + $0x158] sm:$0xff] %vm1662, %v1099
  %1707 = vst.msk [vmem:[#allocation2 + $0x160] sm:$0xff] %vm1662, %v1100
  %1708 = vst.msk [vmem:[#allocation2 + $0x168] sm:$0xff] %vm1662, %v1101
  %1709 = vst.msk [vmem:[#allocation2 + $0x170] sm:$0xff] %vm1662, %v1102
  %1710 = vst.msk [vmem:[#allocation2 + $0x178] sm:$0xff] %vm1662, %v1103
  %1711 = vst.msk [vmem:[#allocation2 + $0x180] sm:$0xff] %vm1662, %v1104
  %1712 = vst.msk [vmem:[#allocation2 + $0x188] sm:$0xff] %vm1662, %v1105
  %1713 = vst.msk [vmem:[#allocation2 + $0x190] sm:$0xff] %vm1662, %v1106
  %1714 = vst.msk [vmem:[#allocation2 + $0x198] sm:$0xff] %vm1662, %v1107
  %1715 = vst.msk [vmem:[#allocation2 + $0x1a0] sm:$0xff] %vm1662, %v1108
  %1716 = vst.msk [vmem:[#allocation2 + $0x1a8] sm:$0xff] %vm1662, %v1109
  %1717 = vst.msk [vmem:[#allocation2 + $0x1b0] sm:$0xff] %vm1662, %v1110
  %1718 = vst.msk [vmem:[#allocation2 + $0x1b8] sm:$0xff] %vm1662, %v1111
  %1719 = vst.msk [vmem:[#allocation2 + $0x1c0] sm:$0xff] %vm1662, %v1112
  %1720 = vst.msk [vmem:[#allocation2 + $0x1c8] sm:$0xff] %vm1662, %v1113
  %1721 = vst.msk [vmem:[#allocation2 + $0x1d0] sm:$0xff] %vm1662, %v1114
  %1722 = vst.msk [vmem:[#allocation2 + $0x1d8] sm:$0xff] %vm1662, %v1115
  %1723 = vst.msk [vmem:[#allocation2 + $0x1e0] sm:$0xff] %vm1662, %v1116
  %1724 = vst.msk [vmem:[#allocation2 + $0x1e8] sm:$0xff] %vm1662, %v1117
  %1725 = vst.msk [vmem:[#allocation2 + $0x1f0] sm:$0xff] %vm1662, %v1118
  %1726 = vst.msk [vmem:[#allocation2 + $0x1f8] sm:$0xff] %vm1662, %v1119
  %1727 = vst.msk [vmem:[#allocation2 + $0x200] sm:$0xff] %vm1662, %v1120
  %1728 = vst.msk [vmem:[#allocation2 + $0x208] sm:$0xff] %vm1662, %v1121
  %1729 = vst.msk [vmem:[#allocation2 + $0x210] sm:$0xff] %vm1662, %v1122
  %1730 = vst.msk [vmem:[#allocation2 + $0x218] sm:$0xff] %vm1662, %v1123
  %1731 = vst.msk [vmem:[#allocation2 + $0x220] sm:$0xff] %vm1662, %v1124
  %1732 = vst.msk [vmem:[#allocation2 + $0x228] sm:$0xff] %vm1662, %v1125
  %1733 = vst.msk [vmem:[#allocation2 + $0x230] sm:$0xff] %vm1662, %v1126
  %1734 = vst.msk [vmem:[#allocation2 + $0x238] sm:$0xff] %vm1662, %v1127
  %1735 = vst.msk [vmem:[#allocation2 + $0x240] sm:$0xff] %vm1662, %v1128
  %1736 = vst.msk [vmem:[#allocation2 + $0x248] sm:$0xff] %vm1662, %v1129
  %1737 = vst.msk [vmem:[#allocation2 + $0x250] sm:$0xff] %vm1662, %v1130
  %1738 = vst.msk [vmem:[#allocation2 + $0x258] sm:$0xff] %vm1662, %v1131
  %1739 = vst.msk [vmem:[#allocation2 + $0x260] sm:$0xff] %vm1662, %v1132
  %1740 = vst.msk [vmem:[#allocation2 + $0x268] sm:$0xff] %vm1662, %v1133
  %1741 = vst.msk [vmem:[#allocation2 + $0x270] sm:$0xff] %vm1662, %v1134
  %1742 = vst.msk [vmem:[#allocation2 + $0x278] sm:$0xff] %vm1662, %v1135
  %1743 = vst.msk [vmem:[#allocation2 + $0x280] sm:$0xff] %vm1662, %v1136
  %1744 = vst.msk [vmem:[#allocation2 + $0x288] sm:$0xff] %vm1662, %v1137
  %1745 = vst.msk [vmem:[#allocation2 + $0x290] sm:$0xff] %vm1662, %v1138
  %1746 = vst.msk [vmem:[#allocation2 + $0x298] sm:$0xff] %vm1662, %v1139
  %1747 = vst.msk [vmem:[#allocation2 + $0x2a0] sm:$0xff] %vm1662, %v1140
  %1748 = vst.msk [vmem:[#allocation2 + $0x2a8] sm:$0xff] %vm1662, %v1141
  %1749 = vst.msk [vmem:[#allocation2 + $0x2b0] sm:$0xff] %vm1662, %v1142
  %1750 = vst.msk [vmem:[#allocation2 + $0x2b8] sm:$0xff] %vm1662, %v1143
  %1751 = vst.msk [vmem:[#allocation2 + $0x2c0] sm:$0xff] %vm1662, %v1144
  %1752 = vst.msk [vmem:[#allocation2 + $0x2c8] sm:$0xff] %vm1662, %v1145
  %1753 = vst.msk [vmem:[#allocation2 + $0x2d0] sm:$0xff] %vm1662, %v1146
  %1754 = vst.msk [vmem:[#allocation2 + $0x2d8] sm:$0xff] %vm1662, %v1147
  %1755 = vst.msk [vmem:[#allocation2 + $0x2e0] sm:$0xff] %vm1662, %v1148
  %1756 = vst.msk [vmem:[#allocation2 + $0x2e8] sm:$0xff] %vm1662, %v1149
  %1757 = vst.msk [vmem:[#allocation2 + $0x2f0] sm:$0xff] %vm1662, %v1150
  %1758 = vst.msk [vmem:[#allocation2 + $0x2f8] sm:$0xff] %vm1662, %v1151
  %1759 = vst.msk [vmem:[#allocation2 + $0x300] sm:$0xff] %vm1662, %v1152
  %1760 = vst.msk [vmem:[#allocation2 + $0x308] sm:$0xff] %vm1662, %v1153
  %1761 = vst.msk [vmem:[#allocation2 + $0x310] sm:$0xff] %vm1662, %v1154
  %1762 = vst.msk [vmem:[#allocation2 + $0x318] sm:$0xff] %vm1662, %v1155
  %1763 = vst.msk [vmem:[#allocation2 + $0x320] sm:$0xff] %vm1662, %v1156
  %1764 = vst.msk [vmem:[#allocation2 + $0x328] sm:$0xff] %vm1662, %v1157
  %1765 = vst.msk [vmem:[#allocation2 + $0x330] sm:$0xff] %vm1662, %v1158
  %1766 = vst.msk [vmem:[#allocation2 + $0x338] sm:$0xff] %vm1662, %v1159
  %1767 = vst.msk [vmem:[#allocation2 + $0x340] sm:$0xff] %vm1662, %v1160
  %1768 = vst.msk [vmem:[#allocation2 + $0x348] sm:$0xff] %vm1662, %v1161
  %1769 = vst.msk [vmem:[#allocation2 + $0x350] sm:$0xff] %vm1662, %v1162
  %1770 = vst.msk [vmem:[#allocation2 + $0x358] sm:$0xff] %vm1662, %v1163
  %1771 = vst.msk [vmem:[#allocation2 + $0x360] sm:$0xff] %vm1662, %v1164
  %1772 = vst.msk [vmem:[#allocation2 + $0x368] sm:$0xff] %vm1662, %v1165
  %1773 = vst.msk [vmem:[#allocation2 + $0x370] sm:$0xff] %vm1662, %v1166
  %1774 = vst.msk [vmem:[#allocation2 + $0x378] sm:$0xff] %vm1662, %v1167
  %1775 = vst.msk [vmem:[#allocation2 + $0x380] sm:$0xff] %vm1662, %v1168
  %1776 = vst.msk [vmem:[#allocation2 + $0x388] sm:$0xff] %vm1662, %v1169
  %1777 = vst.msk [vmem:[#allocation2 + $0x390] sm:$0xff] %vm1662, %v1170
  %1778 = vst.msk [vmem:[#allocation2 + $0x398] sm:$0xff] %vm1662, %v1171
  %1779 = vst.msk [vmem:[#allocation2 + $0x3a0] sm:$0xff] %vm1662, %v1172
  %1780 = vst.msk [vmem:[#allocation2 + $0x3a8] sm:$0xff] %vm1662, %v1173
  %1781 = vst.msk [vmem:[#allocation2 + $0x3b0] sm:$0xff] %vm1662, %v1174
  %1782 = vst.msk [vmem:[#allocation2 + $0x3b8] sm:$0xff] %vm1662, %v1175
  %1783 = vst.msk [vmem:[#allocation2 + $0x3c0] sm:$0xff] %vm1662, %v1176
  %1784 = vst.msk [vmem:[#allocation2 + $0x3c8] sm:$0xff] %vm1662, %v1177
  %1785 = vst.msk [vmem:[#allocation2 + $0x3d0] sm:$0xff] %vm1662, %v1178
  %1786 = vst.msk [vmem:[#allocation2 + $0x3d8] sm:$0xff] %vm1662, %v1179
  %1787 = vst.msk [vmem:[#allocation2 + $0x3e0] sm:$0xff] %vm1662, %v1180
  %1788 = vst.msk [vmem:[#allocation2 + $0x3e8] sm:$0xff] %vm1662, %v1181
  %1789 = vst.msk [vmem:[#allocation2 + $0x3f0] sm:$0xff] %vm1662, %v1182
  %1790 = vst.msk [vmem:[#allocation2 + $0x3f8] sm:$0xff] %vm1662, %v1183
  %1791 = vst.msk [vmem:[#allocation2 + $0x400] sm:$0xff] %vm1662, %v1184
  %1792 = vst.msk [vmem:[#allocation2 + $0x408] sm:$0xff] %vm1662, %v1185
  %1793 = vst.msk [vmem:[#allocation2 + $0x410] sm:$0xff] %vm1662, %v1186
  %1794 = vst.msk [vmem:[#allocation2 + $0x418] sm:$0xff] %vm1662, %v1187
  %1795 = vst.msk [vmem:[#allocation2 + $0x420] sm:$0xff] %vm1662, %v1188
  %1796 = vst.msk [vmem:[#allocation2 + $0x428] sm:$0xff] %vm1662, %v1189
  %1797 = vst.msk [vmem:[#allocation2 + $0x430] sm:$0xff] %vm1662, %v1190
  %1798 = vst.msk [vmem:[#allocation2 + $0x438] sm:$0xff] %vm1662, %v1191
  %1799 = vst.msk [vmem:[#allocation2 + $0x440] sm:$0xff] %vm1662, %v1192
  %1800 = vst.msk [vmem:[#allocation2 + $0x448] sm:$0xff] %vm1662, %v1193
  %1801 = vst.msk [vmem:[#allocation2 + $0x450] sm:$0xff] %vm1662, %v1194
  %1802 = vst.msk [vmem:[#allocation2 + $0x458] sm:$0xff] %vm1662, %v1195
  %1803 = vst.msk [vmem:[#allocation2 + $0x460] sm:$0xff] %vm1662, %v1196
  %1804 = vst.msk [vmem:[#allocation2 + $0x468] sm:$0xff] %vm1662, %v1197
  %1805 = vst.msk [vmem:[#allocation2 + $0x470] sm:$0xff] %vm1662, %v1198
  %1806 = vst.msk [vmem:[#allocation2 + $0x478] sm:$0xff] %vm1662, %v1199
  %1807 = vst.msk [vmem:[#allocation2 + $0x480] sm:$0xff] %vm1662, %v1200
  %1808 = vst.msk [vmem:[#allocation2 + $0x488] sm:$0xff] %vm1662, %v1201
  %1809 = vst.msk [vmem:[#allocation2 + $0x490] sm:$0xff] %vm1662, %v1202
  %1810 = vst.msk [vmem:[#allocation2 + $0x498] sm:$0xff] %vm1662, %v1203
  %1811 = vst.msk [vmem:[#allocation2 + $0x4a0] sm:$0xff] %vm1662, %v1204
  %1812 = vst.msk [vmem:[#allocation2 + $0x4a8] sm:$0xff] %vm1662, %v1205
  %1813 = vst.msk [vmem:[#allocation2 + $0x4b0] sm:$0xff] %vm1662, %v1206
  %1814 = vst.msk [vmem:[#allocation2 + $0x4b8] sm:$0xff] %vm1662, %v1207
  %1815 = vst.msk [vmem:[#allocation2 + $0x4c0] sm:$0xff] %vm1662, %v1208
  %1816 = vst.msk [vmem:[#allocation2 + $0x4c8] sm:$0xff] %vm1662, %v1209
  %1817 = vst.msk [vmem:[#allocation2 + $0x4d0] sm:$0xff] %vm1662, %v1210
  %1818 = vst.msk [vmem:[#allocation2 + $0x4d8] sm:$0xff] %vm1662, %v1211
  %1819 = vst.msk [vmem:[#allocation2 + $0x4e0] sm:$0xff] %vm1662, %v1212
  %1820 = vst.msk [vmem:[#allocation2 + $0x4e8] sm:$0xff] %vm1662, %v1213
  %1821 = vst.msk [vmem:[#allocation2 + $0x4f0] sm:$0xff] %vm1662, %v1214
  %1822 = vst.msk [vmem:[#allocation2 + $0x4f8] sm:$0xff] %vm1662, %v1215
  %1823 = vst.msk [vmem:[#allocation2 + $0x500] sm:$0xff] %vm1662, %v1216
  %1824 = vst.msk [vmem:[#allocation2 + $0x508] sm:$0xff] %vm1662, %v1217
  %1825 = vst.msk [vmem:[#allocation2 + $0x510] sm:$0xff] %vm1662, %v1218
  %1826 = vst.msk [vmem:[#allocation2 + $0x518] sm:$0xff] %vm1662, %v1219
  %1827 = vst.msk [vmem:[#allocation2 + $0x520] sm:$0xff] %vm1662, %v1220
  %1828 = vst.msk [vmem:[#allocation2 + $0x528] sm:$0xff] %vm1662, %v1221
  %1829 = vst.msk [vmem:[#allocation2 + $0x530] sm:$0xff] %vm1662, %v1222
  %1830 = vst.msk [vmem:[#allocation2 + $0x538] sm:$0xff] %vm1662, %v1223
  %1831 = vst.msk [vmem:[#allocation2 + $0x540] sm:$0xff] %vm1662, %v1224
  %1832 = vst.msk [vmem:[#allocation2 + $0x548] sm:$0xff] %vm1662, %v1225
  %1833 = vst.msk [vmem:[#allocation2 + $0x550] sm:$0xff] %vm1662, %v1226
  %1834 = vst.msk [vmem:[#allocation2 + $0x558] sm:$0xff] %vm1662, %v1227
  %1835 = vst.msk [vmem:[#allocation2 + $0x560] sm:$0xff] %vm1662, %v1228
  %1836 = vst.msk [vmem:[#allocation2 + $0x568] sm:$0xff] %vm1662, %v1229
  %1837 = vst.msk [vmem:[#allocation2 + $0x570] sm:$0xff] %vm1662, %v1230
  %1838 = vst.msk [vmem:[#allocation2 + $0x578] sm:$0xff] %vm1662, %v1231
  %1839 = vst.msk [vmem:[#allocation2 + $0x580] sm:$0xff] %vm1662, %v1232
  %1840 = vst.msk [vmem:[#allocation2 + $0x588] sm:$0xff] %vm1662, %v1233
  %1841 = vst.msk [vmem:[#allocation2 + $0x590] sm:$0xff] %vm1662, %v1234
  %1842 = vst.msk [vmem:[#allocation2 + $0x598] sm:$0xff] %vm1662, %v1235
  %1843 = vst.msk [vmem:[#allocation2 + $0x5a0] sm:$0xff] %vm1662, %v1236
  %1844 = vst.msk [vmem:[#allocation2 + $0x5a8] sm:$0xff] %vm1662, %v1237
  %1845 = vst.msk [vmem:[#allocation2 + $0x5b0] sm:$0xff] %vm1662, %v1238
  %1846 = vst.msk [vmem:[#allocation2 + $0x5b8] sm:$0xff] %vm1662, %v1239
  %1847 = vst.msk [vmem:[#allocation2 + $0x5c0] sm:$0xff] %vm1662, %v1240
  %1848 = vst.msk [vmem:[#allocation2 + $0x5c8] sm:$0xff] %vm1662, %v1241
  %1849 = vst.msk [vmem:[#allocation2 + $0x5d0] sm:$0xff] %vm1662, %v1242
  %1850 = vst.msk [vmem:[#allocation2 + $0x5d8] sm:$0xff] %vm1662, %v1243
  %1851 = vst.msk [vmem:[#allocation2 + $0x5e0] sm:$0xff] %vm1662, %v1244
  %1852 = vst.msk [vmem:[#allocation2 + $0x5e8] sm:$0xff] %vm1662, %v1245
  %1853 = vst.msk [vmem:[#allocation2 + $0x5f0] sm:$0xff] %vm1662, %v1246
  %1854 = vst.msk [vmem:[#allocation2 + $0x5f8] sm:$0xff] %vm1662, %v1247
  %1855 = vst.msk [vmem:[#allocation2 + $0x600] sm:$0xff] %vm1662, %v1248
  %1856 = vst.msk [vmem:[#allocation2 + $0x608] sm:$0xff] %vm1662, %v1249
  %1857 = vst.msk [vmem:[#allocation2 + $0x610] sm:$0xff] %vm1662, %v1250
  %1858 = vst.msk [vmem:[#allocation2 + $0x618] sm:$0xff] %vm1662, %v1251
  %1859 = vst.msk [vmem:[#allocation2 + $0x620] sm:$0xff] %vm1662, %v1252
  %1860 = vst.msk [vmem:[#allocation2 + $0x628] sm:$0xff] %vm1662, %v1253
  %1861 = vst.msk [vmem:[#allocation2 + $0x630] sm:$0xff] %vm1662, %v1254
  %1862 = vst.msk [vmem:[#allocation2 + $0x638] sm:$0xff] %vm1662, %v1255
  %1863 = vst.msk [vmem:[#allocation2 + $0x640] sm:$0xff] %vm1662, %v1256
  %1864 = vst.msk [vmem:[#allocation2 + $0x648] sm:$0xff] %vm1662, %v1257
  %1865 = vst.msk [vmem:[#allocation2 + $0x650] sm:$0xff] %vm1662, %v1258
  %1866 = vst.msk [vmem:[#allocation2 + $0x658] sm:$0xff] %vm1662, %v1259
  %1867 = vst.msk [vmem:[#allocation2 + $0x660] sm:$0xff] %vm1662, %v1260
  %1868 = vst.msk [vmem:[#allocation2 + $0x668] sm:$0xff] %vm1662, %v1261
  %1869 = vst.msk [vmem:[#allocation2 + $0x670] sm:$0xff] %vm1662, %v1262
  %1870 = vst.msk [vmem:[#allocation2 + $0x678] sm:$0xff] %vm1662, %v1263
  %1871 = vst.msk [vmem:[#allocation2 + $0x680] sm:$0xff] %vm1662, %v1264
  %1872 = vst.msk [vmem:[#allocation2 + $0x688] sm:$0xff] %vm1662, %v1265
  %1873 = vst.msk [vmem:[#allocation2 + $0x690] sm:$0xff] %vm1662, %v1266
  %1874 = vst.msk [vmem:[#allocation2 + $0x698] sm:$0xff] %vm1662, %v1267
  %1875 = vst.msk [vmem:[#allocation2 + $0x6a0] sm:$0xff] %vm1662, %v1268
  %1876 = vst.msk [vmem:[#allocation2 + $0x6a8] sm:$0xff] %vm1662, %v1269
  %1877 = vst.msk [vmem:[#allocation2 + $0x6b0] sm:$0xff] %vm1662, %v1270
  %1878 = vst.msk [vmem:[#allocation2 + $0x6b8] sm:$0xff] %vm1662, %v1271
  %1879 = vst.msk [vmem:[#allocation2 + $0x6c0] sm:$0xff] %vm1662, %v1272
  %1880 = vst.msk [vmem:[#allocation2 + $0x6c8] sm:$0xff] %vm1662, %v1273
  %1881 = vst.msk [vmem:[#allocation2 + $0x6d0] sm:$0xff] %vm1662, %v1274
  %1882 = vst.msk [vmem:[#allocation2 + $0x6d8] sm:$0xff] %vm1662, %v1275
  %1883 = vst.msk [vmem:[#allocation2 + $0x6e0] sm:$0xff] %vm1662, %v1276
  %1884 = vst.msk [vmem:[#allocation2 + $0x6e8] sm:$0xff] %vm1662, %v1277
  %1885 = vst.msk [vmem:[#allocation2 + $0x6f0] sm:$0xff] %vm1662, %v1278
  %1886 = vst.msk [vmem:[#allocation2 + $0x6f8] sm:$0xff] %vm1662, %v1279
  %1887 = vst.msk [vmem:[#allocation2 + $0x700] sm:$0xff] %vm1662, %v1280
  %1888 = vst.msk [vmem:[#allocation2 + $0x708] sm:$0xff] %vm1662, %v1281
  %1889 = vst.msk [vmem:[#allocation2 + $0x710] sm:$0xff] %vm1662, %v1282
  %1890 = vst.msk [vmem:[#allocation2 + $0x718] sm:$0xff] %vm1662, %v1283
  %1891 = vst.msk [vmem:[#allocation2 + $0x720] sm:$0xff] %vm1662, %v1284
  %1892 = vst.msk [vmem:[#allocation2 + $0x728] sm:$0xff] %vm1662, %v1285
  %1893 = vst.msk [vmem:[#allocation2 + $0x730] sm:$0xff] %vm1662, %v1286
  %1894 = vst.msk [vmem:[#allocation2 + $0x738] sm:$0xff] %vm1662, %v1287
  %1895 = vst.msk [vmem:[#allocation2 + $0x740] sm:$0xff] %vm1662, %v1288
  %1896 = vst.msk [vmem:[#allocation2 + $0x748] sm:$0xff] %vm1662, %v1289
  %1897 = vst.msk [vmem:[#allocation2 + $0x750] sm:$0xff] %vm1662, %v1290
  %1898 = vst.msk [vmem:[#allocation2 + $0x758] sm:$0xff] %vm1662, %v1291
  %1899 = vst.msk [vmem:[#allocation2 + $0x760] sm:$0xff] %vm1662, %v1292
  %1900 = vst.msk [vmem:[#allocation2 + $0x768] sm:$0xff] %vm1662, %v1293
  %1901 = vst.msk [vmem:[#allocation2 + $0x770] sm:$0xff] %vm1662, %v1294
  %1902 = vst.msk [vmem:[#allocation2 + $0x778] sm:$0xff] %vm1662, %v1295
  %1903 = vst.msk [vmem:[#allocation2 + $0x780] sm:$0xff] %vm1662, %v1296
  %1904 = vst.msk [vmem:[#allocation2 + $0x788] sm:$0xff] %vm1662, %v1297
  %1905 = vst.msk [vmem:[#allocation2 + $0x790] sm:$0xff] %vm1662, %v1298
  %1906 = vst.msk [vmem:[#allocation2 + $0x798] sm:$0xff] %vm1662, %v1299
  %1907 = vst.msk [vmem:[#allocation2 + $0x7a0] sm:$0xff] %vm1662, %v1300
  %1908 = vst.msk [vmem:[#allocation2 + $0x7a8] sm:$0xff] %vm1662, %v1301
  %1909 = vst.msk [vmem:[#allocation2 + $0x7b0] sm:$0xff] %vm1662, %v1302
  %1910 = vst.msk [vmem:[#allocation2 + $0x7b8] sm:$0xff] %vm1662, %v1303
  %1911 = vst.msk [vmem:[#allocation2 + $0x7c0] sm:$0xff] %vm1662, %v1304
  %1912 = vst.msk [vmem:[#allocation2 + $0x7c8] sm:$0xff] %vm1662, %v1305
  %1913 = vst.msk [vmem:[#allocation2 + $0x7d0] sm:$0xff] %vm1662, %v1306
  %1914 = vst.msk [vmem:[#allocation2 + $0x7d8] sm:$0xff] %vm1662, %v1307
  %1915 = vst.msk [vmem:[#allocation2 + $0x7e0] sm:$0xff] %vm1662, %v1308
  %1916 = vst.msk [vmem:[#allocation2 + $0x7e8] sm:$0xff] %vm1662, %v1309
  %1917 = vst.msk [vmem:[#allocation2 + $0x7f0] sm:$0xff] %vm1662, %v1310
  %1918 = vst.msk [vmem:[#allocation2 + $0x7f8] sm:$0xff] %vm1662, %v1311
  %1919 = vst.msk [vmem:[#allocation2 + $0x800] sm:$0xff] %vm1662, %v1312
  %1920 = vst.msk [vmem:[#allocation2 + $0x808] sm:$0xff] %vm1662, %v1313
  %1921 = vst.msk [vmem:[#allocation2 + $0x810] sm:$0xff] %vm1662, %v1314
  %1922 = vst.msk [vmem:[#allocation2 + $0x818] sm:$0xff] %vm1662, %v1315
  %1923 = vst.msk [vmem:[#allocation2 + $0x820] sm:$0xff] %vm1662, %v1316
  %1924 = vst.msk [vmem:[#allocation2 + $0x828] sm:$0xff] %vm1662, %v1317
  %1925 = vst.msk [vmem:[#allocation2 + $0x830] sm:$0xff] %vm1662, %v1318
  %1926 = vst.msk [vmem:[#allocation2 + $0x838] sm:$0xff] %vm1662, %v1319
  %1927 = vst.msk [vmem:[#allocation2 + $0x840] sm:$0xff] %vm1662, %v1320
  %1928 = vst.msk [vmem:[#allocation2 + $0x848] sm:$0xff] %vm1662, %v1321
  %1929 = vst.msk [vmem:[#allocation2 + $0x850] sm:$0xff] %vm1662, %v1322
  %1930 = vst.msk [vmem:[#allocation2 + $0x858] sm:$0xff] %vm1662, %v1323
  %1931 = vst.msk [vmem:[#allocation2 + $0x860] sm:$0xff] %vm1662, %v1324
  %1932 = vst.msk [vmem:[#allocation2 + $0x868] sm:$0xff] %vm1662, %v1325
  %1933 = vst.msk [vmem:[#allocation2 + $0x870] sm:$0xff] %vm1662, %v1326
  %1934 = vst.msk [vmem:[#allocation2 + $0x878] sm:$0xff] %vm1662, %v1327
  %1935 = vst.msk [vmem:[#allocation2 + $0x880] sm:$0xff] %vm1662, %v1328
  %1936 = vst.msk [vmem:[#allocation2 + $0x888] sm:$0xff] %vm1662, %v1329
  %1937 = vst.msk [vmem:[#allocation2 + $0x890] sm:$0xff] %vm1662, %v1330
  %1938 = vst.msk [vmem:[#allocation2 + $0x898] sm:$0xff] %vm1662, %v1331
  %1939 = vst.msk [vmem:[#allocation2 + $0x8a0] sm:$0xff] %vm1662, %v1332
  %1940 = vst.msk [vmem:[#allocation2 + $0x8a8] sm:$0xff] %vm1662, %v1333
  %1941 = vst.msk [vmem:[#allocation2 + $0x8b0] sm:$0xff] %vm1662, %v1334
  %1942 = vst.msk [vmem:[#allocation2 + $0x8b8] sm:$0xff] %vm1662, %v1335
  %1943 = vst.msk [vmem:[#allocation2 + $0x8c0] sm:$0xff] %vm1662, %v1336
  %1944 = vst.msk [vmem:[#allocation2 + $0x8c8] sm:$0xff] %vm1662, %v1337
  %1945 = vst.msk [vmem:[#allocation2 + $0x8d0] sm:$0xff] %vm1662, %v1338
  %1946 = vst.msk [vmem:[#allocation2 + $0x8d8] sm:$0xff] %vm1662, %v1339
  %1947 = vst.msk [vmem:[#allocation2 + $0x8e0] sm:$0xff] %vm1662, %v1340
  %1948 = vst.msk [vmem:[#allocation2 + $0x8e8] sm:$0xff] %vm1662, %v1341
  %1949 = vst.msk [vmem:[#allocation2 + $0x8f0] sm:$0xff] %vm1662, %v1342
  %1950 = vst.msk [vmem:[#allocation2 + $0x8f8] sm:$0xff] %vm1662, %v1343
  %1951 = vst.msk [vmem:[#allocation2 + $0x900] sm:$0xff] %vm1662, %v1344
  %1952 = vst.msk [vmem:[#allocation2 + $0x908] sm:$0xff] %vm1662, %v1345
  %1953 = vst.msk [vmem:[#allocation2 + $0x910] sm:$0xff] %vm1662, %v1346
  %1954 = vst.msk [vmem:[#allocation2 + $0x918] sm:$0xff] %vm1662, %v1347
  %1955 = vst.msk [vmem:[#allocation2 + $0x920] sm:$0xff] %vm1662, %v1348
  %1956 = vst.msk [vmem:[#allocation2 + $0x928] sm:$0xff] %vm1662, %v1349
  %1957 = vst.msk [vmem:[#allocation2 + $0x930] sm:$0xff] %vm1662, %v1350
  %1958 = vst.msk [vmem:[#allocation2 + $0x938] sm:$0xff] %vm1662, %v1351
  %1959 = vst.msk [vmem:[#allocation2 + $0x940] sm:$0xff] %vm1662, %v1352
  %1960 = vst.msk [vmem:[#allocation2 + $0x948] sm:$0xff] %vm1662, %v1353
  %1961 = vst.msk [vmem:[#allocation2 + $0x950] sm:$0xff] %vm1662, %v1354
  %1962 = vst.msk [vmem:[#allocation2 + $0x958] sm:$0xff] %vm1662, %v1355
  %1963 = vst.msk [vmem:[#allocation2 + $0x960] sm:$0xff] %vm1662, %v1356
  %1964 = vst.msk [vmem:[#allocation2 + $0x968] sm:$0xff] %vm1662, %v1357
  %1965 = vst.msk [vmem:[#allocation2 + $0x970] sm:$0xff] %vm1662, %v1358
  %1966 = vst.msk [vmem:[#allocation2 + $0x978] sm:$0xff] %vm1662, %v1359
  %1967 = vst.msk [vmem:[#allocation2 + $0x980] sm:$0xff] %vm1662, %v1360
  %1968 = vst.msk [vmem:[#allocation2 + $0x988] sm:$0xff] %vm1662, %v1361
  %1969 = vst.msk [vmem:[#allocation2 + $0x990] sm:$0xff] %vm1662, %v1362
  %1970 = vst.msk [vmem:[#allocation2 + $0x998] sm:$0xff] %vm1662, %v1363
  %1971 = vst.msk [vmem:[#allocation2 + $0x9a0] sm:$0xff] %vm1662, %v1364
  %1972 = vst.msk [vmem:[#allocation2 + $0x9a8] sm:$0xff] %vm1662, %v1365
  %1973 = vst.msk [vmem:[#allocation2 + $0x9b0] sm:$0xff] %vm1662, %v1366
  %1974 = vst.msk [vmem:[#allocation2 + $0x9b8] sm:$0xff] %vm1662, %v1367
  %1975 = vst.msk [vmem:[#allocation2 + $0x9c0] sm:$0xff] %vm1662, %v1368
  %1976 = vst.msk [vmem:[#allocation2 + $0x9c8] sm:$0xff] %vm1662, %v1369
  %1977 = vst.msk [vmem:[#allocation2 + $0x9d0] sm:$0xff] %vm1662, %v1370
  %1978 = vst.msk [vmem:[#allocation2 + $0x9d8] sm:$0xff] %vm1662, %v1371
  %1979 = vst.msk [vmem:[#allocation2 + $0x9e0] sm:$0xff] %vm1662, %v1372
  %1980 = vst.msk [vmem:[#allocation2 + $0x9e8] sm:$0xff] %vm1662, %v1373
  %1981 = vst.msk [vmem:[#allocation2 + $0x9f0] sm:$0xff] %vm1662, %v1374
  %1982 = vst.msk [vmem:[#allocation2 + $0x9f8] sm:$0xff] %vm1662, %v1375
  %1983 = vst.msk [vmem:[#allocation2 + $0xa00] sm:$0xff] %vm1662, %v1376
  %1984 = vst.msk [vmem:[#allocation2 + $0xa08] sm:$0xff] %vm1662, %v1377
  %1985 = vst.msk [vmem:[#allocation2 + $0xa10] sm:$0xff] %vm1662, %v1378
  %1986 = vst.msk [vmem:[#allocation2 + $0xa18] sm:$0xff] %vm1662, %v1379
  %1987 = vst.msk [vmem:[#allocation2 + $0xa20] sm:$0xff] %vm1662, %v1380
  %1988 = vst.msk [vmem:[#allocation2 + $0xa28] sm:$0xff] %vm1662, %v1381
  %1989 = vst.msk [vmem:[#allocation2 + $0xa30] sm:$0xff] %vm1662, %v1382
  %1990 = vst.msk [vmem:[#allocation2 + $0xa38] sm:$0xff] %vm1662, %v1383
  %1991 = vst.msk [vmem:[#allocation2 + $0xa40] sm:$0xff] %vm1662, %v1384
  %1992 = vst.msk [vmem:[#allocation2 + $0xa48] sm:$0xff] %vm1662, %v1385
  %1993 = vst.msk [vmem:[#allocation2 + $0xa50] sm:$0xff] %vm1662, %v1386
  %1994 = vst.msk [vmem:[#allocation2 + $0xa58] sm:$0xff] %vm1662, %v1387
  %1995 = vst.msk [vmem:[#allocation2 + $0xa60] sm:$0xff] %vm1662, %v1388
  %1996 = vst.msk [vmem:[#allocation2 + $0xa68] sm:$0xff] %vm1662, %v1389
  %1997 = vst.msk [vmem:[#allocation2 + $0xa70] sm:$0xff] %vm1662, %v1390
  %1998 = vst.msk [vmem:[#allocation2 + $0xa78] sm:$0xff] %vm1662, %v1391
  %1999 = vst.msk [vmem:[#allocation2 + $0xa80] sm:$0xff] %vm1662, %v1392
  %2000 = vst.msk [vmem:[#allocation2 + $0xa88] sm:$0xff] %vm1662, %v1393
  %2001 = vst.msk [vmem:[#allocation2 + $0xa90] sm:$0xff] %vm1662, %v1394
  %2002 = vst.msk [vmem:[#allocation2 + $0xa98] sm:$0xff] %vm1662, %v1395
  %2003 = vst.msk [vmem:[#allocation2 + $0xaa0] sm:$0xff] %vm1662, %v1396
  %2004 = vst.msk [vmem:[#allocation2 + $0xaa8] sm:$0xff] %vm1662, %v1397
  %2005 = vst.msk [vmem:[#allocation2 + $0xab0] sm:$0xff] %vm1662, %v1398
  %2006 = vst.msk [vmem:[#allocation2 + $0xab8] sm:$0xff] %vm1662, %v1399
  %2007 = vst.msk [vmem:[#allocation2 + $0xac0] sm:$0xff] %vm1662, %v1400
  %2008 = vst.msk [vmem:[#allocation2 + $0xac8] sm:$0xff] %vm1662, %v1401
  %2009 = vst.msk [vmem:[#allocation2 + $0xad0] sm:$0xff] %vm1662, %v1402
  %2010 = vst.msk [vmem:[#allocation2 + $0xad8] sm:$0xff] %vm1662, %v1403
  %2011 = vst.msk [vmem:[#allocation2 + $0xae0] sm:$0xff] %vm1662, %v1404
  %2012 = vst.msk [vmem:[#allocation2 + $0xae8] sm:$0xff] %vm1662, %v1405
  %2013 = vst.msk [vmem:[#allocation2 + $0xaf0] sm:$0xff] %vm1662, %v1406
  %2014 = vst.msk [vmem:[#allocation2 + $0xaf8] sm:$0xff] %vm1662, %v1407
  %2015 = vst.msk [vmem:[#allocation2 + $0xb00] sm:$0xff] %vm1662, %v1408
  %2016 = vst.msk [vmem:[#allocation2 + $0xb08] sm:$0xff] %vm1662, %v1409
  %2017 = vst.msk [vmem:[#allocation2 + $0xb10] sm:$0xff] %vm1662, %v1410
  %2018 = vst.msk [vmem:[#allocation2 + $0xb18] sm:$0xff] %vm1662, %v1411
  %2019 = vst.msk [vmem:[#allocation2 + $0xb20] sm:$0xff] %vm1662, %v1412
  %2020 = vst.msk [vmem:[#allocation2 + $0xb28] sm:$0xff] %vm1662, %v1413
  %2021 = vst.msk [vmem:[#allocation2 + $0xb30] sm:$0xff] %vm1662, %v1414
  %2022 = vst.msk [vmem:[#allocation2 + $0xb38] sm:$0xff] %vm1662, %v1415
  %2023 = vst.msk [vmem:[#allocation2 + $0xb40] sm:$0xff] %vm1662, %v1416
  %2024 = vst.msk [vmem:[#allocation2 + $0xb48] sm:$0xff] %vm1662, %v1417
  %2025 = vst.msk [vmem:[#allocation2 + $0xb50] sm:$0xff] %vm1662, %v1418
  %2026 = vst.msk [vmem:[#allocation2 + $0xb58] sm:$0xff] %vm1662, %v1419
  %2027 = vst.msk [vmem:[#allocation2 + $0xb60] sm:$0xff] %vm1662, %v1420
  %2028 = vst.msk [vmem:[#allocation2 + $0xb68] sm:$0xff] %vm1662, %v1421
  %2029 = vst.msk [vmem:[#allocation2 + $0xb70] sm:$0xff] %vm1662, %v1422
  %2030 = vst.msk [vmem:[#allocation2 + $0xb78] sm:$0xff] %vm1662, %v1423
  %2031 = vst.msk [vmem:[#allocation2 + $0xb80] sm:$0xff] %vm1662, %v1424
  %2032 = vst.msk [vmem:[#allocation2 + $0xb88] sm:$0xff] %vm1662, %v1425
  %2033 = vst.msk [vmem:[#allocation2 + $0xb90] sm:$0xff] %vm1662, %v1426
  %2034 = vst.msk [vmem:[#allocation2 + $0xb98] sm:$0xff] %vm1662, %v1427
  %2035 = vst.msk [vmem:[#allocation2 + $0xba0] sm:$0xff] %vm1662, %v1428
  %2036 = vst.msk [vmem:[#allocation2 + $0xba8] sm:$0xff] %vm1662, %v1429
  %2037 = vst.msk [vmem:[#allocation2 + $0xbb0] sm:$0xff] %vm1662, %v1430
  %2038 = vst.msk [vmem:[#allocation2 + $0xbb8] sm:$0xff] %vm1662, %v1431
  %2039 = vst.msk [vmem:[#allocation2 + $0xbc0] sm:$0xff] %vm1662, %v1432
  %2040 = vst.msk [vmem:[#allocation2 + $0xbc8] sm:$0xff] %vm1662, %v1433
  %2041 = vst.msk [vmem:[#allocation2 + $0xbd0] sm:$0xff] %vm1662, %v1434
  %2042 = vst.msk [vmem:[#allocation2 + $0xbd8] sm:$0xff] %vm1662, %v1435
  %2043 = vst.msk [vmem:[#allocation2 + $0xbe0] sm:$0xff] %vm1662, %v1436
  %2044 = vst.msk [vmem:[#allocation2 + $0xbe8] sm:$0xff] %vm1662, %v1437
  %2045 = vst.msk [vmem:[#allocation2 + $0xbf0] sm:$0xff] %vm1662, %v1438
  %2046 = vst.msk [vmem:[#allocation2 + $0xbf8] sm:$0xff] %vm1662, %v1439
  %2047 = vst.msk [vmem:[#allocation2 + $0xc00] sm:$0xff] %vm1662, %v1440
  %2048 = vst.msk [vmem:[#allocation2 + $0xc08] sm:$0xff] %vm1662, %v1441
  %2049 = vst.msk [vmem:[#allocation2 + $0xc10] sm:$0xff] %vm1662, %v1442
  %2050 = vst.msk [vmem:[#allocation2 + $0xc18] sm:$0xff] %vm1662, %v1443
  %2051 = vst.msk [vmem:[#allocation2 + $0xc20] sm:$0xff] %vm1662, %v1444
  %2052 = vst.msk [vmem:[#allocation2 + $0xc28] sm:$0xff] %vm1662, %v1445
  %2053 = vst.msk [vmem:[#allocation2 + $0xc30] sm:$0xff] %vm1662, %v1446
  %2054 = vst.msk [vmem:[#allocation2 + $0xc38] sm:$0xff] %vm1662, %v1447
  %2055 = vst.msk [vmem:[#allocation2 + $0xc40] sm:$0xff] %vm1662, %v1448
  %2056 = vst.msk [vmem:[#allocation2 + $0xc48] sm:$0xff] %vm1662, %v1449
  %2057 = vst.msk [vmem:[#allocation2 + $0xc50] sm:$0xff] %vm1662, %v1450
  %2058 = vst.msk [vmem:[#allocation2 + $0xc58] sm:$0xff] %vm1662, %v1451
  %2059 = vst.msk [vmem:[#allocation2 + $0xc60] sm:$0xff] %vm1662, %v1452
  %2060 = vst.msk [vmem:[#allocation2 + $0xc68] sm:$0xff] %vm1662, %v1453
  %2061 = vst.msk [vmem:[#allocation2 + $0xc70] sm:$0xff] %vm1662, %v1454
  %2062 = vst.msk [vmem:[#allocation2 + $0xc78] sm:$0xff] %vm1662, %v1455
  %2063 = vst.msk [vmem:[#allocation2 + $0xc80] sm:$0xff] %vm1662, %v1456
  %2064 = vst.msk [vmem:[#allocation2 + $0xc88] sm:$0xff] %vm1662, %v1457
  %2065 = vst.msk [vmem:[#allocation2 + $0xc90] sm:$0xff] %vm1662, %v1458
  %2066 = vst.msk [vmem:[#allocation2 + $0xc98] sm:$0xff] %vm1662, %v1459
  %2067 = vst.msk [vmem:[#allocation2 + $0xca0] sm:$0xff] %vm1662, %v1460
  %2068 = vst.msk [vmem:[#allocation2 + $0xca8] sm:$0xff] %vm1662, %v1461
  %2069 = vst.msk [vmem:[#allocation2 + $0xcb0] sm:$0xff] %vm1662, %v1462
  %2070 = vst.msk [vmem:[#allocation2 + $0xcb8] sm:$0xff] %vm1662, %v1463
  %2071 = vst.msk [vmem:[#allocation2 + $0xcc0] sm:$0xff] %vm1662, %v1464
  %2072 = vst.msk [vmem:[#allocation2 + $0xcc8] sm:$0xff] %vm1662, %v1465
  %2073 = vst.msk [vmem:[#allocation2 + $0xcd0] sm:$0xff] %vm1662, %v1466
  %2074 = vst.msk [vmem:[#allocation2 + $0xcd8] sm:$0xff] %vm1662, %v1467
  %2075 = vst.msk [vmem:[#allocation2 + $0xce0] sm:$0xff] %vm1662, %v1468
  %2076 = vst.msk [vmem:[#allocation2 + $0xce8] sm:$0xff] %vm1662, %v1469
  %2077 = vst.msk [vmem:[#allocation2 + $0xcf0] sm:$0xff] %vm1662, %v1470
  %2078 = vst.msk [vmem:[#allocation2 + $0xcf8] sm:$0xff] %vm1662, %v1471
  %2079 = vst.msk [vmem:[#allocation2 + $0xd00] sm:$0xff] %vm1662, %v1472
  %2080 = vst.msk [vmem:[#allocation2 + $0xd08] sm:$0xff] %vm1662, %v1473
  %2081 = vst.msk [vmem:[#allocation2 + $0xd10] sm:$0xff] %vm1662, %v1474
  %2082 = vst.msk [vmem:[#allocation2 + $0xd18] sm:$0xff] %vm1662, %v1475
  %2083 = vst.msk [vmem:[#allocation2 + $0xd20] sm:$0xff] %vm1662, %v1476
  %2084 = vst.msk [vmem:[#allocation2 + $0xd28] sm:$0xff] %vm1662, %v1477
  %2085 = vst.msk [vmem:[#allocation2 + $0xd30] sm:$0xff] %vm1662, %v1478
  %2086 = vst.msk [vmem:[#allocation2 + $0xd38] sm:$0xff] %vm1662, %v1479
  %2087 = vst.msk [vmem:[#allocation2 + $0xd40] sm:$0xff] %vm1662, %v1480
  %2088 = vst.msk [vmem:[#allocation2 + $0xd48] sm:$0xff] %vm1662, %v1481
  %2089 = vst.msk [vmem:[#allocation2 + $0xd50] sm:$0xff] %vm1662, %v1482
  %2090 = vst.msk [vmem:[#allocation2 + $0xd58] sm:$0xff] %vm1662, %v1483
  %2091 = vst.msk [vmem:[#allocation2 + $0xd60] sm:$0xff] %vm1662, %v1484
  %2092 = vst.msk [vmem:[#allocation2 + $0xd68] sm:$0xff] %vm1662, %v1485
  %2093 = vst.msk [vmem:[#allocation2 + $0xd70] sm:$0xff] %vm1662, %v1486
  %2094 = vst.msk [vmem:[#allocation2 + $0xd78] sm:$0xff] %vm1662, %v1487
  %2095 = vst.msk [vmem:[#allocation2 + $0xd80] sm:$0xff] %vm1662, %v1488
  %2096 = vst.msk [vmem:[#allocation2 + $0xd88] sm:$0xff] %vm1662, %v1489
  %2097 = vst.msk [vmem:[#allocation2 + $0xd90] sm:$0xff] %vm1662, %v1490
  %2098 = vst.msk [vmem:[#allocation2 + $0xd98] sm:$0xff] %vm1662, %v1491
  %2099 = vst.msk [vmem:[#allocation2 + $0xda0] sm:$0xff] %vm1662, %v1492
  %2100 = vst.msk [vmem:[#allocation2 + $0xda8] sm:$0xff] %vm1662, %v1493
  %2101 = vst.msk [vmem:[#allocation2 + $0xdb0] sm:$0xff] %vm1662, %v1494
  %2102 = vst.msk [vmem:[#allocation2 + $0xdb8] sm:$0xff] %vm1662, %v1495
  %2103 = vst.msk [vmem:[#allocation2 + $0xdc0] sm:$0xff] %vm1662, %v1496
  %2104 = vst.msk [vmem:[#allocation2 + $0xdc8] sm:$0xff] %vm1662, %v1497
  %2105 = vst.msk [vmem:[#allocation2 + $0xdd0] sm:$0xff] %vm1662, %v1498
  %2106 = vst.msk [vmem:[#allocation2 + $0xdd8] sm:$0xff] %vm1662, %v1499
  %2107 = vst.msk [vmem:[#allocation2 + $0xde0] sm:$0xff] %vm1662, %v1500
  %2108 = vst.msk [vmem:[#allocation2 + $0xde8] sm:$0xff] %vm1662, %v1501
  %2109 = vst.msk [vmem:[#allocation2 + $0xdf0] sm:$0xff] %vm1662, %v1502
  %2110 = vst.msk [vmem:[#allocation2 + $0xdf8] sm:$0xff] %vm1662, %v1503
  %2111 = vst.msk [vmem:[#allocation2 + $0xe00] sm:$0xff] %vm1662, %v1504
  %2112 = vst.msk [vmem:[#allocation2 + $0xe08] sm:$0xff] %vm1662, %v1505
  %2113 = vst.msk [vmem:[#allocation2 + $0xe10] sm:$0xff] %vm1662, %v1506
  %2114 = vst.msk [vmem:[#allocation2 + $0xe18] sm:$0xff] %vm1662, %v1507
  %2115 = vst.msk [vmem:[#allocation2 + $0xe20] sm:$0xff] %vm1662, %v1508
  %2116 = vst.msk [vmem:[#allocation2 + $0xe28] sm:$0xff] %vm1662, %v1509
  %2117 = vst.msk [vmem:[#allocation2 + $0xe30] sm:$0xff] %vm1662, %v1510
  %2118 = vst.msk [vmem:[#allocation2 + $0xe38] sm:$0xff] %vm1662, %v1511
  %2119 = vst.msk [vmem:[#allocation2 + $0xe40] sm:$0xff] %vm1662, %v1512
  %2120 = vst.msk [vmem:[#allocation2 + $0xe48] sm:$0xff] %vm1662, %v1513
  %2121 = vst.msk [vmem:[#allocation2 + $0xe50] sm:$0xff] %vm1662, %v1514
  %2122 = vst.msk [vmem:[#allocation2 + $0xe58] sm:$0xff] %vm1662, %v1515
  %2123 = vst.msk [vmem:[#allocation2 + $0xe60] sm:$0xff] %vm1662, %v1516
  %2124 = vst.msk [vmem:[#allocation2 + $0xe68] sm:$0xff] %vm1662, %v1517
  %2125 = vst.msk [vmem:[#allocation2 + $0xe70] sm:$0xff] %vm1662, %v1518
  %2126 = vst.msk [vmem:[#allocation2 + $0xe78] sm:$0xff] %vm1662, %v1519
  %2127 = vst.msk [vmem:[#allocation2 + $0xe80] sm:$0xff] %vm1662, %v1520
  %2128 = vst.msk [vmem:[#allocation2 + $0xe88] sm:$0xff] %vm1662, %v1521
  %2129 = vst.msk [vmem:[#allocation2 + $0xe90] sm:$0xff] %vm1662, %v1522
  %2130 = vst.msk [vmem:[#allocation2 + $0xe98] sm:$0xff] %vm1662, %v1523
  %2131 = vst.msk [vmem:[#allocation2 + $0xea0] sm:$0xff] %vm1662, %v1524
  %2132 = vst.msk [vmem:[#allocation2 + $0xea8] sm:$0xff] %vm1662, %v1525
  %2133 = vst.msk [vmem:[#allocation2 + $0xeb0] sm:$0xff] %vm1662, %v1526
  %2134 = vst.msk [vmem:[#allocation2 + $0xeb8] sm:$0xff] %vm1662, %v1527
  %2135 = vst.msk [vmem:[#allocation2 + $0xec0] sm:$0xff] %vm1662, %v1528
  %2136 = vst.msk [vmem:[#allocation2 + $0xec8] sm:$0xff] %vm1662, %v1529
  %2137 = vst.msk [vmem:[#allocation2 + $0xed0] sm:$0xff] %vm1662, %v1530
  %2138 = vst.msk [vmem:[#allocation2 + $0xed8] sm:$0xff] %vm1662, %v1531
  %2139 = vst.msk [vmem:[#allocation2 + $0xee0] sm:$0xff] %vm1662, %v1532
  %2140 = vst.msk [vmem:[#allocation2 + $0xee8] sm:$0xff] %vm1662, %v1533
  %2141 = vst.msk [vmem:[#allocation2 + $0xef0] sm:$0xff] %vm1662, %v1534
  %2142 = vst.msk [vmem:[#allocation2 + $0xef8] sm:$0xff] %vm1662, %v1535
  %2143 = vst.msk [vmem:[#allocation2 + $0xf00] sm:$0xff] %vm1662, %v1536
  %2144 = vst.msk [vmem:[#allocation2 + $0xf08] sm:$0xff] %vm1662, %v1537
  %2145 = vst.msk [vmem:[#allocation2 + $0xf10] sm:$0xff] %vm1662, %v1538
  %2146 = vst.msk [vmem:[#allocation2 + $0xf18] sm:$0xff] %vm1662, %v1539
  %2147 = vst.msk [vmem:[#allocation2 + $0xf20] sm:$0xff] %vm1662, %v1540
  %2148 = vst.msk [vmem:[#allocation2 + $0xf28] sm:$0xff] %vm1662, %v1541
  %2149 = vst.msk [vmem:[#allocation2 + $0xf30] sm:$0xff] %vm1662, %v1542
  %2150 = vst.msk [vmem:[#allocation2 + $0xf38] sm:$0xff] %vm1662, %v1543
  %2151 = vst.msk [vmem:[#allocation2 + $0xf40] sm:$0xff] %vm1662, %v1544
  %2152 = vst.msk [vmem:[#allocation2 + $0xf48] sm:$0xff] %vm1662, %v1545
  %2153 = vst.msk [vmem:[#allocation2 + $0xf50] sm:$0xff] %vm1662, %v1546
  %2154 = vst.msk [vmem:[#allocation2 + $0xf58] sm:$0xff] %vm1662, %v1547
  %2155 = vst.msk [vmem:[#allocation2 + $0xf60] sm:$0xff] %vm1662, %v1548
  %2156 = vst.msk [vmem:[#allocation2 + $0xf68] sm:$0xff] %vm1662, %v1549
  %2157 = vst.msk [vmem:[#allocation2 + $0xf70] sm:$0xff] %vm1662, %v1550
  %2158 = vst.msk [vmem:[#allocation2 + $0xf78] sm:$0xff] %vm1662, %v1551
  %2159 = vst.msk [vmem:[#allocation2 + $0xf80] sm:$0xff] %vm1662, %v1552
  %2160 = vst.msk [vmem:[#allocation2 + $0xf88] sm:$0xff] %vm1662, %v1553
  %2161 = vst.msk [vmem:[#allocation2 + $0xf90] sm:$0xff] %vm1662, %v1554
  %2162 = vst.msk [vmem:[#allocation2 + $0xf98] sm:$0xff] %vm1662, %v1555
  %2163 = vst.msk [vmem:[#allocation2 + $0xfa0] sm:$0xff] %vm1662, %v1556
  %2164 = vst.msk [vmem:[#allocation2 + $0xfa8] sm:$0xff] %vm1662, %v1557
  %2165 = vst.msk [vmem:[#allocation2 + $0xfb0] sm:$0xff] %vm1662, %v1558
  %2166 = vst.msk [vmem:[#allocation2 + $0xfb8] sm:$0xff] %vm1662, %v1559
  %2167 = vst.msk [vmem:[#allocation2 + $0xfc0] sm:$0xff] %vm1662, %v1560
  %2168 = vst.msk [vmem:[#allocation2 + $0xfc8] sm:$0xff] %vm1662, %v1561
  %2169 = vst.msk [vmem:[#allocation2 + $0xfd0] sm:$0xff] %vm1662, %v1562
  %2170 = vst.msk [vmem:[#allocation2 + $0xfd8] sm:$0xff] %vm1662, %v1563
  %2171 = vst.msk [vmem:[#allocation2 + $0xfe0] sm:$0xff] %vm1662, %v1564
  %2172 = vst.msk [vmem:[#allocation2 + $0xfe8] sm:$0xff] %vm1662, %v1565
  %2173 = vst.msk [vmem:[#allocation2 + $0xff0] sm:$0xff] %vm1662, %v1566
  %2174 = vst.msk [vmem:[#allocation2 + $0xff8] sm:$0xff] %vm1662, %v1567
  %2175 = vst.msk [vmem:[#allocation2 + $0x1000] sm:$0xff] %vm1662, %v1568
  %2176 = vst.msk [vmem:[#allocation2 + $0x1008] sm:$0xff] %vm1662, %v1569
  %2177 = vst.msk [vmem:[#allocation2 + $0x1010] sm:$0xff] %vm1662, %v1570
  %2178 = vst.msk [vmem:[#allocation2 + $0x1018] sm:$0xff] %vm1662, %v1571
  %2179 = vst.msk [vmem:[#allocation2 + $0x1020] sm:$0xff] %vm1662, %v1572
  %2180 = vst.msk [vmem:[#allocation2 + $0x1028] sm:$0xff] %vm1662, %v1573
  %2181 = vst.msk [vmem:[#allocation2 + $0x1030] sm:$0xff] %vm1662, %v1574
  %2182 = vst.msk [vmem:[#allocation2 + $0x1038] sm:$0xff] %vm1662, %v1575
  %2183 = vst.msk [vmem:[#allocation2 + $0x1040] sm:$0xff] %vm1662, %v1576
  %2184 = vst.msk [vmem:[#allocation2 + $0x1048] sm:$0xff] %vm1662, %v1577
  %2185 = vst.msk [vmem:[#allocation2 + $0x1050] sm:$0xff] %vm1662, %v1578
  %2186 = vst.msk [vmem:[#allocation2 + $0x1058] sm:$0xff] %vm1662, %v1579
  %2187 = vst.msk [vmem:[#allocation2 + $0x1060] sm:$0xff] %vm1662, %v1580
  %2188 = vst.msk [vmem:[#allocation2 + $0x1068] sm:$0xff] %vm1662, %v1581
  %2189 = vst.msk [vmem:[#allocation2 + $0x1070] sm:$0xff] %vm1662, %v1582
  %2190 = vst.msk [vmem:[#allocation2 + $0x1078] sm:$0xff] %vm1662, %v1583
  %2191 = vst.msk [vmem:[#allocation2 + $0x1080] sm:$0xff] %vm1662, %v1584
  %2192 = vst.msk [vmem:[#allocation2 + $0x1088] sm:$0xff] %vm1662, %v1585
  %2193 = vst.msk [vmem:[#allocation2 + $0x1090] sm:$0xff] %vm1662, %v1586
  %2194 = vst.msk [vmem:[#allocation2 + $0x1098] sm:$0xff] %vm1662, %v1587
  %2195 = vst.msk [vmem:[#allocation2 + $0x10a0] sm:$0xff] %vm1662, %v1588
  %2196 = vst.msk [vmem:[#allocation2 + $0x10a8] sm:$0xff] %vm1662, %v1589
  %2197 = vst.msk [vmem:[#allocation2 + $0x10b0] sm:$0xff] %vm1662, %v1590
  %2198 = vst.msk [vmem:[#allocation2 + $0x10b8] sm:$0xff] %vm1662, %v1591
  %2199 = vst.msk [vmem:[#allocation2 + $0x10c0] sm:$0xff] %vm1662, %v1592
  %2200 = vst.msk [vmem:[#allocation2 + $0x10c8] sm:$0xff] %vm1662, %v1593
  %2201 = vst.msk [vmem:[#allocation2 + $0x10d0] sm:$0xff] %vm1662, %v1594
  %2202 = vst.msk [vmem:[#allocation2 + $0x10d8] sm:$0xff] %vm1662, %v1595
  %2203 = vst.msk [vmem:[#allocation2 + $0x10e0] sm:$0xff] %vm1662, %v1596
  %2204 = vst.msk [vmem:[#allocation2 + $0x10e8] sm:$0xff] %vm1662, %v1597
  %2205 = vst.msk [vmem:[#allocation2 + $0x10f0] sm:$0xff] %vm1662, %v1598
  %2206 = vst.msk [vmem:[#allocation2 + $0x10f8] sm:$0xff] %vm1662, %v1599
  %2207 = vst.msk [vmem:[#allocation2 + $0x1100] sm:$0xff] %vm1662, %v1600
  %2208 = vst.msk [vmem:[#allocation2 + $0x1108] sm:$0xff] %vm1662, %v1601
  %2209 = vst.msk [vmem:[#allocation2 + $0x1110] sm:$0xff] %vm1662, %v1602
  %2210 = vst.msk [vmem:[#allocation2 + $0x1118] sm:$0xff] %vm1662, %v1603
  %2211 = vst.msk [vmem:[#allocation2 + $0x1120] sm:$0xff] %vm1662, %v1604
  %2212 = vst.msk [vmem:[#allocation2 + $0x1128] sm:$0xff] %vm1662, %v1605
  %2213 = vst.msk [vmem:[#allocation2 + $0x1130] sm:$0xff] %vm1662, %v1606
  %2214 = vst.msk [vmem:[#allocation2 + $0x1138] sm:$0xff] %vm1662, %v1607
  %2215 = vst.msk [vmem:[#allocation2 + $0x1140] sm:$0xff] %vm1662, %v1608
  %2216 = vst.msk [vmem:[#allocation2 + $0x1148] sm:$0xff] %vm1662, %v1609
  %2217 = vst.msk [vmem:[#allocation2 + $0x1150] sm:$0xff] %vm1662, %v1610
  %2218 = vst.msk [vmem:[#allocation2 + $0x1158] sm:$0xff] %vm1662, %v1611
  %2219 = vst.msk [vmem:[#allocation2 + $0x1160] sm:$0xff] %vm1662, %v1612
  %2220 = vst.msk [vmem:[#allocation2 + $0x1168] sm:$0xff] %vm1662, %v1613
  %2221 = vst.msk [vmem:[#allocation2 + $0x1170] sm:$0xff] %vm1662, %v1614
  %2222 = vst.msk [vmem:[#allocation2 + $0x1178] sm:$0xff] %vm1662, %v1615
  %2223 = vst.msk [vmem:[#allocation2 + $0x1180] sm:$0xff] %vm1662, %v1616
  %2224 = vst.msk [vmem:[#allocation2 + $0x1188] sm:$0xff] %vm1662, %v1617
  %2225 = vst.msk [vmem:[#allocation2 + $0x1190] sm:$0xff] %vm1662, %v1618
  %2226 = vst.msk [vmem:[#allocation2 + $0x1198] sm:$0xff] %vm1662, %v1619
  %2227 = vst.msk [vmem:[#allocation2 + $0x11a0] sm:$0xff] %vm1662, %v1620
  %2228 = vst.msk [vmem:[#allocation2 + $0x11a8] sm:$0xff] %vm1662, %v1621
  %2229 = vst.msk [vmem:[#allocation2 + $0x11b0] sm:$0xff] %vm1662, %v1622
  %2230 = vst.msk [vmem:[#allocation2 + $0x11b8] sm:$0xff] %vm1662, %v1623
  %2231 = vst.msk [vmem:[#allocation2 + $0x11c0] sm:$0xff] %vm1662, %v1624
  %2232 = vst.msk [vmem:[#allocation2 + $0x11c8] sm:$0xff] %vm1662, %v1625
  %2233 = vst.msk [vmem:[#allocation2 + $0x11d0] sm:$0xff] %vm1662, %v1626
  %2234 = vst.msk [vmem:[#allocation2 + $0x11d8] sm:$0xff] %vm1662, %v1627
  %2235 = vst.msk [vmem:[#allocation2 + $0x11e0] sm:$0xff] %vm1662, %v1628
  %2236 = vst.msk [vmem:[#allocation2 + $0x11e8] sm:$0xff] %vm1662, %v1629
  %2237 = vst.msk [vmem:[#allocation2 + $0x11f0] sm:$0xff] %vm1662, %v1630
  %2238 = vst.msk [vmem:[#allocation2 + $0x11f8] sm:$0xff] %vm1662, %v1631
  %2239 = vst.msk [vmem:[#allocation2 + $0x1200] sm:$0xff] %vm1662, %v1632
  %2240 = vst.msk [vmem:[#allocation2 + $0x1208] sm:$0xff] %vm1662, %v1633
  %2241 = vst.msk [vmem:[#allocation2 + $0x1210] sm:$0xff] %vm1662, %v1634
  %2242 = vst.msk [vmem:[#allocation2 + $0x1218] sm:$0xff] %vm1662, %v1635
  %2243 = vst.msk [vmem:[#allocation2 + $0x1220] sm:$0xff] %vm1662, %v1636
  %2244 = vst.msk [vmem:[#allocation2 + $0x1228] sm:$0xff] %vm1662, %v1637
  %2245 = vst.msk [vmem:[#allocation2 + $0x1230] sm:$0xff] %vm1662, %v1638
  %2246 = vst.msk [vmem:[#allocation2 + $0x1238] sm:$0xff] %vm1662, %v1639
  %2247 = vst.msk [vmem:[#allocation2 + $0x1240] sm:$0xff] %vm1662, %v1640
  %2248 = vst.msk [vmem:[#allocation2 + $0x1248] sm:$0xff] %vm1662, %v1641
  %2249 = vst.msk [vmem:[#allocation2 + $0x1250] sm:$0xff] %vm1662, %v1642
  %2250 = vst.msk [vmem:[#allocation2 + $0x1258] sm:$0xff] %vm1662, %v1643
  %2251 = vst.msk [vmem:[#allocation2 + $0x1260] sm:$0xff] %vm1662, %v1644
  %2252 = vst.msk [vmem:[#allocation2 + $0x1268] sm:$0xff] %vm1662, %v1645
  %2253 = vst.msk [vmem:[#allocation2 + $0x1270] sm:$0xff] %vm1662, %v1646
  %2254 = vst.msk [vmem:[#allocation2 + $0x1278] sm:$0xff] %vm1662, %v1647
  %2255 = vst.msk [vmem:[#allocation2 + $0x1280] sm:$0xff] %vm1662, %v1648
  %2256 = vst.msk [vmem:[#allocation2 + $0x1288] sm:$0xff] %vm1662, %v1649
  %2257 = vst.msk [vmem:[#allocation2 + $0x1290] sm:$0xff] %vm1662, %v1650
  %2258 = vst.msk [vmem:[#allocation2 + $0x1298] sm:$0xff] %vm1662, %v1651
  %2259 = vst.msk [vmem:[#allocation2 + $0x12a0] sm:$0xff] %vm1662, %v1652
  %2260 = vst.msk [vmem:[#allocation2 + $0x12a8] sm:$0xff] %vm1662, %v1653
  %2261 = vst.msk [vmem:[#allocation2 + $0x12b0] sm:$0xff] %vm1662, %v1654
  %2262 = vst.msk [vmem:[#allocation2 + $0x12b8] sm:$0xff] %vm1662, %v1655
  %2263 = vst.msk [vmem:[#allocation2 + $0x12c0] sm:$0xff] %vm1662, %v1656
  %2264 = vst.msk [vmem:[#allocation2 + $0x12c8] sm:$0xff] %vm1662, %v1657
  %2265 = vst.msk [vmem:[#allocation2 + $0x12d0] sm:$0xff] %vm1662, %v1658
  %2266 = vst.msk [vmem:[#allocation2 + $0x12d8] sm:$0xff] %vm1662, %v1659
  %2267 = vst.msk [vmem:[#allocation2 + $0x12e0] sm:$0xff] %vm1662, %v1660
  %2268 = vst.msk [vmem:[#allocation2 + $0x12e8] sm:$0xff] %vm1662, %v1661
  %v2269 = vld [vmem:[%s5] sm:$0xff]
  %v2270 = vld [vmem:[%s5 + $0x8] sm:$0xff]
  %v2271 = vld [vmem:[%s5 + $0x10] sm:$0xff]
  %v2272 = vld [vmem:[%s5 + $0x18] sm:$0xff]
  %v2273 = vld [vmem:[%s5 + $0x20] sm:$0xff]
  %v2274 = vld [vmem:[%s5 + $0x28] sm:$0xff]
  %2276 = vset.pattern.permute.xlu0 0
  %2277 = vperm.xlu0 %2276, %v2269
  %v2278 = vpop.permute.xlu0 %2277
  %2281 = vset.pattern.permute.xlu0 0
  %2282 = vperm.xlu0 %2281, %v2270
  %v2283 = vpop.permute.xlu0 %2282
  %2286 = vset.pattern.permute.xlu0 0
  %2287 = vperm.xlu0 %2286, %v2271
  %v2288 = vpop.permute.xlu0 %2287
  %2291 = vset.pattern.permute.xlu0 0
  %2292 = vperm.xlu0 %2291, %v2272
  %v2293 = vpop.permute.xlu0 %2292
  %2296 = vset.pattern.permute.xlu0 0
  %2297 = vperm.xlu0 %2296, %v2273
  %v2298 = vpop.permute.xlu0 %2297
  %2301 = vset.pattern.permute.xlu0 0
  %2302 = vperm.xlu0 %2301, %v2274
  %v2303 = vpop.permute.xlu0 %2302
  %v2305 = vmul.f32 %v182, %v2278
  %v2306 = vmul.f32 %v182, %v2283
  %v2307 = vmul.f32 %v182, %v2288
  %v2308 = vmul.f32 %v182, %v2293
  %v2309 = vmul.f32 %v182, %v2298
  %v2310 = vmul.f32 %v182, %v2303
  %v2311 = vmul.f32 %v183, %v2278
  %v2312 = vmul.f32 %v183, %v2283
  %v2313 = vmul.f32 %v183, %v2288
  %v2314 = vmul.f32 %v183, %v2293
  %v2315 = vmul.f32 %v183, %v2298
  %v2316 = vmul.f32 %v183, %v2303
  %v2317 = vmul.f32 %v184, %v2278
  %v2318 = vmul.f32 %v184, %v2283
  %v2319 = vmul.f32 %v184, %v2288
  %v2320 = vmul.f32 %v184, %v2293
  %v2321 = vmul.f32 %v184, %v2298
  %v2322 = vmul.f32 %v184, %v2303
  %v2323 = vmul.f32 %v185, %v2278
  %v2324 = vmul.f32 %v185, %v2283
  %v2325 = vmul.f32 %v185, %v2288
  %v2326 = vmul.f32 %v185, %v2293
  %v2327 = vmul.f32 %v185, %v2298
  %v2328 = vmul.f32 %v185, %v2303
  %v2329 = vmul.f32 %v186, %v2278
  %v2330 = vmul.f32 %v186, %v2283
  %v2331 = vmul.f32 %v186, %v2288
  %v2332 = vmul.f32 %v186, %v2293
  %v2333 = vmul.f32 %v186, %v2298
  %v2334 = vmul.f32 %v186, %v2303
  %v2335 = vmul.f32 %v187, %v2278
  %v2336 = vmul.f32 %v187, %v2283
  %v2337 = vmul.f32 %v187, %v2288
  %v2338 = vmul.f32 %v187, %v2293
  %v2339 = vmul.f32 %v187, %v2298
  %v2340 = vmul.f32 %v187, %v2303
  %v2341 = vmul.f32 %v188, %v2278
  %v2342 = vmul.f32 %v188, %v2283
  %v2343 = vmul.f32 %v188, %v2288
  %v2344 = vmul.f32 %v188, %v2293
  %v2345 = vmul.f32 %v188, %v2298
  %v2346 = vmul.f32 %v188, %v2303
  %v2347 = vmul.f32 %v189, %v2278
  %v2348 = vmul.f32 %v189, %v2283
  %v2349 = vmul.f32 %v189, %v2288
  %v2350 = vmul.f32 %v189, %v2293
  %v2351 = vmul.f32 %v189, %v2298
  %v2352 = vmul.f32 %v189, %v2303
  %v2353 = vmul.f32 %v190, %v2278
  %v2354 = vmul.f32 %v190, %v2283
  %v2355 = vmul.f32 %v190, %v2288
  %v2356 = vmul.f32 %v190, %v2293
  %v2357 = vmul.f32 %v190, %v2298
  %v2358 = vmul.f32 %v190, %v2303
  %v2359 = vmul.f32 %v191, %v2278
  %v2360 = vmul.f32 %v191, %v2283
  %v2361 = vmul.f32 %v191, %v2288
  %v2362 = vmul.f32 %v191, %v2293
  %v2363 = vmul.f32 %v191, %v2298
  %v2364 = vmul.f32 %v191, %v2303
  %v2365 = vmul.f32 %v192, %v2278
  %v2366 = vmul.f32 %v192, %v2283
  %v2367 = vmul.f32 %v192, %v2288
  %v2368 = vmul.f32 %v192, %v2293
  %v2369 = vmul.f32 %v192, %v2298
  %v2370 = vmul.f32 %v192, %v2303
  %v2371 = vmul.f32 %v193, %v2278
  %v2372 = vmul.f32 %v193, %v2283
  %v2373 = vmul.f32 %v193, %v2288
  %v2374 = vmul.f32 %v193, %v2293
  %v2375 = vmul.f32 %v193, %v2298
  %v2376 = vmul.f32 %v193, %v2303
  %v2377 = vmul.f32 %v194, %v2278
  %v2378 = vmul.f32 %v194, %v2283
  %v2379 = vmul.f32 %v194, %v2288
  %v2380 = vmul.f32 %v194, %v2293
  %v2381 = vmul.f32 %v194, %v2298
  %v2382 = vmul.f32 %v194, %v2303
  %v2383 = vmul.f32 %v195, %v2278
  %v2384 = vmul.f32 %v195, %v2283
  %v2385 = vmul.f32 %v195, %v2288
  %v2386 = vmul.f32 %v195, %v2293
  %v2387 = vmul.f32 %v195, %v2298
  %v2388 = vmul.f32 %v195, %v2303
  %v2389 = vmul.f32 %v196, %v2278
  %v2390 = vmul.f32 %v196, %v2283
  %v2391 = vmul.f32 %v196, %v2288
  %v2392 = vmul.f32 %v196, %v2293
  %v2393 = vmul.f32 %v196, %v2298
  %v2394 = vmul.f32 %v196, %v2303
  %v2395 = vmul.f32 %v197, %v2278
  %v2396 = vmul.f32 %v197, %v2283
  %v2397 = vmul.f32 %v197, %v2288
  %v2398 = vmul.f32 %v197, %v2293
  %v2399 = vmul.f32 %v197, %v2298
  %v2400 = vmul.f32 %v197, %v2303
  %v2401 = vmul.f32 %v198, %v2278
  %v2402 = vmul.f32 %v198, %v2283
  %v2403 = vmul.f32 %v198, %v2288
  %v2404 = vmul.f32 %v198, %v2293
  %v2405 = vmul.f32 %v198, %v2298
  %v2406 = vmul.f32 %v198, %v2303
  %v2407 = vmul.f32 %v199, %v2278
  %v2408 = vmul.f32 %v199, %v2283
  %v2409 = vmul.f32 %v199, %v2288
  %v2410 = vmul.f32 %v199, %v2293
  %v2411 = vmul.f32 %v199, %v2298
  %v2412 = vmul.f32 %v199, %v2303
  %v2413 = vmul.f32 %v200, %v2278
  %v2414 = vmul.f32 %v200, %v2283
  %v2415 = vmul.f32 %v200, %v2288
  %v2416 = vmul.f32 %v200, %v2293
  %v2417 = vmul.f32 %v200, %v2298
  %v2418 = vmul.f32 %v200, %v2303
  %v2419 = vmul.f32 %v201, %v2278
  %v2420 = vmul.f32 %v201, %v2283
  %v2421 = vmul.f32 %v201, %v2288
  %v2422 = vmul.f32 %v201, %v2293
  %v2423 = vmul.f32 %v201, %v2298
  %v2424 = vmul.f32 %v201, %v2303
  %v2425 = vmul.f32 %v202, %v2278
  %v2426 = vmul.f32 %v202, %v2283
  %v2427 = vmul.f32 %v202, %v2288
  %v2428 = vmul.f32 %v202, %v2293
  %v2429 = vmul.f32 %v202, %v2298
  %v2430 = vmul.f32 %v202, %v2303
  %v2431 = vmul.f32 %v203, %v2278
  %v2432 = vmul.f32 %v203, %v2283
  %v2433 = vmul.f32 %v203, %v2288
  %v2434 = vmul.f32 %v203, %v2293
  %v2435 = vmul.f32 %v203, %v2298
  %v2436 = vmul.f32 %v203, %v2303
  %v2437 = vmul.f32 %v204, %v2278
  %v2438 = vmul.f32 %v204, %v2283
  %v2439 = vmul.f32 %v204, %v2288
  %v2440 = vmul.f32 %v204, %v2293
  %v2441 = vmul.f32 %v204, %v2298
  %v2442 = vmul.f32 %v204, %v2303
  %v2443 = vmul.f32 %v205, %v2278
  %v2444 = vmul.f32 %v205, %v2283
  %v2445 = vmul.f32 %v205, %v2288
  %v2446 = vmul.f32 %v205, %v2293
  %v2447 = vmul.f32 %v205, %v2298
  %v2448 = vmul.f32 %v205, %v2303
  %v2449 = vmul.f32 %v206, %v2278
  %v2450 = vmul.f32 %v206, %v2283
  %v2451 = vmul.f32 %v206, %v2288
  %v2452 = vmul.f32 %v206, %v2293
  %v2453 = vmul.f32 %v206, %v2298
  %v2454 = vmul.f32 %v206, %v2303
  %v2455 = vmul.f32 %v207, %v2278
  %v2456 = vmul.f32 %v207, %v2283
  %v2457 = vmul.f32 %v207, %v2288
  %v2458 = vmul.f32 %v207, %v2293
  %v2459 = vmul.f32 %v207, %v2298
  %v2460 = vmul.f32 %v207, %v2303
  %v2461 = vmul.f32 %v208, %v2278
  %v2462 = vmul.f32 %v208, %v2283
  %v2463 = vmul.f32 %v208, %v2288
  %v2464 = vmul.f32 %v208, %v2293
  %v2465 = vmul.f32 %v208, %v2298
  %v2466 = vmul.f32 %v208, %v2303
  %v2467 = vmul.f32 %v209, %v2278
  %v2468 = vmul.f32 %v209, %v2283
  %v2469 = vmul.f32 %v209, %v2288
  %v2470 = vmul.f32 %v209, %v2293
  %v2471 = vmul.f32 %v209, %v2298
  %v2472 = vmul.f32 %v209, %v2303
  %v2473 = vmul.f32 %v210, %v2278
  %v2474 = vmul.f32 %v210, %v2283
  %v2475 = vmul.f32 %v210, %v2288
  %v2476 = vmul.f32 %v210, %v2293
  %v2477 = vmul.f32 %v210, %v2298
  %v2478 = vmul.f32 %v210, %v2303
  %v2479 = vmul.f32 %v211, %v2278
  %v2480 = vmul.f32 %v211, %v2283
  %v2481 = vmul.f32 %v211, %v2288
  %v2482 = vmul.f32 %v211, %v2293
  %v2483 = vmul.f32 %v211, %v2298
  %v2484 = vmul.f32 %v211, %v2303
  %v2485 = vmul.f32 %v212, %v2278
  %v2486 = vmul.f32 %v212, %v2283
  %v2487 = vmul.f32 %v212, %v2288
  %v2488 = vmul.f32 %v212, %v2293
  %v2489 = vmul.f32 %v212, %v2298
  %v2490 = vmul.f32 %v212, %v2303
  %v2491 = vmul.f32 %v213, %v2278
  %v2492 = vmul.f32 %v213, %v2283
  %v2493 = vmul.f32 %v213, %v2288
  %v2494 = vmul.f32 %v213, %v2293
  %v2495 = vmul.f32 %v213, %v2298
  %v2496 = vmul.f32 %v213, %v2303
  %v2497 = vmul.f32 %v214, %v2278
  %v2498 = vmul.f32 %v214, %v2283
  %v2499 = vmul.f32 %v214, %v2288
  %v2500 = vmul.f32 %v214, %v2293
  %v2501 = vmul.f32 %v214, %v2298
  %v2502 = vmul.f32 %v214, %v2303
  %v2503 = vmul.f32 %v215, %v2278
  %v2504 = vmul.f32 %v215, %v2283
  %v2505 = vmul.f32 %v215, %v2288
  %v2506 = vmul.f32 %v215, %v2293
  %v2507 = vmul.f32 %v215, %v2298
  %v2508 = vmul.f32 %v215, %v2303
  %v2509 = vmul.f32 %v216, %v2278
  %v2510 = vmul.f32 %v216, %v2283
  %v2511 = vmul.f32 %v216, %v2288
  %v2512 = vmul.f32 %v216, %v2293
  %v2513 = vmul.f32 %v216, %v2298
  %v2514 = vmul.f32 %v216, %v2303
  %v2515 = vmul.f32 %v217, %v2278
  %v2516 = vmul.f32 %v217, %v2283
  %v2517 = vmul.f32 %v217, %v2288
  %v2518 = vmul.f32 %v217, %v2293
  %v2519 = vmul.f32 %v217, %v2298
  %v2520 = vmul.f32 %v217, %v2303
  %v2521 = vmul.f32 %v218, %v2278
  %v2522 = vmul.f32 %v218, %v2283
  %v2523 = vmul.f32 %v218, %v2288
  %v2524 = vmul.f32 %v218, %v2293
  %v2525 = vmul.f32 %v218, %v2298
  %v2526 = vmul.f32 %v218, %v2303
  %v2527 = vmul.f32 %v219, %v2278
  %v2528 = vmul.f32 %v219, %v2283
  %v2529 = vmul.f32 %v219, %v2288
  %v2530 = vmul.f32 %v219, %v2293
  %v2531 = vmul.f32 %v219, %v2298
  %v2532 = vmul.f32 %v219, %v2303
  %v2533 = vmul.f32 %v220, %v2278
  %v2534 = vmul.f32 %v220, %v2283
  %v2535 = vmul.f32 %v220, %v2288
  %v2536 = vmul.f32 %v220, %v2293
  %v2537 = vmul.f32 %v220, %v2298
  %v2538 = vmul.f32 %v220, %v2303
  %v2539 = vmul.f32 %v221, %v2278
  %v2540 = vmul.f32 %v221, %v2283
  %v2541 = vmul.f32 %v221, %v2288
  %v2542 = vmul.f32 %v221, %v2293
  %v2543 = vmul.f32 %v221, %v2298
  %v2544 = vmul.f32 %v221, %v2303
  %v2545 = vmul.f32 %v222, %v2278
  %v2546 = vmul.f32 %v222, %v2283
  %v2547 = vmul.f32 %v222, %v2288
  %v2548 = vmul.f32 %v222, %v2293
  %v2549 = vmul.f32 %v222, %v2298
  %v2550 = vmul.f32 %v222, %v2303
  %v2551 = vmul.f32 %v223, %v2278
  %v2552 = vmul.f32 %v223, %v2283
  %v2553 = vmul.f32 %v223, %v2288
  %v2554 = vmul.f32 %v223, %v2293
  %v2555 = vmul.f32 %v223, %v2298
  %v2556 = vmul.f32 %v223, %v2303
  %v2557 = vmul.f32 %v224, %v2278
  %v2558 = vmul.f32 %v224, %v2283
  %v2559 = vmul.f32 %v224, %v2288
  %v2560 = vmul.f32 %v224, %v2293
  %v2561 = vmul.f32 %v224, %v2298
  %v2562 = vmul.f32 %v224, %v2303
  %v2563 = vmul.f32 %v225, %v2278
  %v2564 = vmul.f32 %v225, %v2283
  %v2565 = vmul.f32 %v225, %v2288
  %v2566 = vmul.f32 %v225, %v2293
  %v2567 = vmul.f32 %v225, %v2298
  %v2568 = vmul.f32 %v225, %v2303
  %v2569 = vmul.f32 %v226, %v2278
  %v2570 = vmul.f32 %v226, %v2283
  %v2571 = vmul.f32 %v226, %v2288
  %v2572 = vmul.f32 %v226, %v2293
  %v2573 = vmul.f32 %v226, %v2298
  %v2574 = vmul.f32 %v226, %v2303
  %v2575 = vmul.f32 %v227, %v2278
  %v2576 = vmul.f32 %v227, %v2283
  %v2577 = vmul.f32 %v227, %v2288
  %v2578 = vmul.f32 %v227, %v2293
  %v2579 = vmul.f32 %v227, %v2298
  %v2580 = vmul.f32 %v227, %v2303
  %v2581 = vmul.f32 %v228, %v2278
  %v2582 = vmul.f32 %v228, %v2283
  %v2583 = vmul.f32 %v228, %v2288
  %v2584 = vmul.f32 %v228, %v2293
  %v2585 = vmul.f32 %v228, %v2298
  %v2586 = vmul.f32 %v228, %v2303
  %v2587 = vmul.f32 %v229, %v2278
  %v2588 = vmul.f32 %v229, %v2283
  %v2589 = vmul.f32 %v229, %v2288
  %v2590 = vmul.f32 %v229, %v2293
  %v2591 = vmul.f32 %v229, %v2298
  %v2592 = vmul.f32 %v229, %v2303
  %v2593 = vmul.f32 %v230, %v2278
  %v2594 = vmul.f32 %v230, %v2283
  %v2595 = vmul.f32 %v230, %v2288
  %v2596 = vmul.f32 %v230, %v2293
  %v2597 = vmul.f32 %v230, %v2298
  %v2598 = vmul.f32 %v230, %v2303
  %v2599 = vmul.f32 %v231, %v2278
  %v2600 = vmul.f32 %v231, %v2283
  %v2601 = vmul.f32 %v231, %v2288
  %v2602 = vmul.f32 %v231, %v2293
  %v2603 = vmul.f32 %v231, %v2298
  %v2604 = vmul.f32 %v231, %v2303
  %v2605 = vmul.f32 %v232, %v2278
  %v2606 = vmul.f32 %v232, %v2283
  %v2607 = vmul.f32 %v232, %v2288
  %v2608 = vmul.f32 %v232, %v2293
  %v2609 = vmul.f32 %v232, %v2298
  %v2610 = vmul.f32 %v232, %v2303
  %v2611 = vmul.f32 %v233, %v2278
  %v2612 = vmul.f32 %v233, %v2283
  %v2613 = vmul.f32 %v233, %v2288
  %v2614 = vmul.f32 %v233, %v2293
  %v2615 = vmul.f32 %v233, %v2298
  %v2616 = vmul.f32 %v233, %v2303
  %v2617 = vmul.f32 %v234, %v2278
  %v2618 = vmul.f32 %v234, %v2283
  %v2619 = vmul.f32 %v234, %v2288
  %v2620 = vmul.f32 %v234, %v2293
  %v2621 = vmul.f32 %v234, %v2298
  %v2622 = vmul.f32 %v234, %v2303
  %v2623 = vmul.f32 %v235, %v2278
  %v2624 = vmul.f32 %v235, %v2283
  %v2625 = vmul.f32 %v235, %v2288
  %v2626 = vmul.f32 %v235, %v2293
  %v2627 = vmul.f32 %v235, %v2298
  %v2628 = vmul.f32 %v235, %v2303
  %v2629 = vmul.f32 %v236, %v2278
  %v2630 = vmul.f32 %v236, %v2283
  %v2631 = vmul.f32 %v236, %v2288
  %v2632 = vmul.f32 %v236, %v2293
  %v2633 = vmul.f32 %v236, %v2298
  %v2634 = vmul.f32 %v236, %v2303
  %v2635 = vmul.f32 %v237, %v2278
  %v2636 = vmul.f32 %v237, %v2283
  %v2637 = vmul.f32 %v237, %v2288
  %v2638 = vmul.f32 %v237, %v2293
  %v2639 = vmul.f32 %v237, %v2298
  %v2640 = vmul.f32 %v237, %v2303
  %v2641 = vmul.f32 %v238, %v2278
  %v2642 = vmul.f32 %v238, %v2283
  %v2643 = vmul.f32 %v238, %v2288
  %v2644 = vmul.f32 %v238, %v2293
  %v2645 = vmul.f32 %v238, %v2298
  %v2646 = vmul.f32 %v238, %v2303
  %v2647 = vmul.f32 %v239, %v2278
  %v2648 = vmul.f32 %v239, %v2283
  %v2649 = vmul.f32 %v239, %v2288
  %v2650 = vmul.f32 %v239, %v2293
  %v2651 = vmul.f32 %v239, %v2298
  %v2652 = vmul.f32 %v239, %v2303
  %v2653 = vmul.f32 %v240, %v2278
  %v2654 = vmul.f32 %v240, %v2283
  %v2655 = vmul.f32 %v240, %v2288
  %v2656 = vmul.f32 %v240, %v2293
  %v2657 = vmul.f32 %v240, %v2298
  %v2658 = vmul.f32 %v240, %v2303
  %v2659 = vmul.f32 %v241, %v2278
  %v2660 = vmul.f32 %v241, %v2283
  %v2661 = vmul.f32 %v241, %v2288
  %v2662 = vmul.f32 %v241, %v2293
  %v2663 = vmul.f32 %v241, %v2298
  %v2664 = vmul.f32 %v241, %v2303
  %v2665 = vmul.f32 %v242, %v2278
  %v2666 = vmul.f32 %v242, %v2283
  %v2667 = vmul.f32 %v242, %v2288
  %v2668 = vmul.f32 %v242, %v2293
  %v2669 = vmul.f32 %v242, %v2298
  %v2670 = vmul.f32 %v242, %v2303
  %v2671 = vmul.f32 %v243, %v2278
  %v2672 = vmul.f32 %v243, %v2283
  %v2673 = vmul.f32 %v243, %v2288
  %v2674 = vmul.f32 %v243, %v2293
  %v2675 = vmul.f32 %v243, %v2298
  %v2676 = vmul.f32 %v243, %v2303
  %v2677 = vmul.f32 %v244, %v2278
  %v2678 = vmul.f32 %v244, %v2283
  %v2679 = vmul.f32 %v244, %v2288
  %v2680 = vmul.f32 %v244, %v2293
  %v2681 = vmul.f32 %v244, %v2298
  %v2682 = vmul.f32 %v244, %v2303
  %v2683 = vmul.f32 %v245, %v2278
  %v2684 = vmul.f32 %v245, %v2283
  %v2685 = vmul.f32 %v245, %v2288
  %v2686 = vmul.f32 %v245, %v2293
  %v2687 = vmul.f32 %v245, %v2298
  %v2688 = vmul.f32 %v245, %v2303
  %v2689 = vmul.f32 %v246, %v2278
  %v2690 = vmul.f32 %v246, %v2283
  %v2691 = vmul.f32 %v246, %v2288
  %v2692 = vmul.f32 %v246, %v2293
  %v2693 = vmul.f32 %v246, %v2298
  %v2694 = vmul.f32 %v246, %v2303
  %v2695 = vmul.f32 %v247, %v2278
  %v2696 = vmul.f32 %v247, %v2283
  %v2697 = vmul.f32 %v247, %v2288
  %v2698 = vmul.f32 %v247, %v2293
  %v2699 = vmul.f32 %v247, %v2298
  %v2700 = vmul.f32 %v247, %v2303
  %v2701 = vmul.f32 %v248, %v2278
  %v2702 = vmul.f32 %v248, %v2283
  %v2703 = vmul.f32 %v248, %v2288
  %v2704 = vmul.f32 %v248, %v2293
  %v2705 = vmul.f32 %v248, %v2298
  %v2706 = vmul.f32 %v248, %v2303
  %v2707 = vmul.f32 %v249, %v2278
  %v2708 = vmul.f32 %v249, %v2283
  %v2709 = vmul.f32 %v249, %v2288
  %v2710 = vmul.f32 %v249, %v2293
  %v2711 = vmul.f32 %v249, %v2298
  %v2712 = vmul.f32 %v249, %v2303
  %v2713 = vmul.f32 %v250, %v2278
  %v2714 = vmul.f32 %v250, %v2283
  %v2715 = vmul.f32 %v250, %v2288
  %v2716 = vmul.f32 %v250, %v2293
  %v2717 = vmul.f32 %v250, %v2298
  %v2718 = vmul.f32 %v250, %v2303
  %v2719 = vmul.f32 %v251, %v2278
  %v2720 = vmul.f32 %v251, %v2283
  %v2721 = vmul.f32 %v251, %v2288
  %v2722 = vmul.f32 %v251, %v2293
  %v2723 = vmul.f32 %v251, %v2298
  %v2724 = vmul.f32 %v251, %v2303
  %v2725 = vmul.f32 %v252, %v2278
  %v2726 = vmul.f32 %v252, %v2283
  %v2727 = vmul.f32 %v252, %v2288
  %v2728 = vmul.f32 %v252, %v2293
  %v2729 = vmul.f32 %v252, %v2298
  %v2730 = vmul.f32 %v252, %v2303
  %v2731 = vmul.f32 %v253, %v2278
  %v2732 = vmul.f32 %v253, %v2283
  %v2733 = vmul.f32 %v253, %v2288
  %v2734 = vmul.f32 %v253, %v2293
  %v2735 = vmul.f32 %v253, %v2298
  %v2736 = vmul.f32 %v253, %v2303
  %v2737 = vmul.f32 %v254, %v2278
  %v2738 = vmul.f32 %v254, %v2283
  %v2739 = vmul.f32 %v254, %v2288
  %v2740 = vmul.f32 %v254, %v2293
  %v2741 = vmul.f32 %v254, %v2298
  %v2742 = vmul.f32 %v254, %v2303
  %v2743 = vmul.f32 %v255, %v2278
  %v2744 = vmul.f32 %v255, %v2283
  %v2745 = vmul.f32 %v255, %v2288
  %v2746 = vmul.f32 %v255, %v2293
  %v2747 = vmul.f32 %v255, %v2298
  %v2748 = vmul.f32 %v255, %v2303
  %v2749 = vmul.f32 %v256, %v2278
  %v2750 = vmul.f32 %v256, %v2283
  %v2751 = vmul.f32 %v256, %v2288
  %v2752 = vmul.f32 %v256, %v2293
  %v2753 = vmul.f32 %v256, %v2298
  %v2754 = vmul.f32 %v256, %v2303
  %v2755 = vmul.f32 %v257, %v2278
  %v2756 = vmul.f32 %v257, %v2283
  %v2757 = vmul.f32 %v257, %v2288
  %v2758 = vmul.f32 %v257, %v2293
  %v2759 = vmul.f32 %v257, %v2298
  %v2760 = vmul.f32 %v257, %v2303
  %v2761 = vmul.f32 %v258, %v2278
  %v2762 = vmul.f32 %v258, %v2283
  %v2763 = vmul.f32 %v258, %v2288
  %v2764 = vmul.f32 %v258, %v2293
  %v2765 = vmul.f32 %v258, %v2298
  %v2766 = vmul.f32 %v258, %v2303
  %v2767 = vmul.f32 %v259, %v2278
  %v2768 = vmul.f32 %v259, %v2283
  %v2769 = vmul.f32 %v259, %v2288
  %v2770 = vmul.f32 %v259, %v2293
  %v2771 = vmul.f32 %v259, %v2298
  %v2772 = vmul.f32 %v259, %v2303
  %v2773 = vmul.f32 %v260, %v2278
  %v2774 = vmul.f32 %v260, %v2283
  %v2775 = vmul.f32 %v260, %v2288
  %v2776 = vmul.f32 %v260, %v2293
  %v2777 = vmul.f32 %v260, %v2298
  %v2778 = vmul.f32 %v260, %v2303
  %v2779 = vmul.f32 %v261, %v2278
  %v2780 = vmul.f32 %v261, %v2283
  %v2781 = vmul.f32 %v261, %v2288
  %v2782 = vmul.f32 %v261, %v2293
  %v2783 = vmul.f32 %v261, %v2298
  %v2784 = vmul.f32 %v261, %v2303
  %v2785 = vmul.f32 %v262, %v2278
  %v2786 = vmul.f32 %v262, %v2283
  %v2787 = vmul.f32 %v262, %v2288
  %v2788 = vmul.f32 %v262, %v2293
  %v2789 = vmul.f32 %v262, %v2298
  %v2790 = vmul.f32 %v262, %v2303
  %v2791 = vmul.f32 %v263, %v2278
  %v2792 = vmul.f32 %v263, %v2283
  %v2793 = vmul.f32 %v263, %v2288
  %v2794 = vmul.f32 %v263, %v2293
  %v2795 = vmul.f32 %v263, %v2298
  %v2796 = vmul.f32 %v263, %v2303
  %v2797 = vmul.f32 %v264, %v2278
  %v2798 = vmul.f32 %v264, %v2283
  %v2799 = vmul.f32 %v264, %v2288
  %v2800 = vmul.f32 %v264, %v2293
  %v2801 = vmul.f32 %v264, %v2298
  %v2802 = vmul.f32 %v264, %v2303
  %v2803 = vmul.f32 %v265, %v2278
  %v2804 = vmul.f32 %v265, %v2283
  %v2805 = vmul.f32 %v265, %v2288
  %v2806 = vmul.f32 %v265, %v2293
  %v2807 = vmul.f32 %v265, %v2298
  %v2808 = vmul.f32 %v265, %v2303
  %v2809 = vmul.f32 %v266, %v2278
  %v2810 = vmul.f32 %v266, %v2283
  %v2811 = vmul.f32 %v266, %v2288
  %v2812 = vmul.f32 %v266, %v2293
  %v2813 = vmul.f32 %v266, %v2298
  %v2814 = vmul.f32 %v266, %v2303
  %v2815 = vmul.f32 %v267, %v2278
  %v2816 = vmul.f32 %v267, %v2283
  %v2817 = vmul.f32 %v267, %v2288
  %v2818 = vmul.f32 %v267, %v2293
  %v2819 = vmul.f32 %v267, %v2298
  %v2820 = vmul.f32 %v267, %v2303
  %v2821 = vmul.f32 %v268, %v2278
  %v2822 = vmul.f32 %v268, %v2283
  %v2823 = vmul.f32 %v268, %v2288
  %v2824 = vmul.f32 %v268, %v2293
  %v2825 = vmul.f32 %v268, %v2298
  %v2826 = vmul.f32 %v268, %v2303
  %v2827 = vmul.f32 %v269, %v2278
  %v2828 = vmul.f32 %v269, %v2283
  %v2829 = vmul.f32 %v269, %v2288
  %v2830 = vmul.f32 %v269, %v2293
  %v2831 = vmul.f32 %v269, %v2298
  %v2832 = vmul.f32 %v269, %v2303
  %v2833 = vmul.f32 %v270, %v2278
  %v2834 = vmul.f32 %v270, %v2283
  %v2835 = vmul.f32 %v270, %v2288
  %v2836 = vmul.f32 %v270, %v2293
  %v2837 = vmul.f32 %v270, %v2298
  %v2838 = vmul.f32 %v270, %v2303
  %v2839 = vmul.f32 %v271, %v2278
  %v2840 = vmul.f32 %v271, %v2283
  %v2841 = vmul.f32 %v271, %v2288
  %v2842 = vmul.f32 %v271, %v2293
  %v2843 = vmul.f32 %v271, %v2298
  %v2844 = vmul.f32 %v271, %v2303
  %v2845 = vmul.f32 %v272, %v2278
  %v2846 = vmul.f32 %v272, %v2283
  %v2847 = vmul.f32 %v272, %v2288
  %v2848 = vmul.f32 %v272, %v2293
  %v2849 = vmul.f32 %v272, %v2298
  %v2850 = vmul.f32 %v272, %v2303
  %v2851 = vmul.f32 %v273, %v2278
  %v2852 = vmul.f32 %v273, %v2283
  %v2853 = vmul.f32 %v273, %v2288
  %v2854 = vmul.f32 %v273, %v2293
  %v2855 = vmul.f32 %v273, %v2298
  %v2856 = vmul.f32 %v273, %v2303
  %v2857 = vmul.f32 %v274, %v2278
  %v2858 = vmul.f32 %v274, %v2283
  %v2859 = vmul.f32 %v274, %v2288
  %v2860 = vmul.f32 %v274, %v2293
  %v2861 = vmul.f32 %v274, %v2298
  %v2862 = vmul.f32 %v274, %v2303
  %v2863 = vmul.f32 %v275, %v2278
  %v2864 = vmul.f32 %v275, %v2283
  %v2865 = vmul.f32 %v275, %v2288
  %v2866 = vmul.f32 %v275, %v2293
  %v2867 = vmul.f32 %v275, %v2298
  %v2868 = vmul.f32 %v275, %v2303
  %v2869 = vmul.f32 %v276, %v2278
  %v2870 = vmul.f32 %v276, %v2283
  %v2871 = vmul.f32 %v276, %v2288
  %v2872 = vmul.f32 %v276, %v2293
  %v2873 = vmul.f32 %v276, %v2298
  %v2874 = vmul.f32 %v276, %v2303
  %v2875 = vmul.f32 %v277, %v2278
  %v2876 = vmul.f32 %v277, %v2283
  %v2877 = vmul.f32 %v277, %v2288
  %v2878 = vmul.f32 %v277, %v2293
  %v2879 = vmul.f32 %v277, %v2298
  %v2880 = vmul.f32 %v277, %v2303
  %v2881 = vmul.f32 %v278, %v2278
  %v2882 = vmul.f32 %v278, %v2283
  %v2883 = vmul.f32 %v278, %v2288
  %v2884 = vmul.f32 %v278, %v2293
  %v2885 = vmul.f32 %v278, %v2298
  %v2886 = vmul.f32 %v278, %v2303
  %v2887 = vmul.f32 %v279, %v2278
  %v2888 = vmul.f32 %v279, %v2283
  %v2889 = vmul.f32 %v279, %v2288
  %v2890 = vmul.f32 %v279, %v2293
  %v2891 = vmul.f32 %v279, %v2298
  %v2892 = vmul.f32 %v279, %v2303
  %v2893 = vmul.f32 %v280, %v2278
  %v2894 = vmul.f32 %v280, %v2283
  %v2895 = vmul.f32 %v280, %v2288
  %v2896 = vmul.f32 %v280, %v2293
  %v2897 = vmul.f32 %v280, %v2298
  %v2898 = vmul.f32 %v280, %v2303
  %v2899 = vmul.f32 %v281, %v2278
  %v2900 = vmul.f32 %v281, %v2283
  %v2901 = vmul.f32 %v281, %v2288
  %v2902 = vmul.f32 %v281, %v2293
  %v2903 = vmul.f32 %v281, %v2298
  %v2904 = vmul.f32 %v281, %v2303
  %v2905 = vmul.f32 %v282, %v2278
  %v2906 = vmul.f32 %v282, %v2283
  %v2907 = vmul.f32 %v282, %v2288
  %v2908 = vmul.f32 %v282, %v2293
  %v2909 = vmul.f32 %v282, %v2298
  %v2910 = vmul.f32 %v282, %v2303
  %v2911 = vld [vmem:[%s7] sm:$0xff]
  %v2912 = vld [vmem:[%s7 + $0x8] sm:$0xff]
  %v2913 = vld [vmem:[%s7 + $0x10] sm:$0xff]
  %v2914 = vld [vmem:[%s7 + $0x18] sm:$0xff]
  %v2915 = vld [vmem:[%s7 + $0x20] sm:$0xff]
  %v2916 = vld [vmem:[%s7 + $0x28] sm:$0xff]
  %2918 = vset.pattern.permute.xlu0 0
  %2919 = vperm.xlu0 %2918, %v2911
  %v2920 = vpop.permute.xlu0 %2919
  %2923 = vset.pattern.permute.xlu0 0
  %2924 = vperm.xlu0 %2923, %v2912
  %v2925 = vpop.permute.xlu0 %2924
  %2928 = vset.pattern.permute.xlu0 0
  %2929 = vperm.xlu0 %2928, %v2913
  %v2930 = vpop.permute.xlu0 %2929
  %2933 = vset.pattern.permute.xlu0 0
  %2934 = vperm.xlu0 %2933, %v2914
  %v2935 = vpop.permute.xlu0 %2934
  %2938 = vset.pattern.permute.xlu0 0
  %2939 = vperm.xlu0 %2938, %v2915
  %v2940 = vpop.permute.xlu0 %2939
  %2943 = vset.pattern.permute.xlu0 0
  %2944 = vperm.xlu0 %2943, %v2916
  %v2945 = vpop.permute.xlu0 %2944
  %v2947 = vadd.f32 %v2305, %v2920
  %v2948 = vadd.f32 %v2306, %v2925
  %v2949 = vadd.f32 %v2307, %v2930
  %v2950 = vadd.f32 %v2308, %v2935
  %v2951 = vadd.f32 %v2309, %v2940
  %v2952 = vadd.f32 %v2310, %v2945
  %v2953 = vadd.f32 %v2311, %v2920
  %v2954 = vadd.f32 %v2312, %v2925
  %v2955 = vadd.f32 %v2313, %v2930
  %v2956 = vadd.f32 %v2314, %v2935
  %v2957 = vadd.f32 %v2315, %v2940
  %v2958 = vadd.f32 %v2316, %v2945
  %v2959 = vadd.f32 %v2317, %v2920
  %v2960 = vadd.f32 %v2318, %v2925
  %v2961 = vadd.f32 %v2319, %v2930
  %v2962 = vadd.f32 %v2320, %v2935
  %v2963 = vadd.f32 %v2321, %v2940
  %v2964 = vadd.f32 %v2322, %v2945
  %v2965 = vadd.f32 %v2323, %v2920
  %v2966 = vadd.f32 %v2324, %v2925
  %v2967 = vadd.f32 %v2325, %v2930
  %v2968 = vadd.f32 %v2326, %v2935
  %v2969 = vadd.f32 %v2327, %v2940
  %v2970 = vadd.f32 %v2328, %v2945
  %v2971 = vadd.f32 %v2329, %v2920
  %v2972 = vadd.f32 %v2330, %v2925
  %v2973 = vadd.f32 %v2331, %v2930
  %v2974 = vadd.f32 %v2332, %v2935
  %v2975 = vadd.f32 %v2333, %v2940
  %v2976 = vadd.f32 %v2334, %v2945
  %v2977 = vadd.f32 %v2335, %v2920
  %v2978 = vadd.f32 %v2336, %v2925
  %v2979 = vadd.f32 %v2337, %v2930
  %v2980 = vadd.f32 %v2338, %v2935
  %v2981 = vadd.f32 %v2339, %v2940
  %v2982 = vadd.f32 %v2340, %v2945
  %v2983 = vadd.f32 %v2341, %v2920
  %v2984 = vadd.f32 %v2342, %v2925
  %v2985 = vadd.f32 %v2343, %v2930
  %v2986 = vadd.f32 %v2344, %v2935
  %v2987 = vadd.f32 %v2345, %v2940
  %v2988 = vadd.f32 %v2346, %v2945
  %v2989 = vadd.f32 %v2347, %v2920
  %v2990 = vadd.f32 %v2348, %v2925
  %v2991 = vadd.f32 %v2349, %v2930
  %v2992 = vadd.f32 %v2350, %v2935
  %v2993 = vadd.f32 %v2351, %v2940
  %v2994 = vadd.f32 %v2352, %v2945
  %v2995 = vadd.f32 %v2353, %v2920
  %v2996 = vadd.f32 %v2354, %v2925
  %v2997 = vadd.f32 %v2355, %v2930
  %v2998 = vadd.f32 %v2356, %v2935
  %v2999 = vadd.f32 %v2357, %v2940
  %v3000 = vadd.f32 %v2358, %v2945
  %v3001 = vadd.f32 %v2359, %v2920
  %v3002 = vadd.f32 %v2360, %v2925
  %v3003 = vadd.f32 %v2361, %v2930
  %v3004 = vadd.f32 %v2362, %v2935
  %v3005 = vadd.f32 %v2363, %v2940
  %v3006 = vadd.f32 %v2364, %v2945
  %v3007 = vadd.f32 %v2365, %v2920
  %v3008 = vadd.f32 %v2366, %v2925
  %v3009 = vadd.f32 %v2367, %v2930
  %v3010 = vadd.f32 %v2368, %v2935
  %v3011 = vadd.f32 %v2369, %v2940
  %v3012 = vadd.f32 %v2370, %v2945
  %v3013 = vadd.f32 %v2371, %v2920
  %v3014 = vadd.f32 %v2372, %v2925
  %v3015 = vadd.f32 %v2373, %v2930
  %v3016 = vadd.f32 %v2374, %v2935
  %v3017 = vadd.f32 %v2375, %v2940
  %v3018 = vadd.f32 %v2376, %v2945
  %v3019 = vadd.f32 %v2377, %v2920
  %v3020 = vadd.f32 %v2378, %v2925
  %v3021 = vadd.f32 %v2379, %v2930
  %v3022 = vadd.f32 %v2380, %v2935
  %v3023 = vadd.f32 %v2381, %v2940
  %v3024 = vadd.f32 %v2382, %v2945
  %v3025 = vadd.f32 %v2383, %v2920
  %v3026 = vadd.f32 %v2384, %v2925
  %v3027 = vadd.f32 %v2385, %v2930
  %v3028 = vadd.f32 %v2386, %v2935
  %v3029 = vadd.f32 %v2387, %v2940
  %v3030 = vadd.f32 %v2388, %v2945
  %v3031 = vadd.f32 %v2389, %v2920
  %v3032 = vadd.f32 %v2390, %v2925
  %v3033 = vadd.f32 %v2391, %v2930
  %v3034 = vadd.f32 %v2392, %v2935
  %v3035 = vadd.f32 %v2393, %v2940
  %v3036 = vadd.f32 %v2394, %v2945
  %v3037 = vadd.f32 %v2395, %v2920
  %v3038 = vadd.f32 %v2396, %v2925
  %v3039 = vadd.f32 %v2397, %v2930
  %v3040 = vadd.f32 %v2398, %v2935
  %v3041 = vadd.f32 %v2399, %v2940
  %v3042 = vadd.f32 %v2400, %v2945
  %v3043 = vadd.f32 %v2401, %v2920
  %v3044 = vadd.f32 %v2402, %v2925
  %v3045 = vadd.f32 %v2403, %v2930
  %v3046 = vadd.f32 %v2404, %v2935
  %v3047 = vadd.f32 %v2405, %v2940
  %v3048 = vadd.f32 %v2406, %v2945
  %v3049 = vadd.f32 %v2407, %v2920
  %v3050 = vadd.f32 %v2408, %v2925
  %v3051 = vadd.f32 %v2409, %v2930
  %v3052 = vadd.f32 %v2410, %v2935
  %v3053 = vadd.f32 %v2411, %v2940
  %v3054 = vadd.f32 %v2412, %v2945
  %v3055 = vadd.f32 %v2413, %v2920
  %v3056 = vadd.f32 %v2414, %v2925
  %v3057 = vadd.f32 %v2415, %v2930
  %v3058 = vadd.f32 %v2416, %v2935
  %v3059 = vadd.f32 %v2417, %v2940
  %v3060 = vadd.f32 %v2418, %v2945
  %v3061 = vadd.f32 %v2419, %v2920
  %v3062 = vadd.f32 %v2420, %v2925
  %v3063 = vadd.f32 %v2421, %v2930
  %v3064 = vadd.f32 %v2422, %v2935
  %v3065 = vadd.f32 %v2423, %v2940
  %v3066 = vadd.f32 %v2424, %v2945
  %v3067 = vadd.f32 %v2425, %v2920
  %v3068 = vadd.f32 %v2426, %v2925
  %v3069 = vadd.f32 %v2427, %v2930
  %v3070 = vadd.f32 %v2428, %v2935
  %v3071 = vadd.f32 %v2429, %v2940
  %v3072 = vadd.f32 %v2430, %v2945
  %v3073 = vadd.f32 %v2431, %v2920
  %v3074 = vadd.f32 %v2432, %v2925
  %v3075 = vadd.f32 %v2433, %v2930
  %v3076 = vadd.f32 %v2434, %v2935
  %v3077 = vadd.f32 %v2435, %v2940
  %v3078 = vadd.f32 %v2436, %v2945
  %v3079 = vadd.f32 %v2437, %v2920
  %v3080 = vadd.f32 %v2438, %v2925
  %v3081 = vadd.f32 %v2439, %v2930
  %v3082 = vadd.f32 %v2440, %v2935
  %v3083 = vadd.f32 %v2441, %v2940
  %v3084 = vadd.f32 %v2442, %v2945
  %v3085 = vadd.f32 %v2443, %v2920
  %v3086 = vadd.f32 %v2444, %v2925
  %v3087 = vadd.f32 %v2445, %v2930
  %v3088 = vadd.f32 %v2446, %v2935
  %v3089 = vadd.f32 %v2447, %v2940
  %v3090 = vadd.f32 %v2448, %v2945
  %v3091 = vadd.f32 %v2449, %v2920
  %v3092 = vadd.f32 %v2450, %v2925
  %v3093 = vadd.f32 %v2451, %v2930
  %v3094 = vadd.f32 %v2452, %v2935
  %v3095 = vadd.f32 %v2453, %v2940
  %v3096 = vadd.f32 %v2454, %v2945
  %v3097 = vadd.f32 %v2455, %v2920
  %v3098 = vadd.f32 %v2456, %v2925
  %v3099 = vadd.f32 %v2457, %v2930
  %v3100 = vadd.f32 %v2458, %v2935
  %v3101 = vadd.f32 %v2459, %v2940
  %v3102 = vadd.f32 %v2460, %v2945
  %v3103 = vadd.f32 %v2461, %v2920
  %v3104 = vadd.f32 %v2462, %v2925
  %v3105 = vadd.f32 %v2463, %v2930
  %v3106 = vadd.f32 %v2464, %v2935
  %v3107 = vadd.f32 %v2465, %v2940
  %v3108 = vadd.f32 %v2466, %v2945
  %v3109 = vadd.f32 %v2467, %v2920
  %v3110 = vadd.f32 %v2468, %v2925
  %v3111 = vadd.f32 %v2469, %v2930
  %v3112 = vadd.f32 %v2470, %v2935
  %v3113 = vadd.f32 %v2471, %v2940
  %v3114 = vadd.f32 %v2472, %v2945
  %v3115 = vadd.f32 %v2473, %v2920
  %v3116 = vadd.f32 %v2474, %v2925
  %v3117 = vadd.f32 %v2475, %v2930
  %v3118 = vadd.f32 %v2476, %v2935
  %v3119 = vadd.f32 %v2477, %v2940
  %v3120 = vadd.f32 %v2478, %v2945
  %v3121 = vadd.f32 %v2479, %v2920
  %v3122 = vadd.f32 %v2480, %v2925
  %v3123 = vadd.f32 %v2481, %v2930
  %v3124 = vadd.f32 %v2482, %v2935
  %v3125 = vadd.f32 %v2483, %v2940
  %v3126 = vadd.f32 %v2484, %v2945
  %v3127 = vadd.f32 %v2485, %v2920
  %v3128 = vadd.f32 %v2486, %v2925
  %v3129 = vadd.f32 %v2487, %v2930
  %v3130 = vadd.f32 %v2488, %v2935
  %v3131 = vadd.f32 %v2489, %v2940
  %v3132 = vadd.f32 %v2490, %v2945
  %v3133 = vadd.f32 %v2491, %v2920
  %v3134 = vadd.f32 %v2492, %v2925
  %v3135 = vadd.f32 %v2493, %v2930
  %v3136 = vadd.f32 %v2494, %v2935
  %v3137 = vadd.f32 %v2495, %v2940
  %v3138 = vadd.f32 %v2496, %v2945
  %v3139 = vadd.f32 %v2497, %v2920
  %v3140 = vadd.f32 %v2498, %v2925
  %v3141 = vadd.f32 %v2499, %v2930
  %v3142 = vadd.f32 %v2500, %v2935
  %v3143 = vadd.f32 %v2501, %v2940
  %v3144 = vadd.f32 %v2502, %v2945
  %v3145 = vadd.f32 %v2503, %v2920
  %v3146 = vadd.f32 %v2504, %v2925
  %v3147 = vadd.f32 %v2505, %v2930
  %v3148 = vadd.f32 %v2506, %v2935
  %v3149 = vadd.f32 %v2507, %v2940
  %v3150 = vadd.f32 %v2508, %v2945
  %v3151 = vadd.f32 %v2509, %v2920
  %v3152 = vadd.f32 %v2510, %v2925
  %v3153 = vadd.f32 %v2511, %v2930
  %v3154 = vadd.f32 %v2512, %v2935
  %v3155 = vadd.f32 %v2513, %v2940
  %v3156 = vadd.f32 %v2514, %v2945
  %v3157 = vadd.f32 %v2515, %v2920
  %v3158 = vadd.f32 %v2516, %v2925
  %v3159 = vadd.f32 %v2517, %v2930
  %v3160 = vadd.f32 %v2518, %v2935
  %v3161 = vadd.f32 %v2519, %v2940
  %v3162 = vadd.f32 %v2520, %v2945
  %v3163 = vadd.f32 %v2521, %v2920
  %v3164 = vadd.f32 %v2522, %v2925
  %v3165 = vadd.f32 %v2523, %v2930
  %v3166 = vadd.f32 %v2524, %v2935
  %v3167 = vadd.f32 %v2525, %v2940
  %v3168 = vadd.f32 %v2526, %v2945
  %v3169 = vadd.f32 %v2527, %v2920
  %v3170 = vadd.f32 %v2528, %v2925
  %v3171 = vadd.f32 %v2529, %v2930
  %v3172 = vadd.f32 %v2530, %v2935
  %v3173 = vadd.f32 %v2531, %v2940
  %v3174 = vadd.f32 %v2532, %v2945
  %v3175 = vadd.f32 %v2533, %v2920
  %v3176 = vadd.f32 %v2534, %v2925
  %v3177 = vadd.f32 %v2535, %v2930
  %v3178 = vadd.f32 %v2536, %v2935
  %v3179 = vadd.f32 %v2537, %v2940
  %v3180 = vadd.f32 %v2538, %v2945
  %v3181 = vadd.f32 %v2539, %v2920
  %v3182 = vadd.f32 %v2540, %v2925
  %v3183 = vadd.f32 %v2541, %v2930
  %v3184 = vadd.f32 %v2542, %v2935
  %v3185 = vadd.f32 %v2543, %v2940
  %v3186 = vadd.f32 %v2544, %v2945
  %v3187 = vadd.f32 %v2545, %v2920
  %v3188 = vadd.f32 %v2546, %v2925
  %v3189 = vadd.f32 %v2547, %v2930
  %v3190 = vadd.f32 %v2548, %v2935
  %v3191 = vadd.f32 %v2549, %v2940
  %v3192 = vadd.f32 %v2550, %v2945
  %v3193 = vadd.f32 %v2551, %v2920
  %v3194 = vadd.f32 %v2552, %v2925
  %v3195 = vadd.f32 %v2553, %v2930
  %v3196 = vadd.f32 %v2554, %v2935
  %v3197 = vadd.f32 %v2555, %v2940
  %v3198 = vadd.f32 %v2556, %v2945
  %v3199 = vadd.f32 %v2557, %v2920
  %v3200 = vadd.f32 %v2558, %v2925
  %v3201 = vadd.f32 %v2559, %v2930
  %v3202 = vadd.f32 %v2560, %v2935
  %v3203 = vadd.f32 %v2561, %v2940
  %v3204 = vadd.f32 %v2562, %v2945
  %v3205 = vadd.f32 %v2563, %v2920
  %v3206 = vadd.f32 %v2564, %v2925
  %v3207 = vadd.f32 %v2565, %v2930
  %v3208 = vadd.f32 %v2566, %v2935
  %v3209 = vadd.f32 %v2567, %v2940
  %v3210 = vadd.f32 %v2568, %v2945
  %v3211 = vadd.f32 %v2569, %v2920
  %v3212 = vadd.f32 %v2570, %v2925
  %v3213 = vadd.f32 %v2571, %v2930
  %v3214 = vadd.f32 %v2572, %v2935
  %v3215 = vadd.f32 %v2573, %v2940
  %v3216 = vadd.f32 %v2574, %v2945
  %v3217 = vadd.f32 %v2575, %v2920
  %v3218 = vadd.f32 %v2576, %v2925
  %v3219 = vadd.f32 %v2577, %v2930
  %v3220 = vadd.f32 %v2578, %v2935
  %v3221 = vadd.f32 %v2579, %v2940
  %v3222 = vadd.f32 %v2580, %v2945
  %v3223 = vadd.f32 %v2581, %v2920
  %v3224 = vadd.f32 %v2582, %v2925
  %v3225 = vadd.f32 %v2583, %v2930
  %v3226 = vadd.f32 %v2584, %v2935
  %v3227 = vadd.f32 %v2585, %v2940
  %v3228 = vadd.f32 %v2586, %v2945
  %v3229 = vadd.f32 %v2587, %v2920
  %v3230 = vadd.f32 %v2588, %v2925
  %v3231 = vadd.f32 %v2589, %v2930
  %v3232 = vadd.f32 %v2590, %v2935
  %v3233 = vadd.f32 %v2591, %v2940
  %v3234 = vadd.f32 %v2592, %v2945
  %v3235 = vadd.f32 %v2593, %v2920
  %v3236 = vadd.f32 %v2594, %v2925
  %v3237 = vadd.f32 %v2595, %v2930
  %v3238 = vadd.f32 %v2596, %v2935
  %v3239 = vadd.f32 %v2597, %v2940
  %v3240 = vadd.f32 %v2598, %v2945
  %v3241 = vadd.f32 %v2599, %v2920
  %v3242 = vadd.f32 %v2600, %v2925
  %v3243 = vadd.f32 %v2601, %v2930
  %v3244 = vadd.f32 %v2602, %v2935
  %v3245 = vadd.f32 %v2603, %v2940
  %v3246 = vadd.f32 %v2604, %v2945
  %v3247 = vadd.f32 %v2605, %v2920
  %v3248 = vadd.f32 %v2606, %v2925
  %v3249 = vadd.f32 %v2607, %v2930
  %v3250 = vadd.f32 %v2608, %v2935
  %v3251 = vadd.f32 %v2609, %v2940
  %v3252 = vadd.f32 %v2610, %v2945
  %v3253 = vadd.f32 %v2611, %v2920
  %v3254 = vadd.f32 %v2612, %v2925
  %v3255 = vadd.f32 %v2613, %v2930
  %v3256 = vadd.f32 %v2614, %v2935
  %v3257 = vadd.f32 %v2615, %v2940
  %v3258 = vadd.f32 %v2616, %v2945
  %v3259 = vadd.f32 %v2617, %v2920
  %v3260 = vadd.f32 %v2618, %v2925
  %v3261 = vadd.f32 %v2619, %v2930
  %v3262 = vadd.f32 %v2620, %v2935
  %v3263 = vadd.f32 %v2621, %v2940
  %v3264 = vadd.f32 %v2622, %v2945
  %v3265 = vadd.f32 %v2623, %v2920
  %v3266 = vadd.f32 %v2624, %v2925
  %v3267 = vadd.f32 %v2625, %v2930
  %v3268 = vadd.f32 %v2626, %v2935
  %v3269 = vadd.f32 %v2627, %v2940
  %v3270 = vadd.f32 %v2628, %v2945
  %v3271 = vadd.f32 %v2629, %v2920
  %v3272 = vadd.f32 %v2630, %v2925
  %v3273 = vadd.f32 %v2631, %v2930
  %v3274 = vadd.f32 %v2632, %v2935
  %v3275 = vadd.f32 %v2633, %v2940
  %v3276 = vadd.f32 %v2634, %v2945
  %v3277 = vadd.f32 %v2635, %v2920
  %v3278 = vadd.f32 %v2636, %v2925
  %v3279 = vadd.f32 %v2637, %v2930
  %v3280 = vadd.f32 %v2638, %v2935
  %v3281 = vadd.f32 %v2639, %v2940
  %v3282 = vadd.f32 %v2640, %v2945
  %v3283 = vadd.f32 %v2641, %v2920
  %v3284 = vadd.f32 %v2642, %v2925
  %v3285 = vadd.f32 %v2643, %v2930
  %v3286 = vadd.f32 %v2644, %v2935
  %v3287 = vadd.f32 %v2645, %v2940
  %v3288 = vadd.f32 %v2646, %v2945
  %v3289 = vadd.f32 %v2647, %v2920
  %v3290 = vadd.f32 %v2648, %v2925
  %v3291 = vadd.f32 %v2649, %v2930
  %v3292 = vadd.f32 %v2650, %v2935
  %v3293 = vadd.f32 %v2651, %v2940
  %v3294 = vadd.f32 %v2652, %v2945
  %v3295 = vadd.f32 %v2653, %v2920
  %v3296 = vadd.f32 %v2654, %v2925
  %v3297 = vadd.f32 %v2655, %v2930
  %v3298 = vadd.f32 %v2656, %v2935
  %v3299 = vadd.f32 %v2657, %v2940
  %v3300 = vadd.f32 %v2658, %v2945
  %v3301 = vadd.f32 %v2659, %v2920
  %v3302 = vadd.f32 %v2660, %v2925
  %v3303 = vadd.f32 %v2661, %v2930
  %v3304 = vadd.f32 %v2662, %v2935
  %v3305 = vadd.f32 %v2663, %v2940
  %v3306 = vadd.f32 %v2664, %v2945
  %v3307 = vadd.f32 %v2665, %v2920
  %v3308 = vadd.f32 %v2666, %v2925
  %v3309 = vadd.f32 %v2667, %v2930
  %v3310 = vadd.f32 %v2668, %v2935
  %v3311 = vadd.f32 %v2669, %v2940
  %v3312 = vadd.f32 %v2670, %v2945
  %v3313 = vadd.f32 %v2671, %v2920
  %v3314 = vadd.f32 %v2672, %v2925
  %v3315 = vadd.f32 %v2673, %v2930
  %v3316 = vadd.f32 %v2674, %v2935
  %v3317 = vadd.f32 %v2675, %v2940
  %v3318 = vadd.f32 %v2676, %v2945
  %v3319 = vadd.f32 %v2677, %v2920
  %v3320 = vadd.f32 %v2678, %v2925
  %v3321 = vadd.f32 %v2679, %v2930
  %v3322 = vadd.f32 %v2680, %v2935
  %v3323 = vadd.f32 %v2681, %v2940
  %v3324 = vadd.f32 %v2682, %v2945
  %v3325 = vadd.f32 %v2683, %v2920
  %v3326 = vadd.f32 %v2684, %v2925
  %v3327 = vadd.f32 %v2685, %v2930
  %v3328 = vadd.f32 %v2686, %v2935
  %v3329 = vadd.f32 %v2687, %v2940
  %v3330 = vadd.f32 %v2688, %v2945
  %v3331 = vadd.f32 %v2689, %v2920
  %v3332 = vadd.f32 %v2690, %v2925
  %v3333 = vadd.f32 %v2691, %v2930
  %v3334 = vadd.f32 %v2692, %v2935
  %v3335 = vadd.f32 %v2693, %v2940
  %v3336 = vadd.f32 %v2694, %v2945
  %v3337 = vadd.f32 %v2695, %v2920
  %v3338 = vadd.f32 %v2696, %v2925
  %v3339 = vadd.f32 %v2697, %v2930
  %v3340 = vadd.f32 %v2698, %v2935
  %v3341 = vadd.f32 %v2699, %v2940
  %v3342 = vadd.f32 %v2700, %v2945
  %v3343 = vadd.f32 %v2701, %v2920
  %v3344 = vadd.f32 %v2702, %v2925
  %v3345 = vadd.f32 %v2703, %v2930
  %v3346 = vadd.f32 %v2704, %v2935
  %v3347 = vadd.f32 %v2705, %v2940
  %v3348 = vadd.f32 %v2706, %v2945
  %v3349 = vadd.f32 %v2707, %v2920
  %v3350 = vadd.f32 %v2708, %v2925
  %v3351 = vadd.f32 %v2709, %v2930
  %v3352 = vadd.f32 %v2710, %v2935
  %v3353 = vadd.f32 %v2711, %v2940
  %v3354 = vadd.f32 %v2712, %v2945
  %v3355 = vadd.f32 %v2713, %v2920
  %v3356 = vadd.f32 %v2714, %v2925
  %v3357 = vadd.f32 %v2715, %v2930
  %v3358 = vadd.f32 %v2716, %v2935
  %v3359 = vadd.f32 %v2717, %v2940
  %v3360 = vadd.f32 %v2718, %v2945
  %v3361 = vadd.f32 %v2719, %v2920
  %v3362 = vadd.f32 %v2720, %v2925
  %v3363 = vadd.f32 %v2721, %v2930
  %v3364 = vadd.f32 %v2722, %v2935
  %v3365 = vadd.f32 %v2723, %v2940
  %v3366 = vadd.f32 %v2724, %v2945
  %v3367 = vadd.f32 %v2725, %v2920
  %v3368 = vadd.f32 %v2726, %v2925
  %v3369 = vadd.f32 %v2727, %v2930
  %v3370 = vadd.f32 %v2728, %v2935
  %v3371 = vadd.f32 %v2729, %v2940
  %v3372 = vadd.f32 %v2730, %v2945
  %v3373 = vadd.f32 %v2731, %v2920
  %v3374 = vadd.f32 %v2732, %v2925
  %v3375 = vadd.f32 %v2733, %v2930
  %v3376 = vadd.f32 %v2734, %v2935
  %v3377 = vadd.f32 %v2735, %v2940
  %v3378 = vadd.f32 %v2736, %v2945
  %v3379 = vadd.f32 %v2737, %v2920
  %v3380 = vadd.f32 %v2738, %v2925
  %v3381 = vadd.f32 %v2739, %v2930
  %v3382 = vadd.f32 %v2740, %v2935
  %v3383 = vadd.f32 %v2741, %v2940
  %v3384 = vadd.f32 %v2742, %v2945
  %v3385 = vadd.f32 %v2743, %v2920
  %v3386 = vadd.f32 %v2744, %v2925
  %v3387 = vadd.f32 %v2745, %v2930
  %v3388 = vadd.f32 %v2746, %v2935
  %v3389 = vadd.f32 %v2747, %v2940
  %v3390 = vadd.f32 %v2748, %v2945
  %v3391 = vadd.f32 %v2749, %v2920
  %v3392 = vadd.f32 %v2750, %v2925
  %v3393 = vadd.f32 %v2751, %v2930
  %v3394 = vadd.f32 %v2752, %v2935
  %v3395 = vadd.f32 %v2753, %v2940
  %v3396 = vadd.f32 %v2754, %v2945
  %v3397 = vadd.f32 %v2755, %v2920
  %v3398 = vadd.f32 %v2756, %v2925
  %v3399 = vadd.f32 %v2757, %v2930
  %v3400 = vadd.f32 %v2758, %v2935
  %v3401 = vadd.f32 %v2759, %v2940
  %v3402 = vadd.f32 %v2760, %v2945
  %v3403 = vadd.f32 %v2761, %v2920
  %v3404 = vadd.f32 %v2762, %v2925
  %v3405 = vadd.f32 %v2763, %v2930
  %v3406 = vadd.f32 %v2764, %v2935
  %v3407 = vadd.f32 %v2765, %v2940
  %v3408 = vadd.f32 %v2766, %v2945
  %v3409 = vadd.f32 %v2767, %v2920
  %v3410 = vadd.f32 %v2768, %v2925
  %v3411 = vadd.f32 %v2769, %v2930
  %v3412 = vadd.f32 %v2770, %v2935
  %v3413 = vadd.f32 %v2771, %v2940
  %v3414 = vadd.f32 %v2772, %v2945
  %v3415 = vadd.f32 %v2773, %v2920
  %v3416 = vadd.f32 %v2774, %v2925
  %v3417 = vadd.f32 %v2775, %v2930
  %v3418 = vadd.f32 %v2776, %v2935
  %v3419 = vadd.f32 %v2777, %v2940
  %v3420 = vadd.f32 %v2778, %v2945
  %v3421 = vadd.f32 %v2779, %v2920
  %v3422 = vadd.f32 %v2780, %v2925
  %v3423 = vadd.f32 %v2781, %v2930
  %v3424 = vadd.f32 %v2782, %v2935
  %v3425 = vadd.f32 %v2783, %v2940
  %v3426 = vadd.f32 %v2784, %v2945
  %v3427 = vadd.f32 %v2785, %v2920
  %v3428 = vadd.f32 %v2786, %v2925
  %v3429 = vadd.f32 %v2787, %v2930
  %v3430 = vadd.f32 %v2788, %v2935
  %v3431 = vadd.f32 %v2789, %v2940
  %v3432 = vadd.f32 %v2790, %v2945
  %v3433 = vadd.f32 %v2791, %v2920
  %v3434 = vadd.f32 %v2792, %v2925
  %v3435 = vadd.f32 %v2793, %v2930
  %v3436 = vadd.f32 %v2794, %v2935
  %v3437 = vadd.f32 %v2795, %v2940
  %v3438 = vadd.f32 %v2796, %v2945
  %v3439 = vadd.f32 %v2797, %v2920
  %v3440 = vadd.f32 %v2798, %v2925
  %v3441 = vadd.f32 %v2799, %v2930
  %v3442 = vadd.f32 %v2800, %v2935
  %v3443 = vadd.f32 %v2801, %v2940
  %v3444 = vadd.f32 %v2802, %v2945
  %v3445 = vadd.f32 %v2803, %v2920
  %v3446 = vadd.f32 %v2804, %v2925
  %v3447 = vadd.f32 %v2805, %v2930
  %v3448 = vadd.f32 %v2806, %v2935
  %v3449 = vadd.f32 %v2807, %v2940
  %v3450 = vadd.f32 %v2808, %v2945
  %v3451 = vadd.f32 %v2809, %v2920
  %v3452 = vadd.f32 %v2810, %v2925
  %v3453 = vadd.f32 %v2811, %v2930
  %v3454 = vadd.f32 %v2812, %v2935
  %v3455 = vadd.f32 %v2813, %v2940
  %v3456 = vadd.f32 %v2814, %v2945
  %v3457 = vadd.f32 %v2815, %v2920
  %v3458 = vadd.f32 %v2816, %v2925
  %v3459 = vadd.f32 %v2817, %v2930
  %v3460 = vadd.f32 %v2818, %v2935
  %v3461 = vadd.f32 %v2819, %v2940
  %v3462 = vadd.f32 %v2820, %v2945
  %v3463 = vadd.f32 %v2821, %v2920
  %v3464 = vadd.f32 %v2822, %v2925
  %v3465 = vadd.f32 %v2823, %v2930
  %v3466 = vadd.f32 %v2824, %v2935
  %v3467 = vadd.f32 %v2825, %v2940
  %v3468 = vadd.f32 %v2826, %v2945
  %v3469 = vadd.f32 %v2827, %v2920
  %v3470 = vadd.f32 %v2828, %v2925
  %v3471 = vadd.f32 %v2829, %v2930
  %v3472 = vadd.f32 %v2830, %v2935
  %v3473 = vadd.f32 %v2831, %v2940
  %v3474 = vadd.f32 %v2832, %v2945
  %v3475 = vadd.f32 %v2833, %v2920
  %v3476 = vadd.f32 %v2834, %v2925
  %v3477 = vadd.f32 %v2835, %v2930
  %v3478 = vadd.f32 %v2836, %v2935
  %v3479 = vadd.f32 %v2837, %v2940
  %v3480 = vadd.f32 %v2838, %v2945
  %v3481 = vadd.f32 %v2839, %v2920
  %v3482 = vadd.f32 %v2840, %v2925
  %v3483 = vadd.f32 %v2841, %v2930
  %v3484 = vadd.f32 %v2842, %v2935
  %v3485 = vadd.f32 %v2843, %v2940
  %v3486 = vadd.f32 %v2844, %v2945
  %v3487 = vadd.f32 %v2845, %v2920
  %v3488 = vadd.f32 %v2846, %v2925
  %v3489 = vadd.f32 %v2847, %v2930
  %v3490 = vadd.f32 %v2848, %v2935
  %v3491 = vadd.f32 %v2849, %v2940
  %v3492 = vadd.f32 %v2850, %v2945
  %v3493 = vadd.f32 %v2851, %v2920
  %v3494 = vadd.f32 %v2852, %v2925
  %v3495 = vadd.f32 %v2853, %v2930
  %v3496 = vadd.f32 %v2854, %v2935
  %v3497 = vadd.f32 %v2855, %v2940
  %v3498 = vadd.f32 %v2856, %v2945
  %v3499 = vadd.f32 %v2857, %v2920
  %v3500 = vadd.f32 %v2858, %v2925
  %v3501 = vadd.f32 %v2859, %v2930
  %v3502 = vadd.f32 %v2860, %v2935
  %v3503 = vadd.f32 %v2861, %v2940
  %v3504 = vadd.f32 %v2862, %v2945
  %v3505 = vadd.f32 %v2863, %v2920
  %v3506 = vadd.f32 %v2864, %v2925
  %v3507 = vadd.f32 %v2865, %v2930
  %v3508 = vadd.f32 %v2866, %v2935
  %v3509 = vadd.f32 %v2867, %v2940
  %v3510 = vadd.f32 %v2868, %v2945
  %v3511 = vadd.f32 %v2869, %v2920
  %v3512 = vadd.f32 %v2870, %v2925
  %v3513 = vadd.f32 %v2871, %v2930
  %v3514 = vadd.f32 %v2872, %v2935
  %v3515 = vadd.f32 %v2873, %v2940
  %v3516 = vadd.f32 %v2874, %v2945
  %v3517 = vadd.f32 %v2875, %v2920
  %v3518 = vadd.f32 %v2876, %v2925
  %v3519 = vadd.f32 %v2877, %v2930
  %v3520 = vadd.f32 %v2878, %v2935
  %v3521 = vadd.f32 %v2879, %v2940
  %v3522 = vadd.f32 %v2880, %v2945
  %v3523 = vadd.f32 %v2881, %v2920
  %v3524 = vadd.f32 %v2882, %v2925
  %v3525 = vadd.f32 %v2883, %v2930
  %v3526 = vadd.f32 %v2884, %v2935
  %v3527 = vadd.f32 %v2885, %v2940
  %v3528 = vadd.f32 %v2886, %v2945
  %v3529 = vadd.f32 %v2887, %v2920
  %v3530 = vadd.f32 %v2888, %v2925
  %v3531 = vadd.f32 %v2889, %v2930
  %v3532 = vadd.f32 %v2890, %v2935
  %v3533 = vadd.f32 %v2891, %v2940
  %v3534 = vadd.f32 %v2892, %v2945
  %v3535 = vadd.f32 %v2893, %v2920
  %v3536 = vadd.f32 %v2894, %v2925
  %v3537 = vadd.f32 %v2895, %v2930
  %v3538 = vadd.f32 %v2896, %v2935
  %v3539 = vadd.f32 %v2897, %v2940
  %v3540 = vadd.f32 %v2898, %v2945
  %v3541 = vadd.f32 %v2899, %v2920
  %v3542 = vadd.f32 %v2900, %v2925
  %v3543 = vadd.f32 %v2901, %v2930
  %v3544 = vadd.f32 %v2902, %v2935
  %v3545 = vadd.f32 %v2903, %v2940
  %v3546 = vadd.f32 %v2904, %v2945
  %v3547 = vadd.f32 %v2905, %v2920
  %v3548 = vadd.f32 %v2906, %v2925
  %v3549 = vadd.f32 %v2907, %v2930
  %v3550 = vadd.f32 %v2908, %v2935
  %v3551 = vadd.f32 %v2909, %v2940
  %v3552 = vadd.f32 %v2910, %v2945
  %3553 = vst.msk [vmem:[#allocation3] sm:$0xff] %vm1662, %v2947
  %3554 = vst.msk [vmem:[#allocation3 + $0x8] sm:$0xff] %vm1662, %v2948
  %3555 = vst.msk [vmem:[#allocation3 + $0x10] sm:$0xff] %vm1662, %v2949
  %3556 = vst.msk [vmem:[#allocation3 + $0x18] sm:$0xff] %vm1662, %v2950
  %3557 = vst.msk [vmem:[#allocation3 + $0x20] sm:$0xff] %vm1662, %v2951
  %3558 = vst.msk [vmem:[#allocation3 + $0x28] sm:$0xff] %vm1662, %v2952
  %3559 = vst.msk [vmem:[#allocation3 + $0x30] sm:$0xff] %vm1662, %v2953
  %3560 = vst.msk [vmem:[#allocation3 + $0x38] sm:$0xff] %vm1662, %v2954
  %3561 = vst.msk [vmem:[#allocation3 + $0x40] sm:$0xff] %vm1662, %v2955
  %3562 = vst.msk [vmem:[#allocation3 + $0x48] sm:$0xff] %vm1662, %v2956
  %3563 = vst.msk [vmem:[#allocation3 + $0x50] sm:$0xff] %vm1662, %v2957
  %3564 = vst.msk [vmem:[#allocation3 + $0x58] sm:$0xff] %vm1662, %v2958
  %3565 = vst.msk [vmem:[#allocation3 + $0x60] sm:$0xff] %vm1662, %v2959
  %3566 = vst.msk [vmem:[#allocation3 + $0x68] sm:$0xff] %vm1662, %v2960
  %3567 = vst.msk [vmem:[#allocation3 + $0x70] sm:$0xff] %vm1662, %v2961
  %3568 = vst.msk [vmem:[#allocation3 + $0x78] sm:$0xff] %vm1662, %v2962
  %3569 = vst.msk [vmem:[#allocation3 + $0x80] sm:$0xff] %vm1662, %v2963
  %3570 = vst.msk [vmem:[#allocation3 + $0x88] sm:$0xff] %vm1662, %v2964
  %3571 = vst.msk [vmem:[#allocation3 + $0x90] sm:$0xff] %vm1662, %v2965
  %3572 = vst.msk [vmem:[#allocation3 + $0x98] sm:$0xff] %vm1662, %v2966
  %3573 = vst.msk [vmem:[#allocation3 + $0xa0] sm:$0xff] %vm1662, %v2967
  %3574 = vst.msk [vmem:[#allocation3 + $0xa8] sm:$0xff] %vm1662, %v2968
  %3575 = vst.msk [vmem:[#allocation3 + $0xb0] sm:$0xff] %vm1662, %v2969
  %3576 = vst.msk [vmem:[#allocation3 + $0xb8] sm:$0xff] %vm1662, %v2970
  %3577 = vst.msk [vmem:[#allocation3 + $0xc0] sm:$0xff] %vm1662, %v2971
  %3578 = vst.msk [vmem:[#allocation3 + $0xc8] sm:$0xff] %vm1662, %v2972
  %3579 = vst.msk [vmem:[#allocation3 + $0xd0] sm:$0xff] %vm1662, %v2973
  %3580 = vst.msk [vmem:[#allocation3 + $0xd8] sm:$0xff] %vm1662, %v2974
  %3581 = vst.msk [vmem:[#allocation3 + $0xe0] sm:$0xff] %vm1662, %v2975
  %3582 = vst.msk [vmem:[#allocation3 + $0xe8] sm:$0xff] %vm1662, %v2976
  %3583 = vst.msk [vmem:[#allocation3 + $0xf0] sm:$0xff] %vm1662, %v2977
  %3584 = vst.msk [vmem:[#allocation3 + $0xf8] sm:$0xff] %vm1662, %v2978
  %3585 = vst.msk [vmem:[#allocation3 + $0x100] sm:$0xff] %vm1662, %v2979
  %3586 = vst.msk [vmem:[#allocation3 + $0x108] sm:$0xff] %vm1662, %v2980
  %3587 = vst.msk [vmem:[#allocation3 + $0x110] sm:$0xff] %vm1662, %v2981
  %3588 = vst.msk [vmem:[#allocation3 + $0x118] sm:$0xff] %vm1662, %v2982
  %3589 = vst.msk [vmem:[#allocation3 + $0x120] sm:$0xff] %vm1662, %v2983
  %3590 = vst.msk [vmem:[#allocation3 + $0x128] sm:$0xff] %vm1662, %v2984
  %3591 = vst.msk [vmem:[#allocation3 + $0x130] sm:$0xff] %vm1662, %v2985
  %3592 = vst.msk [vmem:[#allocation3 + $0x138] sm:$0xff] %vm1662, %v2986
  %3593 = vst.msk [vmem:[#allocation3 + $0x140] sm:$0xff] %vm1662, %v2987
  %3594 = vst.msk [vmem:[#allocation3 + $0x148] sm:$0xff] %vm1662, %v2988
  %3595 = vst.msk [vmem:[#allocation3 + $0x150] sm:$0xff] %vm1662, %v2989
  %3596 = vst.msk [vmem:[#allocation3 + $0x158] sm:$0xff] %vm1662, %v2990
  %3597 = vst.msk [vmem:[#allocation3 + $0x160] sm:$0xff] %vm1662, %v2991
  %3598 = vst.msk [vmem:[#allocation3 + $0x168] sm:$0xff] %vm1662, %v2992
  %3599 = vst.msk [vmem:[#allocation3 + $0x170] sm:$0xff] %vm1662, %v2993
  %3600 = vst.msk [vmem:[#allocation3 + $0x178] sm:$0xff] %vm1662, %v2994
  %3601 = vst.msk [vmem:[#allocation3 + $0x180] sm:$0xff] %vm1662, %v2995
  %3602 = vst.msk [vmem:[#allocation3 + $0x188] sm:$0xff] %vm1662, %v2996
  %3603 = vst.msk [vmem:[#allocation3 + $0x190] sm:$0xff] %vm1662, %v2997
  %3604 = vst.msk [vmem:[#allocation3 + $0x198] sm:$0xff] %vm1662, %v2998
  %3605 = vst.msk [vmem:[#allocation3 + $0x1a0] sm:$0xff] %vm1662, %v2999
  %3606 = vst.msk [vmem:[#allocation3 + $0x1a8] sm:$0xff] %vm1662, %v3000
  %3607 = vst.msk [vmem:[#allocation3 + $0x1b0] sm:$0xff] %vm1662, %v3001
  %3608 = vst.msk [vmem:[#allocation3 + $0x1b8] sm:$0xff] %vm1662, %v3002
  %3609 = vst.msk [vmem:[#allocation3 + $0x1c0] sm:$0xff] %vm1662, %v3003
  %3610 = vst.msk [vmem:[#allocation3 + $0x1c8] sm:$0xff] %vm1662, %v3004
  %3611 = vst.msk [vmem:[#allocation3 + $0x1d0] sm:$0xff] %vm1662, %v3005
  %3612 = vst.msk [vmem:[#allocation3 + $0x1d8] sm:$0xff] %vm1662, %v3006
  %3613 = vst.msk [vmem:[#allocation3 + $0x1e0] sm:$0xff] %vm1662, %v3007
  %3614 = vst.msk [vmem:[#allocation3 + $0x1e8] sm:$0xff] %vm1662, %v3008
  %3615 = vst.msk [vmem:[#allocation3 + $0x1f0] sm:$0xff] %vm1662, %v3009
  %3616 = vst.msk [vmem:[#allocation3 + $0x1f8] sm:$0xff] %vm1662, %v3010
  %3617 = vst.msk [vmem:[#allocation3 + $0x200] sm:$0xff] %vm1662, %v3011
  %3618 = vst.msk [vmem:[#allocation3 + $0x208] sm:$0xff] %vm1662, %v3012
  %3619 = vst.msk [vmem:[#allocation3 + $0x210] sm:$0xff] %vm1662, %v3013
  %3620 = vst.msk [vmem:[#allocation3 + $0x218] sm:$0xff] %vm1662, %v3014
  %3621 = vst.msk [vmem:[#allocation3 + $0x220] sm:$0xff] %vm1662, %v3015
  %3622 = vst.msk [vmem:[#allocation3 + $0x228] sm:$0xff] %vm1662, %v3016
  %3623 = vst.msk [vmem:[#allocation3 + $0x230] sm:$0xff] %vm1662, %v3017
  %3624 = vst.msk [vmem:[#allocation3 + $0x238] sm:$0xff] %vm1662, %v3018
  %3625 = vst.msk [vmem:[#allocation3 + $0x240] sm:$0xff] %vm1662, %v3019
  %3626 = vst.msk [vmem:[#allocation3 + $0x248] sm:$0xff] %vm1662, %v3020
  %3627 = vst.msk [vmem:[#allocation3 + $0x250] sm:$0xff] %vm1662, %v3021
  %3628 = vst.msk [vmem:[#allocation3 + $0x258] sm:$0xff] %vm1662, %v3022
  %3629 = vst.msk [vmem:[#allocation3 + $0x260] sm:$0xff] %vm1662, %v3023
  %3630 = vst.msk [vmem:[#allocation3 + $0x268] sm:$0xff] %vm1662, %v3024
  %3631 = vst.msk [vmem:[#allocation3 + $0x270] sm:$0xff] %vm1662, %v3025
  %3632 = vst.msk [vmem:[#allocation3 + $0x278] sm:$0xff] %vm1662, %v3026
  %3633 = vst.msk [vmem:[#allocation3 + $0x280] sm:$0xff] %vm1662, %v3027
  %3634 = vst.msk [vmem:[#allocation3 + $0x288] sm:$0xff] %vm1662, %v3028
  %3635 = vst.msk [vmem:[#allocation3 + $0x290] sm:$0xff] %vm1662, %v3029
  %3636 = vst.msk [vmem:[#allocation3 + $0x298] sm:$0xff] %vm1662, %v3030
  %3637 = vst.msk [vmem:[#allocation3 + $0x2a0] sm:$0xff] %vm1662, %v3031
  %3638 = vst.msk [vmem:[#allocation3 + $0x2a8] sm:$0xff] %vm1662, %v3032
  %3639 = vst.msk [vmem:[#allocation3 + $0x2b0] sm:$0xff] %vm1662, %v3033
  %3640 = vst.msk [vmem:[#allocation3 + $0x2b8] sm:$0xff] %vm1662, %v3034
  %3641 = vst.msk [vmem:[#allocation3 + $0x2c0] sm:$0xff] %vm1662, %v3035
  %3642 = vst.msk [vmem:[#allocation3 + $0x2c8] sm:$0xff] %vm1662, %v3036
  %3643 = vst.msk [vmem:[#allocation3 + $0x2d0] sm:$0xff] %vm1662, %v3037
  %3644 = vst.msk [vmem:[#allocation3 + $0x2d8] sm:$0xff] %vm1662, %v3038
  %3645 = vst.msk [vmem:[#allocation3 + $0x2e0] sm:$0xff] %vm1662, %v3039
  %3646 = vst.msk [vmem:[#allocation3 + $0x2e8] sm:$0xff] %vm1662, %v3040
  %3647 = vst.msk [vmem:[#allocation3 + $0x2f0] sm:$0xff] %vm1662, %v3041
  %3648 = vst.msk [vmem:[#allocation3 + $0x2f8] sm:$0xff] %vm1662, %v3042
  %3649 = vst.msk [vmem:[#allocation3 + $0x300] sm:$0xff] %vm1662, %v3043
  %3650 = vst.msk [vmem:[#allocation3 + $0x308] sm:$0xff] %vm1662, %v3044
  %3651 = vst.msk [vmem:[#allocation3 + $0x310] sm:$0xff] %vm1662, %v3045
  %3652 = vst.msk [vmem:[#allocation3 + $0x318] sm:$0xff] %vm1662, %v3046
  %3653 = vst.msk [vmem:[#allocation3 + $0x320] sm:$0xff] %vm1662, %v3047
  %3654 = vst.msk [vmem:[#allocation3 + $0x328] sm:$0xff] %vm1662, %v3048
  %3655 = vst.msk [vmem:[#allocation3 + $0x330] sm:$0xff] %vm1662, %v3049
  %3656 = vst.msk [vmem:[#allocation3 + $0x338] sm:$0xff] %vm1662, %v3050
  %3657 = vst.msk [vmem:[#allocation3 + $0x340] sm:$0xff] %vm1662, %v3051
  %3658 = vst.msk [vmem:[#allocation3 + $0x348] sm:$0xff] %vm1662, %v3052
  %3659 = vst.msk [vmem:[#allocation3 + $0x350] sm:$0xff] %vm1662, %v3053
  %3660 = vst.msk [vmem:[#allocation3 + $0x358] sm:$0xff] %vm1662, %v3054
  %3661 = vst.msk [vmem:[#allocation3 + $0x360] sm:$0xff] %vm1662, %v3055
  %3662 = vst.msk [vmem:[#allocation3 + $0x368] sm:$0xff] %vm1662, %v3056
  %3663 = vst.msk [vmem:[#allocation3 + $0x370] sm:$0xff] %vm1662, %v3057
  %3664 = vst.msk [vmem:[#allocation3 + $0x378] sm:$0xff] %vm1662, %v3058
  %3665 = vst.msk [vmem:[#allocation3 + $0x380] sm:$0xff] %vm1662, %v3059
  %3666 = vst.msk [vmem:[#allocation3 + $0x388] sm:$0xff] %vm1662, %v3060
  %3667 = vst.msk [vmem:[#allocation3 + $0x390] sm:$0xff] %vm1662, %v3061
  %3668 = vst.msk [vmem:[#allocation3 + $0x398] sm:$0xff] %vm1662, %v3062
  %3669 = vst.msk [vmem:[#allocation3 + $0x3a0] sm:$0xff] %vm1662, %v3063
  %3670 = vst.msk [vmem:[#allocation3 + $0x3a8] sm:$0xff] %vm1662, %v3064
  %3671 = vst.msk [vmem:[#allocation3 + $0x3b0] sm:$0xff] %vm1662, %v3065
  %3672 = vst.msk [vmem:[#allocation3 + $0x3b8] sm:$0xff] %vm1662, %v3066
  %3673 = vst.msk [vmem:[#allocation3 + $0x3c0] sm:$0xff] %vm1662, %v3067
  %3674 = vst.msk [vmem:[#allocation3 + $0x3c8] sm:$0xff] %vm1662, %v3068
  %3675 = vst.msk [vmem:[#allocation3 + $0x3d0] sm:$0xff] %vm1662, %v3069
  %3676 = vst.msk [vmem:[#allocation3 + $0x3d8] sm:$0xff] %vm1662, %v3070
  %3677 = vst.msk [vmem:[#allocation3 + $0x3e0] sm:$0xff] %vm1662, %v3071
  %3678 = vst.msk [vmem:[#allocation3 + $0x3e8] sm:$0xff] %vm1662, %v3072
  %3679 = vst.msk [vmem:[#allocation3 + $0x3f0] sm:$0xff] %vm1662, %v3073
  %3680 = vst.msk [vmem:[#allocation3 + $0x3f8] sm:$0xff] %vm1662, %v3074
  %3681 = vst.msk [vmem:[#allocation3 + $0x400] sm:$0xff] %vm1662, %v3075
  %3682 = vst.msk [vmem:[#allocation3 + $0x408] sm:$0xff] %vm1662, %v3076
  %3683 = vst.msk [vmem:[#allocation3 + $0x410] sm:$0xff] %vm1662, %v3077
  %3684 = vst.msk [vmem:[#allocation3 + $0x418] sm:$0xff] %vm1662, %v3078
  %3685 = vst.msk [vmem:[#allocation3 + $0x420] sm:$0xff] %vm1662, %v3079
  %3686 = vst.msk [vmem:[#allocation3 + $0x428] sm:$0xff] %vm1662, %v3080
  %3687 = vst.msk [vmem:[#allocation3 + $0x430] sm:$0xff] %vm1662, %v3081
  %3688 = vst.msk [vmem:[#allocation3 + $0x438] sm:$0xff] %vm1662, %v3082
  %3689 = vst.msk [vmem:[#allocation3 + $0x440] sm:$0xff] %vm1662, %v3083
  %3690 = vst.msk [vmem:[#allocation3 + $0x448] sm:$0xff] %vm1662, %v3084
  %3691 = vst.msk [vmem:[#allocation3 + $0x450] sm:$0xff] %vm1662, %v3085
  %3692 = vst.msk [vmem:[#allocation3 + $0x458] sm:$0xff] %vm1662, %v3086
  %3693 = vst.msk [vmem:[#allocation3 + $0x460] sm:$0xff] %vm1662, %v3087
  %3694 = vst.msk [vmem:[#allocation3 + $0x468] sm:$0xff] %vm1662, %v3088
  %3695 = vst.msk [vmem:[#allocation3 + $0x470] sm:$0xff] %vm1662, %v3089
  %3696 = vst.msk [vmem:[#allocation3 + $0x478] sm:$0xff] %vm1662, %v3090
  %3697 = vst.msk [vmem:[#allocation3 + $0x480] sm:$0xff] %vm1662, %v3091
  %3698 = vst.msk [vmem:[#allocation3 + $0x488] sm:$0xff] %vm1662, %v3092
  %3699 = vst.msk [vmem:[#allocation3 + $0x490] sm:$0xff] %vm1662, %v3093
  %3700 = vst.msk [vmem:[#allocation3 + $0x498] sm:$0xff] %vm1662, %v3094
  %3701 = vst.msk [vmem:[#allocation3 + $0x4a0] sm:$0xff] %vm1662, %v3095
  %3702 = vst.msk [vmem:[#allocation3 + $0x4a8] sm:$0xff] %vm1662, %v3096
  %3703 = vst.msk [vmem:[#allocation3 + $0x4b0] sm:$0xff] %vm1662, %v3097
  %3704 = vst.msk [vmem:[#allocation3 + $0x4b8] sm:$0xff] %vm1662, %v3098
  %3705 = vst.msk [vmem:[#allocation3 + $0x4c0] sm:$0xff] %vm1662, %v3099
  %3706 = vst.msk [vmem:[#allocation3 + $0x4c8] sm:$0xff] %vm1662, %v3100
  %3707 = vst.msk [vmem:[#allocation3 + $0x4d0] sm:$0xff] %vm1662, %v3101
  %3708 = vst.msk [vmem:[#allocation3 + $0x4d8] sm:$0xff] %vm1662, %v3102
  %3709 = vst.msk [vmem:[#allocation3 + $0x4e0] sm:$0xff] %vm1662, %v3103
  %3710 = vst.msk [vmem:[#allocation3 + $0x4e8] sm:$0xff] %vm1662, %v3104
  %3711 = vst.msk [vmem:[#allocation3 + $0x4f0] sm:$0xff] %vm1662, %v3105
  %3712 = vst.msk [vmem:[#allocation3 + $0x4f8] sm:$0xff] %vm1662, %v3106
  %3713 = vst.msk [vmem:[#allocation3 + $0x500] sm:$0xff] %vm1662, %v3107
  %3714 = vst.msk [vmem:[#allocation3 + $0x508] sm:$0xff] %vm1662, %v3108
  %3715 = vst.msk [vmem:[#allocation3 + $0x510] sm:$0xff] %vm1662, %v3109
  %3716 = vst.msk [vmem:[#allocation3 + $0x518] sm:$0xff] %vm1662, %v3110
  %3717 = vst.msk [vmem:[#allocation3 + $0x520] sm:$0xff] %vm1662, %v3111
  %3718 = vst.msk [vmem:[#allocation3 + $0x528] sm:$0xff] %vm1662, %v3112
  %3719 = vst.msk [vmem:[#allocation3 + $0x530] sm:$0xff] %vm1662, %v3113
  %3720 = vst.msk [vmem:[#allocation3 + $0x538] sm:$0xff] %vm1662, %v3114
  %3721 = vst.msk [vmem:[#allocation3 + $0x540] sm:$0xff] %vm1662, %v3115
  %3722 = vst.msk [vmem:[#allocation3 + $0x548] sm:$0xff] %vm1662, %v3116
  %3723 = vst.msk [vmem:[#allocation3 + $0x550] sm:$0xff] %vm1662, %v3117
  %3724 = vst.msk [vmem:[#allocation3 + $0x558] sm:$0xff] %vm1662, %v3118
  %3725 = vst.msk [vmem:[#allocation3 + $0x560] sm:$0xff] %vm1662, %v3119
  %3726 = vst.msk [vmem:[#allocation3 + $0x568] sm:$0xff] %vm1662, %v3120
  %3727 = vst.msk [vmem:[#allocation3 + $0x570] sm:$0xff] %vm1662, %v3121
  %3728 = vst.msk [vmem:[#allocation3 + $0x578] sm:$0xff] %vm1662, %v3122
  %3729 = vst.msk [vmem:[#allocation3 + $0x580] sm:$0xff] %vm1662, %v3123
  %3730 = vst.msk [vmem:[#allocation3 + $0x588] sm:$0xff] %vm1662, %v3124
  %3731 = vst.msk [vmem:[#allocation3 + $0x590] sm:$0xff] %vm1662, %v3125
  %3732 = vst.msk [vmem:[#allocation3 + $0x598] sm:$0xff] %vm1662, %v3126
  %3733 = vst.msk [vmem:[#allocation3 + $0x5a0] sm:$0xff] %vm1662, %v3127
  %3734 = vst.msk [vmem:[#allocation3 + $0x5a8] sm:$0xff] %vm1662, %v3128
  %3735 = vst.msk [vmem:[#allocation3 + $0x5b0] sm:$0xff] %vm1662, %v3129
  %3736 = vst.msk [vmem:[#allocation3 + $0x5b8] sm:$0xff] %vm1662, %v3130
  %3737 = vst.msk [vmem:[#allocation3 + $0x5c0] sm:$0xff] %vm1662, %v3131
  %3738 = vst.msk [vmem:[#allocation3 + $0x5c8] sm:$0xff] %vm1662, %v3132
  %3739 = vst.msk [vmem:[#allocation3 + $0x5d0] sm:$0xff] %vm1662, %v3133
  %3740 = vst.msk [vmem:[#allocation3 + $0x5d8] sm:$0xff] %vm1662, %v3134
  %3741 = vst.msk [vmem:[#allocation3 + $0x5e0] sm:$0xff] %vm1662, %v3135
  %3742 = vst.msk [vmem:[#allocation3 + $0x5e8] sm:$0xff] %vm1662, %v3136
  %3743 = vst.msk [vmem:[#allocation3 + $0x5f0] sm:$0xff] %vm1662, %v3137
  %3744 = vst.msk [vmem:[#allocation3 + $0x5f8] sm:$0xff] %vm1662, %v3138
  %3745 = vst.msk [vmem:[#allocation3 + $0x600] sm:$0xff] %vm1662, %v3139
  %3746 = vst.msk [vmem:[#allocation3 + $0x608] sm:$0xff] %vm1662, %v3140
  %3747 = vst.msk [vmem:[#allocation3 + $0x610] sm:$0xff] %vm1662, %v3141
  %3748 = vst.msk [vmem:[#allocation3 + $0x618] sm:$0xff] %vm1662, %v3142
  %3749 = vst.msk [vmem:[#allocation3 + $0x620] sm:$0xff] %vm1662, %v3143
  %3750 = vst.msk [vmem:[#allocation3 + $0x628] sm:$0xff] %vm1662, %v3144
  %3751 = vst.msk [vmem:[#allocation3 + $0x630] sm:$0xff] %vm1662, %v3145
  %3752 = vst.msk [vmem:[#allocation3 + $0x638] sm:$0xff] %vm1662, %v3146
  %3753 = vst.msk [vmem:[#allocation3 + $0x640] sm:$0xff] %vm1662, %v3147
  %3754 = vst.msk [vmem:[#allocation3 + $0x648] sm:$0xff] %vm1662, %v3148
  %3755 = vst.msk [vmem:[#allocation3 + $0x650] sm:$0xff] %vm1662, %v3149
  %3756 = vst.msk [vmem:[#allocation3 + $0x658] sm:$0xff] %vm1662, %v3150
  %3757 = vst.msk [vmem:[#allocation3 + $0x660] sm:$0xff] %vm1662, %v3151
  %3758 = vst.msk [vmem:[#allocation3 + $0x668] sm:$0xff] %vm1662, %v3152
  %3759 = vst.msk [vmem:[#allocation3 + $0x670] sm:$0xff] %vm1662, %v3153
  %3760 = vst.msk [vmem:[#allocation3 + $0x678] sm:$0xff] %vm1662, %v3154
  %3761 = vst.msk [vmem:[#allocation3 + $0x680] sm:$0xff] %vm1662, %v3155
  %3762 = vst.msk [vmem:[#allocation3 + $0x688] sm:$0xff] %vm1662, %v3156
  %3763 = vst.msk [vmem:[#allocation3 + $0x690] sm:$0xff] %vm1662, %v3157
  %3764 = vst.msk [vmem:[#allocation3 + $0x698] sm:$0xff] %vm1662, %v3158
  %3765 = vst.msk [vmem:[#allocation3 + $0x6a0] sm:$0xff] %vm1662, %v3159
  %3766 = vst.msk [vmem:[#allocation3 + $0x6a8] sm:$0xff] %vm1662, %v3160
  %3767 = vst.msk [vmem:[#allocation3 + $0x6b0] sm:$0xff] %vm1662, %v3161
  %3768 = vst.msk [vmem:[#allocation3 + $0x6b8] sm:$0xff] %vm1662, %v3162
  %3769 = vst.msk [vmem:[#allocation3 + $0x6c0] sm:$0xff] %vm1662, %v3163
  %3770 = vst.msk [vmem:[#allocation3 + $0x6c8] sm:$0xff] %vm1662, %v3164
  %3771 = vst.msk [vmem:[#allocation3 + $0x6d0] sm:$0xff] %vm1662, %v3165
  %3772 = vst.msk [vmem:[#allocation3 + $0x6d8] sm:$0xff] %vm1662, %v3166
  %3773 = vst.msk [vmem:[#allocation3 + $0x6e0] sm:$0xff] %vm1662, %v3167
  %3774 = vst.msk [vmem:[#allocation3 + $0x6e8] sm:$0xff] %vm1662, %v3168
  %3775 = vst.msk [vmem:[#allocation3 + $0x6f0] sm:$0xff] %vm1662, %v3169
  %3776 = vst.msk [vmem:[#allocation3 + $0x6f8] sm:$0xff] %vm1662, %v3170
  %3777 = vst.msk [vmem:[#allocation3 + $0x700] sm:$0xff] %vm1662, %v3171
  %3778 = vst.msk [vmem:[#allocation3 + $0x708] sm:$0xff] %vm1662, %v3172
  %3779 = vst.msk [vmem:[#allocation3 + $0x710] sm:$0xff] %vm1662, %v3173
  %3780 = vst.msk [vmem:[#allocation3 + $0x718] sm:$0xff] %vm1662, %v3174
  %3781 = vst.msk [vmem:[#allocation3 + $0x720] sm:$0xff] %vm1662, %v3175
  %3782 = vst.msk [vmem:[#allocation3 + $0x728] sm:$0xff] %vm1662, %v3176
  %3783 = vst.msk [vmem:[#allocation3 + $0x730] sm:$0xff] %vm1662, %v3177
  %3784 = vst.msk [vmem:[#allocation3 + $0x738] sm:$0xff] %vm1662, %v3178
  %3785 = vst.msk [vmem:[#allocation3 + $0x740] sm:$0xff] %vm1662, %v3179
  %3786 = vst.msk [vmem:[#allocation3 + $0x748] sm:$0xff] %vm1662, %v3180
  %3787 = vst.msk [vmem:[#allocation3 + $0x750] sm:$0xff] %vm1662, %v3181
  %3788 = vst.msk [vmem:[#allocation3 + $0x758] sm:$0xff] %vm1662, %v3182
  %3789 = vst.msk [vmem:[#allocation3 + $0x760] sm:$0xff] %vm1662, %v3183
  %3790 = vst.msk [vmem:[#allocation3 + $0x768] sm:$0xff] %vm1662, %v3184
  %3791 = vst.msk [vmem:[#allocation3 + $0x770] sm:$0xff] %vm1662, %v3185
  %3792 = vst.msk [vmem:[#allocation3 + $0x778] sm:$0xff] %vm1662, %v3186
  %3793 = vst.msk [vmem:[#allocation3 + $0x780] sm:$0xff] %vm1662, %v3187
  %3794 = vst.msk [vmem:[#allocation3 + $0x788] sm:$0xff] %vm1662, %v3188
  %3795 = vst.msk [vmem:[#allocation3 + $0x790] sm:$0xff] %vm1662, %v3189
  %3796 = vst.msk [vmem:[#allocation3 + $0x798] sm:$0xff] %vm1662, %v3190
  %3797 = vst.msk [vmem:[#allocation3 + $0x7a0] sm:$0xff] %vm1662, %v3191
  %3798 = vst.msk [vmem:[#allocation3 + $0x7a8] sm:$0xff] %vm1662, %v3192
  %3799 = vst.msk [vmem:[#allocation3 + $0x7b0] sm:$0xff] %vm1662, %v3193
  %3800 = vst.msk [vmem:[#allocation3 + $0x7b8] sm:$0xff] %vm1662, %v3194
  %3801 = vst.msk [vmem:[#allocation3 + $0x7c0] sm:$0xff] %vm1662, %v3195
  %3802 = vst.msk [vmem:[#allocation3 + $0x7c8] sm:$0xff] %vm1662, %v3196
  %3803 = vst.msk [vmem:[#allocation3 + $0x7d0] sm:$0xff] %vm1662, %v3197
  %3804 = vst.msk [vmem:[#allocation3 + $0x7d8] sm:$0xff] %vm1662, %v3198
  %3805 = vst.msk [vmem:[#allocation3 + $0x7e0] sm:$0xff] %vm1662, %v3199
  %3806 = vst.msk [vmem:[#allocation3 + $0x7e8] sm:$0xff] %vm1662, %v3200
  %3807 = vst.msk [vmem:[#allocation3 + $0x7f0] sm:$0xff] %vm1662, %v3201
  %3808 = vst.msk [vmem:[#allocation3 + $0x7f8] sm:$0xff] %vm1662, %v3202
  %3809 = vst.msk [vmem:[#allocation3 + $0x800] sm:$0xff] %vm1662, %v3203
  %3810 = vst.msk [vmem:[#allocation3 + $0x808] sm:$0xff] %vm1662, %v3204
  %3811 = vst.msk [vmem:[#allocation3 + $0x810] sm:$0xff] %vm1662, %v3205
  %3812 = vst.msk [vmem:[#allocation3 + $0x818] sm:$0xff] %vm1662, %v3206
  %3813 = vst.msk [vmem:[#allocation3 + $0x820] sm:$0xff] %vm1662, %v3207
  %3814 = vst.msk [vmem:[#allocation3 + $0x828] sm:$0xff] %vm1662, %v3208
  %3815 = vst.msk [vmem:[#allocation3 + $0x830] sm:$0xff] %vm1662, %v3209
  %3816 = vst.msk [vmem:[#allocation3 + $0x838] sm:$0xff] %vm1662, %v3210
  %3817 = vst.msk [vmem:[#allocation3 + $0x840] sm:$0xff] %vm1662, %v3211
  %3818 = vst.msk [vmem:[#allocation3 + $0x848] sm:$0xff] %vm1662, %v3212
  %3819 = vst.msk [vmem:[#allocation3 + $0x850] sm:$0xff] %vm1662, %v3213
  %3820 = vst.msk [vmem:[#allocation3 + $0x858] sm:$0xff] %vm1662, %v3214
  %3821 = vst.msk [vmem:[#allocation3 + $0x860] sm:$0xff] %vm1662, %v3215
  %3822 = vst.msk [vmem:[#allocation3 + $0x868] sm:$0xff] %vm1662, %v3216
  %3823 = vst.msk [vmem:[#allocation3 + $0x870] sm:$0xff] %vm1662, %v3217
  %3824 = vst.msk [vmem:[#allocation3 + $0x878] sm:$0xff] %vm1662, %v3218
  %3825 = vst.msk [vmem:[#allocation3 + $0x880] sm:$0xff] %vm1662, %v3219
  %3826 = vst.msk [vmem:[#allocation3 + $0x888] sm:$0xff] %vm1662, %v3220
  %3827 = vst.msk [vmem:[#allocation3 + $0x890] sm:$0xff] %vm1662, %v3221
  %3828 = vst.msk [vmem:[#allocation3 + $0x898] sm:$0xff] %vm1662, %v3222
  %3829 = vst.msk [vmem:[#allocation3 + $0x8a0] sm:$0xff] %vm1662, %v3223
  %3830 = vst.msk [vmem:[#allocation3 + $0x8a8] sm:$0xff] %vm1662, %v3224
  %3831 = vst.msk [vmem:[#allocation3 + $0x8b0] sm:$0xff] %vm1662, %v3225
  %3832 = vst.msk [vmem:[#allocation3 + $0x8b8] sm:$0xff] %vm1662, %v3226
  %3833 = vst.msk [vmem:[#allocation3 + $0x8c0] sm:$0xff] %vm1662, %v3227
  %3834 = vst.msk [vmem:[#allocation3 + $0x8c8] sm:$0xff] %vm1662, %v3228
  %3835 = vst.msk [vmem:[#allocation3 + $0x8d0] sm:$0xff] %vm1662, %v3229
  %3836 = vst.msk [vmem:[#allocation3 + $0x8d8] sm:$0xff] %vm1662, %v3230
  %3837 = vst.msk [vmem:[#allocation3 + $0x8e0] sm:$0xff] %vm1662, %v3231
  %3838 = vst.msk [vmem:[#allocation3 + $0x8e8] sm:$0xff] %vm1662, %v3232
  %3839 = vst.msk [vmem:[#allocation3 + $0x8f0] sm:$0xff] %vm1662, %v3233
  %3840 = vst.msk [vmem:[#allocation3 + $0x8f8] sm:$0xff] %vm1662, %v3234
  %3841 = vst.msk [vmem:[#allocation3 + $0x900] sm:$0xff] %vm1662, %v3235
  %3842 = vst.msk [vmem:[#allocation3 + $0x908] sm:$0xff] %vm1662, %v3236
  %3843 = vst.msk [vmem:[#allocation3 + $0x910] sm:$0xff] %vm1662, %v3237
  %3844 = vst.msk [vmem:[#allocation3 + $0x918] sm:$0xff] %vm1662, %v3238
  %3845 = vst.msk [vmem:[#allocation3 + $0x920] sm:$0xff] %vm1662, %v3239
  %3846 = vst.msk [vmem:[#allocation3 + $0x928] sm:$0xff] %vm1662, %v3240
  %3847 = vst.msk [vmem:[#allocation3 + $0x930] sm:$0xff] %vm1662, %v3241
  %3848 = vst.msk [vmem:[#allocation3 + $0x938] sm:$0xff] %vm1662, %v3242
  %3849 = vst.msk [vmem:[#allocation3 + $0x940] sm:$0xff] %vm1662, %v3243
  %3850 = vst.msk [vmem:[#allocation3 + $0x948] sm:$0xff] %vm1662, %v3244
  %3851 = vst.msk [vmem:[#allocation3 + $0x950] sm:$0xff] %vm1662, %v3245
  %3852 = vst.msk [vmem:[#allocation3 + $0x958] sm:$0xff] %vm1662, %v3246
  %3853 = vst.msk [vmem:[#allocation3 + $0x960] sm:$0xff] %vm1662, %v3247
  %3854 = vst.msk [vmem:[#allocation3 + $0x968] sm:$0xff] %vm1662, %v3248
  %3855 = vst.msk [vmem:[#allocation3 + $0x970] sm:$0xff] %vm1662, %v3249
  %3856 = vst.msk [vmem:[#allocation3 + $0x978] sm:$0xff] %vm1662, %v3250
  %3857 = vst.msk [vmem:[#allocation3 + $0x980] sm:$0xff] %vm1662, %v3251
  %3858 = vst.msk [vmem:[#allocation3 + $0x988] sm:$0xff] %vm1662, %v3252
  %3859 = vst.msk [vmem:[#allocation3 + $0x990] sm:$0xff] %vm1662, %v3253
  %3860 = vst.msk [vmem:[#allocation3 + $0x998] sm:$0xff] %vm1662, %v3254
  %3861 = vst.msk [vmem:[#allocation3 + $0x9a0] sm:$0xff] %vm1662, %v3255
  %3862 = vst.msk [vmem:[#allocation3 + $0x9a8] sm:$0xff] %vm1662, %v3256
  %3863 = vst.msk [vmem:[#allocation3 + $0x9b0] sm:$0xff] %vm1662, %v3257
  %3864 = vst.msk [vmem:[#allocation3 + $0x9b8] sm:$0xff] %vm1662, %v3258
  %3865 = vst.msk [vmem:[#allocation3 + $0x9c0] sm:$0xff] %vm1662, %v3259
  %3866 = vst.msk [vmem:[#allocation3 + $0x9c8] sm:$0xff] %vm1662, %v3260
  %3867 = vst.msk [vmem:[#allocation3 + $0x9d0] sm:$0xff] %vm1662, %v3261
  %3868 = vst.msk [vmem:[#allocation3 + $0x9d8] sm:$0xff] %vm1662, %v3262
  %3869 = vst.msk [vmem:[#allocation3 + $0x9e0] sm:$0xff] %vm1662, %v3263
  %3870 = vst.msk [vmem:[#allocation3 + $0x9e8] sm:$0xff] %vm1662, %v3264
  %3871 = vst.msk [vmem:[#allocation3 + $0x9f0] sm:$0xff] %vm1662, %v3265
  %3872 = vst.msk [vmem:[#allocation3 + $0x9f8] sm:$0xff] %vm1662, %v3266
  %3873 = vst.msk [vmem:[#allocation3 + $0xa00] sm:$0xff] %vm1662, %v3267
  %3874 = vst.msk [vmem:[#allocation3 + $0xa08] sm:$0xff] %vm1662, %v3268
  %3875 = vst.msk [vmem:[#allocation3 + $0xa10] sm:$0xff] %vm1662, %v3269
  %3876 = vst.msk [vmem:[#allocation3 + $0xa18] sm:$0xff] %vm1662, %v3270
  %3877 = vst.msk [vmem:[#allocation3 + $0xa20] sm:$0xff] %vm1662, %v3271
  %3878 = vst.msk [vmem:[#allocation3 + $0xa28] sm:$0xff] %vm1662, %v3272
  %3879 = vst.msk [vmem:[#allocation3 + $0xa30] sm:$0xff] %vm1662, %v3273
  %3880 = vst.msk [vmem:[#allocation3 + $0xa38] sm:$0xff] %vm1662, %v3274
  %3881 = vst.msk [vmem:[#allocation3 + $0xa40] sm:$0xff] %vm1662, %v3275
  %3882 = vst.msk [vmem:[#allocation3 + $0xa48] sm:$0xff] %vm1662, %v3276
  %3883 = vst.msk [vmem:[#allocation3 + $0xa50] sm:$0xff] %vm1662, %v3277
  %3884 = vst.msk [vmem:[#allocation3 + $0xa58] sm:$0xff] %vm1662, %v3278
  %3885 = vst.msk [vmem:[#allocation3 + $0xa60] sm:$0xff] %vm1662, %v3279
  %3886 = vst.msk [vmem:[#allocation3 + $0xa68] sm:$0xff] %vm1662, %v3280
  %3887 = vst.msk [vmem:[#allocation3 + $0xa70] sm:$0xff] %vm1662, %v3281
  %3888 = vst.msk [vmem:[#allocation3 + $0xa78] sm:$0xff] %vm1662, %v3282
  %3889 = vst.msk [vmem:[#allocation3 + $0xa80] sm:$0xff] %vm1662, %v3283
  %3890 = vst.msk [vmem:[#allocation3 + $0xa88] sm:$0xff] %vm1662, %v3284
  %3891 = vst.msk [vmem:[#allocation3 + $0xa90] sm:$0xff] %vm1662, %v3285
  %3892 = vst.msk [vmem:[#allocation3 + $0xa98] sm:$0xff] %vm1662, %v3286
  %3893 = vst.msk [vmem:[#allocation3 + $0xaa0] sm:$0xff] %vm1662, %v3287
  %3894 = vst.msk [vmem:[#allocation3 + $0xaa8] sm:$0xff] %vm1662, %v3288
  %3895 = vst.msk [vmem:[#allocation3 + $0xab0] sm:$0xff] %vm1662, %v3289
  %3896 = vst.msk [vmem:[#allocation3 + $0xab8] sm:$0xff] %vm1662, %v3290
  %3897 = vst.msk [vmem:[#allocation3 + $0xac0] sm:$0xff] %vm1662, %v3291
  %3898 = vst.msk [vmem:[#allocation3 + $0xac8] sm:$0xff] %vm1662, %v3292
  %3899 = vst.msk [vmem:[#allocation3 + $0xad0] sm:$0xff] %vm1662, %v3293
  %3900 = vst.msk [vmem:[#allocation3 + $0xad8] sm:$0xff] %vm1662, %v3294
  %3901 = vst.msk [vmem:[#allocation3 + $0xae0] sm:$0xff] %vm1662, %v3295
  %3902 = vst.msk [vmem:[#allocation3 + $0xae8] sm:$0xff] %vm1662, %v3296
  %3903 = vst.msk [vmem:[#allocation3 + $0xaf0] sm:$0xff] %vm1662, %v3297
  %3904 = vst.msk [vmem:[#allocation3 + $0xaf8] sm:$0xff] %vm1662, %v3298
  %3905 = vst.msk [vmem:[#allocation3 + $0xb00] sm:$0xff] %vm1662, %v3299
  %3906 = vst.msk [vmem:[#allocation3 + $0xb08] sm:$0xff] %vm1662, %v3300
  %3907 = vst.msk [vmem:[#allocation3 + $0xb10] sm:$0xff] %vm1662, %v3301
  %3908 = vst.msk [vmem:[#allocation3 + $0xb18] sm:$0xff] %vm1662, %v3302
  %3909 = vst.msk [vmem:[#allocation3 + $0xb20] sm:$0xff] %vm1662, %v3303
  %3910 = vst.msk [vmem:[#allocation3 + $0xb28] sm:$0xff] %vm1662, %v3304
  %3911 = vst.msk [vmem:[#allocation3 + $0xb30] sm:$0xff] %vm1662, %v3305
  %3912 = vst.msk [vmem:[#allocation3 + $0xb38] sm:$0xff] %vm1662, %v3306
  %3913 = vst.msk [vmem:[#allocation3 + $0xb40] sm:$0xff] %vm1662, %v3307
  %3914 = vst.msk [vmem:[#allocation3 + $0xb48] sm:$0xff] %vm1662, %v3308
  %3915 = vst.msk [vmem:[#allocation3 + $0xb50] sm:$0xff] %vm1662, %v3309
  %3916 = vst.msk [vmem:[#allocation3 + $0xb58] sm:$0xff] %vm1662, %v3310
  %3917 = vst.msk [vmem:[#allocation3 + $0xb60] sm:$0xff] %vm1662, %v3311
  %3918 = vst.msk [vmem:[#allocation3 + $0xb68] sm:$0xff] %vm1662, %v3312
  %3919 = vst.msk [vmem:[#allocation3 + $0xb70] sm:$0xff] %vm1662, %v3313
  %3920 = vst.msk [vmem:[#allocation3 + $0xb78] sm:$0xff] %vm1662, %v3314
  %3921 = vst.msk [vmem:[#allocation3 + $0xb80] sm:$0xff] %vm1662, %v3315
  %3922 = vst.msk [vmem:[#allocation3 + $0xb88] sm:$0xff] %vm1662, %v3316
  %3923 = vst.msk [vmem:[#allocation3 + $0xb90] sm:$0xff] %vm1662, %v3317
  %3924 = vst.msk [vmem:[#allocation3 + $0xb98] sm:$0xff] %vm1662, %v3318
  %3925 = vst.msk [vmem:[#allocation3 + $0xba0] sm:$0xff] %vm1662, %v3319
  %3926 = vst.msk [vmem:[#allocation3 + $0xba8] sm:$0xff] %vm1662, %v3320
  %3927 = vst.msk [vmem:[#allocation3 + $0xbb0] sm:$0xff] %vm1662, %v3321
  %3928 = vst.msk [vmem:[#allocation3 + $0xbb8] sm:$0xff] %vm1662, %v3322
  %3929 = vst.msk [vmem:[#allocation3 + $0xbc0] sm:$0xff] %vm1662, %v3323
  %3930 = vst.msk [vmem:[#allocation3 + $0xbc8] sm:$0xff] %vm1662, %v3324
  %3931 = vst.msk [vmem:[#allocation3 + $0xbd0] sm:$0xff] %vm1662, %v3325
  %3932 = vst.msk [vmem:[#allocation3 + $0xbd8] sm:$0xff] %vm1662, %v3326
  %3933 = vst.msk [vmem:[#allocation3 + $0xbe0] sm:$0xff] %vm1662, %v3327
  %3934 = vst.msk [vmem:[#allocation3 + $0xbe8] sm:$0xff] %vm1662, %v3328
  %3935 = vst.msk [vmem:[#allocation3 + $0xbf0] sm:$0xff] %vm1662, %v3329
  %3936 = vst.msk [vmem:[#allocation3 + $0xbf8] sm:$0xff] %vm1662, %v3330
  %3937 = vst.msk [vmem:[#allocation3 + $0xc00] sm:$0xff] %vm1662, %v3331
  %3938 = vst.msk [vmem:[#allocation3 + $0xc08] sm:$0xff] %vm1662, %v3332
  %3939 = vst.msk [vmem:[#allocation3 + $0xc10] sm:$0xff] %vm1662, %v3333
  %3940 = vst.msk [vmem:[#allocation3 + $0xc18] sm:$0xff] %vm1662, %v3334
  %3941 = vst.msk [vmem:[#allocation3 + $0xc20] sm:$0xff] %vm1662, %v3335
  %3942 = vst.msk [vmem:[#allocation3 + $0xc28] sm:$0xff] %vm1662, %v3336
  %3943 = vst.msk [vmem:[#allocation3 + $0xc30] sm:$0xff] %vm1662, %v3337
  %3944 = vst.msk [vmem:[#allocation3 + $0xc38] sm:$0xff] %vm1662, %v3338
  %3945 = vst.msk [vmem:[#allocation3 + $0xc40] sm:$0xff] %vm1662, %v3339
  %3946 = vst.msk [vmem:[#allocation3 + $0xc48] sm:$0xff] %vm1662, %v3340
  %3947 = vst.msk [vmem:[#allocation3 + $0xc50] sm:$0xff] %vm1662, %v3341
  %3948 = vst.msk [vmem:[#allocation3 + $0xc58] sm:$0xff] %vm1662, %v3342
  %3949 = vst.msk [vmem:[#allocation3 + $0xc60] sm:$0xff] %vm1662, %v3343
  %3950 = vst.msk [vmem:[#allocation3 + $0xc68] sm:$0xff] %vm1662, %v3344
  %3951 = vst.msk [vmem:[#allocation3 + $0xc70] sm:$0xff] %vm1662, %v3345
  %3952 = vst.msk [vmem:[#allocation3 + $0xc78] sm:$0xff] %vm1662, %v3346
  %3953 = vst.msk [vmem:[#allocation3 + $0xc80] sm:$0xff] %vm1662, %v3347
  %3954 = vst.msk [vmem:[#allocation3 + $0xc88] sm:$0xff] %vm1662, %v3348
  %3955 = vst.msk [vmem:[#allocation3 + $0xc90] sm:$0xff] %vm1662, %v3349
  %3956 = vst.msk [vmem:[#allocation3 + $0xc98] sm:$0xff] %vm1662, %v3350
  %3957 = vst.msk [vmem:[#allocation3 + $0xca0] sm:$0xff] %vm1662, %v3351
  %3958 = vst.msk [vmem:[#allocation3 + $0xca8] sm:$0xff] %vm1662, %v3352
  %3959 = vst.msk [vmem:[#allocation3 + $0xcb0] sm:$0xff] %vm1662, %v3353
  %3960 = vst.msk [vmem:[#allocation3 + $0xcb8] sm:$0xff] %vm1662, %v3354
  %3961 = vst.msk [vmem:[#allocation3 + $0xcc0] sm:$0xff] %vm1662, %v3355
  %3962 = vst.msk [vmem:[#allocation3 + $0xcc8] sm:$0xff] %vm1662, %v3356
  %3963 = vst.msk [vmem:[#allocation3 + $0xcd0] sm:$0xff] %vm1662, %v3357
  %3964 = vst.msk [vmem:[#allocation3 + $0xcd8] sm:$0xff] %vm1662, %v3358
  %3965 = vst.msk [vmem:[#allocation3 + $0xce0] sm:$0xff] %vm1662, %v3359
  %3966 = vst.msk [vmem:[#allocation3 + $0xce8] sm:$0xff] %vm1662, %v3360
  %3967 = vst.msk [vmem:[#allocation3 + $0xcf0] sm:$0xff] %vm1662, %v3361
  %3968 = vst.msk [vmem:[#allocation3 + $0xcf8] sm:$0xff] %vm1662, %v3362
  %3969 = vst.msk [vmem:[#allocation3 + $0xd00] sm:$0xff] %vm1662, %v3363
  %3970 = vst.msk [vmem:[#allocation3 + $0xd08] sm:$0xff] %vm1662, %v3364
  %3971 = vst.msk [vmem:[#allocation3 + $0xd10] sm:$0xff] %vm1662, %v3365
  %3972 = vst.msk [vmem:[#allocation3 + $0xd18] sm:$0xff] %vm1662, %v3366
  %3973 = vst.msk [vmem:[#allocation3 + $0xd20] sm:$0xff] %vm1662, %v3367
  %3974 = vst.msk [vmem:[#allocation3 + $0xd28] sm:$0xff] %vm1662, %v3368
  %3975 = vst.msk [vmem:[#allocation3 + $0xd30] sm:$0xff] %vm1662, %v3369
  %3976 = vst.msk [vmem:[#allocation3 + $0xd38] sm:$0xff] %vm1662, %v3370
  %3977 = vst.msk [vmem:[#allocation3 + $0xd40] sm:$0xff] %vm1662, %v3371
  %3978 = vst.msk [vmem:[#allocation3 + $0xd48] sm:$0xff] %vm1662, %v3372
  %3979 = vst.msk [vmem:[#allocation3 + $0xd50] sm:$0xff] %vm1662, %v3373
  %3980 = vst.msk [vmem:[#allocation3 + $0xd58] sm:$0xff] %vm1662, %v3374
  %3981 = vst.msk [vmem:[#allocation3 + $0xd60] sm:$0xff] %vm1662, %v3375
  %3982 = vst.msk [vmem:[#allocation3 + $0xd68] sm:$0xff] %vm1662, %v3376
  %3983 = vst.msk [vmem:[#allocation3 + $0xd70] sm:$0xff] %vm1662, %v3377
  %3984 = vst.msk [vmem:[#allocation3 + $0xd78] sm:$0xff] %vm1662, %v3378
  %3985 = vst.msk [vmem:[#allocation3 + $0xd80] sm:$0xff] %vm1662, %v3379
  %3986 = vst.msk [vmem:[#allocation3 + $0xd88] sm:$0xff] %vm1662, %v3380
  %3987 = vst.msk [vmem:[#allocation3 + $0xd90] sm:$0xff] %vm1662, %v3381
  %3988 = vst.msk [vmem:[#allocation3 + $0xd98] sm:$0xff] %vm1662, %v3382
  %3989 = vst.msk [vmem:[#allocation3 + $0xda0] sm:$0xff] %vm1662, %v3383
  %3990 = vst.msk [vmem:[#allocation3 + $0xda8] sm:$0xff] %vm1662, %v3384
  %3991 = vst.msk [vmem:[#allocation3 + $0xdb0] sm:$0xff] %vm1662, %v3385
  %3992 = vst.msk [vmem:[#allocation3 + $0xdb8] sm:$0xff] %vm1662, %v3386
  %3993 = vst.msk [vmem:[#allocation3 + $0xdc0] sm:$0xff] %vm1662, %v3387
  %3994 = vst.msk [vmem:[#allocation3 + $0xdc8] sm:$0xff] %vm1662, %v3388
  %3995 = vst.msk [vmem:[#allocation3 + $0xdd0] sm:$0xff] %vm1662, %v3389
  %3996 = vst.msk [vmem:[#allocation3 + $0xdd8] sm:$0xff] %vm1662, %v3390
  %3997 = vst.msk [vmem:[#allocation3 + $0xde0] sm:$0xff] %vm1662, %v3391
  %3998 = vst.msk [vmem:[#allocation3 + $0xde8] sm:$0xff] %vm1662, %v3392
  %3999 = vst.msk [vmem:[#allocation3 + $0xdf0] sm:$0xff] %vm1662, %v3393
  %4000 = vst.msk [vmem:[#allocation3 + $0xdf8] sm:$0xff] %vm1662, %v3394
  %4001 = vst.msk [vmem:[#allocation3 + $0xe00] sm:$0xff] %vm1662, %v3395
  %4002 = vst.msk [vmem:[#allocation3 + $0xe08] sm:$0xff] %vm1662, %v3396
  %4003 = vst.msk [vmem:[#allocation3 + $0xe10] sm:$0xff] %vm1662, %v3397
  %4004 = vst.msk [vmem:[#allocation3 + $0xe18] sm:$0xff] %vm1662, %v3398
  %4005 = vst.msk [vmem:[#allocation3 + $0xe20] sm:$0xff] %vm1662, %v3399
  %4006 = vst.msk [vmem:[#allocation3 + $0xe28] sm:$0xff] %vm1662, %v3400
  %4007 = vst.msk [vmem:[#allocation3 + $0xe30] sm:$0xff] %vm1662, %v3401
  %4008 = vst.msk [vmem:[#allocation3 + $0xe38] sm:$0xff] %vm1662, %v3402
  %4009 = vst.msk [vmem:[#allocation3 + $0xe40] sm:$0xff] %vm1662, %v3403
  %4010 = vst.msk [vmem:[#allocation3 + $0xe48] sm:$0xff] %vm1662, %v3404
  %4011 = vst.msk [vmem:[#allocation3 + $0xe50] sm:$0xff] %vm1662, %v3405
  %4012 = vst.msk [vmem:[#allocation3 + $0xe58] sm:$0xff] %vm1662, %v3406
  %4013 = vst.msk [vmem:[#allocation3 + $0xe60] sm:$0xff] %vm1662, %v3407
  %4014 = vst.msk [vmem:[#allocation3 + $0xe68] sm:$0xff] %vm1662, %v3408
  %4015 = vst.msk [vmem:[#allocation3 + $0xe70] sm:$0xff] %vm1662, %v3409
  %4016 = vst.msk [vmem:[#allocation3 + $0xe78] sm:$0xff] %vm1662, %v3410
  %4017 = vst.msk [vmem:[#allocation3 + $0xe80] sm:$0xff] %vm1662, %v3411
  %4018 = vst.msk [vmem:[#allocation3 + $0xe88] sm:$0xff] %vm1662, %v3412
  %4019 = vst.msk [vmem:[#allocation3 + $0xe90] sm:$0xff] %vm1662, %v3413
  %4020 = vst.msk [vmem:[#allocation3 + $0xe98] sm:$0xff] %vm1662, %v3414
  %4021 = vst.msk [vmem:[#allocation3 + $0xea0] sm:$0xff] %vm1662, %v3415
  %4022 = vst.msk [vmem:[#allocation3 + $0xea8] sm:$0xff] %vm1662, %v3416
  %4023 = vst.msk [vmem:[#allocation3 + $0xeb0] sm:$0xff] %vm1662, %v3417
  %4024 = vst.msk [vmem:[#allocation3 + $0xeb8] sm:$0xff] %vm1662, %v3418
  %4025 = vst.msk [vmem:[#allocation3 + $0xec0] sm:$0xff] %vm1662, %v3419
  %4026 = vst.msk [vmem:[#allocation3 + $0xec8] sm:$0xff] %vm1662, %v3420
  %4027 = vst.msk [vmem:[#allocation3 + $0xed0] sm:$0xff] %vm1662, %v3421
  %4028 = vst.msk [vmem:[#allocation3 + $0xed8] sm:$0xff] %vm1662, %v3422
  %4029 = vst.msk [vmem:[#allocation3 + $0xee0] sm:$0xff] %vm1662, %v3423
  %4030 = vst.msk [vmem:[#allocation3 + $0xee8] sm:$0xff] %vm1662, %v3424
  %4031 = vst.msk [vmem:[#allocation3 + $0xef0] sm:$0xff] %vm1662, %v3425
  %4032 = vst.msk [vmem:[#allocation3 + $0xef8] sm:$0xff] %vm1662, %v3426
  %4033 = vst.msk [vmem:[#allocation3 + $0xf00] sm:$0xff] %vm1662, %v3427
  %4034 = vst.msk [vmem:[#allocation3 + $0xf08] sm:$0xff] %vm1662, %v3428
  %4035 = vst.msk [vmem:[#allocation3 + $0xf10] sm:$0xff] %vm1662, %v3429
  %4036 = vst.msk [vmem:[#allocation3 + $0xf18] sm:$0xff] %vm1662, %v3430
  %4037 = vst.msk [vmem:[#allocation3 + $0xf20] sm:$0xff] %vm1662, %v3431
  %4038 = vst.msk [vmem:[#allocation3 + $0xf28] sm:$0xff] %vm1662, %v3432
  %4039 = vst.msk [vmem:[#allocation3 + $0xf30] sm:$0xff] %vm1662, %v3433
  %4040 = vst.msk [vmem:[#allocation3 + $0xf38] sm:$0xff] %vm1662, %v3434
  %4041 = vst.msk [vmem:[#allocation3 + $0xf40] sm:$0xff] %vm1662, %v3435
  %4042 = vst.msk [vmem:[#allocation3 + $0xf48] sm:$0xff] %vm1662, %v3436
  %4043 = vst.msk [vmem:[#allocation3 + $0xf50] sm:$0xff] %vm1662, %v3437
  %4044 = vst.msk [vmem:[#allocation3 + $0xf58] sm:$0xff] %vm1662, %v3438
  %4045 = vst.msk [vmem:[#allocation3 + $0xf60] sm:$0xff] %vm1662, %v3439
  %4046 = vst.msk [vmem:[#allocation3 + $0xf68] sm:$0xff] %vm1662, %v3440
  %4047 = vst.msk [vmem:[#allocation3 + $0xf70] sm:$0xff] %vm1662, %v3441
  %4048 = vst.msk [vmem:[#allocation3 + $0xf78] sm:$0xff] %vm1662, %v3442
  %4049 = vst.msk [vmem:[#allocation3 + $0xf80] sm:$0xff] %vm1662, %v3443
  %4050 = vst.msk [vmem:[#allocation3 + $0xf88] sm:$0xff] %vm1662, %v3444
  %4051 = vst.msk [vmem:[#allocation3 + $0xf90] sm:$0xff] %vm1662, %v3445
  %4052 = vst.msk [vmem:[#allocation3 + $0xf98] sm:$0xff] %vm1662, %v3446
  %4053 = vst.msk [vmem:[#allocation3 + $0xfa0] sm:$0xff] %vm1662, %v3447
  %4054 = vst.msk [vmem:[#allocation3 + $0xfa8] sm:$0xff] %vm1662, %v3448
  %4055 = vst.msk [vmem:[#allocation3 + $0xfb0] sm:$0xff] %vm1662, %v3449
  %4056 = vst.msk [vmem:[#allocation3 + $0xfb8] sm:$0xff] %vm1662, %v3450
  %4057 = vst.msk [vmem:[#allocation3 + $0xfc0] sm:$0xff] %vm1662, %v3451
  %4058 = vst.msk [vmem:[#allocation3 + $0xfc8] sm:$0xff] %vm1662, %v3452
  %4059 = vst.msk [vmem:[#allocation3 + $0xfd0] sm:$0xff] %vm1662, %v3453
  %4060 = vst.msk [vmem:[#allocation3 + $0xfd8] sm:$0xff] %vm1662, %v3454
  %4061 = vst.msk [vmem:[#allocation3 + $0xfe0] sm:$0xff] %vm1662, %v3455
  %4062 = vst.msk [vmem:[#allocation3 + $0xfe8] sm:$0xff] %vm1662, %v3456
  %4063 = vst.msk [vmem:[#allocation3 + $0xff0] sm:$0xff] %vm1662, %v3457
  %4064 = vst.msk [vmem:[#allocation3 + $0xff8] sm:$0xff] %vm1662, %v3458
  %4065 = vst.msk [vmem:[#allocation3 + $0x1000] sm:$0xff] %vm1662, %v3459
  %4066 = vst.msk [vmem:[#allocation3 + $0x1008] sm:$0xff] %vm1662, %v3460
  %4067 = vst.msk [vmem:[#allocation3 + $0x1010] sm:$0xff] %vm1662, %v3461
  %4068 = vst.msk [vmem:[#allocation3 + $0x1018] sm:$0xff] %vm1662, %v3462
  %4069 = vst.msk [vmem:[#allocation3 + $0x1020] sm:$0xff] %vm1662, %v3463
  %4070 = vst.msk [vmem:[#allocation3 + $0x1028] sm:$0xff] %vm1662, %v3464
  %4071 = vst.msk [vmem:[#allocation3 + $0x1030] sm:$0xff] %vm1662, %v3465
  %4072 = vst.msk [vmem:[#allocation3 + $0x1038] sm:$0xff] %vm1662, %v3466
  %4073 = vst.msk [vmem:[#allocation3 + $0x1040] sm:$0xff] %vm1662, %v3467
  %4074 = vst.msk [vmem:[#allocation3 + $0x1048] sm:$0xff] %vm1662, %v3468
  %4075 = vst.msk [vmem:[#allocation3 + $0x1050] sm:$0xff] %vm1662, %v3469
  %4076 = vst.msk [vmem:[#allocation3 + $0x1058] sm:$0xff] %vm1662, %v3470
  %4077 = vst.msk [vmem:[#allocation3 + $0x1060] sm:$0xff] %vm1662, %v3471
  %4078 = vst.msk [vmem:[#allocation3 + $0x1068] sm:$0xff] %vm1662, %v3472
  %4079 = vst.msk [vmem:[#allocation3 + $0x1070] sm:$0xff] %vm1662, %v3473
  %4080 = vst.msk [vmem:[#allocation3 + $0x1078] sm:$0xff] %vm1662, %v3474
  %4081 = vst.msk [vmem:[#allocation3 + $0x1080] sm:$0xff] %vm1662, %v3475
  %4082 = vst.msk [vmem:[#allocation3 + $0x1088] sm:$0xff] %vm1662, %v3476
  %4083 = vst.msk [vmem:[#allocation3 + $0x1090] sm:$0xff] %vm1662, %v3477
  %4084 = vst.msk [vmem:[#allocation3 + $0x1098] sm:$0xff] %vm1662, %v3478
  %4085 = vst.msk [vmem:[#allocation3 + $0x10a0] sm:$0xff] %vm1662, %v3479
  %4086 = vst.msk [vmem:[#allocation3 + $0x10a8] sm:$0xff] %vm1662, %v3480
  %4087 = vst.msk [vmem:[#allocation3 + $0x10b0] sm:$0xff] %vm1662, %v3481
  %4088 = vst.msk [vmem:[#allocation3 + $0x10b8] sm:$0xff] %vm1662, %v3482
  %4089 = vst.msk [vmem:[#allocation3 + $0x10c0] sm:$0xff] %vm1662, %v3483
  %4090 = vst.msk [vmem:[#allocation3 + $0x10c8] sm:$0xff] %vm1662, %v3484
  %4091 = vst.msk [vmem:[#allocation3 + $0x10d0] sm:$0xff] %vm1662, %v3485
  %4092 = vst.msk [vmem:[#allocation3 + $0x10d8] sm:$0xff] %vm1662, %v3486
  %4093 = vst.msk [vmem:[#allocation3 + $0x10e0] sm:$0xff] %vm1662, %v3487
  %4094 = vst.msk [vmem:[#allocation3 + $0x10e8] sm:$0xff] %vm1662, %v3488
  %4095 = vst.msk [vmem:[#allocation3 + $0x10f0] sm:$0xff] %vm1662, %v3489
  %4096 = vst.msk [vmem:[#allocation3 + $0x10f8] sm:$0xff] %vm1662, %v3490
  %4097 = vst.msk [vmem:[#allocation3 + $0x1100] sm:$0xff] %vm1662, %v3491
  %4098 = vst.msk [vmem:[#allocation3 + $0x1108] sm:$0xff] %vm1662, %v3492
  %4099 = vst.msk [vmem:[#allocation3 + $0x1110] sm:$0xff] %vm1662, %v3493
  %4100 = vst.msk [vmem:[#allocation3 + $0x1118] sm:$0xff] %vm1662, %v3494
  %4101 = vst.msk [vmem:[#allocation3 + $0x1120] sm:$0xff] %vm1662, %v3495
  %4102 = vst.msk [vmem:[#allocation3 + $0x1128] sm:$0xff] %vm1662, %v3496
  %4103 = vst.msk [vmem:[#allocation3 + $0x1130] sm:$0xff] %vm1662, %v3497
  %4104 = vst.msk [vmem:[#allocation3 + $0x1138] sm:$0xff] %vm1662, %v3498
  %4105 = vst.msk [vmem:[#allocation3 + $0x1140] sm:$0xff] %vm1662, %v3499
  %4106 = vst.msk [vmem:[#allocation3 + $0x1148] sm:$0xff] %vm1662, %v3500
  %4107 = vst.msk [vmem:[#allocation3 + $0x1150] sm:$0xff] %vm1662, %v3501
  %4108 = vst.msk [vmem:[#allocation3 + $0x1158] sm:$0xff] %vm1662, %v3502
  %4109 = vst.msk [vmem:[#allocation3 + $0x1160] sm:$0xff] %vm1662, %v3503
  %4110 = vst.msk [vmem:[#allocation3 + $0x1168] sm:$0xff] %vm1662, %v3504
  %4111 = vst.msk [vmem:[#allocation3 + $0x1170] sm:$0xff] %vm1662, %v3505
  %4112 = vst.msk [vmem:[#allocation3 + $0x1178] sm:$0xff] %vm1662, %v3506
  %4113 = vst.msk [vmem:[#allocation3 + $0x1180] sm:$0xff] %vm1662, %v3507
  %4114 = vst.msk [vmem:[#allocation3 + $0x1188] sm:$0xff] %vm1662, %v3508
  %4115 = vst.msk [vmem:[#allocation3 + $0x1190] sm:$0xff] %vm1662, %v3509
  %4116 = vst.msk [vmem:[#allocation3 + $0x1198] sm:$0xff] %vm1662, %v3510
  %4117 = vst.msk [vmem:[#allocation3 + $0x11a0] sm:$0xff] %vm1662, %v3511
  %4118 = vst.msk [vmem:[#allocation3 + $0x11a8] sm:$0xff] %vm1662, %v3512
  %4119 = vst.msk [vmem:[#allocation3 + $0x11b0] sm:$0xff] %vm1662, %v3513
  %4120 = vst.msk [vmem:[#allocation3 + $0x11b8] sm:$0xff] %vm1662, %v3514
  %4121 = vst.msk [vmem:[#allocation3 + $0x11c0] sm:$0xff] %vm1662, %v3515
  %4122 = vst.msk [vmem:[#allocation3 + $0x11c8] sm:$0xff] %vm1662, %v3516
  %4123 = vst.msk [vmem:[#allocation3 + $0x11d0] sm:$0xff] %vm1662, %v3517
  %4124 = vst.msk [vmem:[#allocation3 + $0x11d8] sm:$0xff] %vm1662, %v3518
  %4125 = vst.msk [vmem:[#allocation3 + $0x11e0] sm:$0xff] %vm1662, %v3519
  %4126 = vst.msk [vmem:[#allocation3 + $0x11e8] sm:$0xff] %vm1662, %v3520
  %4127 = vst.msk [vmem:[#allocation3 + $0x11f0] sm:$0xff] %vm1662, %v3521
  %4128 = vst.msk [vmem:[#allocation3 + $0x11f8] sm:$0xff] %vm1662, %v3522
  %4129 = vst.msk [vmem:[#allocation3 + $0x1200] sm:$0xff] %vm1662, %v3523
  %4130 = vst.msk [vmem:[#allocation3 + $0x1208] sm:$0xff] %vm1662, %v3524
  %4131 = vst.msk [vmem:[#allocation3 + $0x1210] sm:$0xff] %vm1662, %v3525
  %4132 = vst.msk [vmem:[#allocation3 + $0x1218] sm:$0xff] %vm1662, %v3526
  %4133 = vst.msk [vmem:[#allocation3 + $0x1220] sm:$0xff] %vm1662, %v3527
  %4134 = vst.msk [vmem:[#allocation3 + $0x1228] sm:$0xff] %vm1662, %v3528
  %4135 = vst.msk [vmem:[#allocation3 + $0x1230] sm:$0xff] %vm1662, %v3529
  %4136 = vst.msk [vmem:[#allocation3 + $0x1238] sm:$0xff] %vm1662, %v3530
  %4137 = vst.msk [vmem:[#allocation3 + $0x1240] sm:$0xff] %vm1662, %v3531
  %4138 = vst.msk [vmem:[#allocation3 + $0x1248] sm:$0xff] %vm1662, %v3532
  %4139 = vst.msk [vmem:[#allocation3 + $0x1250] sm:$0xff] %vm1662, %v3533
  %4140 = vst.msk [vmem:[#allocation3 + $0x1258] sm:$0xff] %vm1662, %v3534
  %4141 = vst.msk [vmem:[#allocation3 + $0x1260] sm:$0xff] %vm1662, %v3535
  %4142 = vst.msk [vmem:[#allocation3 + $0x1268] sm:$0xff] %vm1662, %v3536
  %4143 = vst.msk [vmem:[#allocation3 + $0x1270] sm:$0xff] %vm1662, %v3537
  %4144 = vst.msk [vmem:[#allocation3 + $0x1278] sm:$0xff] %vm1662, %v3538
  %4145 = vst.msk [vmem:[#allocation3 + $0x1280] sm:$0xff] %vm1662, %v3539
  %4146 = vst.msk [vmem:[#allocation3 + $0x1288] sm:$0xff] %vm1662, %v3540
  %4147 = vst.msk [vmem:[#allocation3 + $0x1290] sm:$0xff] %vm1662, %v3541
  %4148 = vst.msk [vmem:[#allocation3 + $0x1298] sm:$0xff] %vm1662, %v3542
  %4149 = vst.msk [vmem:[#allocation3 + $0x12a0] sm:$0xff] %vm1662, %v3543
  %4150 = vst.msk [vmem:[#allocation3 + $0x12a8] sm:$0xff] %vm1662, %v3544
  %4151 = vst.msk [vmem:[#allocation3 + $0x12b0] sm:$0xff] %vm1662, %v3545
  %4152 = vst.msk [vmem:[#allocation3 + $0x12b8] sm:$0xff] %vm1662, %v3546
  %4153 = vst.msk [vmem:[#allocation3 + $0x12c0] sm:$0xff] %vm1662, %v3547
  %4154 = vst.msk [vmem:[#allocation3 + $0x12c8] sm:$0xff] %vm1662, %v3548
  %4155 = vst.msk [vmem:[#allocation3 + $0x12d0] sm:$0xff] %vm1662, %v3549
  %4156 = vst.msk [vmem:[#allocation3 + $0x12d8] sm:$0xff] %vm1662, %v3550
  %4157 = vst.msk [vmem:[#allocation3 + $0x12e0] sm:$0xff] %vm1662, %v3551
  %4158 = vst.msk [vmem:[#allocation3 + $0x12e8] sm:$0xff] %vm1662, %v3552
  %v4159 = vld [vmem:[%s2] sm:$0xff]
  %v4160 = vld [vmem:[%s2 + $0x8] sm:$0xff]
  %v4161 = vld [vmem:[%s2 + $0x10] sm:$0xff]
  %v4162 = vld [vmem:[%s2 + $0x18] sm:$0xff]
  %v4163 = vld [vmem:[%s2 + $0x20] sm:$0xff]
  %v4164 = vld [vmem:[%s2 + $0x28] sm:$0xff]
  %v4165 = vld [vmem:[%s6] sm:$0xff]
  %v4166 = vld [vmem:[%s6 + $0x8] sm:$0xff]
  %v4167 = vld [vmem:[%s6 + $0x10] sm:$0xff]
  %v4168 = vld [vmem:[%s6 + $0x18] sm:$0xff]
  %v4169 = vld [vmem:[%s6 + $0x20] sm:$0xff]
  %v4170 = vld [vmem:[%s6 + $0x28] sm:$0xff]
  %v4171 = vld [vmem:[%s4] sm:$0xff]
  %v4172 = vld [vmem:[%s4 + $0x8] sm:$0xff]
  %v4173 = vld [vmem:[%s4 + $0x10] sm:$0xff]
  %v4174 = vld [vmem:[%s4 + $0x18] sm:$0xff]
  %v4175 = vld [vmem:[%s4 + $0x20] sm:$0xff]
  %v4176 = vld [vmem:[%s4 + $0x28] sm:$0xff]
  %4178 = vset.pattern.permute.xlu0 0
  %4179 = vperm.xlu0 %4178, %v4171
  %v4180 = vpop.permute.xlu0 %4179
  %4183 = vset.pattern.permute.xlu0 0
  %4184 = vperm.xlu0 %4183, %v4172
  %v4185 = vpop.permute.xlu0 %4184
  %4188 = vset.pattern.permute.xlu0 0
  %4189 = vperm.xlu0 %4188, %v4173
  %v4190 = vpop.permute.xlu0 %4189
  %4193 = vset.pattern.permute.xlu0 0
  %4194 = vperm.xlu0 %4193, %v4174
  %v4195 = vpop.permute.xlu0 %4194
  %4198 = vset.pattern.permute.xlu0 0
  %4199 = vperm.xlu0 %4198, %v4175
  %v4200 = vpop.permute.xlu0 %4199
  %4203 = vset.pattern.permute.xlu0 0
  %4204 = vperm.xlu0 %4203, %v4176
  %v4205 = vpop.permute.xlu0 %4204
  %v4207 = vld [vmem:[%s8] sm:$0xff]
  %v4208 = vld [vmem:[%s8 + $0x8] sm:$0xff]
  %v4209 = vld [vmem:[%s8 + $0x10] sm:$0xff]
  %v4210 = vld [vmem:[%s8 + $0x18] sm:$0xff]
  %v4211 = vld [vmem:[%s8 + $0x20] sm:$0xff]
  %v4212 = vld [vmem:[%s8 + $0x28] sm:$0xff]
  %4214 = vset.pattern.permute.xlu0 0
  %4215 = vperm.xlu0 %4214, %v4207
  %v4216 = vpop.permute.xlu0 %4215
  %4219 = vset.pattern.permute.xlu0 0
  %4220 = vperm.xlu0 %4219, %v4208
  %v4221 = vpop.permute.xlu0 %4220
  %4224 = vset.pattern.permute.xlu0 0
  %4225 = vperm.xlu0 %4224, %v4209
  %v4226 = vpop.permute.xlu0 %4225
  %4229 = vset.pattern.permute.xlu0 0
  %4230 = vperm.xlu0 %4229, %v4210
  %v4231 = vpop.permute.xlu0 %4230
  %4234 = vset.pattern.permute.xlu0 0
  %4235 = vperm.xlu0 %4234, %v4211
  %v4236 = vpop.permute.xlu0 %4235
  %4239 = vset.pattern.permute.xlu0 0
  %4240 = vperm.xlu0 %4239, %v4212
  %v4241 = vpop.permute.xlu0 %4240
  loop: start=0, step=1, limit=50
  $region78: #{tpu_custom_call.1} parent=0 // loop_pre_header
    _
  $region79: #{tpu_custom_call.1} parent=0 // loop_header
    %s4244 = sphi 0, %s4248
    %p4245 = scmp.ge.s32.totalorder %s4244, 50
    %v4249 = vphi 0.0, %v5854
    %v4250 = vphi 0.0, %v5855
    %v4251 = vphi 0.0, %v5956
    %v4252 = vphi 0.0, %v5957
  $region80: #{tpu_custom_call.1} parent=0 // loop_header_branch
    %4247 = sbr.rel (%p4245) target = $region84
  $region81: #{tpu_custom_call.1} parent=0 // loop_body
    %s4253 = smul.u32 %s4244, 2
    %s4254 = ssub.s32 100, %s4253
    %vm4255 = vcmask 130048
    %v4257 = vsel %vm4255, %v4159, 0
    %v4260 = vsel %vm4255, %v4160, 0
    %v4263 = vsel %vm4255, %v4161, 0
    %v4266 = vsel %vm4255, %v4162, 0
    %v4269 = vsel %vm4255, %v4163, 0
    %v4272 = vsel %vm4255, %v4164, 0
    %4274 = vmatpush.msra.mxu0 0.0
    %4275 = vmatpush.msra.mxu0 0.0
    %4276 = vmatpush.msra.mxu0 0.0
    %4277 = vmatpush.msra.mxu0 0.0
    %4278 = vmatpush.msra.mxu0 0.0
    %4279 = vmatpush.msra.mxu0 0.0
    %4280 = vmatpush.msra.mxu0 0.0
    %4281 = vmatpush.msra.mxu0 0.0
    %4282 = vmatpush.msra.mxu0 0.0
    %4283 = vmatpush.msra.mxu0 0.0
    %4284 = vmatpush.msra.mxu0 0.0
    %4285 = vmatpush.msra.mxu0 0.0
    %4286 = vmatpush.msra.mxu0 0.0
    %4287 = vmatpush.msra.mxu0 0.0
    %v4288 = vand.u32 %v4250, 4294901760
    %4289 = vmatpush.msra.mxu0 %v4288
    %v4290 = vand.u32 %v4249, 4294901760
    %4291 = vmatpush.msra.mxu0 %v4290
    %v4292 = vand.u32 %v4257, 4294901760
    %v4293 = vsub.f32 %v4257, %v4292
    %v4294 = vand.u32 %v4293, 4294901760
    %v4295 = vsub.f32 %v4293, %v4294
    %v4296 = vand.u32 %v4295, 4294901760
    %4297 = vmatmul.f32.gmra.mxu0 %v4296
    %v4298 = vpop.f32.mrf.mxu0
    %v4299 = vadd.f32 %v4180, %v4298
    %v4300 = vand.u32 %v4260, 4294901760
    %v4301 = vsub.f32 %v4260, %v4300
    %v4302 = vand.u32 %v4301, 4294901760
    %v4303 = vsub.f32 %v4301, %v4302
    %v4304 = vand.u32 %v4303, 4294901760
    %4305 = vmatmul.f32.gmra.mxu0 %v4304
    %v4306 = vpop.f32.mrf.mxu0
    %v4307 = vadd.f32 %v4185, %v4306
    %v4308 = vand.u32 %v4263, 4294901760
    %v4309 = vsub.f32 %v4263, %v4308
    %v4310 = vand.u32 %v4309, 4294901760
    %v4311 = vsub.f32 %v4309, %v4310
    %v4312 = vand.u32 %v4311, 4294901760
    %4313 = vmatmul.f32.gmra.mxu0 %v4312
    %v4314 = vpop.f32.mrf.mxu0
    %v4315 = vadd.f32 %v4190, %v4314
    %v4316 = vand.u32 %v4266, 4294901760
    %v4317 = vsub.f32 %v4266, %v4316
    %v4318 = vand.u32 %v4317, 4294901760
    %v4319 = vsub.f32 %v4317, %v4318
    %v4320 = vand.u32 %v4319, 4294901760
    %4321 = vmatmul.f32.gmra.mxu0 %v4320
    %v4322 = vpop.f32.mrf.mxu0
    %v4323 = vadd.f32 %v4195, %v4322
    %v4324 = vand.u32 %v4269, 4294901760
    %v4325 = vsub.f32 %v4269, %v4324
    %v4326 = vand.u32 %v4325, 4294901760
    %v4327 = vsub.f32 %v4325, %v4326
    %v4328 = vand.u32 %v4327, 4294901760
    %4329 = vmatmul.f32.gmra.mxu0 %v4328
    %v4330 = vpop.f32.mrf.mxu0
    %v4331 = vadd.f32 %v4200, %v4330
    %v4332 = vand.u32 %v4272, 4294901760
    %v4333 = vsub.f32 %v4272, %v4332
    %v4334 = vand.u32 %v4333, 4294901760
    %v4335 = vsub.f32 %v4333, %v4334
    %v4336 = vand.u32 %v4335, 4294901760
    %4337 = vmatmul.f32.gmra.mxu0 %v4336
    %v4338 = vpop.f32.mrf.mxu0
    %v4339 = vadd.f32 %v4205, %v4338
    %4340 = vdwg.mxu0
    %4341 = vmatpush.msra.mxu0 0.0
    %4342 = vmatpush.msra.mxu0 0.0
    %4343 = vmatpush.msra.mxu0 0.0
    %4344 = vmatpush.msra.mxu0 0.0
    %4345 = vmatpush.msra.mxu0 0.0
    %4346 = vmatpush.msra.mxu0 0.0
    %4347 = vmatpush.msra.mxu0 0.0
    %4348 = vmatpush.msra.mxu0 0.0
    %4349 = vmatpush.msra.mxu0 0.0
    %4350 = vmatpush.msra.mxu0 0.0
    %4351 = vmatpush.msra.mxu0 0.0
    %4352 = vmatpush.msra.mxu0 0.0
    %4353 = vmatpush.msra.mxu0 0.0
    %4354 = vmatpush.msra.mxu0 0.0
    %v4355 = vand.u32 %v4250, 4294901760
    %v4356 = vsub.f32 %v4250, %v4355
    %v4357 = vand.u32 %v4356, 4294901760
    %v4358 = vsub.f32 %v4356, %v4357
    %v4359 = vand.u32 %v4358, 4294901760
    %4360 = vmatpush.msra.mxu0 %v4359
    %v4361 = vand.u32 %v4249, 4294901760
    %v4362 = vsub.f32 %v4249, %v4361
    %v4363 = vand.u32 %v4362, 4294901760
    %v4364 = vsub.f32 %v4362, %v4363
    %v4365 = vand.u32 %v4364, 4294901760
    %4366 = vmatpush.msra.mxu0 %v4365
    %v4367 = vand.u32 %v4257, 4294901760
    %4368 = vmatmul.f32.gmra.mxu0 %v4367
    %v4369 = vpop.f32.mrf.mxu0
    %v4370 = vadd.f32 %v4299, %v4369
    %v4371 = vand.u32 %v4260, 4294901760
    %4372 = vmatmul.f32.gmra.mxu0 %v4371
    %v4373 = vpop.f32.mrf.mxu0
    %v4374 = vadd.f32 %v4307, %v4373
    %v4375 = vand.u32 %v4263, 4294901760
    %4376 = vmatmul.f32.gmra.mxu0 %v4375
    %v4377 = vpop.f32.mrf.mxu0
    %v4378 = vadd.f32 %v4315, %v4377
    %v4379 = vand.u32 %v4266, 4294901760
    %4380 = vmatmul.f32.gmra.mxu0 %v4379
    %v4381 = vpop.f32.mrf.mxu0
    %v4382 = vadd.f32 %v4323, %v4381
    %v4383 = vand.u32 %v4269, 4294901760
    %4384 = vmatmul.f32.gmra.mxu0 %v4383
    %v4385 = vpop.f32.mrf.mxu0
    %v4386 = vadd.f32 %v4331, %v4385
    %v4387 = vand.u32 %v4272, 4294901760
    %4388 = vmatmul.f32.gmra.mxu0 %v4387
    %v4389 = vpop.f32.mrf.mxu0
    %v4390 = vadd.f32 %v4339, %v4389
    %4391 = vdwg.mxu0
    %4392 = vmatpush.msra.mxu0 0.0
    %4393 = vmatpush.msra.mxu0 0.0
    %4394 = vmatpush.msra.mxu0 0.0
    %4395 = vmatpush.msra.mxu0 0.0
    %4396 = vmatpush.msra.mxu0 0.0
    %4397 = vmatpush.msra.mxu0 0.0
    %4398 = vmatpush.msra.mxu0 0.0
    %4399 = vmatpush.msra.mxu0 0.0
    %4400 = vmatpush.msra.mxu0 0.0
    %4401 = vmatpush.msra.mxu0 0.0
    %4402 = vmatpush.msra.mxu0 0.0
    %4403 = vmatpush.msra.mxu0 0.0
    %4404 = vmatpush.msra.mxu0 0.0
    %4405 = vmatpush.msra.mxu0 0.0
    %v4406 = vand.u32 %v4250, 4294901760
    %v4407 = vsub.f32 %v4250, %v4406
    %4408 = vmatpush.msra.mxu0 %v4407
    %v4409 = vand.u32 %v4249, 4294901760
    %v4410 = vsub.f32 %v4249, %v4409
    %4411 = vmatpush.msra.mxu0 %v4410
    %v4412 = vand.u32 %v4257, 4294901760
    %v4413 = vsub.f32 %v4257, %v4412
    %4414 = vmatmul.f32.gmra.mxu0 %v4413
    %v4415 = vpop.f32.mrf.mxu0
    %v4416 = vadd.f32 %v4370, %v4415
    %v4417 = vand.u32 %v4260, 4294901760
    %v4418 = vsub.f32 %v4260, %v4417
    %4419 = vmatmul.f32.gmra.mxu0 %v4418
    %v4420 = vpop.f32.mrf.mxu0
    %v4421 = vadd.f32 %v4374, %v4420
    %v4422 = vand.u32 %v4263, 4294901760
    %v4423 = vsub.f32 %v4263, %v4422
    %4424 = vmatmul.f32.gmra.mxu0 %v4423
    %v4425 = vpop.f32.mrf.mxu0
    %v4426 = vadd.f32 %v4378, %v4425
    %v4427 = vand.u32 %v4266, 4294901760
    %v4428 = vsub.f32 %v4266, %v4427
    %4429 = vmatmul.f32.gmra.mxu0 %v4428
    %v4430 = vpop.f32.mrf.mxu0
    %v4431 = vadd.f32 %v4382, %v4430
    %v4432 = vand.u32 %v4269, 4294901760
    %v4433 = vsub.f32 %v4269, %v4432
    %4434 = vmatmul.f32.gmra.mxu0 %v4433
    %v4435 = vpop.f32.mrf.mxu0
    %v4436 = vadd.f32 %v4386, %v4435
    %v4437 = vand.u32 %v4272, 4294901760
    %v4438 = vsub.f32 %v4272, %v4437
    %4439 = vmatmul.f32.gmra.mxu0 %v4438
    %v4440 = vpop.f32.mrf.mxu0
    %v4441 = vadd.f32 %v4390, %v4440
    %4442 = vdwg.mxu0
    %4443 = vmatpush.msra.mxu0 0.0
    %4444 = vmatpush.msra.mxu0 0.0
    %4445 = vmatpush.msra.mxu0 0.0
    %4446 = vmatpush.msra.mxu0 0.0
    %4447 = vmatpush.msra.mxu0 0.0
    %4448 = vmatpush.msra.mxu0 0.0
    %4449 = vmatpush.msra.mxu0 0.0
    %4450 = vmatpush.msra.mxu0 0.0
    %4451 = vmatpush.msra.mxu0 0.0
    %4452 = vmatpush.msra.mxu0 0.0
    %4453 = vmatpush.msra.mxu0 0.0
    %4454 = vmatpush.msra.mxu0 0.0
    %4455 = vmatpush.msra.mxu0 0.0
    %4456 = vmatpush.msra.mxu0 0.0
    %v4457 = vand.u32 %v4250, 4294901760
    %4458 = vmatpush.msra.mxu0 %v4457
    %v4459 = vand.u32 %v4249, 4294901760
    %4460 = vmatpush.msra.mxu0 %v4459
    %v4461 = vand.u32 %v4257, 4294901760
    %v4462 = vsub.f32 %v4257, %v4461
    %v4463 = vand.u32 %v4462, 4294901760
    %4464 = vmatmul.f32.gmra.mxu0 %v4463
    %v4465 = vpop.f32.mrf.mxu0
    %v4466 = vadd.f32 %v4416, %v4465
    %v4467 = vand.u32 %v4260, 4294901760
    %v4468 = vsub.f32 %v4260, %v4467
    %v4469 = vand.u32 %v4468, 4294901760
    %4470 = vmatmul.f32.gmra.mxu0 %v4469
    %v4471 = vpop.f32.mrf.mxu0
    %v4472 = vadd.f32 %v4421, %v4471
    %v4473 = vand.u32 %v4263, 4294901760
    %v4474 = vsub.f32 %v4263, %v4473
    %v4475 = vand.u32 %v4474, 4294901760
    %4476 = vmatmul.f32.gmra.mxu0 %v4475
    %v4477 = vpop.f32.mrf.mxu0
    %v4478 = vadd.f32 %v4426, %v4477
    %v4479 = vand.u32 %v4266, 4294901760
    %v4480 = vsub.f32 %v4266, %v4479
    %v4481 = vand.u32 %v4480, 4294901760
    %4482 = vmatmul.f32.gmra.mxu0 %v4481
    %v4483 = vpop.f32.mrf.mxu0
    %v4484 = vadd.f32 %v4431, %v4483
    %v4485 = vand.u32 %v4269, 4294901760
    %v4486 = vsub.f32 %v4269, %v4485
    %v4487 = vand.u32 %v4486, 4294901760
    %4488 = vmatmul.f32.gmra.mxu0 %v4487
    %v4489 = vpop.f32.mrf.mxu0
    %v4490 = vadd.f32 %v4436, %v4489
    %v4491 = vand.u32 %v4272, 4294901760
    %v4492 = vsub.f32 %v4272, %v4491
    %v4493 = vand.u32 %v4492, 4294901760
    %4494 = vmatmul.f32.gmra.mxu0 %v4493
    %v4495 = vpop.f32.mrf.mxu0
    %v4496 = vadd.f32 %v4441, %v4495
    %4497 = vdwg.mxu0
    %4498 = vmatpush.msra.mxu0 0.0
    %4499 = vmatpush.msra.mxu0 0.0
    %4500 = vmatpush.msra.mxu0 0.0
    %4501 = vmatpush.msra.mxu0 0.0
    %4502 = vmatpush.msra.mxu0 0.0
    %4503 = vmatpush.msra.mxu0 0.0
    %4504 = vmatpush.msra.mxu0 0.0
    %4505 = vmatpush.msra.mxu0 0.0
    %4506 = vmatpush.msra.mxu0 0.0
    %4507 = vmatpush.msra.mxu0 0.0
    %4508 = vmatpush.msra.mxu0 0.0
    %4509 = vmatpush.msra.mxu0 0.0
    %4510 = vmatpush.msra.mxu0 0.0
    %4511 = vmatpush.msra.mxu0 0.0
    %v4512 = vand.u32 %v4250, 4294901760
    %v4513 = vsub.f32 %v4250, %v4512
    %v4514 = vand.u32 %v4513, 4294901760
    %4515 = vmatpush.msra.mxu0 %v4514
    %v4516 = vand.u32 %v4249, 4294901760
    %v4517 = vsub.f32 %v4249, %v4516
    %v4518 = vand.u32 %v4517, 4294901760
    %4519 = vmatpush.msra.mxu0 %v4518
    %v4520 = vand.u32 %v4257, 4294901760
    %4521 = vmatmul.f32.gmra.mxu0 %v4520
    %v4522 = vpop.f32.mrf.mxu0
    %v4523 = vadd.f32 %v4466, %v4522
    %v4524 = vand.u32 %v4260, 4294901760
    %4525 = vmatmul.f32.gmra.mxu0 %v4524
    %v4526 = vpop.f32.mrf.mxu0
    %v4527 = vadd.f32 %v4472, %v4526
    %v4528 = vand.u32 %v4263, 4294901760
    %4529 = vmatmul.f32.gmra.mxu0 %v4528
    %v4530 = vpop.f32.mrf.mxu0
    %v4531 = vadd.f32 %v4478, %v4530
    %v4532 = vand.u32 %v4266, 4294901760
    %4533 = vmatmul.f32.gmra.mxu0 %v4532
    %v4534 = vpop.f32.mrf.mxu0
    %v4535 = vadd.f32 %v4484, %v4534
    %v4536 = vand.u32 %v4269, 4294901760
    %4537 = vmatmul.f32.gmra.mxu0 %v4536
    %v4538 = vpop.f32.mrf.mxu0
    %v4539 = vadd.f32 %v4490, %v4538
    %v4540 = vand.u32 %v4272, 4294901760
    %4541 = vmatmul.f32.gmra.mxu0 %v4540
    %v4542 = vpop.f32.mrf.mxu0
    %v4543 = vadd.f32 %v4496, %v4542
    %4544 = vdwg.mxu0
    %4545 = vmatpush.msra.mxu0 0.0
    %4546 = vmatpush.msra.mxu0 0.0
    %4547 = vmatpush.msra.mxu0 0.0
    %4548 = vmatpush.msra.mxu0 0.0
    %4549 = vmatpush.msra.mxu0 0.0
    %4550 = vmatpush.msra.mxu0 0.0
    %4551 = vmatpush.msra.mxu0 0.0
    %4552 = vmatpush.msra.mxu0 0.0
    %4553 = vmatpush.msra.mxu0 0.0
    %4554 = vmatpush.msra.mxu0 0.0
    %4555 = vmatpush.msra.mxu0 0.0
    %4556 = vmatpush.msra.mxu0 0.0
    %4557 = vmatpush.msra.mxu0 0.0
    %4558 = vmatpush.msra.mxu0 0.0
    %v4559 = vand.u32 %v4250, 4294901760
    %4560 = vmatpush.msra.mxu0 %v4559
    %v4561 = vand.u32 %v4249, 4294901760
    %4562 = vmatpush.msra.mxu0 %v4561
    %v4563 = vand.u32 %v4257, 4294901760
    %4564 = vmatmul.f32.gmra.mxu0 %v4563
    %v4565 = vpop.f32.mrf.mxu0
    %v4566 = vadd.f32 %v4523, %v4565
    %v4567 = vand.u32 %v4260, 4294901760
    %4568 = vmatmul.f32.gmra.mxu0 %v4567
    %v4569 = vpop.f32.mrf.mxu0
    %v4570 = vadd.f32 %v4527, %v4569
    %v4571 = vand.u32 %v4263, 4294901760
    %4572 = vmatmul.f32.gmra.mxu0 %v4571
    %v4573 = vpop.f32.mrf.mxu0
    %v4574 = vadd.f32 %v4531, %v4573
    %v4575 = vand.u32 %v4266, 4294901760
    %4576 = vmatmul.f32.gmra.mxu0 %v4575
    %v4577 = vpop.f32.mrf.mxu0
    %v4578 = vadd.f32 %v4535, %v4577
    %v4579 = vand.u32 %v4269, 4294901760
    %4580 = vmatmul.f32.gmra.mxu0 %v4579
    %v4581 = vpop.f32.mrf.mxu0
    %v4582 = vadd.f32 %v4539, %v4581
    %v4583 = vand.u32 %v4272, 4294901760
    %4584 = vmatmul.f32.gmra.mxu0 %v4583
    %v4585 = vpop.f32.mrf.mxu0
    %v4586 = vadd.f32 %v4543, %v4585
    %4587 = vdwg.mxu0
    %v4589 = vsel %vm4255, %v4165, 0
    %v4592 = vsel %vm4255, %v4166, 0
    %v4595 = vsel %vm4255, %v4167, 0
    %v4598 = vsel %vm4255, %v4168, 0
    %v4601 = vsel %vm4255, %v4169, 0
    %v4604 = vsel %vm4255, %v4170, 0
    %4606 = vmatpush.msra.mxu0 0.0
    %4607 = vmatpush.msra.mxu0 0.0
    %4608 = vmatpush.msra.mxu0 0.0
    %4609 = vmatpush.msra.mxu0 0.0
    %4610 = vmatpush.msra.mxu0 0.0
    %4611 = vmatpush.msra.mxu0 0.0
    %4612 = vmatpush.msra.mxu0 0.0
    %4613 = vmatpush.msra.mxu0 0.0
    %4614 = vmatpush.msra.mxu0 0.0
    %4615 = vmatpush.msra.mxu0 0.0
    %4616 = vmatpush.msra.mxu0 0.0
    %4617 = vmatpush.msra.mxu0 0.0
    %4618 = vmatpush.msra.mxu0 0.0
    %4619 = vmatpush.msra.mxu0 0.0
    %v4620 = vand.u32 %v4252, 4294901760
    %4621 = vmatpush.msra.mxu0 %v4620
    %v4622 = vand.u32 %v4251, 4294901760
    %4623 = vmatpush.msra.mxu0 %v4622
    %v4624 = vand.u32 %v4589, 4294901760
    %v4625 = vsub.f32 %v4589, %v4624
    %v4626 = vand.u32 %v4625, 4294901760
    %v4627 = vsub.f32 %v4625, %v4626
    %v4628 = vand.u32 %v4627, 4294901760
    %4629 = vmatmul.f32.gmra.mxu0 %v4628
    %v4630 = vpop.f32.mrf.mxu0
    %v4631 = vadd.f32 %v4216, %v4630
    %v4632 = vand.u32 %v4592, 4294901760
    %v4633 = vsub.f32 %v4592, %v4632
    %v4634 = vand.u32 %v4633, 4294901760
    %v4635 = vsub.f32 %v4633, %v4634
    %v4636 = vand.u32 %v4635, 4294901760
    %4637 = vmatmul.f32.gmra.mxu0 %v4636
    %v4638 = vpop.f32.mrf.mxu0
    %v4639 = vadd.f32 %v4221, %v4638
    %v4640 = vand.u32 %v4595, 4294901760
    %v4641 = vsub.f32 %v4595, %v4640
    %v4642 = vand.u32 %v4641, 4294901760
    %v4643 = vsub.f32 %v4641, %v4642
    %v4644 = vand.u32 %v4643, 4294901760
    %4645 = vmatmul.f32.gmra.mxu0 %v4644
    %v4646 = vpop.f32.mrf.mxu0
    %v4647 = vadd.f32 %v4226, %v4646
    %v4648 = vand.u32 %v4598, 4294901760
    %v4649 = vsub.f32 %v4598, %v4648
    %v4650 = vand.u32 %v4649, 4294901760
    %v4651 = vsub.f32 %v4649, %v4650
    %v4652 = vand.u32 %v4651, 4294901760
    %4653 = vmatmul.f32.gmra.mxu0 %v4652
    %v4654 = vpop.f32.mrf.mxu0
    %v4655 = vadd.f32 %v4231, %v4654
    %v4656 = vand.u32 %v4601, 4294901760
    %v4657 = vsub.f32 %v4601, %v4656
    %v4658 = vand.u32 %v4657, 4294901760
    %v4659 = vsub.f32 %v4657, %v4658
    %v4660 = vand.u32 %v4659, 4294901760
    %4661 = vmatmul.f32.gmra.mxu0 %v4660
    %v4662 = vpop.f32.mrf.mxu0
    %v4663 = vadd.f32 %v4236, %v4662
    %v4664 = vand.u32 %v4604, 4294901760
    %v4665 = vsub.f32 %v4604, %v4664
    %v4666 = vand.u32 %v4665, 4294901760
    %v4667 = vsub.f32 %v4665, %v4666
    %v4668 = vand.u32 %v4667, 4294901760
    %4669 = vmatmul.f32.gmra.mxu0 %v4668
    %v4670 = vpop.f32.mrf.mxu0
    %v4671 = vadd.f32 %v4241, %v4670
    %4672 = vdwg.mxu0
    %4673 = vmatpush.msra.mxu0 0.0
    %4674 = vmatpush.msra.mxu0 0.0
    %4675 = vmatpush.msra.mxu0 0.0
    %4676 = vmatpush.msra.mxu0 0.0
    %4677 = vmatpush.msra.mxu0 0.0
    %4678 = vmatpush.msra.mxu0 0.0
    %4679 = vmatpush.msra.mxu0 0.0
    %4680 = vmatpush.msra.mxu0 0.0
    %4681 = vmatpush.msra.mxu0 0.0
    %4682 = vmatpush.msra.mxu0 0.0
    %4683 = vmatpush.msra.mxu0 0.0
    %4684 = vmatpush.msra.mxu0 0.0
    %4685 = vmatpush.msra.mxu0 0.0
    %4686 = vmatpush.msra.mxu0 0.0
    %v4687 = vand.u32 %v4252, 4294901760
    %v4688 = vsub.f32 %v4252, %v4687
    %v4689 = vand.u32 %v4688, 4294901760
    %v4690 = vsub.f32 %v4688, %v4689
    %v4691 = vand.u32 %v4690, 4294901760
    %4692 = vmatpush.msra.mxu0 %v4691
    %v4693 = vand.u32 %v4251, 4294901760
    %v4694 = vsub.f32 %v4251, %v4693
    %v4695 = vand.u32 %v4694, 4294901760
    %v4696 = vsub.f32 %v4694, %v4695
    %v4697 = vand.u32 %v4696, 4294901760
    %4698 = vmatpush.msra.mxu0 %v4697
    %v4699 = vand.u32 %v4589, 4294901760
    %4700 = vmatmul.f32.gmra.mxu0 %v4699
    %v4701 = vpop.f32.mrf.mxu0
    %v4702 = vadd.f32 %v4631, %v4701
    %v4703 = vand.u32 %v4592, 4294901760
    %4704 = vmatmul.f32.gmra.mxu0 %v4703
    %v4705 = vpop.f32.mrf.mxu0
    %v4706 = vadd.f32 %v4639, %v4705
    %v4707 = vand.u32 %v4595, 4294901760
    %4708 = vmatmul.f32.gmra.mxu0 %v4707
    %v4709 = vpop.f32.mrf.mxu0
    %v4710 = vadd.f32 %v4647, %v4709
    %v4711 = vand.u32 %v4598, 4294901760
    %4712 = vmatmul.f32.gmra.mxu0 %v4711
    %v4713 = vpop.f32.mrf.mxu0
    %v4714 = vadd.f32 %v4655, %v4713
    %v4715 = vand.u32 %v4601, 4294901760
    %4716 = vmatmul.f32.gmra.mxu0 %v4715
    %v4717 = vpop.f32.mrf.mxu0
    %v4718 = vadd.f32 %v4663, %v4717
    %v4719 = vand.u32 %v4604, 4294901760
    %4720 = vmatmul.f32.gmra.mxu0 %v4719
    %v4721 = vpop.f32.mrf.mxu0
    %v4722 = vadd.f32 %v4671, %v4721
    %4723 = vdwg.mxu0
    %4724 = vmatpush.msra.mxu0 0.0
    %4725 = vmatpush.msra.mxu0 0.0
    %4726 = vmatpush.msra.mxu0 0.0
    %4727 = vmatpush.msra.mxu0 0.0
    %4728 = vmatpush.msra.mxu0 0.0
    %4729 = vmatpush.msra.mxu0 0.0
    %4730 = vmatpush.msra.mxu0 0.0
    %4731 = vmatpush.msra.mxu0 0.0
    %4732 = vmatpush.msra.mxu0 0.0
    %4733 = vmatpush.msra.mxu0 0.0
    %4734 = vmatpush.msra.mxu0 0.0
    %4735 = vmatpush.msra.mxu0 0.0
    %4736 = vmatpush.msra.mxu0 0.0
    %4737 = vmatpush.msra.mxu0 0.0
    %v4738 = vand.u32 %v4252, 4294901760
    %v4739 = vsub.f32 %v4252, %v4738
    %4740 = vmatpush.msra.mxu0 %v4739
    %v4741 = vand.u32 %v4251, 4294901760
    %v4742 = vsub.f32 %v4251, %v4741
    %4743 = vmatpush.msra.mxu0 %v4742
    %v4744 = vand.u32 %v4589, 4294901760
    %v4745 = vsub.f32 %v4589, %v4744
    %4746 = vmatmul.f32.gmra.mxu0 %v4745
    %v4747 = vpop.f32.mrf.mxu0
    %v4748 = vadd.f32 %v4702, %v4747
    %v4749 = vand.u32 %v4592, 4294901760
    %v4750 = vsub.f32 %v4592, %v4749
    %4751 = vmatmul.f32.gmra.mxu0 %v4750
    %v4752 = vpop.f32.mrf.mxu0
    %v4753 = vadd.f32 %v4706, %v4752
    %v4754 = vand.u32 %v4595, 4294901760
    %v4755 = vsub.f32 %v4595, %v4754
    %4756 = vmatmul.f32.gmra.mxu0 %v4755
    %v4757 = vpop.f32.mrf.mxu0
    %v4758 = vadd.f32 %v4710, %v4757
    %v4759 = vand.u32 %v4598, 4294901760
    %v4760 = vsub.f32 %v4598, %v4759
    %4761 = vmatmul.f32.gmra.mxu0 %v4760
    %v4762 = vpop.f32.mrf.mxu0
    %v4763 = vadd.f32 %v4714, %v4762
    %v4764 = vand.u32 %v4601, 4294901760
    %v4765 = vsub.f32 %v4601, %v4764
    %4766 = vmatmul.f32.gmra.mxu0 %v4765
    %v4767 = vpop.f32.mrf.mxu0
    %v4768 = vadd.f32 %v4718, %v4767
    %v4769 = vand.u32 %v4604, 4294901760
    %v4770 = vsub.f32 %v4604, %v4769
    %4771 = vmatmul.f32.gmra.mxu0 %v4770
    %v4772 = vpop.f32.mrf.mxu0
    %v4773 = vadd.f32 %v4722, %v4772
    %4774 = vdwg.mxu0
    %4775 = vmatpush.msra.mxu0 0.0
    %4776 = vmatpush.msra.mxu0 0.0
    %4777 = vmatpush.msra.mxu0 0.0
    %4778 = vmatpush.msra.mxu0 0.0
    %4779 = vmatpush.msra.mxu0 0.0
    %4780 = vmatpush.msra.mxu0 0.0
    %4781 = vmatpush.msra.mxu0 0.0
    %4782 = vmatpush.msra.mxu0 0.0
    %4783 = vmatpush.msra.mxu0 0.0
    %4784 = vmatpush.msra.mxu0 0.0
    %4785 = vmatpush.msra.mxu0 0.0
    %4786 = vmatpush.msra.mxu0 0.0
    %4787 = vmatpush.msra.mxu0 0.0
    %4788 = vmatpush.msra.mxu0 0.0
    %v4789 = vand.u32 %v4252, 4294901760
    %4790 = vmatpush.msra.mxu0 %v4789
    %v4791 = vand.u32 %v4251, 4294901760
    %4792 = vmatpush.msra.mxu0 %v4791
    %v4793 = vand.u32 %v4589, 4294901760
    %v4794 = vsub.f32 %v4589, %v4793
    %v4795 = vand.u32 %v4794, 4294901760
    %4796 = vmatmul.f32.gmra.mxu0 %v4795
    %v4797 = vpop.f32.mrf.mxu0
    %v4798 = vadd.f32 %v4748, %v4797
    %v4799 = vand.u32 %v4592, 4294901760
    %v4800 = vsub.f32 %v4592, %v4799
    %v4801 = vand.u32 %v4800, 4294901760
    %4802 = vmatmul.f32.gmra.mxu0 %v4801
    %v4803 = vpop.f32.mrf.mxu0
    %v4804 = vadd.f32 %v4753, %v4803
    %v4805 = vand.u32 %v4595, 4294901760
    %v4806 = vsub.f32 %v4595, %v4805
    %v4807 = vand.u32 %v4806, 4294901760
    %4808 = vmatmul.f32.gmra.mxu0 %v4807
    %v4809 = vpop.f32.mrf.mxu0
    %v4810 = vadd.f32 %v4758, %v4809
    %v4811 = vand.u32 %v4598, 4294901760
    %v4812 = vsub.f32 %v4598, %v4811
    %v4813 = vand.u32 %v4812, 4294901760
    %4814 = vmatmul.f32.gmra.mxu0 %v4813
    %v4815 = vpop.f32.mrf.mxu0
    %v4816 = vadd.f32 %v4763, %v4815
    %v4817 = vand.u32 %v4601, 4294901760
    %v4818 = vsub.f32 %v4601, %v4817
    %v4819 = vand.u32 %v4818, 4294901760
    %4820 = vmatmul.f32.gmra.mxu0 %v4819
    %v4821 = vpop.f32.mrf.mxu0
    %v4822 = vadd.f32 %v4768, %v4821
    %v4823 = vand.u32 %v4604, 4294901760
    %v4824 = vsub.f32 %v4604, %v4823
    %v4825 = vand.u32 %v4824, 4294901760
    %4826 = vmatmul.f32.gmra.mxu0 %v4825
    %v4827 = vpop.f32.mrf.mxu0
    %v4828 = vadd.f32 %v4773, %v4827
    %4829 = vdwg.mxu0
    %4830 = vmatpush.msra.mxu0 0.0
    %4831 = vmatpush.msra.mxu0 0.0
    %4832 = vmatpush.msra.mxu0 0.0
    %4833 = vmatpush.msra.mxu0 0.0
    %4834 = vmatpush.msra.mxu0 0.0
    %4835 = vmatpush.msra.mxu0 0.0
    %4836 = vmatpush.msra.mxu0 0.0
    %4837 = vmatpush.msra.mxu0 0.0
    %4838 = vmatpush.msra.mxu0 0.0
    %4839 = vmatpush.msra.mxu0 0.0
    %4840 = vmatpush.msra.mxu0 0.0
    %4841 = vmatpush.msra.mxu0 0.0
    %4842 = vmatpush.msra.mxu0 0.0
    %4843 = vmatpush.msra.mxu0 0.0
    %v4844 = vand.u32 %v4252, 4294901760
    %v4845 = vsub.f32 %v4252, %v4844
    %v4846 = vand.u32 %v4845, 4294901760
    %4847 = vmatpush.msra.mxu0 %v4846
    %v4848 = vand.u32 %v4251, 4294901760
    %v4849 = vsub.f32 %v4251, %v4848
    %v4850 = vand.u32 %v4849, 4294901760
    %4851 = vmatpush.msra.mxu0 %v4850
    %v4852 = vand.u32 %v4589, 4294901760
    %4853 = vmatmul.f32.gmra.mxu0 %v4852
    %v4854 = vpop.f32.mrf.mxu0
    %v4855 = vadd.f32 %v4798, %v4854
    %v4856 = vand.u32 %v4592, 4294901760
    %4857 = vmatmul.f32.gmra.mxu0 %v4856
    %v4858 = vpop.f32.mrf.mxu0
    %v4859 = vadd.f32 %v4804, %v4858
    %v4860 = vand.u32 %v4595, 4294901760
    %4861 = vmatmul.f32.gmra.mxu0 %v4860
    %v4862 = vpop.f32.mrf.mxu0
    %v4863 = vadd.f32 %v4810, %v4862
    %v4864 = vand.u32 %v4598, 4294901760
    %4865 = vmatmul.f32.gmra.mxu0 %v4864
    %v4866 = vpop.f32.mrf.mxu0
    %v4867 = vadd.f32 %v4816, %v4866
    %v4868 = vand.u32 %v4601, 4294901760
    %4869 = vmatmul.f32.gmra.mxu0 %v4868
    %v4870 = vpop.f32.mrf.mxu0
    %v4871 = vadd.f32 %v4822, %v4870
    %v4872 = vand.u32 %v4604, 4294901760
    %4873 = vmatmul.f32.gmra.mxu0 %v4872
    %v4874 = vpop.f32.mrf.mxu0
    %v4875 = vadd.f32 %v4828, %v4874
    %4876 = vdwg.mxu0
    %4877 = vmatpush.msra.mxu0 0.0
    %4878 = vmatpush.msra.mxu0 0.0
    %4879 = vmatpush.msra.mxu0 0.0
    %4880 = vmatpush.msra.mxu0 0.0
    %4881 = vmatpush.msra.mxu0 0.0
    %4882 = vmatpush.msra.mxu0 0.0
    %4883 = vmatpush.msra.mxu0 0.0
    %4884 = vmatpush.msra.mxu0 0.0
    %4885 = vmatpush.msra.mxu0 0.0
    %4886 = vmatpush.msra.mxu0 0.0
    %4887 = vmatpush.msra.mxu0 0.0
    %4888 = vmatpush.msra.mxu0 0.0
    %4889 = vmatpush.msra.mxu0 0.0
    %4890 = vmatpush.msra.mxu0 0.0
    %v4891 = vand.u32 %v4252, 4294901760
    %4892 = vmatpush.msra.mxu0 %v4891
    %v4893 = vand.u32 %v4251, 4294901760
    %4894 = vmatpush.msra.mxu0 %v4893
    %v4895 = vand.u32 %v4589, 4294901760
    %4896 = vmatmul.f32.gmra.mxu0 %v4895
    %v4897 = vpop.f32.mrf.mxu0
    %v4898 = vadd.f32 %v4855, %v4897
    %v4899 = vand.u32 %v4592, 4294901760
    %4900 = vmatmul.f32.gmra.mxu0 %v4899
    %v4901 = vpop.f32.mrf.mxu0
    %v4902 = vadd.f32 %v4859, %v4901
    %v4903 = vand.u32 %v4595, 4294901760
    %4904 = vmatmul.f32.gmra.mxu0 %v4903
    %v4905 = vpop.f32.mrf.mxu0
    %v4906 = vadd.f32 %v4863, %v4905
    %v4907 = vand.u32 %v4598, 4294901760
    %4908 = vmatmul.f32.gmra.mxu0 %v4907
    %v4909 = vpop.f32.mrf.mxu0
    %v4910 = vadd.f32 %v4867, %v4909
    %v4911 = vand.u32 %v4601, 4294901760
    %4912 = vmatmul.f32.gmra.mxu0 %v4911
    %v4913 = vpop.f32.mrf.mxu0
    %v4914 = vadd.f32 %v4871, %v4913
    %v4915 = vand.u32 %v4604, 4294901760
    %4916 = vmatmul.f32.gmra.mxu0 %v4915
    %v4917 = vpop.f32.mrf.mxu0
    %v4918 = vadd.f32 %v4875, %v4917
    %4919 = vdwg.mxu0
    %s4920 = smul.u32 %s4253, 48
    %s4921 = scalar_lea.vmem [#allocation2], %s4920
    %v4922 = vld [vmem:[%s4921] sm:$0xff]
    %v4923 = vld [vmem:[%s4921 + $0x8] sm:$0xff]
    %v4924 = vld [vmem:[%s4921 + $0x10] sm:$0xff]
    %v4925 = vld [vmem:[%s4921 + $0x18] sm:$0xff]
    %v4926 = vld [vmem:[%s4921 + $0x20] sm:$0xff]
    %v4927 = vld [vmem:[%s4921 + $0x28] sm:$0xff]
    %v4928 = vadd.f32 %v4922, %v4566
    %v4929 = vadd.f32 %v4923, %v4570
    %v4930 = vxor.u32 %v4928, 2147483648
    %v4931 = vxor.u32 %v4929, 2147483648
    %v4932 = vmul.f32 %v4930, 1.442695
    %v4933 = vpow.pop %v4932
    %v4934 = vmul.f32 %v4931, 1.442695
    %v4935 = vpow.pop %v4934
    %v4936 = vadd.f32 %v4933, 1.0
    %v4937 = vadd.f32 %v4935, 1.0
    %v4938 = vrcp.pop %v4936
    %v4939 = vmul.f32 %v4936, %v4938
    %v4940 = vsub.f32 1.0, %v4939
    %v4941 = vmul.f32 %v4938, %v4940
    %v4942 = vadd.f32 %v4938, %v4941
    %vm4943 = vweird.f32 %v4936
    %vm4944 = vweird.f32 %v4938
    %vm4945 = vmor %vm4943, %vm4944
    %v4946 = vsel %vm4945, %v4938, %v4942
    %v4947 = vand.u32 2147483647, %v4936
    %vm4948 = vcmp.eq.f32.partialorder %v4947, 8.507059e+37
    %v4949 = vand.u32 %v4936, 2147483648
    %v4950 = vor.u32 1.1754944e-38, %v4949
    %v4951 = vsel %vm4948, %v4950, %v4946
    %v4952 = vmul.f32 1.0, %v4951
    %v4953 = vrcp.pop %v4937
    %v4954 = vmul.f32 %v4937, %v4953
    %v4955 = vsub.f32 1.0, %v4954
    %v4956 = vmul.f32 %v4953, %v4955
    %v4957 = vadd.f32 %v4953, %v4956
    %vm4958 = vweird.f32 %v4937
    %vm4959 = vweird.f32 %v4953
    %vm4960 = vmor %vm4958, %vm4959
    %v4961 = vsel %vm4960, %v4953, %v4957
    %v4962 = vand.u32 2147483647, %v4937
    %vm4963 = vcmp.eq.f32.partialorder %v4962, 8.507059e+37
    %v4964 = vand.u32 %v4937, 2147483648
    %v4965 = vor.u32 1.1754944e-38, %v4964
    %v4966 = vsel %vm4963, %v4965, %v4961
    %v4967 = vmul.f32 1.0, %v4966
    %v4968 = vadd.f32 %v4924, %v4574
    %v4969 = vadd.f32 %v4925, %v4578
    %v4970 = vxor.u32 %v4968, 2147483648
    %v4971 = vxor.u32 %v4969, 2147483648
    %v4972 = vmul.f32 %v4970, 1.442695
    %v4973 = vpow.pop %v4972
    %v4974 = vmul.f32 %v4971, 1.442695
    %v4975 = vpow.pop %v4974
    %v4976 = vadd.f32 %v4973, 1.0
    %v4977 = vadd.f32 %v4975, 1.0
    %v4978 = vrcp.pop %v4976
    %v4979 = vmul.f32 %v4976, %v4978
    %v4980 = vsub.f32 1.0, %v4979
    %v4981 = vmul.f32 %v4978, %v4980
    %v4982 = vadd.f32 %v4978, %v4981
    %vm4983 = vweird.f32 %v4976
    %vm4984 = vweird.f32 %v4978
    %vm4985 = vmor %vm4983, %vm4984
    %v4986 = vsel %vm4985, %v4978, %v4982
    %v4987 = vand.u32 2147483647, %v4976
    %vm4988 = vcmp.eq.f32.partialorder %v4987, 8.507059e+37
    %v4989 = vand.u32 %v4976, 2147483648
    %v4990 = vor.u32 1.1754944e-38, %v4989
    %v4991 = vsel %vm4988, %v4990, %v4986
    %v4992 = vmul.f32 1.0, %v4991
    %v4993 = vrcp.pop %v4977
    %v4994 = vmul.f32 %v4977, %v4993
    %v4995 = vsub.f32 1.0, %v4994
    %v4996 = vmul.f32 %v4993, %v4995
    %v4997 = vadd.f32 %v4993, %v4996
    %vm4998 = vweird.f32 %v4977
    %vm4999 = vweird.f32 %v4993
    %vm5000 = vmor %vm4998, %vm4999
    %v5001 = vsel %vm5000, %v4993, %v4997
    %v5002 = vand.u32 2147483647, %v4977
    %vm5003 = vcmp.eq.f32.partialorder %v5002, 8.507059e+37
    %v5004 = vand.u32 %v4977, 2147483648
    %v5005 = vor.u32 1.1754944e-38, %v5004
    %v5006 = vsel %vm5003, %v5005, %v5001
    %v5007 = vmul.f32 1.0, %v5006
    %v5008 = vmul.f32 %v4952, %v4582
    %v5009 = vmul.f32 %v4967, %v4586
    %v5010 = vadd.f32 %v4926, %v5008
    %v5011 = vadd.f32 %v4927, %v5009
    %v5012 = vtanh.pop %v5010
    %v5013 = vtanh.pop %v5011
    %v5014 = vsub.f32 1.0, %v4992
    %v5015 = vsub.f32 1.0, %v5007
    %v5016 = vmul.f32 %v5014, %v5012
    %v5017 = vmul.f32 %v5015, %v5013
    %v5018 = vmul.f32 %v4992, %v4249
    %v5019 = vmul.f32 %v5007, %v4250
    %v5020 = vadd.f32 %v5016, %v5018
    %v5021 = vadd.f32 %v5017, %v5019
    %s5022 = smul.u32 %s4254, 48
    %s5023 = scalar_lea.vmem [#allocation3], %s5022
    %v5024 = vld [vmem:[%s5023] sm:$0xff]
    %v5025 = vld [vmem:[%s5023 + $0x8] sm:$0xff]
    %v5026 = vld [vmem:[%s5023 + $0x10] sm:$0xff]
    %v5027 = vld [vmem:[%s5023 + $0x18] sm:$0xff]
    %v5028 = vld [vmem:[%s5023 + $0x20] sm:$0xff]
    %v5029 = vld [vmem:[%s5023 + $0x28] sm:$0xff]
    %v5030 = vadd.f32 %v5024, %v4898
    %v5031 = vadd.f32 %v5025, %v4902
    %v5032 = vxor.u32 %v5030, 2147483648
    %v5033 = vxor.u32 %v5031, 2147483648
    %v5034 = vmul.f32 %v5032, 1.442695
    %v5035 = vpow.pop %v5034
    %v5036 = vmul.f32 %v5033, 1.442695
    %v5037 = vpow.pop %v5036
    %v5038 = vadd.f32 %v5035, 1.0
    %v5039 = vadd.f32 %v5037, 1.0
    %v5040 = vrcp.pop %v5038
    %v5041 = vmul.f32 %v5038, %v5040
    %v5042 = vsub.f32 1.0, %v5041
    %v5043 = vmul.f32 %v5040, %v5042
    %v5044 = vadd.f32 %v5040, %v5043
    %vm5045 = vweird.f32 %v5038
    %vm5046 = vweird.f32 %v5040
    %vm5047 = vmor %vm5045, %vm5046
    %v5048 = vsel %vm5047, %v5040, %v5044
    %v5049 = vand.u32 2147483647, %v5038
    %vm5050 = vcmp.eq.f32.partialorder %v5049, 8.507059e+37
    %v5051 = vand.u32 %v5038, 2147483648
    %v5052 = vor.u32 1.1754944e-38, %v5051
    %v5053 = vsel %vm5050, %v5052, %v5048
    %v5054 = vmul.f32 1.0, %v5053
    %v5055 = vrcp.pop %v5039
    %v5056 = vmul.f32 %v5039, %v5055
    %v5057 = vsub.f32 1.0, %v5056
    %v5058 = vmul.f32 %v5055, %v5057
    %v5059 = vadd.f32 %v5055, %v5058
    %vm5060 = vweird.f32 %v5039
    %vm5061 = vweird.f32 %v5055
    %vm5062 = vmor %vm5060, %vm5061
    %v5063 = vsel %vm5062, %v5055, %v5059
    %v5064 = vand.u32 2147483647, %v5039
    %vm5065 = vcmp.eq.f32.partialorder %v5064, 8.507059e+37
    %v5066 = vand.u32 %v5039, 2147483648
    %v5067 = vor.u32 1.1754944e-38, %v5066
    %v5068 = vsel %vm5065, %v5067, %v5063
    %v5069 = vmul.f32 1.0, %v5068
    %v5070 = vadd.f32 %v5026, %v4906
    %v5071 = vadd.f32 %v5027, %v4910
    %v5072 = vxor.u32 %v5070, 2147483648
    %v5073 = vxor.u32 %v5071, 2147483648
    %v5074 = vmul.f32 %v5072, 1.442695
    %v5075 = vpow.pop %v5074
    %v5076 = vmul.f32 %v5073, 1.442695
    %v5077 = vpow.pop %v5076
    %v5078 = vadd.f32 %v5075, 1.0
    %v5079 = vadd.f32 %v5077, 1.0
    %v5080 = vrcp.pop %v5078
    %v5081 = vmul.f32 %v5078, %v5080
    %v5082 = vsub.f32 1.0, %v5081
    %v5083 = vmul.f32 %v5080, %v5082
    %v5084 = vadd.f32 %v5080, %v5083
    %vm5085 = vweird.f32 %v5078
    %vm5086 = vweird.f32 %v5080
    %vm5087 = vmor %vm5085, %vm5086
    %v5088 = vsel %vm5087, %v5080, %v5084
    %v5089 = vand.u32 2147483647, %v5078
    %vm5090 = vcmp.eq.f32.partialorder %v5089, 8.507059e+37
    %v5091 = vand.u32 %v5078, 2147483648
    %v5092 = vor.u32 1.1754944e-38, %v5091
    %v5093 = vsel %vm5090, %v5092, %v5088
    %v5094 = vmul.f32 1.0, %v5093
    %v5095 = vrcp.pop %v5079
    %v5096 = vmul.f32 %v5079, %v5095
    %v5097 = vsub.f32 1.0, %v5096
    %v5098 = vmul.f32 %v5095, %v5097
    %v5099 = vadd.f32 %v5095, %v5098
    %vm5100 = vweird.f32 %v5079
    %vm5101 = vweird.f32 %v5095
    %vm5102 = vmor %vm5100, %vm5101
    %v5103 = vsel %vm5102, %v5095, %v5099
    %v5104 = vand.u32 2147483647, %v5079
    %vm5105 = vcmp.eq.f32.partialorder %v5104, 8.507059e+37
    %v5106 = vand.u32 %v5079, 2147483648
    %v5107 = vor.u32 1.1754944e-38, %v5106
    %v5108 = vsel %vm5105, %v5107, %v5103
    %v5109 = vmul.f32 1.0, %v5108
    %v5110 = vmul.f32 %v5054, %v4914
    %v5111 = vmul.f32 %v5069, %v4918
    %v5112 = vadd.f32 %v5028, %v5110
    %v5113 = vadd.f32 %v5029, %v5111
    %v5114 = vtanh.pop %v5112
    %v5115 = vtanh.pop %v5113
    %v5116 = vsub.f32 1.0, %v5094
    %v5117 = vsub.f32 1.0, %v5109
    %v5118 = vmul.f32 %v5116, %v5114
    %v5119 = vmul.f32 %v5117, %v5115
    %v5120 = vmul.f32 %v5094, %v4251
    %v5121 = vmul.f32 %v5109, %v4252
    %v5122 = vadd.f32 %v5118, %v5120
    %v5123 = vadd.f32 %v5119, %v5121
    %s5124 = sadd.s32 %s4253, 1
    %s5125 = ssub.s32 99, %s4253
    %5126 = vmatpush.msra.mxu0 0.0
    %5127 = vmatpush.msra.mxu0 0.0
    %5128 = vmatpush.msra.mxu0 0.0
    %5129 = vmatpush.msra.mxu0 0.0
    %5130 = vmatpush.msra.mxu0 0.0
    %5131 = vmatpush.msra.mxu0 0.0
    %5132 = vmatpush.msra.mxu0 0.0
    %5133 = vmatpush.msra.mxu0 0.0
    %5134 = vmatpush.msra.mxu0 0.0
    %5135 = vmatpush.msra.mxu0 0.0
    %5136 = vmatpush.msra.mxu0 0.0
    %5137 = vmatpush.msra.mxu0 0.0
    %5138 = vmatpush.msra.mxu0 0.0
    %5139 = vmatpush.msra.mxu0 0.0
    %v5140 = vand.u32 %v5021, 4294901760
    %5141 = vmatpush.msra.mxu0 %v5140
    %v5142 = vand.u32 %v5020, 4294901760
    %5143 = vmatpush.msra.mxu0 %v5142
    %v5144 = vand.u32 %v4257, 4294901760
    %v5145 = vsub.f32 %v4257, %v5144
    %v5146 = vand.u32 %v5145, 4294901760
    %v5147 = vsub.f32 %v5145, %v5146
    %v5148 = vand.u32 %v5147, 4294901760
    %5149 = vmatmul.f32.gmra.mxu0 %v5148
    %v5150 = vpop.f32.mrf.mxu0
    %v5151 = vadd.f32 %v4180, %v5150
    %v5152 = vand.u32 %v4260, 4294901760
    %v5153 = vsub.f32 %v4260, %v5152
    %v5154 = vand.u32 %v5153, 4294901760
    %v5155 = vsub.f32 %v5153, %v5154
    %v5156 = vand.u32 %v5155, 4294901760
    %5157 = vmatmul.f32.gmra.mxu0 %v5156
    %v5158 = vpop.f32.mrf.mxu0
    %v5159 = vadd.f32 %v4185, %v5158
    %v5160 = vand.u32 %v4263, 4294901760
    %v5161 = vsub.f32 %v4263, %v5160
    %v5162 = vand.u32 %v5161, 4294901760
    %v5163 = vsub.f32 %v5161, %v5162
    %v5164 = vand.u32 %v5163, 4294901760
    %5165 = vmatmul.f32.gmra.mxu0 %v5164
    %v5166 = vpop.f32.mrf.mxu0
    %v5167 = vadd.f32 %v4190, %v5166
    %v5168 = vand.u32 %v4266, 4294901760
    %v5169 = vsub.f32 %v4266, %v5168
    %v5170 = vand.u32 %v5169, 4294901760
    %v5171 = vsub.f32 %v5169, %v5170
    %v5172 = vand.u32 %v5171, 4294901760
    %5173 = vmatmul.f32.gmra.mxu0 %v5172
    %v5174 = vpop.f32.mrf.mxu0
    %v5175 = vadd.f32 %v4195, %v5174
    %v5176 = vand.u32 %v4269, 4294901760
    %v5177 = vsub.f32 %v4269, %v5176
    %v5178 = vand.u32 %v5177, 4294901760
    %v5179 = vsub.f32 %v5177, %v5178
    %v5180 = vand.u32 %v5179, 4294901760
    %5181 = vmatmul.f32.gmra.mxu0 %v5180
    %v5182 = vpop.f32.mrf.mxu0
    %v5183 = vadd.f32 %v4200, %v5182
    %v5184 = vand.u32 %v4272, 4294901760
    %v5185 = vsub.f32 %v4272, %v5184
    %v5186 = vand.u32 %v5185, 4294901760
    %v5187 = vsub.f32 %v5185, %v5186
    %v5188 = vand.u32 %v5187, 4294901760
    %5189 = vmatmul.f32.gmra.mxu0 %v5188
    %v5190 = vpop.f32.mrf.mxu0
    %v5191 = vadd.f32 %v4205, %v5190
    %5192 = vdwg.mxu0
    %5193 = vmatpush.msra.mxu0 0.0
    %5194 = vmatpush.msra.mxu0 0.0
    %5195 = vmatpush.msra.mxu0 0.0
    %5196 = vmatpush.msra.mxu0 0.0
    %5197 = vmatpush.msra.mxu0 0.0
    %5198 = vmatpush.msra.mxu0 0.0
    %5199 = vmatpush.msra.mxu0 0.0
    %5200 = vmatpush.msra.mxu0 0.0
    %5201 = vmatpush.msra.mxu0 0.0
    %5202 = vmatpush.msra.mxu0 0.0
    %5203 = vmatpush.msra.mxu0 0.0
    %5204 = vmatpush.msra.mxu0 0.0
    %5205 = vmatpush.msra.mxu0 0.0
    %5206 = vmatpush.msra.mxu0 0.0
    %v5207 = vand.u32 %v5021, 4294901760
    %v5208 = vsub.f32 %v5021, %v5207
    %v5209 = vand.u32 %v5208, 4294901760
    %v5210 = vsub.f32 %v5208, %v5209
    %v5211 = vand.u32 %v5210, 4294901760
    %5212 = vmatpush.msra.mxu0 %v5211
    %v5213 = vand.u32 %v5020, 4294901760
    %v5214 = vsub.f32 %v5020, %v5213
    %v5215 = vand.u32 %v5214, 4294901760
    %v5216 = vsub.f32 %v5214, %v5215
    %v5217 = vand.u32 %v5216, 4294901760
    %5218 = vmatpush.msra.mxu0 %v5217
    %v5219 = vand.u32 %v4257, 4294901760
    %5220 = vmatmul.f32.gmra.mxu0 %v5219
    %v5221 = vpop.f32.mrf.mxu0
    %v5222 = vadd.f32 %v5151, %v5221
    %v5223 = vand.u32 %v4260, 4294901760
    %5224 = vmatmul.f32.gmra.mxu0 %v5223
    %v5225 = vpop.f32.mrf.mxu0
    %v5226 = vadd.f32 %v5159, %v5225
    %v5227 = vand.u32 %v4263, 4294901760
    %5228 = vmatmul.f32.gmra.mxu0 %v5227
    %v5229 = vpop.f32.mrf.mxu0
    %v5230 = vadd.f32 %v5167, %v5229
    %v5231 = vand.u32 %v4266, 4294901760
    %5232 = vmatmul.f32.gmra.mxu0 %v5231
    %v5233 = vpop.f32.mrf.mxu0
    %v5234 = vadd.f32 %v5175, %v5233
    %v5235 = vand.u32 %v4269, 4294901760
    %5236 = vmatmul.f32.gmra.mxu0 %v5235
    %v5237 = vpop.f32.mrf.mxu0
    %v5238 = vadd.f32 %v5183, %v5237
    %v5239 = vand.u32 %v4272, 4294901760
    %5240 = vmatmul.f32.gmra.mxu0 %v5239
    %v5241 = vpop.f32.mrf.mxu0
    %v5242 = vadd.f32 %v5191, %v5241
    %5243 = vdwg.mxu0
    %5244 = vmatpush.msra.mxu0 0.0
    %5245 = vmatpush.msra.mxu0 0.0
    %5246 = vmatpush.msra.mxu0 0.0
    %5247 = vmatpush.msra.mxu0 0.0
    %5248 = vmatpush.msra.mxu0 0.0
    %5249 = vmatpush.msra.mxu0 0.0
    %5250 = vmatpush.msra.mxu0 0.0
    %5251 = vmatpush.msra.mxu0 0.0
    %5252 = vmatpush.msra.mxu0 0.0
    %5253 = vmatpush.msra.mxu0 0.0
    %5254 = vmatpush.msra.mxu0 0.0
    %5255 = vmatpush.msra.mxu0 0.0
    %5256 = vmatpush.msra.mxu0 0.0
    %5257 = vmatpush.msra.mxu0 0.0
    %v5258 = vand.u32 %v5021, 4294901760
    %v5259 = vsub.f32 %v5021, %v5258
    %5260 = vmatpush.msra.mxu0 %v5259
    %v5261 = vand.u32 %v5020, 4294901760
    %v5262 = vsub.f32 %v5020, %v5261
    %5263 = vmatpush.msra.mxu0 %v5262
    %v5264 = vand.u32 %v4257, 4294901760
    %v5265 = vsub.f32 %v4257, %v5264
    %5266 = vmatmul.f32.gmra.mxu0 %v5265
    %v5267 = vpop.f32.mrf.mxu0
    %v5268 = vadd.f32 %v5222, %v5267
    %v5269 = vand.u32 %v4260, 4294901760
    %v5270 = vsub.f32 %v4260, %v5269
    %5271 = vmatmul.f32.gmra.mxu0 %v5270
    %v5272 = vpop.f32.mrf.mxu0
    %v5273 = vadd.f32 %v5226, %v5272
    %v5274 = vand.u32 %v4263, 4294901760
    %v5275 = vsub.f32 %v4263, %v5274
    %5276 = vmatmul.f32.gmra.mxu0 %v5275
    %v5277 = vpop.f32.mrf.mxu0
    %v5278 = vadd.f32 %v5230, %v5277
    %v5279 = vand.u32 %v4266, 4294901760
    %v5280 = vsub.f32 %v4266, %v5279
    %5281 = vmatmul.f32.gmra.mxu0 %v5280
    %v5282 = vpop.f32.mrf.mxu0
    %v5283 = vadd.f32 %v5234, %v5282
    %v5284 = vand.u32 %v4269, 4294901760
    %v5285 = vsub.f32 %v4269, %v5284
    %5286 = vmatmul.f32.gmra.mxu0 %v5285
    %v5287 = vpop.f32.mrf.mxu0
    %v5288 = vadd.f32 %v5238, %v5287
    %v5289 = vand.u32 %v4272, 4294901760
    %v5290 = vsub.f32 %v4272, %v5289
    %5291 = vmatmul.f32.gmra.mxu0 %v5290
    %v5292 = vpop.f32.mrf.mxu0
    %v5293 = vadd.f32 %v5242, %v5292
    %5294 = vdwg.mxu0
    %5295 = vmatpush.msra.mxu0 0.0
    %5296 = vmatpush.msra.mxu0 0.0
    %5297 = vmatpush.msra.mxu0 0.0
    %5298 = vmatpush.msra.mxu0 0.0
    %5299 = vmatpush.msra.mxu0 0.0
    %5300 = vmatpush.msra.mxu0 0.0
    %5301 = vmatpush.msra.mxu0 0.0
    %5302 = vmatpush.msra.mxu0 0.0
    %5303 = vmatpush.msra.mxu0 0.0
    %5304 = vmatpush.msra.mxu0 0.0
    %5305 = vmatpush.msra.mxu0 0.0
    %5306 = vmatpush.msra.mxu0 0.0
    %5307 = vmatpush.msra.mxu0 0.0
    %5308 = vmatpush.msra.mxu0 0.0
    %v5309 = vand.u32 %v5021, 4294901760
    %5310 = vmatpush.msra.mxu0 %v5309
    %v5311 = vand.u32 %v5020, 4294901760
    %5312 = vmatpush.msra.mxu0 %v5311
    %v5313 = vand.u32 %v4257, 4294901760
    %v5314 = vsub.f32 %v4257, %v5313
    %v5315 = vand.u32 %v5314, 4294901760
    %5316 = vmatmul.f32.gmra.mxu0 %v5315
    %v5317 = vpop.f32.mrf.mxu0
    %v5318 = vadd.f32 %v5268, %v5317
    %v5319 = vand.u32 %v4260, 4294901760
    %v5320 = vsub.f32 %v4260, %v5319
    %v5321 = vand.u32 %v5320, 4294901760
    %5322 = vmatmul.f32.gmra.mxu0 %v5321
    %v5323 = vpop.f32.mrf.mxu0
    %v5324 = vadd.f32 %v5273, %v5323
    %v5325 = vand.u32 %v4263, 4294901760
    %v5326 = vsub.f32 %v4263, %v5325
    %v5327 = vand.u32 %v5326, 4294901760
    %5328 = vmatmul.f32.gmra.mxu0 %v5327
    %v5329 = vpop.f32.mrf.mxu0
    %v5330 = vadd.f32 %v5278, %v5329
    %v5331 = vand.u32 %v4266, 4294901760
    %v5332 = vsub.f32 %v4266, %v5331
    %v5333 = vand.u32 %v5332, 4294901760
    %5334 = vmatmul.f32.gmra.mxu0 %v5333
    %v5335 = vpop.f32.mrf.mxu0
    %v5336 = vadd.f32 %v5283, %v5335
    %v5337 = vand.u32 %v4269, 4294901760
    %v5338 = vsub.f32 %v4269, %v5337
    %v5339 = vand.u32 %v5338, 4294901760
    %5340 = vmatmul.f32.gmra.mxu0 %v5339
    %v5341 = vpop.f32.mrf.mxu0
    %v5342 = vadd.f32 %v5288, %v5341
    %v5343 = vand.u32 %v4272, 4294901760
    %v5344 = vsub.f32 %v4272, %v5343
    %v5345 = vand.u32 %v5344, 4294901760
    %5346 = vmatmul.f32.gmra.mxu0 %v5345
    %v5347 = vpop.f32.mrf.mxu0
    %v5348 = vadd.f32 %v5293, %v5347
    %5349 = vdwg.mxu0
    %5350 = vmatpush.msra.mxu0 0.0
    %5351 = vmatpush.msra.mxu0 0.0
    %5352 = vmatpush.msra.mxu0 0.0
    %5353 = vmatpush.msra.mxu0 0.0
    %5354 = vmatpush.msra.mxu0 0.0
    %5355 = vmatpush.msra.mxu0 0.0
    %5356 = vmatpush.msra.mxu0 0.0
    %5357 = vmatpush.msra.mxu0 0.0
    %5358 = vmatpush.msra.mxu0 0.0
    %5359 = vmatpush.msra.mxu0 0.0
    %5360 = vmatpush.msra.mxu0 0.0
    %5361 = vmatpush.msra.mxu0 0.0
    %5362 = vmatpush.msra.mxu0 0.0
    %5363 = vmatpush.msra.mxu0 0.0
    %v5364 = vand.u32 %v5021, 4294901760
    %v5365 = vsub.f32 %v5021, %v5364
    %v5366 = vand.u32 %v5365, 4294901760
    %5367 = vmatpush.msra.mxu0 %v5366
    %v5368 = vand.u32 %v5020, 4294901760
    %v5369 = vsub.f32 %v5020, %v5368
    %v5370 = vand.u32 %v5369, 4294901760
    %5371 = vmatpush.msra.mxu0 %v5370
    %v5372 = vand.u32 %v4257, 4294901760
    %5373 = vmatmul.f32.gmra.mxu0 %v5372
    %v5374 = vpop.f32.mrf.mxu0
    %v5375 = vadd.f32 %v5318, %v5374
    %v5376 = vand.u32 %v4260, 4294901760
    %5377 = vmatmul.f32.gmra.mxu0 %v5376
    %v5378 = vpop.f32.mrf.mxu0
    %v5379 = vadd.f32 %v5324, %v5378
    %v5380 = vand.u32 %v4263, 4294901760
    %5381 = vmatmul.f32.gmra.mxu0 %v5380
    %v5382 = vpop.f32.mrf.mxu0
    %v5383 = vadd.f32 %v5330, %v5382
    %v5384 = vand.u32 %v4266, 4294901760
    %5385 = vmatmul.f32.gmra.mxu0 %v5384
    %v5386 = vpop.f32.mrf.mxu0
    %v5387 = vadd.f32 %v5336, %v5386
    %v5388 = vand.u32 %v4269, 4294901760
    %5389 = vmatmul.f32.gmra.mxu0 %v5388
    %v5390 = vpop.f32.mrf.mxu0
    %v5391 = vadd.f32 %v5342, %v5390
    %v5392 = vand.u32 %v4272, 4294901760
    %5393 = vmatmul.f32.gmra.mxu0 %v5392
    %v5394 = vpop.f32.mrf.mxu0
    %v5395 = vadd.f32 %v5348, %v5394
    %5396 = vdwg.mxu0
    %5397 = vmatpush.msra.mxu0 0.0
    %5398 = vmatpush.msra.mxu0 0.0
    %5399 = vmatpush.msra.mxu0 0.0
    %5400 = vmatpush.msra.mxu0 0.0
    %5401 = vmatpush.msra.mxu0 0.0
    %5402 = vmatpush.msra.mxu0 0.0
    %5403 = vmatpush.msra.mxu0 0.0
    %5404 = vmatpush.msra.mxu0 0.0
    %5405 = vmatpush.msra.mxu0 0.0
    %5406 = vmatpush.msra.mxu0 0.0
    %5407 = vmatpush.msra.mxu0 0.0
    %5408 = vmatpush.msra.mxu0 0.0
    %5409 = vmatpush.msra.mxu0 0.0
    %5410 = vmatpush.msra.mxu0 0.0
    %v5411 = vand.u32 %v5021, 4294901760
    %5412 = vmatpush.msra.mxu0 %v5411
    %v5413 = vand.u32 %v5020, 4294901760
    %5414 = vmatpush.msra.mxu0 %v5413
    %v5415 = vand.u32 %v4257, 4294901760
    %5416 = vmatmul.f32.gmra.mxu0 %v5415
    %v5417 = vpop.f32.mrf.mxu0
    %v5418 = vadd.f32 %v5375, %v5417
    %v5419 = vand.u32 %v4260, 4294901760
    %5420 = vmatmul.f32.gmra.mxu0 %v5419
    %v5421 = vpop.f32.mrf.mxu0
    %v5422 = vadd.f32 %v5379, %v5421
    %v5423 = vand.u32 %v4263, 4294901760
    %5424 = vmatmul.f32.gmra.mxu0 %v5423
    %v5425 = vpop.f32.mrf.mxu0
    %v5426 = vadd.f32 %v5383, %v5425
    %v5427 = vand.u32 %v4266, 4294901760
    %5428 = vmatmul.f32.gmra.mxu0 %v5427
    %v5429 = vpop.f32.mrf.mxu0
    %v5430 = vadd.f32 %v5387, %v5429
    %v5431 = vand.u32 %v4269, 4294901760
    %5432 = vmatmul.f32.gmra.mxu0 %v5431
    %v5433 = vpop.f32.mrf.mxu0
    %v5434 = vadd.f32 %v5391, %v5433
    %v5435 = vand.u32 %v4272, 4294901760
    %5436 = vmatmul.f32.gmra.mxu0 %v5435
    %v5437 = vpop.f32.mrf.mxu0
    %v5438 = vadd.f32 %v5395, %v5437
    %5439 = vdwg.mxu0
    %5440 = vmatpush.msra.mxu0 0.0
    %5441 = vmatpush.msra.mxu0 0.0
    %5442 = vmatpush.msra.mxu0 0.0
    %5443 = vmatpush.msra.mxu0 0.0
    %5444 = vmatpush.msra.mxu0 0.0
    %5445 = vmatpush.msra.mxu0 0.0
    %5446 = vmatpush.msra.mxu0 0.0
    %5447 = vmatpush.msra.mxu0 0.0
    %5448 = vmatpush.msra.mxu0 0.0
    %5449 = vmatpush.msra.mxu0 0.0
    %5450 = vmatpush.msra.mxu0 0.0
    %5451 = vmatpush.msra.mxu0 0.0
    %5452 = vmatpush.msra.mxu0 0.0
    %5453 = vmatpush.msra.mxu0 0.0
    %v5454 = vand.u32 %v5123, 4294901760
    %5455 = vmatpush.msra.mxu0 %v5454
    %v5456 = vand.u32 %v5122, 4294901760
    %5457 = vmatpush.msra.mxu0 %v5456
    %v5458 = vand.u32 %v4589, 4294901760
    %v5459 = vsub.f32 %v4589, %v5458
    %v5460 = vand.u32 %v5459, 4294901760
    %v5461 = vsub.f32 %v5459, %v5460
    %v5462 = vand.u32 %v5461, 4294901760
    %5463 = vmatmul.f32.gmra.mxu0 %v5462
    %v5464 = vpop.f32.mrf.mxu0
    %v5465 = vadd.f32 %v4216, %v5464
    %v5466 = vand.u32 %v4592, 4294901760
    %v5467 = vsub.f32 %v4592, %v5466
    %v5468 = vand.u32 %v5467, 4294901760
    %v5469 = vsub.f32 %v5467, %v5468
    %v5470 = vand.u32 %v5469, 4294901760
    %5471 = vmatmul.f32.gmra.mxu0 %v5470
    %v5472 = vpop.f32.mrf.mxu0
    %v5473 = vadd.f32 %v4221, %v5472
    %v5474 = vand.u32 %v4595, 4294901760
    %v5475 = vsub.f32 %v4595, %v5474
    %v5476 = vand.u32 %v5475, 4294901760
    %v5477 = vsub.f32 %v5475, %v5476
    %v5478 = vand.u32 %v5477, 4294901760
    %5479 = vmatmul.f32.gmra.mxu0 %v5478
    %v5480 = vpop.f32.mrf.mxu0
    %v5481 = vadd.f32 %v4226, %v5480
    %v5482 = vand.u32 %v4598, 4294901760
    %v5483 = vsub.f32 %v4598, %v5482
    %v5484 = vand.u32 %v5483, 4294901760
    %v5485 = vsub.f32 %v5483, %v5484
    %v5486 = vand.u32 %v5485, 4294901760
    %5487 = vmatmul.f32.gmra.mxu0 %v5486
    %v5488 = vpop.f32.mrf.mxu0
    %v5489 = vadd.f32 %v4231, %v5488
    %v5490 = vand.u32 %v4601, 4294901760
    %v5491 = vsub.f32 %v4601, %v5490
    %v5492 = vand.u32 %v5491, 4294901760
    %v5493 = vsub.f32 %v5491, %v5492
    %v5494 = vand.u32 %v5493, 4294901760
    %5495 = vmatmul.f32.gmra.mxu0 %v5494
    %v5496 = vpop.f32.mrf.mxu0
    %v5497 = vadd.f32 %v4236, %v5496
    %v5498 = vand.u32 %v4604, 4294901760
    %v5499 = vsub.f32 %v4604, %v5498
    %v5500 = vand.u32 %v5499, 4294901760
    %v5501 = vsub.f32 %v5499, %v5500
    %v5502 = vand.u32 %v5501, 4294901760
    %5503 = vmatmul.f32.gmra.mxu0 %v5502
    %v5504 = vpop.f32.mrf.mxu0
    %v5505 = vadd.f32 %v4241, %v5504
    %5506 = vdwg.mxu0
    %5507 = vmatpush.msra.mxu0 0.0
    %5508 = vmatpush.msra.mxu0 0.0
    %5509 = vmatpush.msra.mxu0 0.0
    %5510 = vmatpush.msra.mxu0 0.0
    %5511 = vmatpush.msra.mxu0 0.0
    %5512 = vmatpush.msra.mxu0 0.0
    %5513 = vmatpush.msra.mxu0 0.0
    %5514 = vmatpush.msra.mxu0 0.0
    %5515 = vmatpush.msra.mxu0 0.0
    %5516 = vmatpush.msra.mxu0 0.0
    %5517 = vmatpush.msra.mxu0 0.0
    %5518 = vmatpush.msra.mxu0 0.0
    %5519 = vmatpush.msra.mxu0 0.0
    %5520 = vmatpush.msra.mxu0 0.0
    %v5521 = vand.u32 %v5123, 4294901760
    %v5522 = vsub.f32 %v5123, %v5521
    %v5523 = vand.u32 %v5522, 4294901760
    %v5524 = vsub.f32 %v5522, %v5523
    %v5525 = vand.u32 %v5524, 4294901760
    %5526 = vmatpush.msra.mxu0 %v5525
    %v5527 = vand.u32 %v5122, 4294901760
    %v5528 = vsub.f32 %v5122, %v5527
    %v5529 = vand.u32 %v5528, 4294901760
    %v5530 = vsub.f32 %v5528, %v5529
    %v5531 = vand.u32 %v5530, 4294901760
    %5532 = vmatpush.msra.mxu0 %v5531
    %v5533 = vand.u32 %v4589, 4294901760
    %5534 = vmatmul.f32.gmra.mxu0 %v5533
    %v5535 = vpop.f32.mrf.mxu0
    %v5536 = vadd.f32 %v5465, %v5535
    %v5537 = vand.u32 %v4592, 4294901760
    %5538 = vmatmul.f32.gmra.mxu0 %v5537
    %v5539 = vpop.f32.mrf.mxu0
    %v5540 = vadd.f32 %v5473, %v5539
    %v5541 = vand.u32 %v4595, 4294901760
    %5542 = vmatmul.f32.gmra.mxu0 %v5541
    %v5543 = vpop.f32.mrf.mxu0
    %v5544 = vadd.f32 %v5481, %v5543
    %v5545 = vand.u32 %v4598, 4294901760
    %5546 = vmatmul.f32.gmra.mxu0 %v5545
    %v5547 = vpop.f32.mrf.mxu0
    %v5548 = vadd.f32 %v5489, %v5547
    %v5549 = vand.u32 %v4601, 4294901760
    %5550 = vmatmul.f32.gmra.mxu0 %v5549
    %v5551 = vpop.f32.mrf.mxu0
    %v5552 = vadd.f32 %v5497, %v5551
    %v5553 = vand.u32 %v4604, 4294901760
    %5554 = vmatmul.f32.gmra.mxu0 %v5553
    %v5555 = vpop.f32.mrf.mxu0
    %v5556 = vadd.f32 %v5505, %v5555
    %5557 = vdwg.mxu0
    %5558 = vmatpush.msra.mxu0 0.0
    %5559 = vmatpush.msra.mxu0 0.0
    %5560 = vmatpush.msra.mxu0 0.0
    %5561 = vmatpush.msra.mxu0 0.0
    %5562 = vmatpush.msra.mxu0 0.0
    %5563 = vmatpush.msra.mxu0 0.0
    %5564 = vmatpush.msra.mxu0 0.0
    %5565 = vmatpush.msra.mxu0 0.0
    %5566 = vmatpush.msra.mxu0 0.0
    %5567 = vmatpush.msra.mxu0 0.0
    %5568 = vmatpush.msra.mxu0 0.0
    %5569 = vmatpush.msra.mxu0 0.0
    %5570 = vmatpush.msra.mxu0 0.0
    %5571 = vmatpush.msra.mxu0 0.0
    %v5572 = vand.u32 %v5123, 4294901760
    %v5573 = vsub.f32 %v5123, %v5572
    %5574 = vmatpush.msra.mxu0 %v5573
    %v5575 = vand.u32 %v5122, 4294901760
    %v5576 = vsub.f32 %v5122, %v5575
    %5577 = vmatpush.msra.mxu0 %v5576
    %v5578 = vand.u32 %v4589, 4294901760
    %v5579 = vsub.f32 %v4589, %v5578
    %5580 = vmatmul.f32.gmra.mxu0 %v5579
    %v5581 = vpop.f32.mrf.mxu0
    %v5582 = vadd.f32 %v5536, %v5581
    %v5583 = vand.u32 %v4592, 4294901760
    %v5584 = vsub.f32 %v4592, %v5583
    %5585 = vmatmul.f32.gmra.mxu0 %v5584
    %v5586 = vpop.f32.mrf.mxu0
    %v5587 = vadd.f32 %v5540, %v5586
    %v5588 = vand.u32 %v4595, 4294901760
    %v5589 = vsub.f32 %v4595, %v5588
    %5590 = vmatmul.f32.gmra.mxu0 %v5589
    %v5591 = vpop.f32.mrf.mxu0
    %v5592 = vadd.f32 %v5544, %v5591
    %v5593 = vand.u32 %v4598, 4294901760
    %v5594 = vsub.f32 %v4598, %v5593
    %5595 = vmatmul.f32.gmra.mxu0 %v5594
    %v5596 = vpop.f32.mrf.mxu0
    %v5597 = vadd.f32 %v5548, %v5596
    %v5598 = vand.u32 %v4601, 4294901760
    %v5599 = vsub.f32 %v4601, %v5598
    %5600 = vmatmul.f32.gmra.mxu0 %v5599
    %v5601 = vpop.f32.mrf.mxu0
    %v5602 = vadd.f32 %v5552, %v5601
    %v5603 = vand.u32 %v4604, 4294901760
    %v5604 = vsub.f32 %v4604, %v5603
    %5605 = vmatmul.f32.gmra.mxu0 %v5604
    %v5606 = vpop.f32.mrf.mxu0
    %v5607 = vadd.f32 %v5556, %v5606
    %5608 = vdwg.mxu0
    %5609 = vmatpush.msra.mxu0 0.0
    %5610 = vmatpush.msra.mxu0 0.0
    %5611 = vmatpush.msra.mxu0 0.0
    %5612 = vmatpush.msra.mxu0 0.0
    %5613 = vmatpush.msra.mxu0 0.0
    %5614 = vmatpush.msra.mxu0 0.0
    %5615 = vmatpush.msra.mxu0 0.0
    %5616 = vmatpush.msra.mxu0 0.0
    %5617 = vmatpush.msra.mxu0 0.0
    %5618 = vmatpush.msra.mxu0 0.0
    %5619 = vmatpush.msra.mxu0 0.0
    %5620 = vmatpush.msra.mxu0 0.0
    %5621 = vmatpush.msra.mxu0 0.0
    %5622 = vmatpush.msra.mxu0 0.0
    %v5623 = vand.u32 %v5123, 4294901760
    %5624 = vmatpush.msra.mxu0 %v5623
    %v5625 = vand.u32 %v5122, 4294901760
    %5626 = vmatpush.msra.mxu0 %v5625
    %v5627 = vand.u32 %v4589, 4294901760
    %v5628 = vsub.f32 %v4589, %v5627
    %v5629 = vand.u32 %v5628, 4294901760
    %5630 = vmatmul.f32.gmra.mxu0 %v5629
    %v5631 = vpop.f32.mrf.mxu0
    %v5632 = vadd.f32 %v5582, %v5631
    %v5633 = vand.u32 %v4592, 4294901760
    %v5634 = vsub.f32 %v4592, %v5633
    %v5635 = vand.u32 %v5634, 4294901760
    %5636 = vmatmul.f32.gmra.mxu0 %v5635
    %v5637 = vpop.f32.mrf.mxu0
    %v5638 = vadd.f32 %v5587, %v5637
    %v5639 = vand.u32 %v4595, 4294901760
    %v5640 = vsub.f32 %v4595, %v5639
    %v5641 = vand.u32 %v5640, 4294901760
    %5642 = vmatmul.f32.gmra.mxu0 %v5641
    %v5643 = vpop.f32.mrf.mxu0
    %v5644 = vadd.f32 %v5592, %v5643
    %v5645 = vand.u32 %v4598, 4294901760
    %v5646 = vsub.f32 %v4598, %v5645
    %v5647 = vand.u32 %v5646, 4294901760
    %5648 = vmatmul.f32.gmra.mxu0 %v5647
    %v5649 = vpop.f32.mrf.mxu0
    %v5650 = vadd.f32 %v5597, %v5649
    %v5651 = vand.u32 %v4601, 4294901760
    %v5652 = vsub.f32 %v4601, %v5651
    %v5653 = vand.u32 %v5652, 4294901760
    %5654 = vmatmul.f32.gmra.mxu0 %v5653
    %v5655 = vpop.f32.mrf.mxu0
    %v5656 = vadd.f32 %v5602, %v5655
    %v5657 = vand.u32 %v4604, 4294901760
    %v5658 = vsub.f32 %v4604, %v5657
    %v5659 = vand.u32 %v5658, 4294901760
    %5660 = vmatmul.f32.gmra.mxu0 %v5659
    %v5661 = vpop.f32.mrf.mxu0
    %v5662 = vadd.f32 %v5607, %v5661
    %5663 = vdwg.mxu0
    %5664 = vmatpush.msra.mxu0 0.0
    %5665 = vmatpush.msra.mxu0 0.0
    %5666 = vmatpush.msra.mxu0 0.0
    %5667 = vmatpush.msra.mxu0 0.0
    %5668 = vmatpush.msra.mxu0 0.0
    %5669 = vmatpush.msra.mxu0 0.0
    %5670 = vmatpush.msra.mxu0 0.0
    %5671 = vmatpush.msra.mxu0 0.0
    %5672 = vmatpush.msra.mxu0 0.0
    %5673 = vmatpush.msra.mxu0 0.0
    %5674 = vmatpush.msra.mxu0 0.0
    %5675 = vmatpush.msra.mxu0 0.0
    %5676 = vmatpush.msra.mxu0 0.0
    %5677 = vmatpush.msra.mxu0 0.0
    %v5678 = vand.u32 %v5123, 4294901760
    %v5679 = vsub.f32 %v5123, %v5678
    %v5680 = vand.u32 %v5679, 4294901760
    %5681 = vmatpush.msra.mxu0 %v5680
    %v5682 = vand.u32 %v5122, 4294901760
    %v5683 = vsub.f32 %v5122, %v5682
    %v5684 = vand.u32 %v5683, 4294901760
    %5685 = vmatpush.msra.mxu0 %v5684
    %v5686 = vand.u32 %v4589, 4294901760
    %5687 = vmatmul.f32.gmra.mxu0 %v5686
    %v5688 = vpop.f32.mrf.mxu0
    %v5689 = vadd.f32 %v5632, %v5688
    %v5690 = vand.u32 %v4592, 4294901760
    %5691 = vmatmul.f32.gmra.mxu0 %v5690
    %v5692 = vpop.f32.mrf.mxu0
    %v5693 = vadd.f32 %v5638, %v5692
    %v5694 = vand.u32 %v4595, 4294901760
    %5695 = vmatmul.f32.gmra.mxu0 %v5694
    %v5696 = vpop.f32.mrf.mxu0
    %v5697 = vadd.f32 %v5644, %v5696
    %v5698 = vand.u32 %v4598, 4294901760
    %5699 = vmatmul.f32.gmra.mxu0 %v5698
    %v5700 = vpop.f32.mrf.mxu0
    %v5701 = vadd.f32 %v5650, %v5700
    %v5702 = vand.u32 %v4601, 4294901760
    %5703 = vmatmul.f32.gmra.mxu0 %v5702
    %v5704 = vpop.f32.mrf.mxu0
    %v5705 = vadd.f32 %v5656, %v5704
    %v5706 = vand.u32 %v4604, 4294901760
    %5707 = vmatmul.f32.gmra.mxu0 %v5706
    %v5708 = vpop.f32.mrf.mxu0
    %v5709 = vadd.f32 %v5662, %v5708
    %5710 = vdwg.mxu0
    %5711 = vmatpush.msra.mxu0 0.0
    %5712 = vmatpush.msra.mxu0 0.0
    %5713 = vmatpush.msra.mxu0 0.0
    %5714 = vmatpush.msra.mxu0 0.0
    %5715 = vmatpush.msra.mxu0 0.0
    %5716 = vmatpush.msra.mxu0 0.0
    %5717 = vmatpush.msra.mxu0 0.0
    %5718 = vmatpush.msra.mxu0 0.0
    %5719 = vmatpush.msra.mxu0 0.0
    %5720 = vmatpush.msra.mxu0 0.0
    %5721 = vmatpush.msra.mxu0 0.0
    %5722 = vmatpush.msra.mxu0 0.0
    %5723 = vmatpush.msra.mxu0 0.0
    %5724 = vmatpush.msra.mxu0 0.0
    %v5725 = vand.u32 %v5123, 4294901760
    %5726 = vmatpush.msra.mxu0 %v5725
    %v5727 = vand.u32 %v5122, 4294901760
    %5728 = vmatpush.msra.mxu0 %v5727
    %v5729 = vand.u32 %v4589, 4294901760
    %5730 = vmatmul.f32.gmra.mxu0 %v5729
    %v5731 = vpop.f32.mrf.mxu0
    %v5732 = vadd.f32 %v5689, %v5731
    %v5733 = vand.u32 %v4592, 4294901760
    %5734 = vmatmul.f32.gmra.mxu0 %v5733
    %v5735 = vpop.f32.mrf.mxu0
    %v5736 = vadd.f32 %v5693, %v5735
    %v5737 = vand.u32 %v4595, 4294901760
    %5738 = vmatmul.f32.gmra.mxu0 %v5737
    %v5739 = vpop.f32.mrf.mxu0
    %v5740 = vadd.f32 %v5697, %v5739
    %v5741 = vand.u32 %v4598, 4294901760
    %5742 = vmatmul.f32.gmra.mxu0 %v5741
    %v5743 = vpop.f32.mrf.mxu0
    %v5744 = vadd.f32 %v5701, %v5743
    %v5745 = vand.u32 %v4601, 4294901760
    %5746 = vmatmul.f32.gmra.mxu0 %v5745
    %v5747 = vpop.f32.mrf.mxu0
    %v5748 = vadd.f32 %v5705, %v5747
    %v5749 = vand.u32 %v4604, 4294901760
    %5750 = vmatmul.f32.gmra.mxu0 %v5749
    %v5751 = vpop.f32.mrf.mxu0
    %v5752 = vadd.f32 %v5709, %v5751
    %5753 = vdwg.mxu0
    %s5754 = smul.u32 %s5124, 48
    %s5755 = scalar_lea.vmem [#allocation2], %s5754
    %v5756 = vld [vmem:[%s5755] sm:$0xff]
    %v5757 = vld [vmem:[%s5755 + $0x8] sm:$0xff]
    %v5758 = vld [vmem:[%s5755 + $0x10] sm:$0xff]
    %v5759 = vld [vmem:[%s5755 + $0x18] sm:$0xff]
    %v5760 = vld [vmem:[%s5755 + $0x20] sm:$0xff]
    %v5761 = vld [vmem:[%s5755 + $0x28] sm:$0xff]
    %v5762 = vadd.f32 %v5756, %v5418
    %v5763 = vadd.f32 %v5757, %v5422
    %v5764 = vxor.u32 %v5762, 2147483648
    %v5765 = vxor.u32 %v5763, 2147483648
    %v5766 = vmul.f32 %v5764, 1.442695
    %v5767 = vpow.pop %v5766
    %v5768 = vmul.f32 %v5765, 1.442695
    %v5769 = vpow.pop %v5768
    %v5770 = vadd.f32 %v5767, 1.0
    %v5771 = vadd.f32 %v5769, 1.0
    %v5772 = vrcp.pop %v5770
    %v5773 = vmul.f32 %v5770, %v5772
    %v5774 = vsub.f32 1.0, %v5773
    %v5775 = vmul.f32 %v5772, %v5774
    %v5776 = vadd.f32 %v5772, %v5775
    %vm5777 = vweird.f32 %v5770
    %vm5778 = vweird.f32 %v5772
    %vm5779 = vmor %vm5777, %vm5778
    %v5780 = vsel %vm5779, %v5772, %v5776
    %v5781 = vand.u32 2147483647, %v5770
    %vm5782 = vcmp.eq.f32.partialorder %v5781, 8.507059e+37
    %v5783 = vand.u32 %v5770, 2147483648
    %v5784 = vor.u32 1.1754944e-38, %v5783
    %v5785 = vsel %vm5782, %v5784, %v5780
    %v5786 = vmul.f32 1.0, %v5785
    %v5787 = vrcp.pop %v5771
    %v5788 = vmul.f32 %v5771, %v5787
    %v5789 = vsub.f32 1.0, %v5788
    %v5790 = vmul.f32 %v5787, %v5789
    %v5791 = vadd.f32 %v5787, %v5790
    %vm5792 = vweird.f32 %v5771
    %vm5793 = vweird.f32 %v5787
    %vm5794 = vmor %vm5792, %vm5793
    %v5795 = vsel %vm5794, %v5787, %v5791
    %v5796 = vand.u32 2147483647, %v5771
    %vm5797 = vcmp.eq.f32.partialorder %v5796, 8.507059e+37
    %v5798 = vand.u32 %v5771, 2147483648
    %v5799 = vor.u32 1.1754944e-38, %v5798
    %v5800 = vsel %vm5797, %v5799, %v5795
    %v5801 = vmul.f32 1.0, %v5800
    %v5802 = vadd.f32 %v5758, %v5426
    %v5803 = vadd.f32 %v5759, %v5430
    %v5804 = vxor.u32 %v5802, 2147483648
    %v5805 = vxor.u32 %v5803, 2147483648
    %v5806 = vmul.f32 %v5804, 1.442695
    %v5807 = vpow.pop %v5806
    %v5808 = vmul.f32 %v5805, 1.442695
    %v5809 = vpow.pop %v5808
    %v5810 = vadd.f32 %v5807, 1.0
    %v5811 = vadd.f32 %v5809, 1.0
    %v5812 = vrcp.pop %v5810
    %v5813 = vmul.f32 %v5810, %v5812
    %v5814 = vsub.f32 1.0, %v5813
    %v5815 = vmul.f32 %v5812, %v5814
    %v5816 = vadd.f32 %v5812, %v5815
    %vm5817 = vweird.f32 %v5810
    %vm5818 = vweird.f32 %v5812
    %vm5819 = vmor %vm5817, %vm5818
    %v5820 = vsel %vm5819, %v5812, %v5816
    %v5821 = vand.u32 2147483647, %v5810
    %vm5822 = vcmp.eq.f32.partialorder %v5821, 8.507059e+37
    %v5823 = vand.u32 %v5810, 2147483648
    %v5824 = vor.u32 1.1754944e-38, %v5823
    %v5825 = vsel %vm5822, %v5824, %v5820
    %v5826 = vmul.f32 1.0, %v5825
    %v5827 = vrcp.pop %v5811
    %v5828 = vmul.f32 %v5811, %v5827
    %v5829 = vsub.f32 1.0, %v5828
    %v5830 = vmul.f32 %v5827, %v5829
    %v5831 = vadd.f32 %v5827, %v5830
    %vm5832 = vweird.f32 %v5811
    %vm5833 = vweird.f32 %v5827
    %vm5834 = vmor %vm5832, %vm5833
    %v5835 = vsel %vm5834, %v5827, %v5831
    %v5836 = vand.u32 2147483647, %v5811
    %vm5837 = vcmp.eq.f32.partialorder %v5836, 8.507059e+37
    %v5838 = vand.u32 %v5811, 2147483648
    %v5839 = vor.u32 1.1754944e-38, %v5838
    %v5840 = vsel %vm5837, %v5839, %v5835
    %v5841 = vmul.f32 1.0, %v5840
    %v5842 = vmul.f32 %v5786, %v5434
    %v5843 = vmul.f32 %v5801, %v5438
    %v5844 = vadd.f32 %v5760, %v5842
    %v5845 = vadd.f32 %v5761, %v5843
    %v5846 = vtanh.pop %v5844
    %v5847 = vtanh.pop %v5845
    %v5848 = vsub.f32 1.0, %v5826
    %v5849 = vsub.f32 1.0, %v5841
    %v5850 = vmul.f32 %v5848, %v5846
    %v5851 = vmul.f32 %v5849, %v5847
    %v5852 = vmul.f32 %v5826, %v5020
    %v5853 = vmul.f32 %v5841, %v5021
    %v5854 = vadd.f32 %v5850, %v5852
    %v5855 = vadd.f32 %v5851, %v5853
    %s5856 = smul.u32 %s5125, 48
    %s5857 = scalar_lea.vmem [#allocation3], %s5856
    %v5858 = vld [vmem:[%s5857] sm:$0xff]
    %v5859 = vld [vmem:[%s5857 + $0x8] sm:$0xff]
    %v5860 = vld [vmem:[%s5857 + $0x10] sm:$0xff]
    %v5861 = vld [vmem:[%s5857 + $0x18] sm:$0xff]
    %v5862 = vld [vmem:[%s5857 + $0x20] sm:$0xff]
    %v5863 = vld [vmem:[%s5857 + $0x28] sm:$0xff]
    %v5864 = vadd.f32 %v5858, %v5732
    %v5865 = vadd.f32 %v5859, %v5736
    %v5866 = vxor.u32 %v5864, 2147483648
    %v5867 = vxor.u32 %v5865, 2147483648
    %v5868 = vmul.f32 %v5866, 1.442695
    %v5869 = vpow.pop %v5868
    %v5870 = vmul.f32 %v5867, 1.442695
    %v5871 = vpow.pop %v5870
    %v5872 = vadd.f32 %v5869, 1.0
    %v5873 = vadd.f32 %v5871, 1.0
    %v5874 = vrcp.pop %v5872
    %v5875 = vmul.f32 %v5872, %v5874
    %v5876 = vsub.f32 1.0, %v5875
    %v5877 = vmul.f32 %v5874, %v5876
    %v5878 = vadd.f32 %v5874, %v5877
    %vm5879 = vweird.f32 %v5872
    %vm5880 = vweird.f32 %v5874
    %vm5881 = vmor %vm5879, %vm5880
    %v5882 = vsel %vm5881, %v5874, %v5878
    %v5883 = vand.u32 2147483647, %v5872
    %vm5884 = vcmp.eq.f32.partialorder %v5883, 8.507059e+37
    %v5885 = vand.u32 %v5872, 2147483648
    %v5886 = vor.u32 1.1754944e-38, %v5885
    %v5887 = vsel %vm5884, %v5886, %v5882
    %v5888 = vmul.f32 1.0, %v5887
    %v5889 = vrcp.pop %v5873
    %v5890 = vmul.f32 %v5873, %v5889
    %v5891 = vsub.f32 1.0, %v5890
    %v5892 = vmul.f32 %v5889, %v5891
    %v5893 = vadd.f32 %v5889, %v5892
    %vm5894 = vweird.f32 %v5873
    %vm5895 = vweird.f32 %v5889
    %vm5896 = vmor %vm5894, %vm5895
    %v5897 = vsel %vm5896, %v5889, %v5893
    %v5898 = vand.u32 2147483647, %v5873
    %vm5899 = vcmp.eq.f32.partialorder %v5898, 8.507059e+37
    %v5900 = vand.u32 %v5873, 2147483648
    %v5901 = vor.u32 1.1754944e-38, %v5900
    %v5902 = vsel %vm5899, %v5901, %v5897
    %v5903 = vmul.f32 1.0, %v5902
    %v5904 = vadd.f32 %v5860, %v5740
    %v5905 = vadd.f32 %v5861, %v5744
    %v5906 = vxor.u32 %v5904, 2147483648
    %v5907 = vxor.u32 %v5905, 2147483648
    %v5908 = vmul.f32 %v5906, 1.442695
    %v5909 = vpow.pop %v5908
    %v5910 = vmul.f32 %v5907, 1.442695
    %v5911 = vpow.pop %v5910
    %v5912 = vadd.f32 %v5909, 1.0
    %v5913 = vadd.f32 %v5911, 1.0
    %v5914 = vrcp.pop %v5912
    %v5915 = vmul.f32 %v5912, %v5914
    %v5916 = vsub.f32 1.0, %v5915
    %v5917 = vmul.f32 %v5914, %v5916
    %v5918 = vadd.f32 %v5914, %v5917
    %vm5919 = vweird.f32 %v5912
    %vm5920 = vweird.f32 %v5914
    %vm5921 = vmor %vm5919, %vm5920
    %v5922 = vsel %vm5921, %v5914, %v5918
    %v5923 = vand.u32 2147483647, %v5912
    %vm5924 = vcmp.eq.f32.partialorder %v5923, 8.507059e+37
    %v5925 = vand.u32 %v5912, 2147483648
    %v5926 = vor.u32 1.1754944e-38, %v5925
    %v5927 = vsel %vm5924, %v5926, %v5922
    %v5928 = vmul.f32 1.0, %v5927
    %v5929 = vrcp.pop %v5913
    %v5930 = vmul.f32 %v5913, %v5929
    %v5931 = vsub.f32 1.0, %v5930
    %v5932 = vmul.f32 %v5929, %v5931
    %v5933 = vadd.f32 %v5929, %v5932
    %vm5934 = vweird.f32 %v5913
    %vm5935 = vweird.f32 %v5929
    %vm5936 = vmor %vm5934, %vm5935
    %v5937 = vsel %vm5936, %v5929, %v5933
    %v5938 = vand.u32 2147483647, %v5913
    %vm5939 = vcmp.eq.f32.partialorder %v5938, 8.507059e+37
    %v5940 = vand.u32 %v5913, 2147483648
    %v5941 = vor.u32 1.1754944e-38, %v5940
    %v5942 = vsel %vm5939, %v5941, %v5937
    %v5943 = vmul.f32 1.0, %v5942
    %v5944 = vmul.f32 %v5888, %v5748
    %v5945 = vmul.f32 %v5903, %v5752
    %v5946 = vadd.f32 %v5862, %v5944
    %v5947 = vadd.f32 %v5863, %v5945
    %v5948 = vtanh.pop %v5946
    %v5949 = vtanh.pop %v5947
    %v5950 = vsub.f32 1.0, %v5928
    %v5951 = vsub.f32 1.0, %v5943
    %v5952 = vmul.f32 %v5950, %v5948
    %v5953 = vmul.f32 %v5951, %v5949
    %v5954 = vmul.f32 %v5928, %v5122
    %v5955 = vmul.f32 %v5943, %v5123
    %v5956 = vadd.f32 %v5952, %v5954
    %v5957 = vadd.f32 %v5953, %v5955
  $region82: #{tpu_custom_call.1} parent=0 // loop_footer
    %s4248 = sadd.s32 1, %s4244
  $region83: #{tpu_custom_call.1} parent=0 // loop_footer_branch
    %4243 = sbr.rel target = $region79
  $region84: #{tpu_custom_call.1} parent=0 // loop_exit
    _
  %vm5958 = vcmask 130048
  %v5960 = vsel %vm5958, %v4159, 0
  %v5963 = vsel %vm5958, %v4160, 0
  %v5966 = vsel %vm5958, %v4161, 0
  %v5969 = vsel %vm5958, %v4162, 0
  %v5972 = vsel %vm5958, %v4163, 0
  %v5975 = vsel %vm5958, %v4164, 0
  %5977 = vmatpush.msra.mxu0 0.0
  %5978 = vmatpush.msra.mxu0 0.0
  %5979 = vmatpush.msra.mxu0 0.0
  %5980 = vmatpush.msra.mxu0 0.0
  %5981 = vmatpush.msra.mxu0 0.0
  %5982 = vmatpush.msra.mxu0 0.0
  %5983 = vmatpush.msra.mxu0 0.0
  %5984 = vmatpush.msra.mxu0 0.0
  %5985 = vmatpush.msra.mxu0 0.0
  %5986 = vmatpush.msra.mxu0 0.0
  %5987 = vmatpush.msra.mxu0 0.0
  %5988 = vmatpush.msra.mxu0 0.0
  %5989 = vmatpush.msra.mxu0 0.0
  %5990 = vmatpush.msra.mxu0 0.0
  %v5991 = vand.u32 %v4250, 4294901760
  %5992 = vmatpush.msra.mxu0 %v5991
  %v5993 = vand.u32 %v4249, 4294901760
  %5994 = vmatpush.msra.mxu0 %v5993
  %v5995 = vand.u32 %v5960, 4294901760
  %v5996 = vsub.f32 %v5960, %v5995
  %v5997 = vand.u32 %v5996, 4294901760
  %v5998 = vsub.f32 %v5996, %v5997
  %v5999 = vand.u32 %v5998, 4294901760
  %6000 = vmatmul.f32.gmra.mxu0 %v5999
  %v6001 = vpop.f32.mrf.mxu0
  %v6002 = vadd.f32 %v4180, %v6001
  %v6003 = vand.u32 %v5963, 4294901760
  %v6004 = vsub.f32 %v5963, %v6003
  %v6005 = vand.u32 %v6004, 4294901760
  %v6006 = vsub.f32 %v6004, %v6005
  %v6007 = vand.u32 %v6006, 4294901760
  %6008 = vmatmul.f32.gmra.mxu0 %v6007
  %v6009 = vpop.f32.mrf.mxu0
  %v6010 = vadd.f32 %v4185, %v6009
  %v6011 = vand.u32 %v5966, 4294901760
  %v6012 = vsub.f32 %v5966, %v6011
  %v6013 = vand.u32 %v6012, 4294901760
  %v6014 = vsub.f32 %v6012, %v6013
  %v6015 = vand.u32 %v6014, 4294901760
  %6016 = vmatmul.f32.gmra.mxu0 %v6015
  %v6017 = vpop.f32.mrf.mxu0
  %v6018 = vadd.f32 %v4190, %v6017
  %v6019 = vand.u32 %v5969, 4294901760
  %v6020 = vsub.f32 %v5969, %v6019
  %v6021 = vand.u32 %v6020, 4294901760
  %v6022 = vsub.f32 %v6020, %v6021
  %v6023 = vand.u32 %v6022, 4294901760
  %6024 = vmatmul.f32.gmra.mxu0 %v6023
  %v6025 = vpop.f32.mrf.mxu0
  %v6026 = vadd.f32 %v4195, %v6025
  %v6027 = vand.u32 %v5972, 4294901760
  %v6028 = vsub.f32 %v5972, %v6027
  %v6029 = vand.u32 %v6028, 4294901760
  %v6030 = vsub.f32 %v6028, %v6029
  %v6031 = vand.u32 %v6030, 4294901760
  %6032 = vmatmul.f32.gmra.mxu0 %v6031
  %v6033 = vpop.f32.mrf.mxu0
  %v6034 = vadd.f32 %v4200, %v6033
  %v6035 = vand.u32 %v5975, 4294901760
  %v6036 = vsub.f32 %v5975, %v6035
  %v6037 = vand.u32 %v6036, 4294901760
  %v6038 = vsub.f32 %v6036, %v6037
  %v6039 = vand.u32 %v6038, 4294901760
  %6040 = vmatmul.f32.gmra.mxu0 %v6039
  %v6041 = vpop.f32.mrf.mxu0
  %v6042 = vadd.f32 %v4205, %v6041
  %6043 = vdwg.mxu0
  %6044 = vmatpush.msra.mxu0 0.0
  %6045 = vmatpush.msra.mxu0 0.0
  %6046 = vmatpush.msra.mxu0 0.0
  %6047 = vmatpush.msra.mxu0 0.0
  %6048 = vmatpush.msra.mxu0 0.0
  %6049 = vmatpush.msra.mxu0 0.0
  %6050 = vmatpush.msra.mxu0 0.0
  %6051 = vmatpush.msra.mxu0 0.0
  %6052 = vmatpush.msra.mxu0 0.0
  %6053 = vmatpush.msra.mxu0 0.0
  %6054 = vmatpush.msra.mxu0 0.0
  %6055 = vmatpush.msra.mxu0 0.0
  %6056 = vmatpush.msra.mxu0 0.0
  %6057 = vmatpush.msra.mxu0 0.0
  %v6058 = vand.u32 %v4250, 4294901760
  %v6059 = vsub.f32 %v4250, %v6058
  %v6060 = vand.u32 %v6059, 4294901760
  %v6061 = vsub.f32 %v6059, %v6060
  %v6062 = vand.u32 %v6061, 4294901760
  %6063 = vmatpush.msra.mxu0 %v6062
  %v6064 = vand.u32 %v4249, 4294901760
  %v6065 = vsub.f32 %v4249, %v6064
  %v6066 = vand.u32 %v6065, 4294901760
  %v6067 = vsub.f32 %v6065, %v6066
  %v6068 = vand.u32 %v6067, 4294901760
  %6069 = vmatpush.msra.mxu0 %v6068
  %v6070 = vand.u32 %v5960, 4294901760
  %6071 = vmatmul.f32.gmra.mxu0 %v6070
  %v6072 = vpop.f32.mrf.mxu0
  %v6073 = vadd.f32 %v6002, %v6072
  %v6074 = vand.u32 %v5963, 4294901760
  %6075 = vmatmul.f32.gmra.mxu0 %v6074
  %v6076 = vpop.f32.mrf.mxu0
  %v6077 = vadd.f32 %v6010, %v6076
  %v6078 = vand.u32 %v5966, 4294901760
  %6079 = vmatmul.f32.gmra.mxu0 %v6078
  %v6080 = vpop.f32.mrf.mxu0
  %v6081 = vadd.f32 %v6018, %v6080
  %v6082 = vand.u32 %v5969, 4294901760
  %6083 = vmatmul.f32.gmra.mxu0 %v6082
  %v6084 = vpop.f32.mrf.mxu0
  %v6085 = vadd.f32 %v6026, %v6084
  %v6086 = vand.u32 %v5972, 4294901760
  %6087 = vmatmul.f32.gmra.mxu0 %v6086
  %v6088 = vpop.f32.mrf.mxu0
  %v6089 = vadd.f32 %v6034, %v6088
  %v6090 = vand.u32 %v5975, 4294901760
  %6091 = vmatmul.f32.gmra.mxu0 %v6090
  %v6092 = vpop.f32.mrf.mxu0
  %v6093 = vadd.f32 %v6042, %v6092
  %6094 = vdwg.mxu0
  %6095 = vmatpush.msra.mxu0 0.0
  %6096 = vmatpush.msra.mxu0 0.0
  %6097 = vmatpush.msra.mxu0 0.0
  %6098 = vmatpush.msra.mxu0 0.0
  %6099 = vmatpush.msra.mxu0 0.0
  %6100 = vmatpush.msra.mxu0 0.0
  %6101 = vmatpush.msra.mxu0 0.0
  %6102 = vmatpush.msra.mxu0 0.0
  %6103 = vmatpush.msra.mxu0 0.0
  %6104 = vmatpush.msra.mxu0 0.0
  %6105 = vmatpush.msra.mxu0 0.0
  %6106 = vmatpush.msra.mxu0 0.0
  %6107 = vmatpush.msra.mxu0 0.0
  %6108 = vmatpush.msra.mxu0 0.0
  %v6109 = vand.u32 %v4250, 4294901760
  %v6110 = vsub.f32 %v4250, %v6109
  %6111 = vmatpush.msra.mxu0 %v6110
  %v6112 = vand.u32 %v4249, 4294901760
  %v6113 = vsub.f32 %v4249, %v6112
  %6114 = vmatpush.msra.mxu0 %v6113
  %v6115 = vand.u32 %v5960, 4294901760
  %v6116 = vsub.f32 %v5960, %v6115
  %6117 = vmatmul.f32.gmra.mxu0 %v6116
  %v6118 = vpop.f32.mrf.mxu0
  %v6119 = vadd.f32 %v6073, %v6118
  %v6120 = vand.u32 %v5963, 4294901760
  %v6121 = vsub.f32 %v5963, %v6120
  %6122 = vmatmul.f32.gmra.mxu0 %v6121
  %v6123 = vpop.f32.mrf.mxu0
  %v6124 = vadd.f32 %v6077, %v6123
  %v6125 = vand.u32 %v5966, 4294901760
  %v6126 = vsub.f32 %v5966, %v6125
  %6127 = vmatmul.f32.gmra.mxu0 %v6126
  %v6128 = vpop.f32.mrf.mxu0
  %v6129 = vadd.f32 %v6081, %v6128
  %v6130 = vand.u32 %v5969, 4294901760
  %v6131 = vsub.f32 %v5969, %v6130
  %6132 = vmatmul.f32.gmra.mxu0 %v6131
  %v6133 = vpop.f32.mrf.mxu0
  %v6134 = vadd.f32 %v6085, %v6133
  %v6135 = vand.u32 %v5972, 4294901760
  %v6136 = vsub.f32 %v5972, %v6135
  %6137 = vmatmul.f32.gmra.mxu0 %v6136
  %v6138 = vpop.f32.mrf.mxu0
  %v6139 = vadd.f32 %v6089, %v6138
  %v6140 = vand.u32 %v5975, 4294901760
  %v6141 = vsub.f32 %v5975, %v6140
  %6142 = vmatmul.f32.gmra.mxu0 %v6141
  %v6143 = vpop.f32.mrf.mxu0
  %v6144 = vadd.f32 %v6093, %v6143
  %6145 = vdwg.mxu0
  %6146 = vmatpush.msra.mxu0 0.0
  %6147 = vmatpush.msra.mxu0 0.0
  %6148 = vmatpush.msra.mxu0 0.0
  %6149 = vmatpush.msra.mxu0 0.0
  %6150 = vmatpush.msra.mxu0 0.0
  %6151 = vmatpush.msra.mxu0 0.0
  %6152 = vmatpush.msra.mxu0 0.0
  %6153 = vmatpush.msra.mxu0 0.0
  %6154 = vmatpush.msra.mxu0 0.0
  %6155 = vmatpush.msra.mxu0 0.0
  %6156 = vmatpush.msra.mxu0 0.0
  %6157 = vmatpush.msra.mxu0 0.0
  %6158 = vmatpush.msra.mxu0 0.0
  %6159 = vmatpush.msra.mxu0 0.0
  %v6160 = vand.u32 %v4250, 4294901760
  %6161 = vmatpush.msra.mxu0 %v6160
  %v6162 = vand.u32 %v4249, 4294901760
  %6163 = vmatpush.msra.mxu0 %v6162
  %v6164 = vand.u32 %v5960, 4294901760
  %v6165 = vsub.f32 %v5960, %v6164
  %v6166 = vand.u32 %v6165, 4294901760
  %6167 = vmatmul.f32.gmra.mxu0 %v6166
  %v6168 = vpop.f32.mrf.mxu0
  %v6169 = vadd.f32 %v6119, %v6168
  %v6170 = vand.u32 %v5963, 4294901760
  %v6171 = vsub.f32 %v5963, %v6170
  %v6172 = vand.u32 %v6171, 4294901760
  %6173 = vmatmul.f32.gmra.mxu0 %v6172
  %v6174 = vpop.f32.mrf.mxu0
  %v6175 = vadd.f32 %v6124, %v6174
  %v6176 = vand.u32 %v5966, 4294901760
  %v6177 = vsub.f32 %v5966, %v6176
  %v6178 = vand.u32 %v6177, 4294901760
  %6179 = vmatmul.f32.gmra.mxu0 %v6178
  %v6180 = vpop.f32.mrf.mxu0
  %v6181 = vadd.f32 %v6129, %v6180
  %v6182 = vand.u32 %v5969, 4294901760
  %v6183 = vsub.f32 %v5969, %v6182
  %v6184 = vand.u32 %v6183, 4294901760
  %6185 = vmatmul.f32.gmra.mxu0 %v6184
  %v6186 = vpop.f32.mrf.mxu0
  %v6187 = vadd.f32 %v6134, %v6186
  %v6188 = vand.u32 %v5972, 4294901760
  %v6189 = vsub.f32 %v5972, %v6188
  %v6190 = vand.u32 %v6189, 4294901760
  %6191 = vmatmul.f32.gmra.mxu0 %v6190
  %v6192 = vpop.f32.mrf.mxu0
  %v6193 = vadd.f32 %v6139, %v6192
  %v6194 = vand.u32 %v5975, 4294901760
  %v6195 = vsub.f32 %v5975, %v6194
  %v6196 = vand.u32 %v6195, 4294901760
  %6197 = vmatmul.f32.gmra.mxu0 %v6196
  %v6198 = vpop.f32.mrf.mxu0
  %v6199 = vadd.f32 %v6144, %v6198
  %6200 = vdwg.mxu0
  %6201 = vmatpush.msra.mxu0 0.0
  %6202 = vmatpush.msra.mxu0 0.0
  %6203 = vmatpush.msra.mxu0 0.0
  %6204 = vmatpush.msra.mxu0 0.0
  %6205 = vmatpush.msra.mxu0 0.0
  %6206 = vmatpush.msra.mxu0 0.0
  %6207 = vmatpush.msra.mxu0 0.0
  %6208 = vmatpush.msra.mxu0 0.0
  %6209 = vmatpush.msra.mxu0 0.0
  %6210 = vmatpush.msra.mxu0 0.0
  %6211 = vmatpush.msra.mxu0 0.0
  %6212 = vmatpush.msra.mxu0 0.0
  %6213 = vmatpush.msra.mxu0 0.0
  %6214 = vmatpush.msra.mxu0 0.0
  %v6215 = vand.u32 %v4250, 4294901760
  %v6216 = vsub.f32 %v4250, %v6215
  %v6217 = vand.u32 %v6216, 4294901760
  %6218 = vmatpush.msra.mxu0 %v6217
  %v6219 = vand.u32 %v4249, 4294901760
  %v6220 = vsub.f32 %v4249, %v6219
  %v6221 = vand.u32 %v6220, 4294901760
  %6222 = vmatpush.msra.mxu0 %v6221
  %v6223 = vand.u32 %v5960, 4294901760
  %6224 = vmatmul.f32.gmra.mxu0 %v6223
  %v6225 = vpop.f32.mrf.mxu0
  %v6226 = vadd.f32 %v6169, %v6225
  %v6227 = vand.u32 %v5963, 4294901760
  %6228 = vmatmul.f32.gmra.mxu0 %v6227
  %v6229 = vpop.f32.mrf.mxu0
  %v6230 = vadd.f32 %v6175, %v6229
  %v6231 = vand.u32 %v5966, 4294901760
  %6232 = vmatmul.f32.gmra.mxu0 %v6231
  %v6233 = vpop.f32.mrf.mxu0
  %v6234 = vadd.f32 %v6181, %v6233
  %v6235 = vand.u32 %v5969, 4294901760
  %6236 = vmatmul.f32.gmra.mxu0 %v6235
  %v6237 = vpop.f32.mrf.mxu0
  %v6238 = vadd.f32 %v6187, %v6237
  %v6239 = vand.u32 %v5972, 4294901760
  %6240 = vmatmul.f32.gmra.mxu0 %v6239
  %v6241 = vpop.f32.mrf.mxu0
  %v6242 = vadd.f32 %v6193, %v6241
  %v6243 = vand.u32 %v5975, 4294901760
  %6244 = vmatmul.f32.gmra.mxu0 %v6243
  %v6245 = vpop.f32.mrf.mxu0
  %v6246 = vadd.f32 %v6199, %v6245
  %6247 = vdwg.mxu0
  %6248 = vmatpush.msra.mxu0 0.0
  %6249 = vmatpush.msra.mxu0 0.0
  %6250 = vmatpush.msra.mxu0 0.0
  %6251 = vmatpush.msra.mxu0 0.0
  %6252 = vmatpush.msra.mxu0 0.0
  %6253 = vmatpush.msra.mxu0 0.0
  %6254 = vmatpush.msra.mxu0 0.0
  %6255 = vmatpush.msra.mxu0 0.0
  %6256 = vmatpush.msra.mxu0 0.0
  %6257 = vmatpush.msra.mxu0 0.0
  %6258 = vmatpush.msra.mxu0 0.0
  %6259 = vmatpush.msra.mxu0 0.0
  %6260 = vmatpush.msra.mxu0 0.0
  %6261 = vmatpush.msra.mxu0 0.0
  %v6262 = vand.u32 %v4250, 4294901760
  %6263 = vmatpush.msra.mxu0 %v6262
  %v6264 = vand.u32 %v4249, 4294901760
  %6265 = vmatpush.msra.mxu0 %v6264
  %v6266 = vand.u32 %v5960, 4294901760
  %6267 = vmatmul.f32.gmra.mxu0 %v6266
  %v6268 = vpop.f32.mrf.mxu0
  %v6269 = vadd.f32 %v6226, %v6268
  %v6270 = vand.u32 %v5963, 4294901760
  %6271 = vmatmul.f32.gmra.mxu0 %v6270
  %v6272 = vpop.f32.mrf.mxu0
  %v6273 = vadd.f32 %v6230, %v6272
  %v6274 = vand.u32 %v5966, 4294901760
  %6275 = vmatmul.f32.gmra.mxu0 %v6274
  %v6276 = vpop.f32.mrf.mxu0
  %v6277 = vadd.f32 %v6234, %v6276
  %v6278 = vand.u32 %v5969, 4294901760
  %6279 = vmatmul.f32.gmra.mxu0 %v6278
  %v6280 = vpop.f32.mrf.mxu0
  %v6281 = vadd.f32 %v6238, %v6280
  %v6282 = vand.u32 %v5972, 4294901760
  %6283 = vmatmul.f32.gmra.mxu0 %v6282
  %v6284 = vpop.f32.mrf.mxu0
  %v6285 = vadd.f32 %v6242, %v6284
  %v6286 = vand.u32 %v5975, 4294901760
  %6287 = vmatmul.f32.gmra.mxu0 %v6286
  %v6288 = vpop.f32.mrf.mxu0
  %v6289 = vadd.f32 %v6246, %v6288
  %6290 = vdwg.mxu0
  %v6292 = vsel %vm5958, %v4165, 0
  %v6295 = vsel %vm5958, %v4166, 0
  %v6298 = vsel %vm5958, %v4167, 0
  %v6301 = vsel %vm5958, %v4168, 0
  %v6304 = vsel %vm5958, %v4169, 0
  %v6307 = vsel %vm5958, %v4170, 0
  %6309 = vmatpush.msra.mxu0 0.0
  %6310 = vmatpush.msra.mxu0 0.0
  %6311 = vmatpush.msra.mxu0 0.0
  %6312 = vmatpush.msra.mxu0 0.0
  %6313 = vmatpush.msra.mxu0 0.0
  %6314 = vmatpush.msra.mxu0 0.0
  %6315 = vmatpush.msra.mxu0 0.0
  %6316 = vmatpush.msra.mxu0 0.0
  %6317 = vmatpush.msra.mxu0 0.0
  %6318 = vmatpush.msra.mxu0 0.0
  %6319 = vmatpush.msra.mxu0 0.0
  %6320 = vmatpush.msra.mxu0 0.0
  %6321 = vmatpush.msra.mxu0 0.0
  %6322 = vmatpush.msra.mxu0 0.0
  %v6323 = vand.u32 %v4252, 4294901760
  %6324 = vmatpush.msra.mxu0 %v6323
  %v6325 = vand.u32 %v4251, 4294901760
  %6326 = vmatpush.msra.mxu0 %v6325
  %v6327 = vand.u32 %v6292, 4294901760
  %v6328 = vsub.f32 %v6292, %v6327
  %v6329 = vand.u32 %v6328, 4294901760
  %v6330 = vsub.f32 %v6328, %v6329
  %v6331 = vand.u32 %v6330, 4294901760
  %6332 = vmatmul.f32.gmra.mxu0 %v6331
  %v6333 = vpop.f32.mrf.mxu0
  %v6334 = vadd.f32 %v4216, %v6333
  %v6335 = vand.u32 %v6295, 4294901760
  %v6336 = vsub.f32 %v6295, %v6335
  %v6337 = vand.u32 %v6336, 4294901760
  %v6338 = vsub.f32 %v6336, %v6337
  %v6339 = vand.u32 %v6338, 4294901760
  %6340 = vmatmul.f32.gmra.mxu0 %v6339
  %v6341 = vpop.f32.mrf.mxu0
  %v6342 = vadd.f32 %v4221, %v6341
  %v6343 = vand.u32 %v6298, 4294901760
  %v6344 = vsub.f32 %v6298, %v6343
  %v6345 = vand.u32 %v6344, 4294901760
  %v6346 = vsub.f32 %v6344, %v6345
  %v6347 = vand.u32 %v6346, 4294901760
  %6348 = vmatmul.f32.gmra.mxu0 %v6347
  %v6349 = vpop.f32.mrf.mxu0
  %v6350 = vadd.f32 %v4226, %v6349
  %v6351 = vand.u32 %v6301, 4294901760
  %v6352 = vsub.f32 %v6301, %v6351
  %v6353 = vand.u32 %v6352, 4294901760
  %v6354 = vsub.f32 %v6352, %v6353
  %v6355 = vand.u32 %v6354, 4294901760
  %6356 = vmatmul.f32.gmra.mxu0 %v6355
  %v6357 = vpop.f32.mrf.mxu0
  %v6358 = vadd.f32 %v4231, %v6357
  %v6359 = vand.u32 %v6304, 4294901760
  %v6360 = vsub.f32 %v6304, %v6359
  %v6361 = vand.u32 %v6360, 4294901760
  %v6362 = vsub.f32 %v6360, %v6361
  %v6363 = vand.u32 %v6362, 4294901760
  %6364 = vmatmul.f32.gmra.mxu0 %v6363
  %v6365 = vpop.f32.mrf.mxu0
  %v6366 = vadd.f32 %v4236, %v6365
  %v6367 = vand.u32 %v6307, 4294901760
  %v6368 = vsub.f32 %v6307, %v6367
  %v6369 = vand.u32 %v6368, 4294901760
  %v6370 = vsub.f32 %v6368, %v6369
  %v6371 = vand.u32 %v6370, 4294901760
  %6372 = vmatmul.f32.gmra.mxu0 %v6371
  %v6373 = vpop.f32.mrf.mxu0
  %v6374 = vadd.f32 %v4241, %v6373
  %6375 = vdwg.mxu0
  %6376 = vmatpush.msra.mxu0 0.0
  %6377 = vmatpush.msra.mxu0 0.0
  %6378 = vmatpush.msra.mxu0 0.0
  %6379 = vmatpush.msra.mxu0 0.0
  %6380 = vmatpush.msra.mxu0 0.0
  %6381 = vmatpush.msra.mxu0 0.0
  %6382 = vmatpush.msra.mxu0 0.0
  %6383 = vmatpush.msra.mxu0 0.0
  %6384 = vmatpush.msra.mxu0 0.0
  %6385 = vmatpush.msra.mxu0 0.0
  %6386 = vmatpush.msra.mxu0 0.0
  %6387 = vmatpush.msra.mxu0 0.0
  %6388 = vmatpush.msra.mxu0 0.0
  %6389 = vmatpush.msra.mxu0 0.0
  %v6390 = vand.u32 %v4252, 4294901760
  %v6391 = vsub.f32 %v4252, %v6390
  %v6392 = vand.u32 %v6391, 4294901760
  %v6393 = vsub.f32 %v6391, %v6392
  %v6394 = vand.u32 %v6393, 4294901760
  %6395 = vmatpush.msra.mxu0 %v6394
  %v6396 = vand.u32 %v4251, 4294901760
  %v6397 = vsub.f32 %v4251, %v6396
  %v6398 = vand.u32 %v6397, 4294901760
  %v6399 = vsub.f32 %v6397, %v6398
  %v6400 = vand.u32 %v6399, 4294901760
  %6401 = vmatpush.msra.mxu0 %v6400
  %v6402 = vand.u32 %v6292, 4294901760
  %6403 = vmatmul.f32.gmra.mxu0 %v6402
  %v6404 = vpop.f32.mrf.mxu0
  %v6405 = vadd.f32 %v6334, %v6404
  %v6406 = vand.u32 %v6295, 4294901760
  %6407 = vmatmul.f32.gmra.mxu0 %v6406
  %v6408 = vpop.f32.mrf.mxu0
  %v6409 = vadd.f32 %v6342, %v6408
  %v6410 = vand.u32 %v6298, 4294901760
  %6411 = vmatmul.f32.gmra.mxu0 %v6410
  %v6412 = vpop.f32.mrf.mxu0
  %v6413 = vadd.f32 %v6350, %v6412
  %v6414 = vand.u32 %v6301, 4294901760
  %6415 = vmatmul.f32.gmra.mxu0 %v6414
  %v6416 = vpop.f32.mrf.mxu0
  %v6417 = vadd.f32 %v6358, %v6416
  %v6418 = vand.u32 %v6304, 4294901760
  %6419 = vmatmul.f32.gmra.mxu0 %v6418
  %v6420 = vpop.f32.mrf.mxu0
  %v6421 = vadd.f32 %v6366, %v6420
  %v6422 = vand.u32 %v6307, 4294901760
  %6423 = vmatmul.f32.gmra.mxu0 %v6422
  %v6424 = vpop.f32.mrf.mxu0
  %v6425 = vadd.f32 %v6374, %v6424
  %6426 = vdwg.mxu0
  %6427 = vmatpush.msra.mxu0 0.0
  %6428 = vmatpush.msra.mxu0 0.0
  %6429 = vmatpush.msra.mxu0 0.0
  %6430 = vmatpush.msra.mxu0 0.0
  %6431 = vmatpush.msra.mxu0 0.0
  %6432 = vmatpush.msra.mxu0 0.0
  %6433 = vmatpush.msra.mxu0 0.0
  %6434 = vmatpush.msra.mxu0 0.0
  %6435 = vmatpush.msra.mxu0 0.0
  %6436 = vmatpush.msra.mxu0 0.0
  %6437 = vmatpush.msra.mxu0 0.0
  %6438 = vmatpush.msra.mxu0 0.0
  %6439 = vmatpush.msra.mxu0 0.0
  %6440 = vmatpush.msra.mxu0 0.0
  %v6441 = vand.u32 %v4252, 4294901760
  %v6442 = vsub.f32 %v4252, %v6441
  %6443 = vmatpush.msra.mxu0 %v6442
  %v6444 = vand.u32 %v4251, 4294901760
  %v6445 = vsub.f32 %v4251, %v6444
  %6446 = vmatpush.msra.mxu0 %v6445
  %v6447 = vand.u32 %v6292, 4294901760
  %v6448 = vsub.f32 %v6292, %v6447
  %6449 = vmatmul.f32.gmra.mxu0 %v6448
  %v6450 = vpop.f32.mrf.mxu0
  %v6451 = vadd.f32 %v6405, %v6450
  %v6452 = vand.u32 %v6295, 4294901760
  %v6453 = vsub.f32 %v6295, %v6452
  %6454 = vmatmul.f32.gmra.mxu0 %v6453
  %v6455 = vpop.f32.mrf.mxu0
  %v6456 = vadd.f32 %v6409, %v6455
  %v6457 = vand.u32 %v6298, 4294901760
  %v6458 = vsub.f32 %v6298, %v6457
  %6459 = vmatmul.f32.gmra.mxu0 %v6458
  %v6460 = vpop.f32.mrf.mxu0
  %v6461 = vadd.f32 %v6413, %v6460
  %v6462 = vand.u32 %v6301, 4294901760
  %v6463 = vsub.f32 %v6301, %v6462
  %6464 = vmatmul.f32.gmra.mxu0 %v6463
  %v6465 = vpop.f32.mrf.mxu0
  %v6466 = vadd.f32 %v6417, %v6465
  %v6467 = vand.u32 %v6304, 4294901760
  %v6468 = vsub.f32 %v6304, %v6467
  %6469 = vmatmul.f32.gmra.mxu0 %v6468
  %v6470 = vpop.f32.mrf.mxu0
  %v6471 = vadd.f32 %v6421, %v6470
  %v6472 = vand.u32 %v6307, 4294901760
  %v6473 = vsub.f32 %v6307, %v6472
  %6474 = vmatmul.f32.gmra.mxu0 %v6473
  %v6475 = vpop.f32.mrf.mxu0
  %v6476 = vadd.f32 %v6425, %v6475
  %6477 = vdwg.mxu0
  %6478 = vmatpush.msra.mxu0 0.0
  %6479 = vmatpush.msra.mxu0 0.0
  %6480 = vmatpush.msra.mxu0 0.0
  %6481 = vmatpush.msra.mxu0 0.0
  %6482 = vmatpush.msra.mxu0 0.0
  %6483 = vmatpush.msra.mxu0 0.0
  %6484 = vmatpush.msra.mxu0 0.0
  %6485 = vmatpush.msra.mxu0 0.0
  %6486 = vmatpush.msra.mxu0 0.0
  %6487 = vmatpush.msra.mxu0 0.0
  %6488 = vmatpush.msra.mxu0 0.0
  %6489 = vmatpush.msra.mxu0 0.0
  %6490 = vmatpush.msra.mxu0 0.0
  %6491 = vmatpush.msra.mxu0 0.0
  %v6492 = vand.u32 %v4252, 4294901760
  %6493 = vmatpush.msra.mxu0 %v6492
  %v6494 = vand.u32 %v4251, 4294901760
  %6495 = vmatpush.msra.mxu0 %v6494
  %v6496 = vand.u32 %v6292, 4294901760
  %v6497 = vsub.f32 %v6292, %v6496
  %v6498 = vand.u32 %v6497, 4294901760
  %6499 = vmatmul.f32.gmra.mxu0 %v6498
  %v6500 = vpop.f32.mrf.mxu0
  %v6501 = vadd.f32 %v6451, %v6500
  %v6502 = vand.u32 %v6295, 4294901760
  %v6503 = vsub.f32 %v6295, %v6502
  %v6504 = vand.u32 %v6503, 4294901760
  %6505 = vmatmul.f32.gmra.mxu0 %v6504
  %v6506 = vpop.f32.mrf.mxu0
  %v6507 = vadd.f32 %v6456, %v6506
  %v6508 = vand.u32 %v6298, 4294901760
  %v6509 = vsub.f32 %v6298, %v6508
  %v6510 = vand.u32 %v6509, 4294901760
  %6511 = vmatmul.f32.gmra.mxu0 %v6510
  %v6512 = vpop.f32.mrf.mxu0
  %v6513 = vadd.f32 %v6461, %v6512
  %v6514 = vand.u32 %v6301, 4294901760
  %v6515 = vsub.f32 %v6301, %v6514
  %v6516 = vand.u32 %v6515, 4294901760
  %6517 = vmatmul.f32.gmra.mxu0 %v6516
  %v6518 = vpop.f32.mrf.mxu0
  %v6519 = vadd.f32 %v6466, %v6518
  %v6520 = vand.u32 %v6304, 4294901760
  %v6521 = vsub.f32 %v6304, %v6520
  %v6522 = vand.u32 %v6521, 4294901760
  %6523 = vmatmul.f32.gmra.mxu0 %v6522
  %v6524 = vpop.f32.mrf.mxu0
  %v6525 = vadd.f32 %v6471, %v6524
  %v6526 = vand.u32 %v6307, 4294901760
  %v6527 = vsub.f32 %v6307, %v6526
  %v6528 = vand.u32 %v6527, 4294901760
  %6529 = vmatmul.f32.gmra.mxu0 %v6528
  %v6530 = vpop.f32.mrf.mxu0
  %v6531 = vadd.f32 %v6476, %v6530
  %6532 = vdwg.mxu0
  %6533 = vmatpush.msra.mxu0 0.0
  %6534 = vmatpush.msra.mxu0 0.0
  %6535 = vmatpush.msra.mxu0 0.0
  %6536 = vmatpush.msra.mxu0 0.0
  %6537 = vmatpush.msra.mxu0 0.0
  %6538 = vmatpush.msra.mxu0 0.0
  %6539 = vmatpush.msra.mxu0 0.0
  %6540 = vmatpush.msra.mxu0 0.0
  %6541 = vmatpush.msra.mxu0 0.0
  %6542 = vmatpush.msra.mxu0 0.0
  %6543 = vmatpush.msra.mxu0 0.0
  %6544 = vmatpush.msra.mxu0 0.0
  %6545 = vmatpush.msra.mxu0 0.0
  %6546 = vmatpush.msra.mxu0 0.0
  %v6547 = vand.u32 %v4252, 4294901760
  %v6548 = vsub.f32 %v4252, %v6547
  %v6549 = vand.u32 %v6548, 4294901760
  %6550 = vmatpush.msra.mxu0 %v6549
  %v6551 = vand.u32 %v4251, 4294901760
  %v6552 = vsub.f32 %v4251, %v6551
  %v6553 = vand.u32 %v6552, 4294901760
  %6554 = vmatpush.msra.mxu0 %v6553
  %v6555 = vand.u32 %v6292, 4294901760
  %6556 = vmatmul.f32.gmra.mxu0 %v6555
  %v6557 = vpop.f32.mrf.mxu0
  %v6558 = vadd.f32 %v6501, %v6557
  %v6559 = vand.u32 %v6295, 4294901760
  %6560 = vmatmul.f32.gmra.mxu0 %v6559
  %v6561 = vpop.f32.mrf.mxu0
  %v6562 = vadd.f32 %v6507, %v6561
  %v6563 = vand.u32 %v6298, 4294901760
  %6564 = vmatmul.f32.gmra.mxu0 %v6563
  %v6565 = vpop.f32.mrf.mxu0
  %v6566 = vadd.f32 %v6513, %v6565
  %v6567 = vand.u32 %v6301, 4294901760
  %6568 = vmatmul.f32.gmra.mxu0 %v6567
  %v6569 = vpop.f32.mrf.mxu0
  %v6570 = vadd.f32 %v6519, %v6569
  %v6571 = vand.u32 %v6304, 4294901760
  %6572 = vmatmul.f32.gmra.mxu0 %v6571
  %v6573 = vpop.f32.mrf.mxu0
  %v6574 = vadd.f32 %v6525, %v6573
  %v6575 = vand.u32 %v6307, 4294901760
  %6576 = vmatmul.f32.gmra.mxu0 %v6575
  %v6577 = vpop.f32.mrf.mxu0
  %v6578 = vadd.f32 %v6531, %v6577
  %6579 = vdwg.mxu0
  %6580 = vmatpush.msra.mxu0 0.0
  %6581 = vmatpush.msra.mxu0 0.0
  %6582 = vmatpush.msra.mxu0 0.0
  %6583 = vmatpush.msra.mxu0 0.0
  %6584 = vmatpush.msra.mxu0 0.0
  %6585 = vmatpush.msra.mxu0 0.0
  %6586 = vmatpush.msra.mxu0 0.0
  %6587 = vmatpush.msra.mxu0 0.0
  %6588 = vmatpush.msra.mxu0 0.0
  %6589 = vmatpush.msra.mxu0 0.0
  %6590 = vmatpush.msra.mxu0 0.0
  %6591 = vmatpush.msra.mxu0 0.0
  %6592 = vmatpush.msra.mxu0 0.0
  %6593 = vmatpush.msra.mxu0 0.0
  %v6594 = vand.u32 %v4252, 4294901760
  %6595 = vmatpush.msra.mxu0 %v6594
  %v6596 = vand.u32 %v4251, 4294901760
  %6597 = vmatpush.msra.mxu0 %v6596
  %v6598 = vand.u32 %v6292, 4294901760
  %6599 = vmatmul.f32.gmra.mxu0 %v6598
  %v6600 = vpop.f32.mrf.mxu0
  %v6601 = vadd.f32 %v6558, %v6600
  %v6602 = vand.u32 %v6295, 4294901760
  %6603 = vmatmul.f32.gmra.mxu0 %v6602
  %v6604 = vpop.f32.mrf.mxu0
  %v6605 = vadd.f32 %v6562, %v6604
  %v6606 = vand.u32 %v6298, 4294901760
  %6607 = vmatmul.f32.gmra.mxu0 %v6606
  %v6608 = vpop.f32.mrf.mxu0
  %v6609 = vadd.f32 %v6566, %v6608
  %v6610 = vand.u32 %v6301, 4294901760
  %6611 = vmatmul.f32.gmra.mxu0 %v6610
  %v6612 = vpop.f32.mrf.mxu0
  %v6613 = vadd.f32 %v6570, %v6612
  %v6614 = vand.u32 %v6304, 4294901760
  %6615 = vmatmul.f32.gmra.mxu0 %v6614
  %v6616 = vpop.f32.mrf.mxu0
  %v6617 = vadd.f32 %v6574, %v6616
  %v6618 = vand.u32 %v6307, 4294901760
  %6619 = vmatmul.f32.gmra.mxu0 %v6618
  %v6620 = vpop.f32.mrf.mxu0
  %v6621 = vadd.f32 %v6578, %v6620
  %6622 = vdwg.mxu0
  %s6623 = scalar_lea.vmem [#allocation2], 4800
  %v6624 = vld [vmem:[%s6623] sm:$0xff]
  %v6625 = vld [vmem:[%s6623 + $0x8] sm:$0xff]
  %v6626 = vld [vmem:[%s6623 + $0x10] sm:$0xff]
  %v6627 = vld [vmem:[%s6623 + $0x18] sm:$0xff]
  %v6628 = vld [vmem:[%s6623 + $0x20] sm:$0xff]
  %v6629 = vld [vmem:[%s6623 + $0x28] sm:$0xff]
  %v6630 = vadd.f32 %v6624, %v6269
  %v6631 = vadd.f32 %v6625, %v6273
  %v6632 = vxor.u32 %v6630, 2147483648
  %v6633 = vxor.u32 %v6631, 2147483648
  %v6634 = vmul.f32 %v6632, 1.442695
  %v6635 = vpow.pop %v6634
  %v6636 = vmul.f32 %v6633, 1.442695
  %v6637 = vpow.pop %v6636
  %v6638 = vadd.f32 %v6635, 1.0
  %v6639 = vadd.f32 %v6637, 1.0
  %v6640 = vrcp.pop %v6638
  %v6641 = vmul.f32 %v6638, %v6640
  %v6642 = vsub.f32 1.0, %v6641
  %v6643 = vmul.f32 %v6640, %v6642
  %v6644 = vadd.f32 %v6640, %v6643
  %vm6645 = vweird.f32 %v6638
  %vm6646 = vweird.f32 %v6640
  %vm6647 = vmor %vm6645, %vm6646
  %v6648 = vsel %vm6647, %v6640, %v6644
  %v6649 = vand.u32 2147483647, %v6638
  %vm6650 = vcmp.eq.f32.partialorder %v6649, 8.507059e+37
  %v6651 = vand.u32 %v6638, 2147483648
  %v6652 = vor.u32 1.1754944e-38, %v6651
  %v6653 = vsel %vm6650, %v6652, %v6648
  %v6654 = vmul.f32 1.0, %v6653
  %v6655 = vrcp.pop %v6639
  %v6656 = vmul.f32 %v6639, %v6655
  %v6657 = vsub.f32 1.0, %v6656
  %v6658 = vmul.f32 %v6655, %v6657
  %v6659 = vadd.f32 %v6655, %v6658
  %vm6660 = vweird.f32 %v6639
  %vm6661 = vweird.f32 %v6655
  %vm6662 = vmor %vm6660, %vm6661
  %v6663 = vsel %vm6662, %v6655, %v6659
  %v6664 = vand.u32 2147483647, %v6639
  %vm6665 = vcmp.eq.f32.partialorder %v6664, 8.507059e+37
  %v6666 = vand.u32 %v6639, 2147483648
  %v6667 = vor.u32 1.1754944e-38, %v6666
  %v6668 = vsel %vm6665, %v6667, %v6663
  %v6669 = vmul.f32 1.0, %v6668
  %v6670 = vadd.f32 %v6626, %v6277
  %v6671 = vadd.f32 %v6627, %v6281
  %v6672 = vxor.u32 %v6670, 2147483648
  %v6673 = vxor.u32 %v6671, 2147483648
  %v6674 = vmul.f32 %v6672, 1.442695
  %v6675 = vpow.pop %v6674
  %v6676 = vmul.f32 %v6673, 1.442695
  %v6677 = vpow.pop %v6676
  %v6678 = vadd.f32 %v6675, 1.0
  %v6679 = vadd.f32 %v6677, 1.0
  %v6680 = vrcp.pop %v6678
  %v6681 = vmul.f32 %v6678, %v6680
  %v6682 = vsub.f32 1.0, %v6681
  %v6683 = vmul.f32 %v6680, %v6682
  %v6684 = vadd.f32 %v6680, %v6683
  %vm6685 = vweird.f32 %v6678
  %vm6686 = vweird.f32 %v6680
  %vm6687 = vmor %vm6685, %vm6686
  %v6688 = vsel %vm6687, %v6680, %v6684
  %v6689 = vand.u32 2147483647, %v6678
  %vm6690 = vcmp.eq.f32.partialorder %v6689, 8.507059e+37
  %v6691 = vand.u32 %v6678, 2147483648
  %v6692 = vor.u32 1.1754944e-38, %v6691
  %v6693 = vsel %vm6690, %v6692, %v6688
  %v6694 = vmul.f32 1.0, %v6693
  %v6695 = vrcp.pop %v6679
  %v6696 = vmul.f32 %v6679, %v6695
  %v6697 = vsub.f32 1.0, %v6696
  %v6698 = vmul.f32 %v6695, %v6697
  %v6699 = vadd.f32 %v6695, %v6698
  %vm6700 = vweird.f32 %v6679
  %vm6701 = vweird.f32 %v6695
  %vm6702 = vmor %vm6700, %vm6701
  %v6703 = vsel %vm6702, %v6695, %v6699
  %v6704 = vand.u32 2147483647, %v6679
  %vm6705 = vcmp.eq.f32.partialorder %v6704, 8.507059e+37
  %v6706 = vand.u32 %v6679, 2147483648
  %v6707 = vor.u32 1.1754944e-38, %v6706
  %v6708 = vsel %vm6705, %v6707, %v6703
  %v6709 = vmul.f32 1.0, %v6708
  %v6710 = vmul.f32 %v6654, %v6285
  %v6711 = vmul.f32 %v6669, %v6289
  %v6712 = vadd.f32 %v6628, %v6710
  %v6713 = vadd.f32 %v6629, %v6711
  %v6714 = vtanh.pop %v6712
  %v6715 = vtanh.pop %v6713
  %v6716 = vsub.f32 1.0, %v6694
  %v6717 = vsub.f32 1.0, %v6709
  %v6718 = vmul.f32 %v6716, %v6714
  %v6719 = vmul.f32 %v6717, %v6715
  %v6720 = vmul.f32 %v6694, %v4249
  %v6721 = vmul.f32 %v6709, %v4250
  %v6722 = vadd.f32 %v6718, %v6720
  %v6723 = vadd.f32 %v6719, %v6721
  %v6724 = vld [vmem:[#allocation3] sm:$0xff]
  %v6725 = vld [vmem:[#allocation3 + $0x8] sm:$0xff]
  %v6726 = vld [vmem:[#allocation3 + $0x10] sm:$0xff]
  %v6727 = vld [vmem:[#allocation3 + $0x18] sm:$0xff]
  %v6728 = vld [vmem:[#allocation3 + $0x20] sm:$0xff]
  %v6729 = vld [vmem:[#allocation3 + $0x28] sm:$0xff]
  %v6730 = vadd.f32 %v6724, %v6601
  %v6731 = vadd.f32 %v6725, %v6605
  %v6732 = vxor.u32 %v6730, 2147483648
  %v6733 = vxor.u32 %v6731, 2147483648
  %v6734 = vmul.f32 %v6732, 1.442695
  %v6735 = vpow.pop %v6734
  %v6736 = vmul.f32 %v6733, 1.442695
  %v6737 = vpow.pop %v6736
  %v6738 = vadd.f32 %v6735, 1.0
  %v6739 = vadd.f32 %v6737, 1.0
  %v6740 = vrcp.pop %v6738
  %v6741 = vmul.f32 %v6738, %v6740
  %v6742 = vsub.f32 1.0, %v6741
  %v6743 = vmul.f32 %v6740, %v6742
  %v6744 = vadd.f32 %v6740, %v6743
  %vm6745 = vweird.f32 %v6738
  %vm6746 = vweird.f32 %v6740
  %vm6747 = vmor %vm6745, %vm6746
  %v6748 = vsel %vm6747, %v6740, %v6744
  %v6749 = vand.u32 2147483647, %v6738
  %vm6750 = vcmp.eq.f32.partialorder %v6749, 8.507059e+37
  %v6751 = vand.u32 %v6738, 2147483648
  %v6752 = vor.u32 1.1754944e-38, %v6751
  %v6753 = vsel %vm6750, %v6752, %v6748
  %v6754 = vmul.f32 1.0, %v6753
  %v6755 = vrcp.pop %v6739
  %v6756 = vmul.f32 %v6739, %v6755
  %v6757 = vsub.f32 1.0, %v6756
  %v6758 = vmul.f32 %v6755, %v6757
  %v6759 = vadd.f32 %v6755, %v6758
  %vm6760 = vweird.f32 %v6739
  %vm6761 = vweird.f32 %v6755
  %vm6762 = vmor %vm6760, %vm6761
  %v6763 = vsel %vm6762, %v6755, %v6759
  %v6764 = vand.u32 2147483647, %v6739
  %vm6765 = vcmp.eq.f32.partialorder %v6764, 8.507059e+37
  %v6766 = vand.u32 %v6739, 2147483648
  %v6767 = vor.u32 1.1754944e-38, %v6766
  %v6768 = vsel %vm6765, %v6767, %v6763
  %v6769 = vmul.f32 1.0, %v6768
  %v6770 = vadd.f32 %v6726, %v6609
  %v6771 = vadd.f32 %v6727, %v6613
  %v6772 = vxor.u32 %v6770, 2147483648
  %v6773 = vxor.u32 %v6771, 2147483648
  %v6774 = vmul.f32 %v6772, 1.442695
  %v6775 = vpow.pop %v6774
  %v6776 = vmul.f32 %v6773, 1.442695
  %v6777 = vpow.pop %v6776
  %v6778 = vadd.f32 %v6775, 1.0
  %v6779 = vadd.f32 %v6777, 1.0
  %v6780 = vrcp.pop %v6778
  %v6781 = vmul.f32 %v6778, %v6780
  %v6782 = vsub.f32 1.0, %v6781
  %v6783 = vmul.f32 %v6780, %v6782
  %v6784 = vadd.f32 %v6780, %v6783
  %vm6785 = vweird.f32 %v6778
  %vm6786 = vweird.f32 %v6780
  %vm6787 = vmor %vm6785, %vm6786
  %v6788 = vsel %vm6787, %v6780, %v6784
  %v6789 = vand.u32 2147483647, %v6778
  %vm6790 = vcmp.eq.f32.partialorder %v6789, 8.507059e+37
  %v6791 = vand.u32 %v6778, 2147483648
  %v6792 = vor.u32 1.1754944e-38, %v6791
  %v6793 = vsel %vm6790, %v6792, %v6788
  %v6794 = vmul.f32 1.0, %v6793
  %v6795 = vrcp.pop %v6779
  %v6796 = vmul.f32 %v6779, %v6795
  %v6797 = vsub.f32 1.0, %v6796
  %v6798 = vmul.f32 %v6795, %v6797
  %v6799 = vadd.f32 %v6795, %v6798
  %vm6800 = vweird.f32 %v6779
  %vm6801 = vweird.f32 %v6795
  %vm6802 = vmor %vm6800, %vm6801
  %v6803 = vsel %vm6802, %v6795, %v6799
  %v6804 = vand.u32 2147483647, %v6779
  %vm6805 = vcmp.eq.f32.partialorder %v6804, 8.507059e+37
  %v6806 = vand.u32 %v6779, 2147483648
  %v6807 = vor.u32 1.1754944e-38, %v6806
  %v6808 = vsel %vm6805, %v6807, %v6803
  %v6809 = vmul.f32 1.0, %v6808
  %v6810 = vmul.f32 %v6754, %v6617
  %v6811 = vmul.f32 %v6769, %v6621
  %v6812 = vadd.f32 %v6728, %v6810
  %v6813 = vadd.f32 %v6729, %v6811
  %v6814 = vtanh.pop %v6812
  %v6815 = vtanh.pop %v6813
  %v6816 = vsub.f32 1.0, %v6794
  %v6817 = vsub.f32 1.0, %v6809
  %v6818 = vmul.f32 %v6816, %v6814
  %v6819 = vmul.f32 %v6817, %v6815
  %v6820 = vmul.f32 %v6794, %v4251
  %v6821 = vmul.f32 %v6809, %v4252
  %v6822 = vadd.f32 %v6818, %v6820
  %v6823 = vadd.f32 %v6819, %v6821
  %v6824 = vld [vmem:[%s9] sm:$0xff]
  %v6825 = vld [vmem:[%s9 + $0x8] sm:$0xff]
  %v6826 = vld [vmem:[%s9 + $0x10] sm:$0xff]
  %v6827 = vld [vmem:[%s9 + $0x18] sm:$0xff]
  %v6828 = vld [vmem:[%s9 + $0x20] sm:$0xff]
  %v6829 = vld [vmem:[%s9 + $0x28] sm:$0xff]
  %v6830 = vld [vmem:[%s11] sm:$0xff]
  %v6831 = vld [vmem:[%s11 + $0x8] sm:$0xff]
  %v6832 = vld [vmem:[%s11 + $0x10] sm:$0xff]
  %v6833 = vld [vmem:[%s11 + $0x18] sm:$0xff]
  %v6834 = vld [vmem:[%s11 + $0x20] sm:$0xff]
  %v6835 = vld [vmem:[%s11 + $0x28] sm:$0xff]
  %6837 = vset.pattern.permute.xlu0 0
  %6838 = vperm.xlu0 %6837, %v6830
  %v6839 = vpop.permute.xlu0 %6838
  %6842 = vset.pattern.permute.xlu0 0
  %6843 = vperm.xlu0 %6842, %v6831
  %v6844 = vpop.permute.xlu0 %6843
  %6847 = vset.pattern.permute.xlu0 0
  %6848 = vperm.xlu0 %6847, %v6832
  %v6849 = vpop.permute.xlu0 %6848
  %6852 = vset.pattern.permute.xlu0 0
  %6853 = vperm.xlu0 %6852, %v6833
  %v6854 = vpop.permute.xlu0 %6853
  %6857 = vset.pattern.permute.xlu0 0
  %6858 = vperm.xlu0 %6857, %v6834
  %v6859 = vpop.permute.xlu0 %6858
  %6862 = vset.pattern.permute.xlu0 0
  %6863 = vperm.xlu0 %6862, %v6835
  %v6864 = vpop.permute.xlu0 %6863
  %v6867 = vsel %vm5958, %v6824, 0
  %v6870 = vsel %vm5958, %v6825, 0
  %v6873 = vsel %vm5958, %v6826, 0
  %v6876 = vsel %vm5958, %v6827, 0
  %v6879 = vsel %vm5958, %v6828, 0
  %v6882 = vsel %vm5958, %v6829, 0
  %6884 = vmatpush.msra.mxu0 0.0
  %6885 = vmatpush.msra.mxu0 0.0
  %6886 = vmatpush.msra.mxu0 0.0
  %6887 = vmatpush.msra.mxu0 0.0
  %6888 = vmatpush.msra.mxu0 0.0
  %6889 = vmatpush.msra.mxu0 0.0
  %6890 = vmatpush.msra.mxu0 0.0
  %6891 = vmatpush.msra.mxu0 0.0
  %6892 = vmatpush.msra.mxu0 0.0
  %6893 = vmatpush.msra.mxu0 0.0
  %6894 = vmatpush.msra.mxu0 0.0
  %6895 = vmatpush.msra.mxu0 0.0
  %6896 = vmatpush.msra.mxu0 0.0
  %6897 = vmatpush.msra.mxu0 0.0
  %v6898 = vand.u32 %v6723, 4294901760
  %6899 = vmatpush.msra.mxu0 %v6898
  %v6900 = vand.u32 %v6722, 4294901760
  %6901 = vmatpush.msra.mxu0 %v6900
  %v6902 = vand.u32 %v6867, 4294901760
  %v6903 = vsub.f32 %v6867, %v6902
  %v6904 = vand.u32 %v6903, 4294901760
  %v6905 = vsub.f32 %v6903, %v6904
  %v6906 = vand.u32 %v6905, 4294901760
  %6907 = vmatmul.f32.gmra.mxu0 %v6906
  %v6908 = vpop.f32.mrf.mxu0
  %v6909 = vadd.f32 %v6839, %v6908
  %v6910 = vand.u32 %v6870, 4294901760
  %v6911 = vsub.f32 %v6870, %v6910
  %v6912 = vand.u32 %v6911, 4294901760
  %v6913 = vsub.f32 %v6911, %v6912
  %v6914 = vand.u32 %v6913, 4294901760
  %6915 = vmatmul.f32.gmra.mxu0 %v6914
  %v6916 = vpop.f32.mrf.mxu0
  %v6917 = vadd.f32 %v6844, %v6916
  %v6918 = vand.u32 %v6873, 4294901760
  %v6919 = vsub.f32 %v6873, %v6918
  %v6920 = vand.u32 %v6919, 4294901760
  %v6921 = vsub.f32 %v6919, %v6920
  %v6922 = vand.u32 %v6921, 4294901760
  %6923 = vmatmul.f32.gmra.mxu0 %v6922
  %v6924 = vpop.f32.mrf.mxu0
  %v6925 = vadd.f32 %v6849, %v6924
  %v6926 = vand.u32 %v6876, 4294901760
  %v6927 = vsub.f32 %v6876, %v6926
  %v6928 = vand.u32 %v6927, 4294901760
  %v6929 = vsub.f32 %v6927, %v6928
  %v6930 = vand.u32 %v6929, 4294901760
  %6931 = vmatmul.f32.gmra.mxu0 %v6930
  %v6932 = vpop.f32.mrf.mxu0
  %v6933 = vadd.f32 %v6854, %v6932
  %v6934 = vand.u32 %v6879, 4294901760
  %v6935 = vsub.f32 %v6879, %v6934
  %v6936 = vand.u32 %v6935, 4294901760
  %v6937 = vsub.f32 %v6935, %v6936
  %v6938 = vand.u32 %v6937, 4294901760
  %6939 = vmatmul.f32.gmra.mxu0 %v6938
  %v6940 = vpop.f32.mrf.mxu0
  %v6941 = vadd.f32 %v6859, %v6940
  %v6942 = vand.u32 %v6882, 4294901760
  %v6943 = vsub.f32 %v6882, %v6942
  %v6944 = vand.u32 %v6943, 4294901760
  %v6945 = vsub.f32 %v6943, %v6944
  %v6946 = vand.u32 %v6945, 4294901760
  %6947 = vmatmul.f32.gmra.mxu0 %v6946
  %v6948 = vpop.f32.mrf.mxu0
  %v6949 = vadd.f32 %v6864, %v6948
  %6950 = vdwg.mxu0
  %6951 = vmatpush.msra.mxu0 0.0
  %6952 = vmatpush.msra.mxu0 0.0
  %6953 = vmatpush.msra.mxu0 0.0
  %6954 = vmatpush.msra.mxu0 0.0
  %6955 = vmatpush.msra.mxu0 0.0
  %6956 = vmatpush.msra.mxu0 0.0
  %6957 = vmatpush.msra.mxu0 0.0
  %6958 = vmatpush.msra.mxu0 0.0
  %6959 = vmatpush.msra.mxu0 0.0
  %6960 = vmatpush.msra.mxu0 0.0
  %6961 = vmatpush.msra.mxu0 0.0
  %6962 = vmatpush.msra.mxu0 0.0
  %6963 = vmatpush.msra.mxu0 0.0
  %6964 = vmatpush.msra.mxu0 0.0
  %v6965 = vand.u32 %v6723, 4294901760
  %v6966 = vsub.f32 %v6723, %v6965
  %v6967 = vand.u32 %v6966, 4294901760
  %v6968 = vsub.f32 %v6966, %v6967
  %v6969 = vand.u32 %v6968, 4294901760
  %6970 = vmatpush.msra.mxu0 %v6969
  %v6971 = vand.u32 %v6722, 4294901760
  %v6972 = vsub.f32 %v6722, %v6971
  %v6973 = vand.u32 %v6972, 4294901760
  %v6974 = vsub.f32 %v6972, %v6973
  %v6975 = vand.u32 %v6974, 4294901760
  %6976 = vmatpush.msra.mxu0 %v6975
  %v6977 = vand.u32 %v6867, 4294901760
  %6978 = vmatmul.f32.gmra.mxu0 %v6977
  %v6979 = vpop.f32.mrf.mxu0
  %v6980 = vadd.f32 %v6909, %v6979
  %v6981 = vand.u32 %v6870, 4294901760
  %6982 = vmatmul.f32.gmra.mxu0 %v6981
  %v6983 = vpop.f32.mrf.mxu0
  %v6984 = vadd.f32 %v6917, %v6983
  %v6985 = vand.u32 %v6873, 4294901760
  %6986 = vmatmul.f32.gmra.mxu0 %v6985
  %v6987 = vpop.f32.mrf.mxu0
  %v6988 = vadd.f32 %v6925, %v6987
  %v6989 = vand.u32 %v6876, 4294901760
  %6990 = vmatmul.f32.gmra.mxu0 %v6989
  %v6991 = vpop.f32.mrf.mxu0
  %v6992 = vadd.f32 %v6933, %v6991
  %v6993 = vand.u32 %v6879, 4294901760
  %6994 = vmatmul.f32.gmra.mxu0 %v6993
  %v6995 = vpop.f32.mrf.mxu0
  %v6996 = vadd.f32 %v6941, %v6995
  %v6997 = vand.u32 %v6882, 4294901760
  %6998 = vmatmul.f32.gmra.mxu0 %v6997
  %v6999 = vpop.f32.mrf.mxu0
  %v7000 = vadd.f32 %v6949, %v6999
  %7001 = vdwg.mxu0
  %7002 = vmatpush.msra.mxu0 0.0
  %7003 = vmatpush.msra.mxu0 0.0
  %7004 = vmatpush.msra.mxu0 0.0
  %7005 = vmatpush.msra.mxu0 0.0
  %7006 = vmatpush.msra.mxu0 0.0
  %7007 = vmatpush.msra.mxu0 0.0
  %7008 = vmatpush.msra.mxu0 0.0
  %7009 = vmatpush.msra.mxu0 0.0
  %7010 = vmatpush.msra.mxu0 0.0
  %7011 = vmatpush.msra.mxu0 0.0
  %7012 = vmatpush.msra.mxu0 0.0
  %7013 = vmatpush.msra.mxu0 0.0
  %7014 = vmatpush.msra.mxu0 0.0
  %7015 = vmatpush.msra.mxu0 0.0
  %v7016 = vand.u32 %v6723, 4294901760
  %v7017 = vsub.f32 %v6723, %v7016
  %7018 = vmatpush.msra.mxu0 %v7017
  %v7019 = vand.u32 %v6722, 4294901760
  %v7020 = vsub.f32 %v6722, %v7019
  %7021 = vmatpush.msra.mxu0 %v7020
  %v7022 = vand.u32 %v6867, 4294901760
  %v7023 = vsub.f32 %v6867, %v7022
  %7024 = vmatmul.f32.gmra.mxu0 %v7023
  %v7025 = vpop.f32.mrf.mxu0
  %v7026 = vadd.f32 %v6980, %v7025
  %v7027 = vand.u32 %v6870, 4294901760
  %v7028 = vsub.f32 %v6870, %v7027
  %7029 = vmatmul.f32.gmra.mxu0 %v7028
  %v7030 = vpop.f32.mrf.mxu0
  %v7031 = vadd.f32 %v6984, %v7030
  %v7032 = vand.u32 %v6873, 4294901760
  %v7033 = vsub.f32 %v6873, %v7032
  %7034 = vmatmul.f32.gmra.mxu0 %v7033
  %v7035 = vpop.f32.mrf.mxu0
  %v7036 = vadd.f32 %v6988, %v7035
  %v7037 = vand.u32 %v6876, 4294901760
  %v7038 = vsub.f32 %v6876, %v7037
  %7039 = vmatmul.f32.gmra.mxu0 %v7038
  %v7040 = vpop.f32.mrf.mxu0
  %v7041 = vadd.f32 %v6992, %v7040
  %v7042 = vand.u32 %v6879, 4294901760
  %v7043 = vsub.f32 %v6879, %v7042
  %7044 = vmatmul.f32.gmra.mxu0 %v7043
  %v7045 = vpop.f32.mrf.mxu0
  %v7046 = vadd.f32 %v6996, %v7045
  %v7047 = vand.u32 %v6882, 4294901760
  %v7048 = vsub.f32 %v6882, %v7047
  %7049 = vmatmul.f32.gmra.mxu0 %v7048
  %v7050 = vpop.f32.mrf.mxu0
  %v7051 = vadd.f32 %v7000, %v7050
  %7052 = vdwg.mxu0
  %7053 = vmatpush.msra.mxu0 0.0
  %7054 = vmatpush.msra.mxu0 0.0
  %7055 = vmatpush.msra.mxu0 0.0
  %7056 = vmatpush.msra.mxu0 0.0
  %7057 = vmatpush.msra.mxu0 0.0
  %7058 = vmatpush.msra.mxu0 0.0
  %7059 = vmatpush.msra.mxu0 0.0
  %7060 = vmatpush.msra.mxu0 0.0
  %7061 = vmatpush.msra.mxu0 0.0
  %7062 = vmatpush.msra.mxu0 0.0
  %7063 = vmatpush.msra.mxu0 0.0
  %7064 = vmatpush.msra.mxu0 0.0
  %7065 = vmatpush.msra.mxu0 0.0
  %7066 = vmatpush.msra.mxu0 0.0
  %v7067 = vand.u32 %v6723, 4294901760
  %7068 = vmatpush.msra.mxu0 %v7067
  %v7069 = vand.u32 %v6722, 4294901760
  %7070 = vmatpush.msra.mxu0 %v7069
  %v7071 = vand.u32 %v6867, 4294901760
  %v7072 = vsub.f32 %v6867, %v7071
  %v7073 = vand.u32 %v7072, 4294901760
  %7074 = vmatmul.f32.gmra.mxu0 %v7073
  %v7075 = vpop.f32.mrf.mxu0
  %v7076 = vadd.f32 %v7026, %v7075
  %v7077 = vand.u32 %v6870, 4294901760
  %v7078 = vsub.f32 %v6870, %v7077
  %v7079 = vand.u32 %v7078, 4294901760
  %7080 = vmatmul.f32.gmra.mxu0 %v7079
  %v7081 = vpop.f32.mrf.mxu0
  %v7082 = vadd.f32 %v7031, %v7081
  %v7083 = vand.u32 %v6873, 4294901760
  %v7084 = vsub.f32 %v6873, %v7083
  %v7085 = vand.u32 %v7084, 4294901760
  %7086 = vmatmul.f32.gmra.mxu0 %v7085
  %v7087 = vpop.f32.mrf.mxu0
  %v7088 = vadd.f32 %v7036, %v7087
  %v7089 = vand.u32 %v6876, 4294901760
  %v7090 = vsub.f32 %v6876, %v7089
  %v7091 = vand.u32 %v7090, 4294901760
  %7092 = vmatmul.f32.gmra.mxu0 %v7091
  %v7093 = vpop.f32.mrf.mxu0
  %v7094 = vadd.f32 %v7041, %v7093
  %v7095 = vand.u32 %v6879, 4294901760
  %v7096 = vsub.f32 %v6879, %v7095
  %v7097 = vand.u32 %v7096, 4294901760
  %7098 = vmatmul.f32.gmra.mxu0 %v7097
  %v7099 = vpop.f32.mrf.mxu0
  %v7100 = vadd.f32 %v7046, %v7099
  %v7101 = vand.u32 %v6882, 4294901760
  %v7102 = vsub.f32 %v6882, %v7101
  %v7103 = vand.u32 %v7102, 4294901760
  %7104 = vmatmul.f32.gmra.mxu0 %v7103
  %v7105 = vpop.f32.mrf.mxu0
  %v7106 = vadd.f32 %v7051, %v7105
  %7107 = vdwg.mxu0
  %7108 = vmatpush.msra.mxu0 0.0
  %7109 = vmatpush.msra.mxu0 0.0
  %7110 = vmatpush.msra.mxu0 0.0
  %7111 = vmatpush.msra.mxu0 0.0
  %7112 = vmatpush.msra.mxu0 0.0
  %7113 = vmatpush.msra.mxu0 0.0
  %7114 = vmatpush.msra.mxu0 0.0
  %7115 = vmatpush.msra.mxu0 0.0
  %7116 = vmatpush.msra.mxu0 0.0
  %7117 = vmatpush.msra.mxu0 0.0
  %7118 = vmatpush.msra.mxu0 0.0
  %7119 = vmatpush.msra.mxu0 0.0
  %7120 = vmatpush.msra.mxu0 0.0
  %7121 = vmatpush.msra.mxu0 0.0
  %v7122 = vand.u32 %v6723, 4294901760
  %v7123 = vsub.f32 %v6723, %v7122
  %v7124 = vand.u32 %v7123, 4294901760
  %7125 = vmatpush.msra.mxu0 %v7124
  %v7126 = vand.u32 %v6722, 4294901760
  %v7127 = vsub.f32 %v6722, %v7126
  %v7128 = vand.u32 %v7127, 4294901760
  %7129 = vmatpush.msra.mxu0 %v7128
  %v7130 = vand.u32 %v6867, 4294901760
  %7131 = vmatmul.f32.gmra.mxu0 %v7130
  %v7132 = vpop.f32.mrf.mxu0
  %v7133 = vadd.f32 %v7076, %v7132
  %v7134 = vand.u32 %v6870, 4294901760
  %7135 = vmatmul.f32.gmra.mxu0 %v7134
  %v7136 = vpop.f32.mrf.mxu0
  %v7137 = vadd.f32 %v7082, %v7136
  %v7138 = vand.u32 %v6873, 4294901760
  %7139 = vmatmul.f32.gmra.mxu0 %v7138
  %v7140 = vpop.f32.mrf.mxu0
  %v7141 = vadd.f32 %v7088, %v7140
  %v7142 = vand.u32 %v6876, 4294901760
  %7143 = vmatmul.f32.gmra.mxu0 %v7142
  %v7144 = vpop.f32.mrf.mxu0
  %v7145 = vadd.f32 %v7094, %v7144
  %v7146 = vand.u32 %v6879, 4294901760
  %7147 = vmatmul.f32.gmra.mxu0 %v7146
  %v7148 = vpop.f32.mrf.mxu0
  %v7149 = vadd.f32 %v7100, %v7148
  %v7150 = vand.u32 %v6882, 4294901760
  %7151 = vmatmul.f32.gmra.mxu0 %v7150
  %v7152 = vpop.f32.mrf.mxu0
  %v7153 = vadd.f32 %v7106, %v7152
  %7154 = vdwg.mxu0
  %7155 = vmatpush.msra.mxu0 0.0
  %7156 = vmatpush.msra.mxu0 0.0
  %7157 = vmatpush.msra.mxu0 0.0
  %7158 = vmatpush.msra.mxu0 0.0
  %7159 = vmatpush.msra.mxu0 0.0
  %7160 = vmatpush.msra.mxu0 0.0
  %7161 = vmatpush.msra.mxu0 0.0
  %7162 = vmatpush.msra.mxu0 0.0
  %7163 = vmatpush.msra.mxu0 0.0
  %7164 = vmatpush.msra.mxu0 0.0
  %7165 = vmatpush.msra.mxu0 0.0
  %7166 = vmatpush.msra.mxu0 0.0
  %7167 = vmatpush.msra.mxu0 0.0
  %7168 = vmatpush.msra.mxu0 0.0
  %v7169 = vand.u32 %v6723, 4294901760
  %7170 = vmatpush.msra.mxu0 %v7169
  %v7171 = vand.u32 %v6722, 4294901760
  %7172 = vmatpush.msra.mxu0 %v7171
  %v7173 = vand.u32 %v6867, 4294901760
  %7174 = vmatmul.f32.gmra.mxu0 %v7173
  %v7175 = vpop.f32.mrf.mxu0
  %v7176 = vadd.f32 %v7133, %v7175
  %v7177 = vand.u32 %v6870, 4294901760
  %7178 = vmatmul.f32.gmra.mxu0 %v7177
  %v7179 = vpop.f32.mrf.mxu0
  %v7180 = vadd.f32 %v7137, %v7179
  %v7181 = vand.u32 %v6873, 4294901760
  %7182 = vmatmul.f32.gmra.mxu0 %v7181
  %v7183 = vpop.f32.mrf.mxu0
  %v7184 = vadd.f32 %v7141, %v7183
  %v7185 = vand.u32 %v6876, 4294901760
  %7186 = vmatmul.f32.gmra.mxu0 %v7185
  %v7187 = vpop.f32.mrf.mxu0
  %v7188 = vadd.f32 %v7145, %v7187
  %v7189 = vand.u32 %v6879, 4294901760
  %7190 = vmatmul.f32.gmra.mxu0 %v7189
  %v7191 = vpop.f32.mrf.mxu0
  %v7192 = vadd.f32 %v7149, %v7191
  %v7193 = vand.u32 %v6882, 4294901760
  %7194 = vmatmul.f32.gmra.mxu0 %v7193
  %v7195 = vpop.f32.mrf.mxu0
  %v7196 = vadd.f32 %v7153, %v7195
  %7197 = vdwg.mxu0
  %v7198 = vld [vmem:[%s10] sm:$0xff]
  %v7199 = vld [vmem:[%s10 + $0x8] sm:$0xff]
  %v7200 = vld [vmem:[%s10 + $0x10] sm:$0xff]
  %v7201 = vld [vmem:[%s10 + $0x18] sm:$0xff]
  %v7202 = vld [vmem:[%s10 + $0x20] sm:$0xff]
  %v7203 = vld [vmem:[%s10 + $0x28] sm:$0xff]
  %v7204 = vld [vmem:[%s12] sm:$0xff]
  %v7205 = vld [vmem:[%s12 + $0x8] sm:$0xff]
  %v7206 = vld [vmem:[%s12 + $0x10] sm:$0xff]
  %v7207 = vld [vmem:[%s12 + $0x18] sm:$0xff]
  %v7208 = vld [vmem:[%s12 + $0x20] sm:$0xff]
  %v7209 = vld [vmem:[%s12 + $0x28] sm:$0xff]
  %7211 = vset.pattern.permute.xlu0 0
  %7212 = vperm.xlu0 %7211, %v7204
  %v7213 = vpop.permute.xlu0 %7212
  %7216 = vset.pattern.permute.xlu0 0
  %7217 = vperm.xlu0 %7216, %v7205
  %v7218 = vpop.permute.xlu0 %7217
  %7221 = vset.pattern.permute.xlu0 0
  %7222 = vperm.xlu0 %7221, %v7206
  %v7223 = vpop.permute.xlu0 %7222
  %7226 = vset.pattern.permute.xlu0 0
  %7227 = vperm.xlu0 %7226, %v7207
  %v7228 = vpop.permute.xlu0 %7227
  %7231 = vset.pattern.permute.xlu0 0
  %7232 = vperm.xlu0 %7231, %v7208
  %v7233 = vpop.permute.xlu0 %7232
  %7236 = vset.pattern.permute.xlu0 0
  %7237 = vperm.xlu0 %7236, %v7209
  %v7238 = vpop.permute.xlu0 %7237
  %v7241 = vsel %vm5958, %v7198, 0
  %v7244 = vsel %vm5958, %v7199, 0
  %v7247 = vsel %vm5958, %v7200, 0
  %v7250 = vsel %vm5958, %v7201, 0
  %v7253 = vsel %vm5958, %v7202, 0
  %v7256 = vsel %vm5958, %v7203, 0
  %7258 = vmatpush.msra.mxu0 0.0
  %7259 = vmatpush.msra.mxu0 0.0
  %7260 = vmatpush.msra.mxu0 0.0
  %7261 = vmatpush.msra.mxu0 0.0
  %7262 = vmatpush.msra.mxu0 0.0
  %7263 = vmatpush.msra.mxu0 0.0
  %7264 = vmatpush.msra.mxu0 0.0
  %7265 = vmatpush.msra.mxu0 0.0
  %7266 = vmatpush.msra.mxu0 0.0
  %7267 = vmatpush.msra.mxu0 0.0
  %7268 = vmatpush.msra.mxu0 0.0
  %7269 = vmatpush.msra.mxu0 0.0
  %7270 = vmatpush.msra.mxu0 0.0
  %7271 = vmatpush.msra.mxu0 0.0
  %7272 = vmatpush.msra.mxu0 0.0
  %7273 = vmatpush.msra.mxu0 0.0
  %v7274 = vand.u32 %v7241, 4294901760
  %v7275 = vsub.f32 %v7241, %v7274
  %v7276 = vand.u32 %v7275, 4294901760
  %v7277 = vsub.f32 %v7275, %v7276
  %v7278 = vand.u32 %v7277, 4294901760
  %7279 = vmatmul.f32.gmra.mxu0 %v7278
  %v7280 = vpop.f32.mrf.mxu0
  %v7281 = vadd.f32 %v7213, %v7280
  %v7282 = vand.u32 %v7244, 4294901760
  %v7283 = vsub.f32 %v7244, %v7282
  %v7284 = vand.u32 %v7283, 4294901760
  %v7285 = vsub.f32 %v7283, %v7284
  %v7286 = vand.u32 %v7285, 4294901760
  %7287 = vmatmul.f32.gmra.mxu0 %v7286
  %v7288 = vpop.f32.mrf.mxu0
  %v7289 = vadd.f32 %v7218, %v7288
  %v7290 = vand.u32 %v7247, 4294901760
  %v7291 = vsub.f32 %v7247, %v7290
  %v7292 = vand.u32 %v7291, 4294901760
  %v7293 = vsub.f32 %v7291, %v7292
  %v7294 = vand.u32 %v7293, 4294901760
  %7295 = vmatmul.f32.gmra.mxu0 %v7294
  %v7296 = vpop.f32.mrf.mxu0
  %v7297 = vadd.f32 %v7223, %v7296
  %v7298 = vand.u32 %v7250, 4294901760
  %v7299 = vsub.f32 %v7250, %v7298
  %v7300 = vand.u32 %v7299, 4294901760
  %v7301 = vsub.f32 %v7299, %v7300
  %v7302 = vand.u32 %v7301, 4294901760
  %7303 = vmatmul.f32.gmra.mxu0 %v7302
  %v7304 = vpop.f32.mrf.mxu0
  %v7305 = vadd.f32 %v7228, %v7304
  %v7306 = vand.u32 %v7253, 4294901760
  %v7307 = vsub.f32 %v7253, %v7306
  %v7308 = vand.u32 %v7307, 4294901760
  %v7309 = vsub.f32 %v7307, %v7308
  %v7310 = vand.u32 %v7309, 4294901760
  %7311 = vmatmul.f32.gmra.mxu0 %v7310
  %v7312 = vpop.f32.mrf.mxu0
  %v7313 = vadd.f32 %v7233, %v7312
  %v7314 = vand.u32 %v7256, 4294901760
  %v7315 = vsub.f32 %v7256, %v7314
  %v7316 = vand.u32 %v7315, 4294901760
  %v7317 = vsub.f32 %v7315, %v7316
  %v7318 = vand.u32 %v7317, 4294901760
  %7319 = vmatmul.f32.gmra.mxu0 %v7318
  %v7320 = vpop.f32.mrf.mxu0
  %v7321 = vadd.f32 %v7238, %v7320
  %7322 = vdwg.mxu0
  %7323 = vmatpush.msra.mxu0 0.0
  %7324 = vmatpush.msra.mxu0 0.0
  %7325 = vmatpush.msra.mxu0 0.0
  %7326 = vmatpush.msra.mxu0 0.0
  %7327 = vmatpush.msra.mxu0 0.0
  %7328 = vmatpush.msra.mxu0 0.0
  %7329 = vmatpush.msra.mxu0 0.0
  %7330 = vmatpush.msra.mxu0 0.0
  %7331 = vmatpush.msra.mxu0 0.0
  %7332 = vmatpush.msra.mxu0 0.0
  %7333 = vmatpush.msra.mxu0 0.0
  %7334 = vmatpush.msra.mxu0 0.0
  %7335 = vmatpush.msra.mxu0 0.0
  %7336 = vmatpush.msra.mxu0 0.0
  %7337 = vmatpush.msra.mxu0 0.0
  %7338 = vmatpush.msra.mxu0 0.0
  %v7339 = vand.u32 %v7241, 4294901760
  %7340 = vmatmul.f32.gmra.mxu0 %v7339
  %v7341 = vpop.f32.mrf.mxu0
  %v7342 = vadd.f32 %v7281, %v7341
  %v7343 = vand.u32 %v7244, 4294901760
  %7344 = vmatmul.f32.gmra.mxu0 %v7343
  %v7345 = vpop.f32.mrf.mxu0
  %v7346 = vadd.f32 %v7289, %v7345
  %v7347 = vand.u32 %v7247, 4294901760
  %7348 = vmatmul.f32.gmra.mxu0 %v7347
  %v7349 = vpop.f32.mrf.mxu0
  %v7350 = vadd.f32 %v7297, %v7349
  %v7351 = vand.u32 %v7250, 4294901760
  %7352 = vmatmul.f32.gmra.mxu0 %v7351
  %v7353 = vpop.f32.mrf.mxu0
  %v7354 = vadd.f32 %v7305, %v7353
  %v7355 = vand.u32 %v7253, 4294901760
  %7356 = vmatmul.f32.gmra.mxu0 %v7355
  %v7357 = vpop.f32.mrf.mxu0
  %v7358 = vadd.f32 %v7313, %v7357
  %v7359 = vand.u32 %v7256, 4294901760
  %7360 = vmatmul.f32.gmra.mxu0 %v7359
  %v7361 = vpop.f32.mrf.mxu0
  %v7362 = vadd.f32 %v7321, %v7361
  %7363 = vdwg.mxu0
  %7364 = vmatpush.msra.mxu0 0.0
  %7365 = vmatpush.msra.mxu0 0.0
  %7366 = vmatpush.msra.mxu0 0.0
  %7367 = vmatpush.msra.mxu0 0.0
  %7368 = vmatpush.msra.mxu0 0.0
  %7369 = vmatpush.msra.mxu0 0.0
  %7370 = vmatpush.msra.mxu0 0.0
  %7371 = vmatpush.msra.mxu0 0.0
  %7372 = vmatpush.msra.mxu0 0.0
  %7373 = vmatpush.msra.mxu0 0.0
  %7374 = vmatpush.msra.mxu0 0.0
  %7375 = vmatpush.msra.mxu0 0.0
  %7376 = vmatpush.msra.mxu0 0.0
  %7377 = vmatpush.msra.mxu0 0.0
  %7378 = vmatpush.msra.mxu0 0.0
  %7379 = vmatpush.msra.mxu0 0.0
  %v7380 = vand.u32 %v7241, 4294901760
  %v7381 = vsub.f32 %v7241, %v7380
  %7382 = vmatmul.f32.gmra.mxu0 %v7381
  %v7383 = vpop.f32.mrf.mxu0
  %v7384 = vadd.f32 %v7342, %v7383
  %v7385 = vand.u32 %v7244, 4294901760
  %v7386 = vsub.f32 %v7244, %v7385
  %7387 = vmatmul.f32.gmra.mxu0 %v7386
  %v7388 = vpop.f32.mrf.mxu0
  %v7389 = vadd.f32 %v7346, %v7388
  %v7390 = vand.u32 %v7247, 4294901760
  %v7391 = vsub.f32 %v7247, %v7390
  %7392 = vmatmul.f32.gmra.mxu0 %v7391
  %v7393 = vpop.f32.mrf.mxu0
  %v7394 = vadd.f32 %v7350, %v7393
  %v7395 = vand.u32 %v7250, 4294901760
  %v7396 = vsub.f32 %v7250, %v7395
  %7397 = vmatmul.f32.gmra.mxu0 %v7396
  %v7398 = vpop.f32.mrf.mxu0
  %v7399 = vadd.f32 %v7354, %v7398
  %v7400 = vand.u32 %v7253, 4294901760
  %v7401 = vsub.f32 %v7253, %v7400
  %7402 = vmatmul.f32.gmra.mxu0 %v7401
  %v7403 = vpop.f32.mrf.mxu0
  %v7404 = vadd.f32 %v7358, %v7403
  %v7405 = vand.u32 %v7256, 4294901760
  %v7406 = vsub.f32 %v7256, %v7405
  %7407 = vmatmul.f32.gmra.mxu0 %v7406
  %v7408 = vpop.f32.mrf.mxu0
  %v7409 = vadd.f32 %v7362, %v7408
  %7410 = vdwg.mxu0
  %7411 = vmatpush.msra.mxu0 0.0
  %7412 = vmatpush.msra.mxu0 0.0
  %7413 = vmatpush.msra.mxu0 0.0
  %7414 = vmatpush.msra.mxu0 0.0
  %7415 = vmatpush.msra.mxu0 0.0
  %7416 = vmatpush.msra.mxu0 0.0
  %7417 = vmatpush.msra.mxu0 0.0
  %7418 = vmatpush.msra.mxu0 0.0
  %7419 = vmatpush.msra.mxu0 0.0
  %7420 = vmatpush.msra.mxu0 0.0
  %7421 = vmatpush.msra.mxu0 0.0
  %7422 = vmatpush.msra.mxu0 0.0
  %7423 = vmatpush.msra.mxu0 0.0
  %7424 = vmatpush.msra.mxu0 0.0
  %7425 = vmatpush.msra.mxu0 0.0
  %7426 = vmatpush.msra.mxu0 0.0
  %v7427 = vand.u32 %v7241, 4294901760
  %v7428 = vsub.f32 %v7241, %v7427
  %v7429 = vand.u32 %v7428, 4294901760
  %7430 = vmatmul.f32.gmra.mxu0 %v7429
  %v7431 = vpop.f32.mrf.mxu0
  %v7432 = vadd.f32 %v7384, %v7431
  %v7433 = vand.u32 %v7244, 4294901760
  %v7434 = vsub.f32 %v7244, %v7433
  %v7435 = vand.u32 %v7434, 4294901760
  %7436 = vmatmul.f32.gmra.mxu0 %v7435
  %v7437 = vpop.f32.mrf.mxu0
  %v7438 = vadd.f32 %v7389, %v7437
  %v7439 = vand.u32 %v7247, 4294901760
  %v7440 = vsub.f32 %v7247, %v7439
  %v7441 = vand.u32 %v7440, 4294901760
  %7442 = vmatmul.f32.gmra.mxu0 %v7441
  %v7443 = vpop.f32.mrf.mxu0
  %v7444 = vadd.f32 %v7394, %v7443
  %v7445 = vand.u32 %v7250, 4294901760
  %v7446 = vsub.f32 %v7250, %v7445
  %v7447 = vand.u32 %v7446, 4294901760
  %7448 = vmatmul.f32.gmra.mxu0 %v7447
  %v7449 = vpop.f32.mrf.mxu0
  %v7450 = vadd.f32 %v7399, %v7449
  %v7451 = vand.u32 %v7253, 4294901760
  %v7452 = vsub.f32 %v7253, %v7451
  %v7453 = vand.u32 %v7452, 4294901760
  %7454 = vmatmul.f32.gmra.mxu0 %v7453
  %v7455 = vpop.f32.mrf.mxu0
  %v7456 = vadd.f32 %v7404, %v7455
  %v7457 = vand.u32 %v7256, 4294901760
  %v7458 = vsub.f32 %v7256, %v7457
  %v7459 = vand.u32 %v7458, 4294901760
  %7460 = vmatmul.f32.gmra.mxu0 %v7459
  %v7461 = vpop.f32.mrf.mxu0
  %v7462 = vadd.f32 %v7409, %v7461
  %7463 = vdwg.mxu0
  %7464 = vmatpush.msra.mxu0 0.0
  %7465 = vmatpush.msra.mxu0 0.0
  %7466 = vmatpush.msra.mxu0 0.0
  %7467 = vmatpush.msra.mxu0 0.0
  %7468 = vmatpush.msra.mxu0 0.0
  %7469 = vmatpush.msra.mxu0 0.0
  %7470 = vmatpush.msra.mxu0 0.0
  %7471 = vmatpush.msra.mxu0 0.0
  %7472 = vmatpush.msra.mxu0 0.0
  %7473 = vmatpush.msra.mxu0 0.0
  %7474 = vmatpush.msra.mxu0 0.0
  %7475 = vmatpush.msra.mxu0 0.0
  %7476 = vmatpush.msra.mxu0 0.0
  %7477 = vmatpush.msra.mxu0 0.0
  %7478 = vmatpush.msra.mxu0 0.0
  %7479 = vmatpush.msra.mxu0 0.0
  %v7480 = vand.u32 %v7241, 4294901760
  %7481 = vmatmul.f32.gmra.mxu0 %v7480
  %v7482 = vpop.f32.mrf.mxu0
  %v7483 = vadd.f32 %v7432, %v7482
  %v7484 = vand.u32 %v7244, 4294901760
  %7485 = vmatmul.f32.gmra.mxu0 %v7484
  %v7486 = vpop.f32.mrf.mxu0
  %v7487 = vadd.f32 %v7438, %v7486
  %v7488 = vand.u32 %v7247, 4294901760
  %7489 = vmatmul.f32.gmra.mxu0 %v7488
  %v7490 = vpop.f32.mrf.mxu0
  %v7491 = vadd.f32 %v7444, %v7490
  %v7492 = vand.u32 %v7250, 4294901760
  %7493 = vmatmul.f32.gmra.mxu0 %v7492
  %v7494 = vpop.f32.mrf.mxu0
  %v7495 = vadd.f32 %v7450, %v7494
  %v7496 = vand.u32 %v7253, 4294901760
  %7497 = vmatmul.f32.gmra.mxu0 %v7496
  %v7498 = vpop.f32.mrf.mxu0
  %v7499 = vadd.f32 %v7456, %v7498
  %v7500 = vand.u32 %v7256, 4294901760
  %7501 = vmatmul.f32.gmra.mxu0 %v7500
  %v7502 = vpop.f32.mrf.mxu0
  %v7503 = vadd.f32 %v7462, %v7502
  %7504 = vdwg.mxu0
  %7505 = vmatpush.msra.mxu0 0.0
  %7506 = vmatpush.msra.mxu0 0.0
  %7507 = vmatpush.msra.mxu0 0.0
  %7508 = vmatpush.msra.mxu0 0.0
  %7509 = vmatpush.msra.mxu0 0.0
  %7510 = vmatpush.msra.mxu0 0.0
  %7511 = vmatpush.msra.mxu0 0.0
  %7512 = vmatpush.msra.mxu0 0.0
  %7513 = vmatpush.msra.mxu0 0.0
  %7514 = vmatpush.msra.mxu0 0.0
  %7515 = vmatpush.msra.mxu0 0.0
  %7516 = vmatpush.msra.mxu0 0.0
  %7517 = vmatpush.msra.mxu0 0.0
  %7518 = vmatpush.msra.mxu0 0.0
  %7519 = vmatpush.msra.mxu0 0.0
  %7520 = vmatpush.msra.mxu0 0.0
  %v7521 = vand.u32 %v7241, 4294901760
  %7522 = vmatmul.f32.gmra.mxu0 %v7521
  %v7523 = vpop.f32.mrf.mxu0
  %v7524 = vadd.f32 %v7483, %v7523
  %v7525 = vand.u32 %v7244, 4294901760
  %7526 = vmatmul.f32.gmra.mxu0 %v7525
  %v7527 = vpop.f32.mrf.mxu0
  %v7528 = vadd.f32 %v7487, %v7527
  %v7529 = vand.u32 %v7247, 4294901760
  %7530 = vmatmul.f32.gmra.mxu0 %v7529
  %v7531 = vpop.f32.mrf.mxu0
  %v7532 = vadd.f32 %v7491, %v7531
  %v7533 = vand.u32 %v7250, 4294901760
  %7534 = vmatmul.f32.gmra.mxu0 %v7533
  %v7535 = vpop.f32.mrf.mxu0
  %v7536 = vadd.f32 %v7495, %v7535
  %v7537 = vand.u32 %v7253, 4294901760
  %7538 = vmatmul.f32.gmra.mxu0 %v7537
  %v7539 = vpop.f32.mrf.mxu0
  %v7540 = vadd.f32 %v7499, %v7539
  %v7541 = vand.u32 %v7256, 4294901760
  %7542 = vmatmul.f32.gmra.mxu0 %v7541
  %v7543 = vpop.f32.mrf.mxu0
  %v7544 = vadd.f32 %v7503, %v7543
  %7545 = vdwg.mxu0
  %v7546 = vadd.f32 %v7176, %v7524
  %v7547 = vadd.f32 %v7180, %v7528
  %v7548 = vxor.u32 %v7546, 2147483648
  %v7549 = vxor.u32 %v7547, 2147483648
  %v7550 = vmul.f32 %v7548, 1.442695
  %v7551 = vpow.pop %v7550
  %v7552 = vmul.f32 %v7549, 1.442695
  %v7553 = vpow.pop %v7552
  %v7554 = vadd.f32 %v7551, 1.0
  %v7555 = vadd.f32 %v7553, 1.0
  %v7556 = vrcp.pop %v7554
  %v7557 = vmul.f32 %v7554, %v7556
  %v7558 = vsub.f32 1.0, %v7557
  %v7559 = vmul.f32 %v7556, %v7558
  %v7560 = vadd.f32 %v7556, %v7559
  %vm7561 = vweird.f32 %v7554
  %vm7562 = vweird.f32 %v7556
  %vm7563 = vmor %vm7561, %vm7562
  %v7564 = vsel %vm7563, %v7556, %v7560
  %v7565 = vand.u32 2147483647, %v7554
  %vm7566 = vcmp.eq.f32.partialorder %v7565, 8.507059e+37
  %v7567 = vand.u32 %v7554, 2147483648
  %v7568 = vor.u32 1.1754944e-38, %v7567
  %v7569 = vsel %vm7566, %v7568, %v7564
  %v7570 = vmul.f32 1.0, %v7569
  %v7571 = vrcp.pop %v7555
  %v7572 = vmul.f32 %v7555, %v7571
  %v7573 = vsub.f32 1.0, %v7572
  %v7574 = vmul.f32 %v7571, %v7573
  %v7575 = vadd.f32 %v7571, %v7574
  %vm7576 = vweird.f32 %v7555
  %vm7577 = vweird.f32 %v7571
  %vm7578 = vmor %vm7576, %vm7577
  %v7579 = vsel %vm7578, %v7571, %v7575
  %v7580 = vand.u32 2147483647, %v7555
  %vm7581 = vcmp.eq.f32.partialorder %v7580, 8.507059e+37
  %v7582 = vand.u32 %v7555, 2147483648
  %v7583 = vor.u32 1.1754944e-38, %v7582
  %v7584 = vsel %vm7581, %v7583, %v7579
  %v7585 = vmul.f32 1.0, %v7584
  %v7586 = vadd.f32 %v7184, %v7532
  %v7587 = vadd.f32 %v7188, %v7536
  %v7588 = vxor.u32 %v7586, 2147483648
  %v7589 = vxor.u32 %v7587, 2147483648
  %v7590 = vmul.f32 %v7588, 1.442695
  %v7591 = vpow.pop %v7590
  %v7592 = vmul.f32 %v7589, 1.442695
  %v7593 = vpow.pop %v7592
  %v7594 = vadd.f32 %v7591, 1.0
  %v7595 = vadd.f32 %v7593, 1.0
  %v7596 = vrcp.pop %v7594
  %v7597 = vmul.f32 %v7594, %v7596
  %v7598 = vsub.f32 1.0, %v7597
  %v7599 = vmul.f32 %v7596, %v7598
  %v7600 = vadd.f32 %v7596, %v7599
  %vm7601 = vweird.f32 %v7594
  %vm7602 = vweird.f32 %v7596
  %vm7603 = vmor %vm7601, %vm7602
  %v7604 = vsel %vm7603, %v7596, %v7600
  %v7605 = vand.u32 2147483647, %v7594
  %vm7606 = vcmp.eq.f32.partialorder %v7605, 8.507059e+37
  %v7607 = vand.u32 %v7594, 2147483648
  %v7608 = vor.u32 1.1754944e-38, %v7607
  %v7609 = vsel %vm7606, %v7608, %v7604
  %v7610 = vmul.f32 1.0, %v7609
  %v7611 = vrcp.pop %v7595
  %v7612 = vmul.f32 %v7595, %v7611
  %v7613 = vsub.f32 1.0, %v7612
  %v7614 = vmul.f32 %v7611, %v7613
  %v7615 = vadd.f32 %v7611, %v7614
  %vm7616 = vweird.f32 %v7595
  %vm7617 = vweird.f32 %v7611
  %vm7618 = vmor %vm7616, %vm7617
  %v7619 = vsel %vm7618, %v7611, %v7615
  %v7620 = vand.u32 2147483647, %v7595
  %vm7621 = vcmp.eq.f32.partialorder %v7620, 8.507059e+37
  %v7622 = vand.u32 %v7595, 2147483648
  %v7623 = vor.u32 1.1754944e-38, %v7622
  %v7624 = vsel %vm7621, %v7623, %v7619
  %v7625 = vmul.f32 1.0, %v7624
  %v7626 = vmul.f32 %v7570, %v7540
  %v7627 = vmul.f32 %v7585, %v7544
  %v7628 = vadd.f32 %v7192, %v7626
  %v7629 = vadd.f32 %v7196, %v7627
  %v7630 = vtanh.pop %v7628
  %v7631 = vtanh.pop %v7629
  %v7632 = vsub.f32 1.0, %v7610
  %v7633 = vsub.f32 1.0, %v7625
  %v7634 = vmul.f32 %v7632, %v7630
  %v7635 = vmul.f32 %v7633, %v7631
  %v7636 = vmul.f32 %v7610, 0.0
  %v7637 = vmul.f32 %v7625, 0.0
  %v7638 = vadd.f32 %v7634, %v7636
  %v7639 = vadd.f32 %v7635, %v7637
  %7640 = vmatpush.msra.mxu0 0.0
  %7641 = vmatpush.msra.mxu0 0.0
  %7642 = vmatpush.msra.mxu0 0.0
  %7643 = vmatpush.msra.mxu0 0.0
  %7644 = vmatpush.msra.mxu0 0.0
  %7645 = vmatpush.msra.mxu0 0.0
  %7646 = vmatpush.msra.mxu0 0.0
  %7647 = vmatpush.msra.mxu0 0.0
  %7648 = vmatpush.msra.mxu0 0.0
  %7649 = vmatpush.msra.mxu0 0.0
  %7650 = vmatpush.msra.mxu0 0.0
  %7651 = vmatpush.msra.mxu0 0.0
  %7652 = vmatpush.msra.mxu0 0.0
  %7653 = vmatpush.msra.mxu0 0.0
  %v7654 = vand.u32 %v6823, 4294901760
  %7655 = vmatpush.msra.mxu0 %v7654
  %v7656 = vand.u32 %v6822, 4294901760
  %7657 = vmatpush.msra.mxu0 %v7656
  %v7658 = vand.u32 %v6867, 4294901760
  %v7659 = vsub.f32 %v6867, %v7658
  %v7660 = vand.u32 %v7659, 4294901760
  %v7661 = vsub.f32 %v7659, %v7660
  %v7662 = vand.u32 %v7661, 4294901760
  %7663 = vmatmul.f32.gmra.mxu0 %v7662
  %v7664 = vpop.f32.mrf.mxu0
  %v7665 = vadd.f32 %v6839, %v7664
  %v7666 = vand.u32 %v6870, 4294901760
  %v7667 = vsub.f32 %v6870, %v7666
  %v7668 = vand.u32 %v7667, 4294901760
  %v7669 = vsub.f32 %v7667, %v7668
  %v7670 = vand.u32 %v7669, 4294901760
  %7671 = vmatmul.f32.gmra.mxu0 %v7670
  %v7672 = vpop.f32.mrf.mxu0
  %v7673 = vadd.f32 %v6844, %v7672
  %v7674 = vand.u32 %v6873, 4294901760
  %v7675 = vsub.f32 %v6873, %v7674
  %v7676 = vand.u32 %v7675, 4294901760
  %v7677 = vsub.f32 %v7675, %v7676
  %v7678 = vand.u32 %v7677, 4294901760
  %7679 = vmatmul.f32.gmra.mxu0 %v7678
  %v7680 = vpop.f32.mrf.mxu0
  %v7681 = vadd.f32 %v6849, %v7680
  %v7682 = vand.u32 %v6876, 4294901760
  %v7683 = vsub.f32 %v6876, %v7682
  %v7684 = vand.u32 %v7683, 4294901760
  %v7685 = vsub.f32 %v7683, %v7684
  %v7686 = vand.u32 %v7685, 4294901760
  %7687 = vmatmul.f32.gmra.mxu0 %v7686
  %v7688 = vpop.f32.mrf.mxu0
  %v7689 = vadd.f32 %v6854, %v7688
  %v7690 = vand.u32 %v6879, 4294901760
  %v7691 = vsub.f32 %v6879, %v7690
  %v7692 = vand.u32 %v7691, 4294901760
  %v7693 = vsub.f32 %v7691, %v7692
  %v7694 = vand.u32 %v7693, 4294901760
  %7695 = vmatmul.f32.gmra.mxu0 %v7694
  %v7696 = vpop.f32.mrf.mxu0
  %v7697 = vadd.f32 %v6859, %v7696
  %v7698 = vand.u32 %v6882, 4294901760
  %v7699 = vsub.f32 %v6882, %v7698
  %v7700 = vand.u32 %v7699, 4294901760
  %v7701 = vsub.f32 %v7699, %v7700
  %v7702 = vand.u32 %v7701, 4294901760
  %7703 = vmatmul.f32.gmra.mxu0 %v7702
  %v7704 = vpop.f32.mrf.mxu0
  %v7705 = vadd.f32 %v6864, %v7704
  %7706 = vdwg.mxu0
  %7707 = vmatpush.msra.mxu0 0.0
  %7708 = vmatpush.msra.mxu0 0.0
  %7709 = vmatpush.msra.mxu0 0.0
  %7710 = vmatpush.msra.mxu0 0.0
  %7711 = vmatpush.msra.mxu0 0.0
  %7712 = vmatpush.msra.mxu0 0.0
  %7713 = vmatpush.msra.mxu0 0.0
  %7714 = vmatpush.msra.mxu0 0.0
  %7715 = vmatpush.msra.mxu0 0.0
  %7716 = vmatpush.msra.mxu0 0.0
  %7717 = vmatpush.msra.mxu0 0.0
  %7718 = vmatpush.msra.mxu0 0.0
  %7719 = vmatpush.msra.mxu0 0.0
  %7720 = vmatpush.msra.mxu0 0.0
  %v7721 = vand.u32 %v6823, 4294901760
  %v7722 = vsub.f32 %v6823, %v7721
  %v7723 = vand.u32 %v7722, 4294901760
  %v7724 = vsub.f32 %v7722, %v7723
  %v7725 = vand.u32 %v7724, 4294901760
  %7726 = vmatpush.msra.mxu0 %v7725
  %v7727 = vand.u32 %v6822, 4294901760
  %v7728 = vsub.f32 %v6822, %v7727
  %v7729 = vand.u32 %v7728, 4294901760
  %v7730 = vsub.f32 %v7728, %v7729
  %v7731 = vand.u32 %v7730, 4294901760
  %7732 = vmatpush.msra.mxu0 %v7731
  %v7733 = vand.u32 %v6867, 4294901760
  %7734 = vmatmul.f32.gmra.mxu0 %v7733
  %v7735 = vpop.f32.mrf.mxu0
  %v7736 = vadd.f32 %v7665, %v7735
  %v7737 = vand.u32 %v6870, 4294901760
  %7738 = vmatmul.f32.gmra.mxu0 %v7737
  %v7739 = vpop.f32.mrf.mxu0
  %v7740 = vadd.f32 %v7673, %v7739
  %v7741 = vand.u32 %v6873, 4294901760
  %7742 = vmatmul.f32.gmra.mxu0 %v7741
  %v7743 = vpop.f32.mrf.mxu0
  %v7744 = vadd.f32 %v7681, %v7743
  %v7745 = vand.u32 %v6876, 4294901760
  %7746 = vmatmul.f32.gmra.mxu0 %v7745
  %v7747 = vpop.f32.mrf.mxu0
  %v7748 = vadd.f32 %v7689, %v7747
  %v7749 = vand.u32 %v6879, 4294901760
  %7750 = vmatmul.f32.gmra.mxu0 %v7749
  %v7751 = vpop.f32.mrf.mxu0
  %v7752 = vadd.f32 %v7697, %v7751
  %v7753 = vand.u32 %v6882, 4294901760
  %7754 = vmatmul.f32.gmra.mxu0 %v7753
  %v7755 = vpop.f32.mrf.mxu0
  %v7756 = vadd.f32 %v7705, %v7755
  %7757 = vdwg.mxu0
  %7758 = vmatpush.msra.mxu0 0.0
  %7759 = vmatpush.msra.mxu0 0.0
  %7760 = vmatpush.msra.mxu0 0.0
  %7761 = vmatpush.msra.mxu0 0.0
  %7762 = vmatpush.msra.mxu0 0.0
  %7763 = vmatpush.msra.mxu0 0.0
  %7764 = vmatpush.msra.mxu0 0.0
  %7765 = vmatpush.msra.mxu0 0.0
  %7766 = vmatpush.msra.mxu0 0.0
  %7767 = vmatpush.msra.mxu0 0.0
  %7768 = vmatpush.msra.mxu0 0.0
  %7769 = vmatpush.msra.mxu0 0.0
  %7770 = vmatpush.msra.mxu0 0.0
  %7771 = vmatpush.msra.mxu0 0.0
  %v7772 = vand.u32 %v6823, 4294901760
  %v7773 = vsub.f32 %v6823, %v7772
  %7774 = vmatpush.msra.mxu0 %v7773
  %v7775 = vand.u32 %v6822, 4294901760
  %v7776 = vsub.f32 %v6822, %v7775
  %7777 = vmatpush.msra.mxu0 %v7776
  %v7778 = vand.u32 %v6867, 4294901760
  %v7779 = vsub.f32 %v6867, %v7778
  %7780 = vmatmul.f32.gmra.mxu0 %v7779
  %v7781 = vpop.f32.mrf.mxu0
  %v7782 = vadd.f32 %v7736, %v7781
  %v7783 = vand.u32 %v6870, 4294901760
  %v7784 = vsub.f32 %v6870, %v7783
  %7785 = vmatmul.f32.gmra.mxu0 %v7784
  %v7786 = vpop.f32.mrf.mxu0
  %v7787 = vadd.f32 %v7740, %v7786
  %v7788 = vand.u32 %v6873, 4294901760
  %v7789 = vsub.f32 %v6873, %v7788
  %7790 = vmatmul.f32.gmra.mxu0 %v7789
  %v7791 = vpop.f32.mrf.mxu0
  %v7792 = vadd.f32 %v7744, %v7791
  %v7793 = vand.u32 %v6876, 4294901760
  %v7794 = vsub.f32 %v6876, %v7793
  %7795 = vmatmul.f32.gmra.mxu0 %v7794
  %v7796 = vpop.f32.mrf.mxu0
  %v7797 = vadd.f32 %v7748, %v7796
  %v7798 = vand.u32 %v6879, 4294901760
  %v7799 = vsub.f32 %v6879, %v7798
  %7800 = vmatmul.f32.gmra.mxu0 %v7799
  %v7801 = vpop.f32.mrf.mxu0
  %v7802 = vadd.f32 %v7752, %v7801
  %v7803 = vand.u32 %v6882, 4294901760
  %v7804 = vsub.f32 %v6882, %v7803
  %7805 = vmatmul.f32.gmra.mxu0 %v7804
  %v7806 = vpop.f32.mrf.mxu0
  %v7807 = vadd.f32 %v7756, %v7806
  %7808 = vdwg.mxu0
  %7809 = vmatpush.msra.mxu0 0.0
  %7810 = vmatpush.msra.mxu0 0.0
  %7811 = vmatpush.msra.mxu0 0.0
  %7812 = vmatpush.msra.mxu0 0.0
  %7813 = vmatpush.msra.mxu0 0.0
  %7814 = vmatpush.msra.mxu0 0.0
  %7815 = vmatpush.msra.mxu0 0.0
  %7816 = vmatpush.msra.mxu0 0.0
  %7817 = vmatpush.msra.mxu0 0.0
  %7818 = vmatpush.msra.mxu0 0.0
  %7819 = vmatpush.msra.mxu0 0.0
  %7820 = vmatpush.msra.mxu0 0.0
  %7821 = vmatpush.msra.mxu0 0.0
  %7822 = vmatpush.msra.mxu0 0.0
  %v7823 = vand.u32 %v6823, 4294901760
  %7824 = vmatpush.msra.mxu0 %v7823
  %v7825 = vand.u32 %v6822, 4294901760
  %7826 = vmatpush.msra.mxu0 %v7825
  %v7827 = vand.u32 %v6867, 4294901760
  %v7828 = vsub.f32 %v6867, %v7827
  %v7829 = vand.u32 %v7828, 4294901760
  %7830 = vmatmul.f32.gmra.mxu0 %v7829
  %v7831 = vpop.f32.mrf.mxu0
  %v7832 = vadd.f32 %v7782, %v7831
  %v7833 = vand.u32 %v6870, 4294901760
  %v7834 = vsub.f32 %v6870, %v7833
  %v7835 = vand.u32 %v7834, 4294901760
  %7836 = vmatmul.f32.gmra.mxu0 %v7835
  %v7837 = vpop.f32.mrf.mxu0
  %v7838 = vadd.f32 %v7787, %v7837
  %v7839 = vand.u32 %v6873, 4294901760
  %v7840 = vsub.f32 %v6873, %v7839
  %v7841 = vand.u32 %v7840, 4294901760
  %7842 = vmatmul.f32.gmra.mxu0 %v7841
  %v7843 = vpop.f32.mrf.mxu0
  %v7844 = vadd.f32 %v7792, %v7843
  %v7845 = vand.u32 %v6876, 4294901760
  %v7846 = vsub.f32 %v6876, %v7845
  %v7847 = vand.u32 %v7846, 4294901760
  %7848 = vmatmul.f32.gmra.mxu0 %v7847
  %v7849 = vpop.f32.mrf.mxu0
  %v7850 = vadd.f32 %v7797, %v7849
  %v7851 = vand.u32 %v6879, 4294901760
  %v7852 = vsub.f32 %v6879, %v7851
  %v7853 = vand.u32 %v7852, 4294901760
  %7854 = vmatmul.f32.gmra.mxu0 %v7853
  %v7855 = vpop.f32.mrf.mxu0
  %v7856 = vadd.f32 %v7802, %v7855
  %v7857 = vand.u32 %v6882, 4294901760
  %v7858 = vsub.f32 %v6882, %v7857
  %v7859 = vand.u32 %v7858, 4294901760
  %7860 = vmatmul.f32.gmra.mxu0 %v7859
  %v7861 = vpop.f32.mrf.mxu0
  %v7862 = vadd.f32 %v7807, %v7861
  %7863 = vdwg.mxu0
  %7864 = vmatpush.msra.mxu0 0.0
  %7865 = vmatpush.msra.mxu0 0.0
  %7866 = vmatpush.msra.mxu0 0.0
  %7867 = vmatpush.msra.mxu0 0.0
  %7868 = vmatpush.msra.mxu0 0.0
  %7869 = vmatpush.msra.mxu0 0.0
  %7870 = vmatpush.msra.mxu0 0.0
  %7871 = vmatpush.msra.mxu0 0.0
  %7872 = vmatpush.msra.mxu0 0.0
  %7873 = vmatpush.msra.mxu0 0.0
  %7874 = vmatpush.msra.mxu0 0.0
  %7875 = vmatpush.msra.mxu0 0.0
  %7876 = vmatpush.msra.mxu0 0.0
  %7877 = vmatpush.msra.mxu0 0.0
  %v7878 = vand.u32 %v6823, 4294901760
  %v7879 = vsub.f32 %v6823, %v7878
  %v7880 = vand.u32 %v7879, 4294901760
  %7881 = vmatpush.msra.mxu0 %v7880
  %v7882 = vand.u32 %v6822, 4294901760
  %v7883 = vsub.f32 %v6822, %v7882
  %v7884 = vand.u32 %v7883, 4294901760
  %7885 = vmatpush.msra.mxu0 %v7884
  %v7886 = vand.u32 %v6867, 4294901760
  %7887 = vmatmul.f32.gmra.mxu0 %v7886
  %v7888 = vpop.f32.mrf.mxu0
  %v7889 = vadd.f32 %v7832, %v7888
  %v7890 = vand.u32 %v6870, 4294901760
  %7891 = vmatmul.f32.gmra.mxu0 %v7890
  %v7892 = vpop.f32.mrf.mxu0
  %v7893 = vadd.f32 %v7838, %v7892
  %v7894 = vand.u32 %v6873, 4294901760
  %7895 = vmatmul.f32.gmra.mxu0 %v7894
  %v7896 = vpop.f32.mrf.mxu0
  %v7897 = vadd.f32 %v7844, %v7896
  %v7898 = vand.u32 %v6876, 4294901760
  %7899 = vmatmul.f32.gmra.mxu0 %v7898
  %v7900 = vpop.f32.mrf.mxu0
  %v7901 = vadd.f32 %v7850, %v7900
  %v7902 = vand.u32 %v6879, 4294901760
  %7903 = vmatmul.f32.gmra.mxu0 %v7902
  %v7904 = vpop.f32.mrf.mxu0
  %v7905 = vadd.f32 %v7856, %v7904
  %v7906 = vand.u32 %v6882, 4294901760
  %7907 = vmatmul.f32.gmra.mxu0 %v7906
  %v7908 = vpop.f32.mrf.mxu0
  %v7909 = vadd.f32 %v7862, %v7908
  %7910 = vdwg.mxu0
  %7911 = vmatpush.msra.mxu0 0.0
  %7912 = vmatpush.msra.mxu0 0.0
  %7913 = vmatpush.msra.mxu0 0.0
  %7914 = vmatpush.msra.mxu0 0.0
  %7915 = vmatpush.msra.mxu0 0.0
  %7916 = vmatpush.msra.mxu0 0.0
  %7917 = vmatpush.msra.mxu0 0.0
  %7918 = vmatpush.msra.mxu0 0.0
  %7919 = vmatpush.msra.mxu0 0.0
  %7920 = vmatpush.msra.mxu0 0.0
  %7921 = vmatpush.msra.mxu0 0.0
  %7922 = vmatpush.msra.mxu0 0.0
  %7923 = vmatpush.msra.mxu0 0.0
  %7924 = vmatpush.msra.mxu0 0.0
  %v7925 = vand.u32 %v6823, 4294901760
  %7926 = vmatpush.msra.mxu0 %v7925
  %v7927 = vand.u32 %v6822, 4294901760
  %7928 = vmatpush.msra.mxu0 %v7927
  %v7929 = vand.u32 %v6867, 4294901760
  %7930 = vmatmul.f32.gmra.mxu0 %v7929
  %v7931 = vpop.f32.mrf.mxu0
  %v7932 = vadd.f32 %v7889, %v7931
  %v7933 = vand.u32 %v6870, 4294901760
  %7934 = vmatmul.f32.gmra.mxu0 %v7933
  %v7935 = vpop.f32.mrf.mxu0
  %v7936 = vadd.f32 %v7893, %v7935
  %v7937 = vand.u32 %v6873, 4294901760
  %7938 = vmatmul.f32.gmra.mxu0 %v7937
  %v7939 = vpop.f32.mrf.mxu0
  %v7940 = vadd.f32 %v7897, %v7939
  %v7941 = vand.u32 %v6876, 4294901760
  %7942 = vmatmul.f32.gmra.mxu0 %v7941
  %v7943 = vpop.f32.mrf.mxu0
  %v7944 = vadd.f32 %v7901, %v7943
  %v7945 = vand.u32 %v6879, 4294901760
  %7946 = vmatmul.f32.gmra.mxu0 %v7945
  %v7947 = vpop.f32.mrf.mxu0
  %v7948 = vadd.f32 %v7905, %v7947
  %v7949 = vand.u32 %v6882, 4294901760
  %7950 = vmatmul.f32.gmra.mxu0 %v7949
  %v7951 = vpop.f32.mrf.mxu0
  %v7952 = vadd.f32 %v7909, %v7951
  %7953 = vdwg.mxu0
  %7954 = vmatpush.msra.mxu0 0.0
  %7955 = vmatpush.msra.mxu0 0.0
  %7956 = vmatpush.msra.mxu0 0.0
  %7957 = vmatpush.msra.mxu0 0.0
  %7958 = vmatpush.msra.mxu0 0.0
  %7959 = vmatpush.msra.mxu0 0.0
  %7960 = vmatpush.msra.mxu0 0.0
  %7961 = vmatpush.msra.mxu0 0.0
  %7962 = vmatpush.msra.mxu0 0.0
  %7963 = vmatpush.msra.mxu0 0.0
  %7964 = vmatpush.msra.mxu0 0.0
  %7965 = vmatpush.msra.mxu0 0.0
  %7966 = vmatpush.msra.mxu0 0.0
  %7967 = vmatpush.msra.mxu0 0.0
  %v7968 = vand.u32 %v7639, 4294901760
  %7969 = vmatpush.msra.mxu0 %v7968
  %v7970 = vand.u32 %v7638, 4294901760
  %7971 = vmatpush.msra.mxu0 %v7970
  %v7972 = vand.u32 %v7241, 4294901760
  %v7973 = vsub.f32 %v7241, %v7972
  %v7974 = vand.u32 %v7973, 4294901760
  %v7975 = vsub.f32 %v7973, %v7974
  %v7976 = vand.u32 %v7975, 4294901760
  %7977 = vmatmul.f32.gmra.mxu0 %v7976
  %v7978 = vpop.f32.mrf.mxu0
  %v7979 = vadd.f32 %v7213, %v7978
  %v7980 = vand.u32 %v7244, 4294901760
  %v7981 = vsub.f32 %v7244, %v7980
  %v7982 = vand.u32 %v7981, 4294901760
  %v7983 = vsub.f32 %v7981, %v7982
  %v7984 = vand.u32 %v7983, 4294901760
  %7985 = vmatmul.f32.gmra.mxu0 %v7984
  %v7986 = vpop.f32.mrf.mxu0
  %v7987 = vadd.f32 %v7218, %v7986
  %v7988 = vand.u32 %v7247, 4294901760
  %v7989 = vsub.f32 %v7247, %v7988
  %v7990 = vand.u32 %v7989, 4294901760
  %v7991 = vsub.f32 %v7989, %v7990
  %v7992 = vand.u32 %v7991, 4294901760
  %7993 = vmatmul.f32.gmra.mxu0 %v7992
  %v7994 = vpop.f32.mrf.mxu0
  %v7995 = vadd.f32 %v7223, %v7994
  %v7996 = vand.u32 %v7250, 4294901760
  %v7997 = vsub.f32 %v7250, %v7996
  %v7998 = vand.u32 %v7997, 4294901760
  %v7999 = vsub.f32 %v7997, %v7998
  %v8000 = vand.u32 %v7999, 4294901760
  %8001 = vmatmul.f32.gmra.mxu0 %v8000
  %v8002 = vpop.f32.mrf.mxu0
  %v8003 = vadd.f32 %v7228, %v8002
  %v8004 = vand.u32 %v7253, 4294901760
  %v8005 = vsub.f32 %v7253, %v8004
  %v8006 = vand.u32 %v8005, 4294901760
  %v8007 = vsub.f32 %v8005, %v8006
  %v8008 = vand.u32 %v8007, 4294901760
  %8009 = vmatmul.f32.gmra.mxu0 %v8008
  %v8010 = vpop.f32.mrf.mxu0
  %v8011 = vadd.f32 %v7233, %v8010
  %v8012 = vand.u32 %v7256, 4294901760
  %v8013 = vsub.f32 %v7256, %v8012
  %v8014 = vand.u32 %v8013, 4294901760
  %v8015 = vsub.f32 %v8013, %v8014
  %v8016 = vand.u32 %v8015, 4294901760
  %8017 = vmatmul.f32.gmra.mxu0 %v8016
  %v8018 = vpop.f32.mrf.mxu0
  %v8019 = vadd.f32 %v7238, %v8018
  %8020 = vdwg.mxu0
  %8021 = vmatpush.msra.mxu0 0.0
  %8022 = vmatpush.msra.mxu0 0.0
  %8023 = vmatpush.msra.mxu0 0.0
  %8024 = vmatpush.msra.mxu0 0.0
  %8025 = vmatpush.msra.mxu0 0.0
  %8026 = vmatpush.msra.mxu0 0.0
  %8027 = vmatpush.msra.mxu0 0.0
  %8028 = vmatpush.msra.mxu0 0.0
  %8029 = vmatpush.msra.mxu0 0.0
  %8030 = vmatpush.msra.mxu0 0.0
  %8031 = vmatpush.msra.mxu0 0.0
  %8032 = vmatpush.msra.mxu0 0.0
  %8033 = vmatpush.msra.mxu0 0.0
  %8034 = vmatpush.msra.mxu0 0.0
  %v8035 = vand.u32 %v7639, 4294901760
  %v8036 = vsub.f32 %v7639, %v8035
  %v8037 = vand.u32 %v8036, 4294901760
  %v8038 = vsub.f32 %v8036, %v8037
  %v8039 = vand.u32 %v8038, 4294901760
  %8040 = vmatpush.msra.mxu0 %v8039
  %v8041 = vand.u32 %v7638, 4294901760
  %v8042 = vsub.f32 %v7638, %v8041
  %v8043 = vand.u32 %v8042, 4294901760
  %v8044 = vsub.f32 %v8042, %v8043
  %v8045 = vand.u32 %v8044, 4294901760
  %8046 = vmatpush.msra.mxu0 %v8045
  %v8047 = vand.u32 %v7241, 4294901760
  %8048 = vmatmul.f32.gmra.mxu0 %v8047
  %v8049 = vpop.f32.mrf.mxu0
  %v8050 = vadd.f32 %v7979, %v8049
  %v8051 = vand.u32 %v7244, 4294901760
  %8052 = vmatmul.f32.gmra.mxu0 %v8051
  %v8053 = vpop.f32.mrf.mxu0
  %v8054 = vadd.f32 %v7987, %v8053
  %v8055 = vand.u32 %v7247, 4294901760
  %8056 = vmatmul.f32.gmra.mxu0 %v8055
  %v8057 = vpop.f32.mrf.mxu0
  %v8058 = vadd.f32 %v7995, %v8057
  %v8059 = vand.u32 %v7250, 4294901760
  %8060 = vmatmul.f32.gmra.mxu0 %v8059
  %v8061 = vpop.f32.mrf.mxu0
  %v8062 = vadd.f32 %v8003, %v8061
  %v8063 = vand.u32 %v7253, 4294901760
  %8064 = vmatmul.f32.gmra.mxu0 %v8063
  %v8065 = vpop.f32.mrf.mxu0
  %v8066 = vadd.f32 %v8011, %v8065
  %v8067 = vand.u32 %v7256, 4294901760
  %8068 = vmatmul.f32.gmra.mxu0 %v8067
  %v8069 = vpop.f32.mrf.mxu0
  %v8070 = vadd.f32 %v8019, %v8069
  %8071 = vdwg.mxu0
  %8072 = vmatpush.msra.mxu0 0.0
  %8073 = vmatpush.msra.mxu0 0.0
  %8074 = vmatpush.msra.mxu0 0.0
  %8075 = vmatpush.msra.mxu0 0.0
  %8076 = vmatpush.msra.mxu0 0.0
  %8077 = vmatpush.msra.mxu0 0.0
  %8078 = vmatpush.msra.mxu0 0.0
  %8079 = vmatpush.msra.mxu0 0.0
  %8080 = vmatpush.msra.mxu0 0.0
  %8081 = vmatpush.msra.mxu0 0.0
  %8082 = vmatpush.msra.mxu0 0.0
  %8083 = vmatpush.msra.mxu0 0.0
  %8084 = vmatpush.msra.mxu0 0.0
  %8085 = vmatpush.msra.mxu0 0.0
  %v8086 = vand.u32 %v7639, 4294901760
  %v8087 = vsub.f32 %v7639, %v8086
  %8088 = vmatpush.msra.mxu0 %v8087
  %v8089 = vand.u32 %v7638, 4294901760
  %v8090 = vsub.f32 %v7638, %v8089
  %8091 = vmatpush.msra.mxu0 %v8090
  %v8092 = vand.u32 %v7241, 4294901760
  %v8093 = vsub.f32 %v7241, %v8092
  %8094 = vmatmul.f32.gmra.mxu0 %v8093
  %v8095 = vpop.f32.mrf.mxu0
  %v8096 = vadd.f32 %v8050, %v8095
  %v8097 = vand.u32 %v7244, 4294901760
  %v8098 = vsub.f32 %v7244, %v8097
  %8099 = vmatmul.f32.gmra.mxu0 %v8098
  %v8100 = vpop.f32.mrf.mxu0
  %v8101 = vadd.f32 %v8054, %v8100
  %v8102 = vand.u32 %v7247, 4294901760
  %v8103 = vsub.f32 %v7247, %v8102
  %8104 = vmatmul.f32.gmra.mxu0 %v8103
  %v8105 = vpop.f32.mrf.mxu0
  %v8106 = vadd.f32 %v8058, %v8105
  %v8107 = vand.u32 %v7250, 4294901760
  %v8108 = vsub.f32 %v7250, %v8107
  %8109 = vmatmul.f32.gmra.mxu0 %v8108
  %v8110 = vpop.f32.mrf.mxu0
  %v8111 = vadd.f32 %v8062, %v8110
  %v8112 = vand.u32 %v7253, 4294901760
  %v8113 = vsub.f32 %v7253, %v8112
  %8114 = vmatmul.f32.gmra.mxu0 %v8113
  %v8115 = vpop.f32.mrf.mxu0
  %v8116 = vadd.f32 %v8066, %v8115
  %v8117 = vand.u32 %v7256, 4294901760
  %v8118 = vsub.f32 %v7256, %v8117
  %8119 = vmatmul.f32.gmra.mxu0 %v8118
  %v8120 = vpop.f32.mrf.mxu0
  %v8121 = vadd.f32 %v8070, %v8120
  %8122 = vdwg.mxu0
  %8123 = vmatpush.msra.mxu0 0.0
  %8124 = vmatpush.msra.mxu0 0.0
  %8125 = vmatpush.msra.mxu0 0.0
  %8126 = vmatpush.msra.mxu0 0.0
  %8127 = vmatpush.msra.mxu0 0.0
  %8128 = vmatpush.msra.mxu0 0.0
  %8129 = vmatpush.msra.mxu0 0.0
  %8130 = vmatpush.msra.mxu0 0.0
  %8131 = vmatpush.msra.mxu0 0.0
  %8132 = vmatpush.msra.mxu0 0.0
  %8133 = vmatpush.msra.mxu0 0.0
  %8134 = vmatpush.msra.mxu0 0.0
  %8135 = vmatpush.msra.mxu0 0.0
  %8136 = vmatpush.msra.mxu0 0.0
  %v8137 = vand.u32 %v7639, 4294901760
  %8138 = vmatpush.msra.mxu0 %v8137
  %v8139 = vand.u32 %v7638, 4294901760
  %8140 = vmatpush.msra.mxu0 %v8139
  %v8141 = vand.u32 %v7241, 4294901760
  %v8142 = vsub.f32 %v7241, %v8141
  %v8143 = vand.u32 %v8142, 4294901760
  %8144 = vmatmul.f32.gmra.mxu0 %v8143
  %v8145 = vpop.f32.mrf.mxu0
  %v8146 = vadd.f32 %v8096, %v8145
  %v8147 = vand.u32 %v7244, 4294901760
  %v8148 = vsub.f32 %v7244, %v8147
  %v8149 = vand.u32 %v8148, 4294901760
  %8150 = vmatmul.f32.gmra.mxu0 %v8149
  %v8151 = vpop.f32.mrf.mxu0
  %v8152 = vadd.f32 %v8101, %v8151
  %v8153 = vand.u32 %v7247, 4294901760
  %v8154 = vsub.f32 %v7247, %v8153
  %v8155 = vand.u32 %v8154, 4294901760
  %8156 = vmatmul.f32.gmra.mxu0 %v8155
  %v8157 = vpop.f32.mrf.mxu0
  %v8158 = vadd.f32 %v8106, %v8157
  %v8159 = vand.u32 %v7250, 4294901760
  %v8160 = vsub.f32 %v7250, %v8159
  %v8161 = vand.u32 %v8160, 4294901760
  %8162 = vmatmul.f32.gmra.mxu0 %v8161
  %v8163 = vpop.f32.mrf.mxu0
  %v8164 = vadd.f32 %v8111, %v8163
  %v8165 = vand.u32 %v7253, 4294901760
  %v8166 = vsub.f32 %v7253, %v8165
  %v8167 = vand.u32 %v8166, 4294901760
  %8168 = vmatmul.f32.gmra.mxu0 %v8167
  %v8169 = vpop.f32.mrf.mxu0
  %v8170 = vadd.f32 %v8116, %v8169
  %v8171 = vand.u32 %v7256, 4294901760
  %v8172 = vsub.f32 %v7256, %v8171
  %v8173 = vand.u32 %v8172, 4294901760
  %8174 = vmatmul.f32.gmra.mxu0 %v8173
  %v8175 = vpop.f32.mrf.mxu0
  %v8176 = vadd.f32 %v8121, %v8175
  %8177 = vdwg.mxu0
  %8178 = vmatpush.msra.mxu0 0.0
  %8179 = vmatpush.msra.mxu0 0.0
  %8180 = vmatpush.msra.mxu0 0.0
  %8181 = vmatpush.msra.mxu0 0.0
  %8182 = vmatpush.msra.mxu0 0.0
  %8183 = vmatpush.msra.mxu0 0.0
  %8184 = vmatpush.msra.mxu0 0.0
  %8185 = vmatpush.msra.mxu0 0.0
  %8186 = vmatpush.msra.mxu0 0.0
  %8187 = vmatpush.msra.mxu0 0.0
  %8188 = vmatpush.msra.mxu0 0.0
  %8189 = vmatpush.msra.mxu0 0.0
  %8190 = vmatpush.msra.mxu0 0.0
  %8191 = vmatpush.msra.mxu0 0.0
  %v8192 = vand.u32 %v7639, 4294901760
  %v8193 = vsub.f32 %v7639, %v8192
  %v8194 = vand.u32 %v8193, 4294901760
  %8195 = vmatpush.msra.mxu0 %v8194
  %v8196 = vand.u32 %v7638, 4294901760
  %v8197 = vsub.f32 %v7638, %v8196
  %v8198 = vand.u32 %v8197, 4294901760
  %8199 = vmatpush.msra.mxu0 %v8198
  %v8200 = vand.u32 %v7241, 4294901760
  %8201 = vmatmul.f32.gmra.mxu0 %v8200
  %v8202 = vpop.f32.mrf.mxu0
  %v8203 = vadd.f32 %v8146, %v8202
  %v8204 = vand.u32 %v7244, 4294901760
  %8205 = vmatmul.f32.gmra.mxu0 %v8204
  %v8206 = vpop.f32.mrf.mxu0
  %v8207 = vadd.f32 %v8152, %v8206
  %v8208 = vand.u32 %v7247, 4294901760
  %8209 = vmatmul.f32.gmra.mxu0 %v8208
  %v8210 = vpop.f32.mrf.mxu0
  %v8211 = vadd.f32 %v8158, %v8210
  %v8212 = vand.u32 %v7250, 4294901760
  %8213 = vmatmul.f32.gmra.mxu0 %v8212
  %v8214 = vpop.f32.mrf.mxu0
  %v8215 = vadd.f32 %v8164, %v8214
  %v8216 = vand.u32 %v7253, 4294901760
  %8217 = vmatmul.f32.gmra.mxu0 %v8216
  %v8218 = vpop.f32.mrf.mxu0
  %v8219 = vadd.f32 %v8170, %v8218
  %v8220 = vand.u32 %v7256, 4294901760
  %8221 = vmatmul.f32.gmra.mxu0 %v8220
  %v8222 = vpop.f32.mrf.mxu0
  %v8223 = vadd.f32 %v8176, %v8222
  %8224 = vdwg.mxu0
  %8225 = vmatpush.msra.mxu0 0.0
  %8226 = vmatpush.msra.mxu0 0.0
  %8227 = vmatpush.msra.mxu0 0.0
  %8228 = vmatpush.msra.mxu0 0.0
  %8229 = vmatpush.msra.mxu0 0.0
  %8230 = vmatpush.msra.mxu0 0.0
  %8231 = vmatpush.msra.mxu0 0.0
  %8232 = vmatpush.msra.mxu0 0.0
  %8233 = vmatpush.msra.mxu0 0.0
  %8234 = vmatpush.msra.mxu0 0.0
  %8235 = vmatpush.msra.mxu0 0.0
  %8236 = vmatpush.msra.mxu0 0.0
  %8237 = vmatpush.msra.mxu0 0.0
  %8238 = vmatpush.msra.mxu0 0.0
  %v8239 = vand.u32 %v7639, 4294901760
  %8240 = vmatpush.msra.mxu0 %v8239
  %v8241 = vand.u32 %v7638, 4294901760
  %8242 = vmatpush.msra.mxu0 %v8241
  %v8243 = vand.u32 %v7241, 4294901760
  %8244 = vmatmul.f32.gmra.mxu0 %v8243
  %v8245 = vpop.f32.mrf.mxu0
  %v8246 = vadd.f32 %v8203, %v8245
  %v8247 = vand.u32 %v7244, 4294901760
  %8248 = vmatmul.f32.gmra.mxu0 %v8247
  %v8249 = vpop.f32.mrf.mxu0
  %v8250 = vadd.f32 %v8207, %v8249
  %v8251 = vand.u32 %v7247, 4294901760
  %8252 = vmatmul.f32.gmra.mxu0 %v8251
  %v8253 = vpop.f32.mrf.mxu0
  %v8254 = vadd.f32 %v8211, %v8253
  %v8255 = vand.u32 %v7250, 4294901760
  %8256 = vmatmul.f32.gmra.mxu0 %v8255
  %v8257 = vpop.f32.mrf.mxu0
  %v8258 = vadd.f32 %v8215, %v8257
  %v8259 = vand.u32 %v7253, 4294901760
  %8260 = vmatmul.f32.gmra.mxu0 %v8259
  %v8261 = vpop.f32.mrf.mxu0
  %v8262 = vadd.f32 %v8219, %v8261
  %v8263 = vand.u32 %v7256, 4294901760
  %8264 = vmatmul.f32.gmra.mxu0 %v8263
  %v8265 = vpop.f32.mrf.mxu0
  %v8266 = vadd.f32 %v8223, %v8265
  %8267 = vdwg.mxu0
  %v8268 = vadd.f32 %v7932, %v8246
  %v8269 = vadd.f32 %v7936, %v8250
  %v8270 = vxor.u32 %v8268, 2147483648
  %v8271 = vxor.u32 %v8269, 2147483648
  %v8272 = vmul.f32 %v8270, 1.442695
  %v8273 = vpow.pop %v8272
  %v8274 = vmul.f32 %v8271, 1.442695
  %v8275 = vpow.pop %v8274
  %v8276 = vadd.f32 %v8273, 1.0
  %v8277 = vadd.f32 %v8275, 1.0
  %v8278 = vrcp.pop %v8276
  %v8279 = vmul.f32 %v8276, %v8278
  %v8280 = vsub.f32 1.0, %v8279
  %v8281 = vmul.f32 %v8278, %v8280
  %v8282 = vadd.f32 %v8278, %v8281
  %vm8283 = vweird.f32 %v8276
  %vm8284 = vweird.f32 %v8278
  %vm8285 = vmor %vm8283, %vm8284
  %v8286 = vsel %vm8285, %v8278, %v8282
  %v8287 = vand.u32 2147483647, %v8276
  %vm8288 = vcmp.eq.f32.partialorder %v8287, 8.507059e+37
  %v8289 = vand.u32 %v8276, 2147483648
  %v8290 = vor.u32 1.1754944e-38, %v8289
  %v8291 = vsel %vm8288, %v8290, %v8286
  %v8292 = vmul.f32 1.0, %v8291
  %v8293 = vrcp.pop %v8277
  %v8294 = vmul.f32 %v8277, %v8293
  %v8295 = vsub.f32 1.0, %v8294
  %v8296 = vmul.f32 %v8293, %v8295
  %v8297 = vadd.f32 %v8293, %v8296
  %vm8298 = vweird.f32 %v8277
  %vm8299 = vweird.f32 %v8293
  %vm8300 = vmor %vm8298, %vm8299
  %v8301 = vsel %vm8300, %v8293, %v8297
  %v8302 = vand.u32 2147483647, %v8277
  %vm8303 = vcmp.eq.f32.partialorder %v8302, 8.507059e+37
  %v8304 = vand.u32 %v8277, 2147483648
  %v8305 = vor.u32 1.1754944e-38, %v8304
  %v8306 = vsel %vm8303, %v8305, %v8301
  %v8307 = vmul.f32 1.0, %v8306
  %v8308 = vadd.f32 %v7940, %v8254
  %v8309 = vadd.f32 %v7944, %v8258
  %v8310 = vxor.u32 %v8308, 2147483648
  %v8311 = vxor.u32 %v8309, 2147483648
  %v8312 = vmul.f32 %v8310, 1.442695
  %v8313 = vpow.pop %v8312
  %v8314 = vmul.f32 %v8311, 1.442695
  %v8315 = vpow.pop %v8314
  %v8316 = vadd.f32 %v8313, 1.0
  %v8317 = vadd.f32 %v8315, 1.0
  %v8318 = vrcp.pop %v8316
  %v8319 = vmul.f32 %v8316, %v8318
  %v8320 = vsub.f32 1.0, %v8319
  %v8321 = vmul.f32 %v8318, %v8320
  %v8322 = vadd.f32 %v8318, %v8321
  %vm8323 = vweird.f32 %v8316
  %vm8324 = vweird.f32 %v8318
  %vm8325 = vmor %vm8323, %vm8324
  %v8326 = vsel %vm8325, %v8318, %v8322
  %v8327 = vand.u32 2147483647, %v8316
  %vm8328 = vcmp.eq.f32.partialorder %v8327, 8.507059e+37
  %v8329 = vand.u32 %v8316, 2147483648
  %v8330 = vor.u32 1.1754944e-38, %v8329
  %v8331 = vsel %vm8328, %v8330, %v8326
  %v8332 = vmul.f32 1.0, %v8331
  %v8333 = vrcp.pop %v8317
  %v8334 = vmul.f32 %v8317, %v8333
  %v8335 = vsub.f32 1.0, %v8334
  %v8336 = vmul.f32 %v8333, %v8335
  %v8337 = vadd.f32 %v8333, %v8336
  %vm8338 = vweird.f32 %v8317
  %vm8339 = vweird.f32 %v8333
  %vm8340 = vmor %vm8338, %vm8339
  %v8341 = vsel %vm8340, %v8333, %v8337
  %v8342 = vand.u32 2147483647, %v8317
  %vm8343 = vcmp.eq.f32.partialorder %v8342, 8.507059e+37
  %v8344 = vand.u32 %v8317, 2147483648
  %v8345 = vor.u32 1.1754944e-38, %v8344
  %v8346 = vsel %vm8343, %v8345, %v8341
  %v8347 = vmul.f32 1.0, %v8346
  %v8348 = vmul.f32 %v8292, %v8262
  %v8349 = vmul.f32 %v8307, %v8266
  %v8350 = vadd.f32 %v7948, %v8348
  %v8351 = vadd.f32 %v7952, %v8349
  %v8352 = vtanh.pop %v8350
  %v8353 = vtanh.pop %v8351
  %v8354 = vsub.f32 1.0, %v8332
  %v8355 = vsub.f32 1.0, %v8347
  %v8356 = vmul.f32 %v8354, %v8352
  %v8357 = vmul.f32 %v8355, %v8353
  %v8358 = vmul.f32 %v8332, %v7638
  %v8359 = vmul.f32 %v8347, %v7639
  %v8360 = vadd.f32 %v8356, %v8358
  %v8361 = vadd.f32 %v8357, %v8359
  %v8362 = vld [vmem:[%s13] sm:$0xff]
  %v8363 = vld [vmem:[%s13 + $0x8] sm:$0xff]
  %v8364 = vld [vmem:[%s13 + $0x10] sm:$0xff]
  %v8365 = vld [vmem:[%s13 + $0x18] sm:$0xff]
  %v8366 = vld [vmem:[%s13 + $0x20] sm:$0xff]
  %v8367 = vld [vmem:[%s13 + $0x28] sm:$0xff]
  %v8368 = vld [vmem:[%s15] sm:$0xff]
  %v8369 = vld [vmem:[%s15 + $0x8] sm:$0xff]
  %v8370 = vld [vmem:[%s15 + $0x10] sm:$0xff]
  %v8371 = vld [vmem:[%s15 + $0x18] sm:$0xff]
  %v8372 = vld [vmem:[%s15 + $0x20] sm:$0xff]
  %v8373 = vld [vmem:[%s15 + $0x28] sm:$0xff]
  %8375 = vset.pattern.permute.xlu0 0
  %8376 = vperm.xlu0 %8375, %v8368
  %v8377 = vpop.permute.xlu0 %8376
  %8380 = vset.pattern.permute.xlu0 0
  %8381 = vperm.xlu0 %8380, %v8369
  %v8382 = vpop.permute.xlu0 %8381
  %8385 = vset.pattern.permute.xlu0 0
  %8386 = vperm.xlu0 %8385, %v8370
  %v8387 = vpop.permute.xlu0 %8386
  %8390 = vset.pattern.permute.xlu0 0
  %8391 = vperm.xlu0 %8390, %v8371
  %v8392 = vpop.permute.xlu0 %8391
  %8395 = vset.pattern.permute.xlu0 0
  %8396 = vperm.xlu0 %8395, %v8372
  %v8397 = vpop.permute.xlu0 %8396
  %8400 = vset.pattern.permute.xlu0 0
  %8401 = vperm.xlu0 %8400, %v8373
  %v8402 = vpop.permute.xlu0 %8401
  %v8405 = vsel %vm5958, %v8362, 0
  %v8408 = vsel %vm5958, %v8363, 0
  %v8411 = vsel %vm5958, %v8364, 0
  %v8414 = vsel %vm5958, %v8365, 0
  %v8417 = vsel %vm5958, %v8366, 0
  %v8420 = vsel %vm5958, %v8367, 0
  %8422 = vmatpush.msra.mxu0 0.0
  %8423 = vmatpush.msra.mxu0 0.0
  %8424 = vmatpush.msra.mxu0 0.0
  %8425 = vmatpush.msra.mxu0 0.0
  %8426 = vmatpush.msra.mxu0 0.0
  %8427 = vmatpush.msra.mxu0 0.0
  %8428 = vmatpush.msra.mxu0 0.0
  %8429 = vmatpush.msra.mxu0 0.0
  %8430 = vmatpush.msra.mxu0 0.0
  %8431 = vmatpush.msra.mxu0 0.0
  %8432 = vmatpush.msra.mxu0 0.0
  %8433 = vmatpush.msra.mxu0 0.0
  %8434 = vmatpush.msra.mxu0 0.0
  %8435 = vmatpush.msra.mxu0 0.0
  %v8436 = vand.u32 %v6823, 4294901760
  %8437 = vmatpush.msra.mxu0 %v8436
  %v8438 = vand.u32 %v6822, 4294901760
  %8439 = vmatpush.msra.mxu0 %v8438
  %v8440 = vand.u32 %v8405, 4294901760
  %v8441 = vsub.f32 %v8405, %v8440
  %v8442 = vand.u32 %v8441, 4294901760
  %v8443 = vsub.f32 %v8441, %v8442
  %v8444 = vand.u32 %v8443, 4294901760
  %8445 = vmatmul.f32.gmra.mxu0 %v8444
  %v8446 = vpop.f32.mrf.mxu0
  %v8447 = vadd.f32 %v8377, %v8446
  %v8448 = vand.u32 %v8408, 4294901760
  %v8449 = vsub.f32 %v8408, %v8448
  %v8450 = vand.u32 %v8449, 4294901760
  %v8451 = vsub.f32 %v8449, %v8450
  %v8452 = vand.u32 %v8451, 4294901760
  %8453 = vmatmul.f32.gmra.mxu0 %v8452
  %v8454 = vpop.f32.mrf.mxu0
  %v8455 = vadd.f32 %v8382, %v8454
  %v8456 = vand.u32 %v8411, 4294901760
  %v8457 = vsub.f32 %v8411, %v8456
  %v8458 = vand.u32 %v8457, 4294901760
  %v8459 = vsub.f32 %v8457, %v8458
  %v8460 = vand.u32 %v8459, 4294901760
  %8461 = vmatmul.f32.gmra.mxu0 %v8460
  %v8462 = vpop.f32.mrf.mxu0
  %v8463 = vadd.f32 %v8387, %v8462
  %v8464 = vand.u32 %v8414, 4294901760
  %v8465 = vsub.f32 %v8414, %v8464
  %v8466 = vand.u32 %v8465, 4294901760
  %v8467 = vsub.f32 %v8465, %v8466
  %v8468 = vand.u32 %v8467, 4294901760
  %8469 = vmatmul.f32.gmra.mxu0 %v8468
  %v8470 = vpop.f32.mrf.mxu0
  %v8471 = vadd.f32 %v8392, %v8470
  %v8472 = vand.u32 %v8417, 4294901760
  %v8473 = vsub.f32 %v8417, %v8472
  %v8474 = vand.u32 %v8473, 4294901760
  %v8475 = vsub.f32 %v8473, %v8474
  %v8476 = vand.u32 %v8475, 4294901760
  %8477 = vmatmul.f32.gmra.mxu0 %v8476
  %v8478 = vpop.f32.mrf.mxu0
  %v8479 = vadd.f32 %v8397, %v8478
  %v8480 = vand.u32 %v8420, 4294901760
  %v8481 = vsub.f32 %v8420, %v8480
  %v8482 = vand.u32 %v8481, 4294901760
  %v8483 = vsub.f32 %v8481, %v8482
  %v8484 = vand.u32 %v8483, 4294901760
  %8485 = vmatmul.f32.gmra.mxu0 %v8484
  %v8486 = vpop.f32.mrf.mxu0
  %v8487 = vadd.f32 %v8402, %v8486
  %8488 = vdwg.mxu0
  %8489 = vmatpush.msra.mxu0 0.0
  %8490 = vmatpush.msra.mxu0 0.0
  %8491 = vmatpush.msra.mxu0 0.0
  %8492 = vmatpush.msra.mxu0 0.0
  %8493 = vmatpush.msra.mxu0 0.0
  %8494 = vmatpush.msra.mxu0 0.0
  %8495 = vmatpush.msra.mxu0 0.0
  %8496 = vmatpush.msra.mxu0 0.0
  %8497 = vmatpush.msra.mxu0 0.0
  %8498 = vmatpush.msra.mxu0 0.0
  %8499 = vmatpush.msra.mxu0 0.0
  %8500 = vmatpush.msra.mxu0 0.0
  %8501 = vmatpush.msra.mxu0 0.0
  %8502 = vmatpush.msra.mxu0 0.0
  %v8503 = vand.u32 %v6823, 4294901760
  %v8504 = vsub.f32 %v6823, %v8503
  %v8505 = vand.u32 %v8504, 4294901760
  %v8506 = vsub.f32 %v8504, %v8505
  %v8507 = vand.u32 %v8506, 4294901760
  %8508 = vmatpush.msra.mxu0 %v8507
  %v8509 = vand.u32 %v6822, 4294901760
  %v8510 = vsub.f32 %v6822, %v8509
  %v8511 = vand.u32 %v8510, 4294901760
  %v8512 = vsub.f32 %v8510, %v8511
  %v8513 = vand.u32 %v8512, 4294901760
  %8514 = vmatpush.msra.mxu0 %v8513
  %v8515 = vand.u32 %v8405, 4294901760
  %8516 = vmatmul.f32.gmra.mxu0 %v8515
  %v8517 = vpop.f32.mrf.mxu0
  %v8518 = vadd.f32 %v8447, %v8517
  %v8519 = vand.u32 %v8408, 4294901760
  %8520 = vmatmul.f32.gmra.mxu0 %v8519
  %v8521 = vpop.f32.mrf.mxu0
  %v8522 = vadd.f32 %v8455, %v8521
  %v8523 = vand.u32 %v8411, 4294901760
  %8524 = vmatmul.f32.gmra.mxu0 %v8523
  %v8525 = vpop.f32.mrf.mxu0
  %v8526 = vadd.f32 %v8463, %v8525
  %v8527 = vand.u32 %v8414, 4294901760
  %8528 = vmatmul.f32.gmra.mxu0 %v8527
  %v8529 = vpop.f32.mrf.mxu0
  %v8530 = vadd.f32 %v8471, %v8529
  %v8531 = vand.u32 %v8417, 4294901760
  %8532 = vmatmul.f32.gmra.mxu0 %v8531
  %v8533 = vpop.f32.mrf.mxu0
  %v8534 = vadd.f32 %v8479, %v8533
  %v8535 = vand.u32 %v8420, 4294901760
  %8536 = vmatmul.f32.gmra.mxu0 %v8535
  %v8537 = vpop.f32.mrf.mxu0
  %v8538 = vadd.f32 %v8487, %v8537
  %8539 = vdwg.mxu0
  %8540 = vmatpush.msra.mxu0 0.0
  %8541 = vmatpush.msra.mxu0 0.0
  %8542 = vmatpush.msra.mxu0 0.0
  %8543 = vmatpush.msra.mxu0 0.0
  %8544 = vmatpush.msra.mxu0 0.0
  %8545 = vmatpush.msra.mxu0 0.0
  %8546 = vmatpush.msra.mxu0 0.0
  %8547 = vmatpush.msra.mxu0 0.0
  %8548 = vmatpush.msra.mxu0 0.0
  %8549 = vmatpush.msra.mxu0 0.0
  %8550 = vmatpush.msra.mxu0 0.0
  %8551 = vmatpush.msra.mxu0 0.0
  %8552 = vmatpush.msra.mxu0 0.0
  %8553 = vmatpush.msra.mxu0 0.0
  %v8554 = vand.u32 %v6823, 4294901760
  %v8555 = vsub.f32 %v6823, %v8554
  %8556 = vmatpush.msra.mxu0 %v8555
  %v8557 = vand.u32 %v6822, 4294901760
  %v8558 = vsub.f32 %v6822, %v8557
  %8559 = vmatpush.msra.mxu0 %v8558
  %v8560 = vand.u32 %v8405, 4294901760
  %v8561 = vsub.f32 %v8405, %v8560
  %8562 = vmatmul.f32.gmra.mxu0 %v8561
  %v8563 = vpop.f32.mrf.mxu0
  %v8564 = vadd.f32 %v8518, %v8563
  %v8565 = vand.u32 %v8408, 4294901760
  %v8566 = vsub.f32 %v8408, %v8565
  %8567 = vmatmul.f32.gmra.mxu0 %v8566
  %v8568 = vpop.f32.mrf.mxu0
  %v8569 = vadd.f32 %v8522, %v8568
  %v8570 = vand.u32 %v8411, 4294901760
  %v8571 = vsub.f32 %v8411, %v8570
  %8572 = vmatmul.f32.gmra.mxu0 %v8571
  %v8573 = vpop.f32.mrf.mxu0
  %v8574 = vadd.f32 %v8526, %v8573
  %v8575 = vand.u32 %v8414, 4294901760
  %v8576 = vsub.f32 %v8414, %v8575
  %8577 = vmatmul.f32.gmra.mxu0 %v8576
  %v8578 = vpop.f32.mrf.mxu0
  %v8579 = vadd.f32 %v8530, %v8578
  %v8580 = vand.u32 %v8417, 4294901760
  %v8581 = vsub.f32 %v8417, %v8580
  %8582 = vmatmul.f32.gmra.mxu0 %v8581
  %v8583 = vpop.f32.mrf.mxu0
  %v8584 = vadd.f32 %v8534, %v8583
  %v8585 = vand.u32 %v8420, 4294901760
  %v8586 = vsub.f32 %v8420, %v8585
  %8587 = vmatmul.f32.gmra.mxu0 %v8586
  %v8588 = vpop.f32.mrf.mxu0
  %v8589 = vadd.f32 %v8538, %v8588
  %8590 = vdwg.mxu0
  %8591 = vmatpush.msra.mxu0 0.0
  %8592 = vmatpush.msra.mxu0 0.0
  %8593 = vmatpush.msra.mxu0 0.0
  %8594 = vmatpush.msra.mxu0 0.0
  %8595 = vmatpush.msra.mxu0 0.0
  %8596 = vmatpush.msra.mxu0 0.0
  %8597 = vmatpush.msra.mxu0 0.0
  %8598 = vmatpush.msra.mxu0 0.0
  %8599 = vmatpush.msra.mxu0 0.0
  %8600 = vmatpush.msra.mxu0 0.0
  %8601 = vmatpush.msra.mxu0 0.0
  %8602 = vmatpush.msra.mxu0 0.0
  %8603 = vmatpush.msra.mxu0 0.0
  %8604 = vmatpush.msra.mxu0 0.0
  %v8605 = vand.u32 %v6823, 4294901760
  %8606 = vmatpush.msra.mxu0 %v8605
  %v8607 = vand.u32 %v6822, 4294901760
  %8608 = vmatpush.msra.mxu0 %v8607
  %v8609 = vand.u32 %v8405, 4294901760
  %v8610 = vsub.f32 %v8405, %v8609
  %v8611 = vand.u32 %v8610, 4294901760
  %8612 = vmatmul.f32.gmra.mxu0 %v8611
  %v8613 = vpop.f32.mrf.mxu0
  %v8614 = vadd.f32 %v8564, %v8613
  %v8615 = vand.u32 %v8408, 4294901760
  %v8616 = vsub.f32 %v8408, %v8615
  %v8617 = vand.u32 %v8616, 4294901760
  %8618 = vmatmul.f32.gmra.mxu0 %v8617
  %v8619 = vpop.f32.mrf.mxu0
  %v8620 = vadd.f32 %v8569, %v8619
  %v8621 = vand.u32 %v8411, 4294901760
  %v8622 = vsub.f32 %v8411, %v8621
  %v8623 = vand.u32 %v8622, 4294901760
  %8624 = vmatmul.f32.gmra.mxu0 %v8623
  %v8625 = vpop.f32.mrf.mxu0
  %v8626 = vadd.f32 %v8574, %v8625
  %v8627 = vand.u32 %v8414, 4294901760
  %v8628 = vsub.f32 %v8414, %v8627
  %v8629 = vand.u32 %v8628, 4294901760
  %8630 = vmatmul.f32.gmra.mxu0 %v8629
  %v8631 = vpop.f32.mrf.mxu0
  %v8632 = vadd.f32 %v8579, %v8631
  %v8633 = vand.u32 %v8417, 4294901760
  %v8634 = vsub.f32 %v8417, %v8633
  %v8635 = vand.u32 %v8634, 4294901760
  %8636 = vmatmul.f32.gmra.mxu0 %v8635
  %v8637 = vpop.f32.mrf.mxu0
  %v8638 = vadd.f32 %v8584, %v8637
  %v8639 = vand.u32 %v8420, 4294901760
  %v8640 = vsub.f32 %v8420, %v8639
  %v8641 = vand.u32 %v8640, 4294901760
  %8642 = vmatmul.f32.gmra.mxu0 %v8641
  %v8643 = vpop.f32.mrf.mxu0
  %v8644 = vadd.f32 %v8589, %v8643
  %8645 = vdwg.mxu0
  %8646 = vmatpush.msra.mxu0 0.0
  %8647 = vmatpush.msra.mxu0 0.0
  %8648 = vmatpush.msra.mxu0 0.0
  %8649 = vmatpush.msra.mxu0 0.0
  %8650 = vmatpush.msra.mxu0 0.0
  %8651 = vmatpush.msra.mxu0 0.0
  %8652 = vmatpush.msra.mxu0 0.0
  %8653 = vmatpush.msra.mxu0 0.0
  %8654 = vmatpush.msra.mxu0 0.0
  %8655 = vmatpush.msra.mxu0 0.0
  %8656 = vmatpush.msra.mxu0 0.0
  %8657 = vmatpush.msra.mxu0 0.0
  %8658 = vmatpush.msra.mxu0 0.0
  %8659 = vmatpush.msra.mxu0 0.0
  %v8660 = vand.u32 %v6823, 4294901760
  %v8661 = vsub.f32 %v6823, %v8660
  %v8662 = vand.u32 %v8661, 4294901760
  %8663 = vmatpush.msra.mxu0 %v8662
  %v8664 = vand.u32 %v6822, 4294901760
  %v8665 = vsub.f32 %v6822, %v8664
  %v8666 = vand.u32 %v8665, 4294901760
  %8667 = vmatpush.msra.mxu0 %v8666
  %v8668 = vand.u32 %v8405, 4294901760
  %8669 = vmatmul.f32.gmra.mxu0 %v8668
  %v8670 = vpop.f32.mrf.mxu0
  %v8671 = vadd.f32 %v8614, %v8670
  %v8672 = vand.u32 %v8408, 4294901760
  %8673 = vmatmul.f32.gmra.mxu0 %v8672
  %v8674 = vpop.f32.mrf.mxu0
  %v8675 = vadd.f32 %v8620, %v8674
  %v8676 = vand.u32 %v8411, 4294901760
  %8677 = vmatmul.f32.gmra.mxu0 %v8676
  %v8678 = vpop.f32.mrf.mxu0
  %v8679 = vadd.f32 %v8626, %v8678
  %v8680 = vand.u32 %v8414, 4294901760
  %8681 = vmatmul.f32.gmra.mxu0 %v8680
  %v8682 = vpop.f32.mrf.mxu0
  %v8683 = vadd.f32 %v8632, %v8682
  %v8684 = vand.u32 %v8417, 4294901760
  %8685 = vmatmul.f32.gmra.mxu0 %v8684
  %v8686 = vpop.f32.mrf.mxu0
  %v8687 = vadd.f32 %v8638, %v8686
  %v8688 = vand.u32 %v8420, 4294901760
  %8689 = vmatmul.f32.gmra.mxu0 %v8688
  %v8690 = vpop.f32.mrf.mxu0
  %v8691 = vadd.f32 %v8644, %v8690
  %8692 = vdwg.mxu0
  %8693 = vmatpush.msra.mxu0 0.0
  %8694 = vmatpush.msra.mxu0 0.0
  %8695 = vmatpush.msra.mxu0 0.0
  %8696 = vmatpush.msra.mxu0 0.0
  %8697 = vmatpush.msra.mxu0 0.0
  %8698 = vmatpush.msra.mxu0 0.0
  %8699 = vmatpush.msra.mxu0 0.0
  %8700 = vmatpush.msra.mxu0 0.0
  %8701 = vmatpush.msra.mxu0 0.0
  %8702 = vmatpush.msra.mxu0 0.0
  %8703 = vmatpush.msra.mxu0 0.0
  %8704 = vmatpush.msra.mxu0 0.0
  %8705 = vmatpush.msra.mxu0 0.0
  %8706 = vmatpush.msra.mxu0 0.0
  %v8707 = vand.u32 %v6823, 4294901760
  %8708 = vmatpush.msra.mxu0 %v8707
  %v8709 = vand.u32 %v6822, 4294901760
  %8710 = vmatpush.msra.mxu0 %v8709
  %v8711 = vand.u32 %v8405, 4294901760
  %8712 = vmatmul.f32.gmra.mxu0 %v8711
  %v8713 = vpop.f32.mrf.mxu0
  %v8714 = vadd.f32 %v8671, %v8713
  %v8715 = vand.u32 %v8408, 4294901760
  %8716 = vmatmul.f32.gmra.mxu0 %v8715
  %v8717 = vpop.f32.mrf.mxu0
  %v8718 = vadd.f32 %v8675, %v8717
  %v8719 = vand.u32 %v8411, 4294901760
  %8720 = vmatmul.f32.gmra.mxu0 %v8719
  %v8721 = vpop.f32.mrf.mxu0
  %v8722 = vadd.f32 %v8679, %v8721
  %v8723 = vand.u32 %v8414, 4294901760
  %8724 = vmatmul.f32.gmra.mxu0 %v8723
  %v8725 = vpop.f32.mrf.mxu0
  %v8726 = vadd.f32 %v8683, %v8725
  %v8727 = vand.u32 %v8417, 4294901760
  %8728 = vmatmul.f32.gmra.mxu0 %v8727
  %v8729 = vpop.f32.mrf.mxu0
  %v8730 = vadd.f32 %v8687, %v8729
  %v8731 = vand.u32 %v8420, 4294901760
  %8732 = vmatmul.f32.gmra.mxu0 %v8731
  %v8733 = vpop.f32.mrf.mxu0
  %v8734 = vadd.f32 %v8691, %v8733
  %8735 = vdwg.mxu0
  %v8736 = vld [vmem:[%s14] sm:$0xff]
  %v8737 = vld [vmem:[%s14 + $0x8] sm:$0xff]
  %v8738 = vld [vmem:[%s14 + $0x10] sm:$0xff]
  %v8739 = vld [vmem:[%s14 + $0x18] sm:$0xff]
  %v8740 = vld [vmem:[%s14 + $0x20] sm:$0xff]
  %v8741 = vld [vmem:[%s14 + $0x28] sm:$0xff]
  %v8742 = vld [vmem:[%s16] sm:$0xff]
  %v8743 = vld [vmem:[%s16 + $0x8] sm:$0xff]
  %v8744 = vld [vmem:[%s16 + $0x10] sm:$0xff]
  %v8745 = vld [vmem:[%s16 + $0x18] sm:$0xff]
  %v8746 = vld [vmem:[%s16 + $0x20] sm:$0xff]
  %v8747 = vld [vmem:[%s16 + $0x28] sm:$0xff]
  %8749 = vset.pattern.permute.xlu0 0
  %8750 = vperm.xlu0 %8749, %v8742
  %v8751 = vpop.permute.xlu0 %8750
  %8754 = vset.pattern.permute.xlu0 0
  %8755 = vperm.xlu0 %8754, %v8743
  %v8756 = vpop.permute.xlu0 %8755
  %8759 = vset.pattern.permute.xlu0 0
  %8760 = vperm.xlu0 %8759, %v8744
  %v8761 = vpop.permute.xlu0 %8760
  %8764 = vset.pattern.permute.xlu0 0
  %8765 = vperm.xlu0 %8764, %v8745
  %v8766 = vpop.permute.xlu0 %8765
  %8769 = vset.pattern.permute.xlu0 0
  %8770 = vperm.xlu0 %8769, %v8746
  %v8771 = vpop.permute.xlu0 %8770
  %8774 = vset.pattern.permute.xlu0 0
  %8775 = vperm.xlu0 %8774, %v8747
  %v8776 = vpop.permute.xlu0 %8775
  %v8779 = vsel %vm5958, %v8736, 0
  %v8782 = vsel %vm5958, %v8737, 0
  %v8785 = vsel %vm5958, %v8738, 0
  %v8788 = vsel %vm5958, %v8739, 0
  %v8791 = vsel %vm5958, %v8740, 0
  %v8794 = vsel %vm5958, %v8741, 0
  %8796 = vmatpush.msra.mxu0 0.0
  %8797 = vmatpush.msra.mxu0 0.0
  %8798 = vmatpush.msra.mxu0 0.0
  %8799 = vmatpush.msra.mxu0 0.0
  %8800 = vmatpush.msra.mxu0 0.0
  %8801 = vmatpush.msra.mxu0 0.0
  %8802 = vmatpush.msra.mxu0 0.0
  %8803 = vmatpush.msra.mxu0 0.0
  %8804 = vmatpush.msra.mxu0 0.0
  %8805 = vmatpush.msra.mxu0 0.0
  %8806 = vmatpush.msra.mxu0 0.0
  %8807 = vmatpush.msra.mxu0 0.0
  %8808 = vmatpush.msra.mxu0 0.0
  %8809 = vmatpush.msra.mxu0 0.0
  %8810 = vmatpush.msra.mxu0 0.0
  %8811 = vmatpush.msra.mxu0 0.0
  %v8812 = vand.u32 %v8779, 4294901760
  %v8813 = vsub.f32 %v8779, %v8812
  %v8814 = vand.u32 %v8813, 4294901760
  %v8815 = vsub.f32 %v8813, %v8814
  %v8816 = vand.u32 %v8815, 4294901760
  %8817 = vmatmul.f32.gmra.mxu0 %v8816
  %v8818 = vpop.f32.mrf.mxu0
  %v8819 = vadd.f32 %v8751, %v8818
  %v8820 = vand.u32 %v8782, 4294901760
  %v8821 = vsub.f32 %v8782, %v8820
  %v8822 = vand.u32 %v8821, 4294901760
  %v8823 = vsub.f32 %v8821, %v8822
  %v8824 = vand.u32 %v8823, 4294901760
  %8825 = vmatmul.f32.gmra.mxu0 %v8824
  %v8826 = vpop.f32.mrf.mxu0
  %v8827 = vadd.f32 %v8756, %v8826
  %v8828 = vand.u32 %v8785, 4294901760
  %v8829 = vsub.f32 %v8785, %v8828
  %v8830 = vand.u32 %v8829, 4294901760
  %v8831 = vsub.f32 %v8829, %v8830
  %v8832 = vand.u32 %v8831, 4294901760
  %8833 = vmatmul.f32.gmra.mxu0 %v8832
  %v8834 = vpop.f32.mrf.mxu0
  %v8835 = vadd.f32 %v8761, %v8834
  %v8836 = vand.u32 %v8788, 4294901760
  %v8837 = vsub.f32 %v8788, %v8836
  %v8838 = vand.u32 %v8837, 4294901760
  %v8839 = vsub.f32 %v8837, %v8838
  %v8840 = vand.u32 %v8839, 4294901760
  %8841 = vmatmul.f32.gmra.mxu0 %v8840
  %v8842 = vpop.f32.mrf.mxu0
  %v8843 = vadd.f32 %v8766, %v8842
  %v8844 = vand.u32 %v8791, 4294901760
  %v8845 = vsub.f32 %v8791, %v8844
  %v8846 = vand.u32 %v8845, 4294901760
  %v8847 = vsub.f32 %v8845, %v8846
  %v8848 = vand.u32 %v8847, 4294901760
  %8849 = vmatmul.f32.gmra.mxu0 %v8848
  %v8850 = vpop.f32.mrf.mxu0
  %v8851 = vadd.f32 %v8771, %v8850
  %v8852 = vand.u32 %v8794, 4294901760
  %v8853 = vsub.f32 %v8794, %v8852
  %v8854 = vand.u32 %v8853, 4294901760
  %v8855 = vsub.f32 %v8853, %v8854
  %v8856 = vand.u32 %v8855, 4294901760
  %8857 = vmatmul.f32.gmra.mxu0 %v8856
  %v8858 = vpop.f32.mrf.mxu0
  %v8859 = vadd.f32 %v8776, %v8858
  %8860 = vdwg.mxu0
  %8861 = vmatpush.msra.mxu0 0.0
  %8862 = vmatpush.msra.mxu0 0.0
  %8863 = vmatpush.msra.mxu0 0.0
  %8864 = vmatpush.msra.mxu0 0.0
  %8865 = vmatpush.msra.mxu0 0.0
  %8866 = vmatpush.msra.mxu0 0.0
  %8867 = vmatpush.msra.mxu0 0.0
  %8868 = vmatpush.msra.mxu0 0.0
  %8869 = vmatpush.msra.mxu0 0.0
  %8870 = vmatpush.msra.mxu0 0.0
  %8871 = vmatpush.msra.mxu0 0.0
  %8872 = vmatpush.msra.mxu0 0.0
  %8873 = vmatpush.msra.mxu0 0.0
  %8874 = vmatpush.msra.mxu0 0.0
  %8875 = vmatpush.msra.mxu0 0.0
  %8876 = vmatpush.msra.mxu0 0.0
  %v8877 = vand.u32 %v8779, 4294901760
  %8878 = vmatmul.f32.gmra.mxu0 %v8877
  %v8879 = vpop.f32.mrf.mxu0
  %v8880 = vadd.f32 %v8819, %v8879
  %v8881 = vand.u32 %v8782, 4294901760
  %8882 = vmatmul.f32.gmra.mxu0 %v8881
  %v8883 = vpop.f32.mrf.mxu0
  %v8884 = vadd.f32 %v8827, %v8883
  %v8885 = vand.u32 %v8785, 4294901760
  %8886 = vmatmul.f32.gmra.mxu0 %v8885
  %v8887 = vpop.f32.mrf.mxu0
  %v8888 = vadd.f32 %v8835, %v8887
  %v8889 = vand.u32 %v8788, 4294901760
  %8890 = vmatmul.f32.gmra.mxu0 %v8889
  %v8891 = vpop.f32.mrf.mxu0
  %v8892 = vadd.f32 %v8843, %v8891
  %v8893 = vand.u32 %v8791, 4294901760
  %8894 = vmatmul.f32.gmra.mxu0 %v8893
  %v8895 = vpop.f32.mrf.mxu0
  %v8896 = vadd.f32 %v8851, %v8895
  %v8897 = vand.u32 %v8794, 4294901760
  %8898 = vmatmul.f32.gmra.mxu0 %v8897
  %v8899 = vpop.f32.mrf.mxu0
  %v8900 = vadd.f32 %v8859, %v8899
  %8901 = vdwg.mxu0
  %8902 = vmatpush.msra.mxu0 0.0
  %8903 = vmatpush.msra.mxu0 0.0
  %8904 = vmatpush.msra.mxu0 0.0
  %8905 = vmatpush.msra.mxu0 0.0
  %8906 = vmatpush.msra.mxu0 0.0
  %8907 = vmatpush.msra.mxu0 0.0
  %8908 = vmatpush.msra.mxu0 0.0
  %8909 = vmatpush.msra.mxu0 0.0
  %8910 = vmatpush.msra.mxu0 0.0
  %8911 = vmatpush.msra.mxu0 0.0
  %8912 = vmatpush.msra.mxu0 0.0
  %8913 = vmatpush.msra.mxu0 0.0
  %8914 = vmatpush.msra.mxu0 0.0
  %8915 = vmatpush.msra.mxu0 0.0
  %8916 = vmatpush.msra.mxu0 0.0
  %8917 = vmatpush.msra.mxu0 0.0
  %v8918 = vand.u32 %v8779, 4294901760
  %v8919 = vsub.f32 %v8779, %v8918
  %8920 = vmatmul.f32.gmra.mxu0 %v8919
  %v8921 = vpop.f32.mrf.mxu0
  %v8922 = vadd.f32 %v8880, %v8921
  %v8923 = vand.u32 %v8782, 4294901760
  %v8924 = vsub.f32 %v8782, %v8923
  %8925 = vmatmul.f32.gmra.mxu0 %v8924
  %v8926 = vpop.f32.mrf.mxu0
  %v8927 = vadd.f32 %v8884, %v8926
  %v8928 = vand.u32 %v8785, 4294901760
  %v8929 = vsub.f32 %v8785, %v8928
  %8930 = vmatmul.f32.gmra.mxu0 %v8929
  %v8931 = vpop.f32.mrf.mxu0
  %v8932 = vadd.f32 %v8888, %v8931
  %v8933 = vand.u32 %v8788, 4294901760
  %v8934 = vsub.f32 %v8788, %v8933
  %8935 = vmatmul.f32.gmra.mxu0 %v8934
  %v8936 = vpop.f32.mrf.mxu0
  %v8937 = vadd.f32 %v8892, %v8936
  %v8938 = vand.u32 %v8791, 4294901760
  %v8939 = vsub.f32 %v8791, %v8938
  %8940 = vmatmul.f32.gmra.mxu0 %v8939
  %v8941 = vpop.f32.mrf.mxu0
  %v8942 = vadd.f32 %v8896, %v8941
  %v8943 = vand.u32 %v8794, 4294901760
  %v8944 = vsub.f32 %v8794, %v8943
  %8945 = vmatmul.f32.gmra.mxu0 %v8944
  %v8946 = vpop.f32.mrf.mxu0
  %v8947 = vadd.f32 %v8900, %v8946
  %8948 = vdwg.mxu0
  %8949 = vmatpush.msra.mxu0 0.0
  %8950 = vmatpush.msra.mxu0 0.0
  %8951 = vmatpush.msra.mxu0 0.0
  %8952 = vmatpush.msra.mxu0 0.0
  %8953 = vmatpush.msra.mxu0 0.0
  %8954 = vmatpush.msra.mxu0 0.0
  %8955 = vmatpush.msra.mxu0 0.0
  %8956 = vmatpush.msra.mxu0 0.0
  %8957 = vmatpush.msra.mxu0 0.0
  %8958 = vmatpush.msra.mxu0 0.0
  %8959 = vmatpush.msra.mxu0 0.0
  %8960 = vmatpush.msra.mxu0 0.0
  %8961 = vmatpush.msra.mxu0 0.0
  %8962 = vmatpush.msra.mxu0 0.0
  %8963 = vmatpush.msra.mxu0 0.0
  %8964 = vmatpush.msra.mxu0 0.0
  %v8965 = vand.u32 %v8779, 4294901760
  %v8966 = vsub.f32 %v8779, %v8965
  %v8967 = vand.u32 %v8966, 4294901760
  %8968 = vmatmul.f32.gmra.mxu0 %v8967
  %v8969 = vpop.f32.mrf.mxu0
  %v8970 = vadd.f32 %v8922, %v8969
  %v8971 = vand.u32 %v8782, 4294901760
  %v8972 = vsub.f32 %v8782, %v8971
  %v8973 = vand.u32 %v8972, 4294901760
  %8974 = vmatmul.f32.gmra.mxu0 %v8973
  %v8975 = vpop.f32.mrf.mxu0
  %v8976 = vadd.f32 %v8927, %v8975
  %v8977 = vand.u32 %v8785, 4294901760
  %v8978 = vsub.f32 %v8785, %v8977
  %v8979 = vand.u32 %v8978, 4294901760
  %8980 = vmatmul.f32.gmra.mxu0 %v8979
  %v8981 = vpop.f32.mrf.mxu0
  %v8982 = vadd.f32 %v8932, %v8981
  %v8983 = vand.u32 %v8788, 4294901760
  %v8984 = vsub.f32 %v8788, %v8983
  %v8985 = vand.u32 %v8984, 4294901760
  %8986 = vmatmul.f32.gmra.mxu0 %v8985
  %v8987 = vpop.f32.mrf.mxu0
  %v8988 = vadd.f32 %v8937, %v8987
  %v8989 = vand.u32 %v8791, 4294901760
  %v8990 = vsub.f32 %v8791, %v8989
  %v8991 = vand.u32 %v8990, 4294901760
  %8992 = vmatmul.f32.gmra.mxu0 %v8991
  %v8993 = vpop.f32.mrf.mxu0
  %v8994 = vadd.f32 %v8942, %v8993
  %v8995 = vand.u32 %v8794, 4294901760
  %v8996 = vsub.f32 %v8794, %v8995
  %v8997 = vand.u32 %v8996, 4294901760
  %8998 = vmatmul.f32.gmra.mxu0 %v8997
  %v8999 = vpop.f32.mrf.mxu0
  %v9000 = vadd.f32 %v8947, %v8999
  %9001 = vdwg.mxu0
  %9002 = vmatpush.msra.mxu0 0.0
  %9003 = vmatpush.msra.mxu0 0.0
  %9004 = vmatpush.msra.mxu0 0.0
  %9005 = vmatpush.msra.mxu0 0.0
  %9006 = vmatpush.msra.mxu0 0.0
  %9007 = vmatpush.msra.mxu0 0.0
  %9008 = vmatpush.msra.mxu0 0.0
  %9009 = vmatpush.msra.mxu0 0.0
  %9010 = vmatpush.msra.mxu0 0.0
  %9011 = vmatpush.msra.mxu0 0.0
  %9012 = vmatpush.msra.mxu0 0.0
  %9013 = vmatpush.msra.mxu0 0.0
  %9014 = vmatpush.msra.mxu0 0.0
  %9015 = vmatpush.msra.mxu0 0.0
  %9016 = vmatpush.msra.mxu0 0.0
  %9017 = vmatpush.msra.mxu0 0.0
  %v9018 = vand.u32 %v8779, 4294901760
  %9019 = vmatmul.f32.gmra.mxu0 %v9018
  %v9020 = vpop.f32.mrf.mxu0
  %v9021 = vadd.f32 %v8970, %v9020
  %v9022 = vand.u32 %v8782, 4294901760
  %9023 = vmatmul.f32.gmra.mxu0 %v9022
  %v9024 = vpop.f32.mrf.mxu0
  %v9025 = vadd.f32 %v8976, %v9024
  %v9026 = vand.u32 %v8785, 4294901760
  %9027 = vmatmul.f32.gmra.mxu0 %v9026
  %v9028 = vpop.f32.mrf.mxu0
  %v9029 = vadd.f32 %v8982, %v9028
  %v9030 = vand.u32 %v8788, 4294901760
  %9031 = vmatmul.f32.gmra.mxu0 %v9030
  %v9032 = vpop.f32.mrf.mxu0
  %v9033 = vadd.f32 %v8988, %v9032
  %v9034 = vand.u32 %v8791, 4294901760
  %9035 = vmatmul.f32.gmra.mxu0 %v9034
  %v9036 = vpop.f32.mrf.mxu0
  %v9037 = vadd.f32 %v8994, %v9036
  %v9038 = vand.u32 %v8794, 4294901760
  %9039 = vmatmul.f32.gmra.mxu0 %v9038
  %v9040 = vpop.f32.mrf.mxu0
  %v9041 = vadd.f32 %v9000, %v9040
  %9042 = vdwg.mxu0
  %9043 = vmatpush.msra.mxu0 0.0
  %9044 = vmatpush.msra.mxu0 0.0
  %9045 = vmatpush.msra.mxu0 0.0
  %9046 = vmatpush.msra.mxu0 0.0
  %9047 = vmatpush.msra.mxu0 0.0
  %9048 = vmatpush.msra.mxu0 0.0
  %9049 = vmatpush.msra.mxu0 0.0
  %9050 = vmatpush.msra.mxu0 0.0
  %9051 = vmatpush.msra.mxu0 0.0
  %9052 = vmatpush.msra.mxu0 0.0
  %9053 = vmatpush.msra.mxu0 0.0
  %9054 = vmatpush.msra.mxu0 0.0
  %9055 = vmatpush.msra.mxu0 0.0
  %9056 = vmatpush.msra.mxu0 0.0
  %9057 = vmatpush.msra.mxu0 0.0
  %9058 = vmatpush.msra.mxu0 0.0
  %v9059 = vand.u32 %v8779, 4294901760
  %9060 = vmatmul.f32.gmra.mxu0 %v9059
  %v9061 = vpop.f32.mrf.mxu0
  %v9062 = vadd.f32 %v9021, %v9061
  %v9063 = vand.u32 %v8782, 4294901760
  %9064 = vmatmul.f32.gmra.mxu0 %v9063
  %v9065 = vpop.f32.mrf.mxu0
  %v9066 = vadd.f32 %v9025, %v9065
  %v9067 = vand.u32 %v8785, 4294901760
  %9068 = vmatmul.f32.gmra.mxu0 %v9067
  %v9069 = vpop.f32.mrf.mxu0
  %v9070 = vadd.f32 %v9029, %v9069
  %v9071 = vand.u32 %v8788, 4294901760
  %9072 = vmatmul.f32.gmra.mxu0 %v9071
  %v9073 = vpop.f32.mrf.mxu0
  %v9074 = vadd.f32 %v9033, %v9073
  %v9075 = vand.u32 %v8791, 4294901760
  %9076 = vmatmul.f32.gmra.mxu0 %v9075
  %v9077 = vpop.f32.mrf.mxu0
  %v9078 = vadd.f32 %v9037, %v9077
  %v9079 = vand.u32 %v8794, 4294901760
  %9080 = vmatmul.f32.gmra.mxu0 %v9079
  %v9081 = vpop.f32.mrf.mxu0
  %v9082 = vadd.f32 %v9041, %v9081
  %9083 = vdwg.mxu0
  %v9084 = vadd.f32 %v8714, %v9062
  %v9085 = vadd.f32 %v8718, %v9066
  %v9086 = vxor.u32 %v9084, 2147483648
  %v9087 = vxor.u32 %v9085, 2147483648
  %v9088 = vmul.f32 %v9086, 1.442695
  %v9089 = vpow.pop %v9088
  %v9090 = vmul.f32 %v9087, 1.442695
  %v9091 = vpow.pop %v9090
  %v9092 = vadd.f32 %v9089, 1.0
  %v9093 = vadd.f32 %v9091, 1.0
  %v9094 = vrcp.pop %v9092
  %v9095 = vmul.f32 %v9092, %v9094
  %v9096 = vsub.f32 1.0, %v9095
  %v9097 = vmul.f32 %v9094, %v9096
  %v9098 = vadd.f32 %v9094, %v9097
  %vm9099 = vweird.f32 %v9092
  %vm9100 = vweird.f32 %v9094
  %vm9101 = vmor %vm9099, %vm9100
  %v9102 = vsel %vm9101, %v9094, %v9098
  %v9103 = vand.u32 2147483647, %v9092
  %vm9104 = vcmp.eq.f32.partialorder %v9103, 8.507059e+37
  %v9105 = vand.u32 %v9092, 2147483648
  %v9106 = vor.u32 1.1754944e-38, %v9105
  %v9107 = vsel %vm9104, %v9106, %v9102
  %v9108 = vmul.f32 1.0, %v9107
  %v9109 = vrcp.pop %v9093
  %v9110 = vmul.f32 %v9093, %v9109
  %v9111 = vsub.f32 1.0, %v9110
  %v9112 = vmul.f32 %v9109, %v9111
  %v9113 = vadd.f32 %v9109, %v9112
  %vm9114 = vweird.f32 %v9093
  %vm9115 = vweird.f32 %v9109
  %vm9116 = vmor %vm9114, %vm9115
  %v9117 = vsel %vm9116, %v9109, %v9113
  %v9118 = vand.u32 2147483647, %v9093
  %vm9119 = vcmp.eq.f32.partialorder %v9118, 8.507059e+37
  %v9120 = vand.u32 %v9093, 2147483648
  %v9121 = vor.u32 1.1754944e-38, %v9120
  %v9122 = vsel %vm9119, %v9121, %v9117
  %v9123 = vmul.f32 1.0, %v9122
  %v9124 = vadd.f32 %v8722, %v9070
  %v9125 = vadd.f32 %v8726, %v9074
  %v9126 = vxor.u32 %v9124, 2147483648
  %v9127 = vxor.u32 %v9125, 2147483648
  %v9128 = vmul.f32 %v9126, 1.442695
  %v9129 = vpow.pop %v9128
  %v9130 = vmul.f32 %v9127, 1.442695
  %v9131 = vpow.pop %v9130
  %v9132 = vadd.f32 %v9129, 1.0
  %v9133 = vadd.f32 %v9131, 1.0
  %v9134 = vrcp.pop %v9132
  %v9135 = vmul.f32 %v9132, %v9134
  %v9136 = vsub.f32 1.0, %v9135
  %v9137 = vmul.f32 %v9134, %v9136
  %v9138 = vadd.f32 %v9134, %v9137
  %vm9139 = vweird.f32 %v9132
  %vm9140 = vweird.f32 %v9134
  %vm9141 = vmor %vm9139, %vm9140
  %v9142 = vsel %vm9141, %v9134, %v9138
  %v9143 = vand.u32 2147483647, %v9132
  %vm9144 = vcmp.eq.f32.partialorder %v9143, 8.507059e+37
  %v9145 = vand.u32 %v9132, 2147483648
  %v9146 = vor.u32 1.1754944e-38, %v9145
  %v9147 = vsel %vm9144, %v9146, %v9142
  %v9148 = vmul.f32 1.0, %v9147
  %v9149 = vrcp.pop %v9133
  %v9150 = vmul.f32 %v9133, %v9149
  %v9151 = vsub.f32 1.0, %v9150
  %v9152 = vmul.f32 %v9149, %v9151
  %v9153 = vadd.f32 %v9149, %v9152
  %vm9154 = vweird.f32 %v9133
  %vm9155 = vweird.f32 %v9149
  %vm9156 = vmor %vm9154, %vm9155
  %v9157 = vsel %vm9156, %v9149, %v9153
  %v9158 = vand.u32 2147483647, %v9133
  %vm9159 = vcmp.eq.f32.partialorder %v9158, 8.507059e+37
  %v9160 = vand.u32 %v9133, 2147483648
  %v9161 = vor.u32 1.1754944e-38, %v9160
  %v9162 = vsel %vm9159, %v9161, %v9157
  %v9163 = vmul.f32 1.0, %v9162
  %v9164 = vmul.f32 %v9108, %v9078
  %v9165 = vmul.f32 %v9123, %v9082
  %v9166 = vadd.f32 %v8730, %v9164
  %v9167 = vadd.f32 %v8734, %v9165
  %v9168 = vtanh.pop %v9166
  %v9169 = vtanh.pop %v9167
  %v9170 = vsub.f32 1.0, %v9148
  %v9171 = vsub.f32 1.0, %v9163
  %v9172 = vmul.f32 %v9170, %v9168
  %v9173 = vmul.f32 %v9171, %v9169
  %v9174 = vmul.f32 %v9148, 0.0
  %v9175 = vmul.f32 %v9163, 0.0
  %v9176 = vadd.f32 %v9172, %v9174
  %v9177 = vadd.f32 %v9173, %v9175
  %9178 = vmatpush.msra.mxu0 0.0
  %9179 = vmatpush.msra.mxu0 0.0
  %9180 = vmatpush.msra.mxu0 0.0
  %9181 = vmatpush.msra.mxu0 0.0
  %9182 = vmatpush.msra.mxu0 0.0
  %9183 = vmatpush.msra.mxu0 0.0
  %9184 = vmatpush.msra.mxu0 0.0
  %9185 = vmatpush.msra.mxu0 0.0
  %9186 = vmatpush.msra.mxu0 0.0
  %9187 = vmatpush.msra.mxu0 0.0
  %9188 = vmatpush.msra.mxu0 0.0
  %9189 = vmatpush.msra.mxu0 0.0
  %9190 = vmatpush.msra.mxu0 0.0
  %9191 = vmatpush.msra.mxu0 0.0
  %v9192 = vand.u32 %v6723, 4294901760
  %9193 = vmatpush.msra.mxu0 %v9192
  %v9194 = vand.u32 %v6722, 4294901760
  %9195 = vmatpush.msra.mxu0 %v9194
  %v9196 = vand.u32 %v8405, 4294901760
  %v9197 = vsub.f32 %v8405, %v9196
  %v9198 = vand.u32 %v9197, 4294901760
  %v9199 = vsub.f32 %v9197, %v9198
  %v9200 = vand.u32 %v9199, 4294901760
  %9201 = vmatmul.f32.gmra.mxu0 %v9200
  %v9202 = vpop.f32.mrf.mxu0
  %v9203 = vadd.f32 %v8377, %v9202
  %v9204 = vand.u32 %v8408, 4294901760
  %v9205 = vsub.f32 %v8408, %v9204
  %v9206 = vand.u32 %v9205, 4294901760
  %v9207 = vsub.f32 %v9205, %v9206
  %v9208 = vand.u32 %v9207, 4294901760
  %9209 = vmatmul.f32.gmra.mxu0 %v9208
  %v9210 = vpop.f32.mrf.mxu0
  %v9211 = vadd.f32 %v8382, %v9210
  %v9212 = vand.u32 %v8411, 4294901760
  %v9213 = vsub.f32 %v8411, %v9212
  %v9214 = vand.u32 %v9213, 4294901760
  %v9215 = vsub.f32 %v9213, %v9214
  %v9216 = vand.u32 %v9215, 4294901760
  %9217 = vmatmul.f32.gmra.mxu0 %v9216
  %v9218 = vpop.f32.mrf.mxu0
  %v9219 = vadd.f32 %v8387, %v9218
  %v9220 = vand.u32 %v8414, 4294901760
  %v9221 = vsub.f32 %v8414, %v9220
  %v9222 = vand.u32 %v9221, 4294901760
  %v9223 = vsub.f32 %v9221, %v9222
  %v9224 = vand.u32 %v9223, 4294901760
  %9225 = vmatmul.f32.gmra.mxu0 %v9224
  %v9226 = vpop.f32.mrf.mxu0
  %v9227 = vadd.f32 %v8392, %v9226
  %v9228 = vand.u32 %v8417, 4294901760
  %v9229 = vsub.f32 %v8417, %v9228
  %v9230 = vand.u32 %v9229, 4294901760
  %v9231 = vsub.f32 %v9229, %v9230
  %v9232 = vand.u32 %v9231, 4294901760
  %9233 = vmatmul.f32.gmra.mxu0 %v9232
  %v9234 = vpop.f32.mrf.mxu0
  %v9235 = vadd.f32 %v8397, %v9234
  %v9236 = vand.u32 %v8420, 4294901760
  %v9237 = vsub.f32 %v8420, %v9236
  %v9238 = vand.u32 %v9237, 4294901760
  %v9239 = vsub.f32 %v9237, %v9238
  %v9240 = vand.u32 %v9239, 4294901760
  %9241 = vmatmul.f32.gmra.mxu0 %v9240
  %v9242 = vpop.f32.mrf.mxu0
  %v9243 = vadd.f32 %v8402, %v9242
  %9244 = vdwg.mxu0
  %9245 = vmatpush.msra.mxu0 0.0
  %9246 = vmatpush.msra.mxu0 0.0
  %9247 = vmatpush.msra.mxu0 0.0
  %9248 = vmatpush.msra.mxu0 0.0
  %9249 = vmatpush.msra.mxu0 0.0
  %9250 = vmatpush.msra.mxu0 0.0
  %9251 = vmatpush.msra.mxu0 0.0
  %9252 = vmatpush.msra.mxu0 0.0
  %9253 = vmatpush.msra.mxu0 0.0
  %9254 = vmatpush.msra.mxu0 0.0
  %9255 = vmatpush.msra.mxu0 0.0
  %9256 = vmatpush.msra.mxu0 0.0
  %9257 = vmatpush.msra.mxu0 0.0
  %9258 = vmatpush.msra.mxu0 0.0
  %v9259 = vand.u32 %v6723, 4294901760
  %v9260 = vsub.f32 %v6723, %v9259
  %v9261 = vand.u32 %v9260, 4294901760
  %v9262 = vsub.f32 %v9260, %v9261
  %v9263 = vand.u32 %v9262, 4294901760
  %9264 = vmatpush.msra.mxu0 %v9263
  %v9265 = vand.u32 %v6722, 4294901760
  %v9266 = vsub.f32 %v6722, %v9265
  %v9267 = vand.u32 %v9266, 4294901760
  %v9268 = vsub.f32 %v9266, %v9267
  %v9269 = vand.u32 %v9268, 4294901760
  %9270 = vmatpush.msra.mxu0 %v9269
  %v9271 = vand.u32 %v8405, 4294901760
  %9272 = vmatmul.f32.gmra.mxu0 %v9271
  %v9273 = vpop.f32.mrf.mxu0
  %v9274 = vadd.f32 %v9203, %v9273
  %v9275 = vand.u32 %v8408, 4294901760
  %9276 = vmatmul.f32.gmra.mxu0 %v9275
  %v9277 = vpop.f32.mrf.mxu0
  %v9278 = vadd.f32 %v9211, %v9277
  %v9279 = vand.u32 %v8411, 4294901760
  %9280 = vmatmul.f32.gmra.mxu0 %v9279
  %v9281 = vpop.f32.mrf.mxu0
  %v9282 = vadd.f32 %v9219, %v9281
  %v9283 = vand.u32 %v8414, 4294901760
  %9284 = vmatmul.f32.gmra.mxu0 %v9283
  %v9285 = vpop.f32.mrf.mxu0
  %v9286 = vadd.f32 %v9227, %v9285
  %v9287 = vand.u32 %v8417, 4294901760
  %9288 = vmatmul.f32.gmra.mxu0 %v9287
  %v9289 = vpop.f32.mrf.mxu0
  %v9290 = vadd.f32 %v9235, %v9289
  %v9291 = vand.u32 %v8420, 4294901760
  %9292 = vmatmul.f32.gmra.mxu0 %v9291
  %v9293 = vpop.f32.mrf.mxu0
  %v9294 = vadd.f32 %v9243, %v9293
  %9295 = vdwg.mxu0
  %9296 = vmatpush.msra.mxu0 0.0
  %9297 = vmatpush.msra.mxu0 0.0
  %9298 = vmatpush.msra.mxu0 0.0
  %9299 = vmatpush.msra.mxu0 0.0
  %9300 = vmatpush.msra.mxu0 0.0
  %9301 = vmatpush.msra.mxu0 0.0
  %9302 = vmatpush.msra.mxu0 0.0
  %9303 = vmatpush.msra.mxu0 0.0
  %9304 = vmatpush.msra.mxu0 0.0
  %9305 = vmatpush.msra.mxu0 0.0
  %9306 = vmatpush.msra.mxu0 0.0
  %9307 = vmatpush.msra.mxu0 0.0
  %9308 = vmatpush.msra.mxu0 0.0
  %9309 = vmatpush.msra.mxu0 0.0
  %v9310 = vand.u32 %v6723, 4294901760
  %v9311 = vsub.f32 %v6723, %v9310
  %9312 = vmatpush.msra.mxu0 %v9311
  %v9313 = vand.u32 %v6722, 4294901760
  %v9314 = vsub.f32 %v6722, %v9313
  %9315 = vmatpush.msra.mxu0 %v9314
  %v9316 = vand.u32 %v8405, 4294901760
  %v9317 = vsub.f32 %v8405, %v9316
  %9318 = vmatmul.f32.gmra.mxu0 %v9317
  %v9319 = vpop.f32.mrf.mxu0
  %v9320 = vadd.f32 %v9274, %v9319
  %v9321 = vand.u32 %v8408, 4294901760
  %v9322 = vsub.f32 %v8408, %v9321
  %9323 = vmatmul.f32.gmra.mxu0 %v9322
  %v9324 = vpop.f32.mrf.mxu0
  %v9325 = vadd.f32 %v9278, %v9324
  %v9326 = vand.u32 %v8411, 4294901760
  %v9327 = vsub.f32 %v8411, %v9326
  %9328 = vmatmul.f32.gmra.mxu0 %v9327
  %v9329 = vpop.f32.mrf.mxu0
  %v9330 = vadd.f32 %v9282, %v9329
  %v9331 = vand.u32 %v8414, 4294901760
  %v9332 = vsub.f32 %v8414, %v9331
  %9333 = vmatmul.f32.gmra.mxu0 %v9332
  %v9334 = vpop.f32.mrf.mxu0
  %v9335 = vadd.f32 %v9286, %v9334
  %v9336 = vand.u32 %v8417, 4294901760
  %v9337 = vsub.f32 %v8417, %v9336
  %9338 = vmatmul.f32.gmra.mxu0 %v9337
  %v9339 = vpop.f32.mrf.mxu0
  %v9340 = vadd.f32 %v9290, %v9339
  %v9341 = vand.u32 %v8420, 4294901760
  %v9342 = vsub.f32 %v8420, %v9341
  %9343 = vmatmul.f32.gmra.mxu0 %v9342
  %v9344 = vpop.f32.mrf.mxu0
  %v9345 = vadd.f32 %v9294, %v9344
  %9346 = vdwg.mxu0
  %9347 = vmatpush.msra.mxu0 0.0
  %9348 = vmatpush.msra.mxu0 0.0
  %9349 = vmatpush.msra.mxu0 0.0
  %9350 = vmatpush.msra.mxu0 0.0
  %9351 = vmatpush.msra.mxu0 0.0
  %9352 = vmatpush.msra.mxu0 0.0
  %9353 = vmatpush.msra.mxu0 0.0
  %9354 = vmatpush.msra.mxu0 0.0
  %9355 = vmatpush.msra.mxu0 0.0
  %9356 = vmatpush.msra.mxu0 0.0
  %9357 = vmatpush.msra.mxu0 0.0
  %9358 = vmatpush.msra.mxu0 0.0
  %9359 = vmatpush.msra.mxu0 0.0
  %9360 = vmatpush.msra.mxu0 0.0
  %v9361 = vand.u32 %v6723, 4294901760
  %9362 = vmatpush.msra.mxu0 %v9361
  %v9363 = vand.u32 %v6722, 4294901760
  %9364 = vmatpush.msra.mxu0 %v9363
  %v9365 = vand.u32 %v8405, 4294901760
  %v9366 = vsub.f32 %v8405, %v9365
  %v9367 = vand.u32 %v9366, 4294901760
  %9368 = vmatmul.f32.gmra.mxu0 %v9367
  %v9369 = vpop.f32.mrf.mxu0
  %v9370 = vadd.f32 %v9320, %v9369
  %v9371 = vand.u32 %v8408, 4294901760
  %v9372 = vsub.f32 %v8408, %v9371
  %v9373 = vand.u32 %v9372, 4294901760
  %9374 = vmatmul.f32.gmra.mxu0 %v9373
  %v9375 = vpop.f32.mrf.mxu0
  %v9376 = vadd.f32 %v9325, %v9375
  %v9377 = vand.u32 %v8411, 4294901760
  %v9378 = vsub.f32 %v8411, %v9377
  %v9379 = vand.u32 %v9378, 4294901760
  %9380 = vmatmul.f32.gmra.mxu0 %v9379
  %v9381 = vpop.f32.mrf.mxu0
  %v9382 = vadd.f32 %v9330, %v9381
  %v9383 = vand.u32 %v8414, 4294901760
  %v9384 = vsub.f32 %v8414, %v9383
  %v9385 = vand.u32 %v9384, 4294901760
  %9386 = vmatmul.f32.gmra.mxu0 %v9385
  %v9387 = vpop.f32.mrf.mxu0
  %v9388 = vadd.f32 %v9335, %v9387
  %v9389 = vand.u32 %v8417, 4294901760
  %v9390 = vsub.f32 %v8417, %v9389
  %v9391 = vand.u32 %v9390, 4294901760
  %9392 = vmatmul.f32.gmra.mxu0 %v9391
  %v9393 = vpop.f32.mrf.mxu0
  %v9394 = vadd.f32 %v9340, %v9393
  %v9395 = vand.u32 %v8420, 4294901760
  %v9396 = vsub.f32 %v8420, %v9395
  %v9397 = vand.u32 %v9396, 4294901760
  %9398 = vmatmul.f32.gmra.mxu0 %v9397
  %v9399 = vpop.f32.mrf.mxu0
  %v9400 = vadd.f32 %v9345, %v9399
  %9401 = vdwg.mxu0
  %9402 = vmatpush.msra.mxu0 0.0
  %9403 = vmatpush.msra.mxu0 0.0
  %9404 = vmatpush.msra.mxu0 0.0
  %9405 = vmatpush.msra.mxu0 0.0
  %9406 = vmatpush.msra.mxu0 0.0
  %9407 = vmatpush.msra.mxu0 0.0
  %9408 = vmatpush.msra.mxu0 0.0
  %9409 = vmatpush.msra.mxu0 0.0
  %9410 = vmatpush.msra.mxu0 0.0
  %9411 = vmatpush.msra.mxu0 0.0
  %9412 = vmatpush.msra.mxu0 0.0
  %9413 = vmatpush.msra.mxu0 0.0
  %9414 = vmatpush.msra.mxu0 0.0
  %9415 = vmatpush.msra.mxu0 0.0
  %v9416 = vand.u32 %v6723, 4294901760
  %v9417 = vsub.f32 %v6723, %v9416
  %v9418 = vand.u32 %v9417, 4294901760
  %9419 = vmatpush.msra.mxu0 %v9418
  %v9420 = vand.u32 %v6722, 4294901760
  %v9421 = vsub.f32 %v6722, %v9420
  %v9422 = vand.u32 %v9421, 4294901760
  %9423 = vmatpush.msra.mxu0 %v9422
  %v9424 = vand.u32 %v8405, 4294901760
  %9425 = vmatmul.f32.gmra.mxu0 %v9424
  %v9426 = vpop.f32.mrf.mxu0
  %v9427 = vadd.f32 %v9370, %v9426
  %v9428 = vand.u32 %v8408, 4294901760
  %9429 = vmatmul.f32.gmra.mxu0 %v9428
  %v9430 = vpop.f32.mrf.mxu0
  %v9431 = vadd.f32 %v9376, %v9430
  %v9432 = vand.u32 %v8411, 4294901760
  %9433 = vmatmul.f32.gmra.mxu0 %v9432
  %v9434 = vpop.f32.mrf.mxu0
  %v9435 = vadd.f32 %v9382, %v9434
  %v9436 = vand.u32 %v8414, 4294901760
  %9437 = vmatmul.f32.gmra.mxu0 %v9436
  %v9438 = vpop.f32.mrf.mxu0
  %v9439 = vadd.f32 %v9388, %v9438
  %v9440 = vand.u32 %v8417, 4294901760
  %9441 = vmatmul.f32.gmra.mxu0 %v9440
  %v9442 = vpop.f32.mrf.mxu0
  %v9443 = vadd.f32 %v9394, %v9442
  %v9444 = vand.u32 %v8420, 4294901760
  %9445 = vmatmul.f32.gmra.mxu0 %v9444
  %v9446 = vpop.f32.mrf.mxu0
  %v9447 = vadd.f32 %v9400, %v9446
  %9448 = vdwg.mxu0
  %9449 = vmatpush.msra.mxu0 0.0
  %9450 = vmatpush.msra.mxu0 0.0
  %9451 = vmatpush.msra.mxu0 0.0
  %9452 = vmatpush.msra.mxu0 0.0
  %9453 = vmatpush.msra.mxu0 0.0
  %9454 = vmatpush.msra.mxu0 0.0
  %9455 = vmatpush.msra.mxu0 0.0
  %9456 = vmatpush.msra.mxu0 0.0
  %9457 = vmatpush.msra.mxu0 0.0
  %9458 = vmatpush.msra.mxu0 0.0
  %9459 = vmatpush.msra.mxu0 0.0
  %9460 = vmatpush.msra.mxu0 0.0
  %9461 = vmatpush.msra.mxu0 0.0
  %9462 = vmatpush.msra.mxu0 0.0
  %v9463 = vand.u32 %v6723, 4294901760
  %9464 = vmatpush.msra.mxu0 %v9463
  %v9465 = vand.u32 %v6722, 4294901760
  %9466 = vmatpush.msra.mxu0 %v9465
  %v9467 = vand.u32 %v8405, 4294901760
  %9468 = vmatmul.f32.gmra.mxu0 %v9467
  %v9469 = vpop.f32.mrf.mxu0
  %v9470 = vadd.f32 %v9427, %v9469
  %v9471 = vand.u32 %v8408, 4294901760
  %9472 = vmatmul.f32.gmra.mxu0 %v9471
  %v9473 = vpop.f32.mrf.mxu0
  %v9474 = vadd.f32 %v9431, %v9473
  %v9475 = vand.u32 %v8411, 4294901760
  %9476 = vmatmul.f32.gmra.mxu0 %v9475
  %v9477 = vpop.f32.mrf.mxu0
  %v9478 = vadd.f32 %v9435, %v9477
  %v9479 = vand.u32 %v8414, 4294901760
  %9480 = vmatmul.f32.gmra.mxu0 %v9479
  %v9481 = vpop.f32.mrf.mxu0
  %v9482 = vadd.f32 %v9439, %v9481
  %v9483 = vand.u32 %v8417, 4294901760
  %9484 = vmatmul.f32.gmra.mxu0 %v9483
  %v9485 = vpop.f32.mrf.mxu0
  %v9486 = vadd.f32 %v9443, %v9485
  %v9487 = vand.u32 %v8420, 4294901760
  %9488 = vmatmul.f32.gmra.mxu0 %v9487
  %v9489 = vpop.f32.mrf.mxu0
  %v9490 = vadd.f32 %v9447, %v9489
  %9491 = vdwg.mxu0
  %9492 = vmatpush.msra.mxu0 0.0
  %9493 = vmatpush.msra.mxu0 0.0
  %9494 = vmatpush.msra.mxu0 0.0
  %9495 = vmatpush.msra.mxu0 0.0
  %9496 = vmatpush.msra.mxu0 0.0
  %9497 = vmatpush.msra.mxu0 0.0
  %9498 = vmatpush.msra.mxu0 0.0
  %9499 = vmatpush.msra.mxu0 0.0
  %9500 = vmatpush.msra.mxu0 0.0
  %9501 = vmatpush.msra.mxu0 0.0
  %9502 = vmatpush.msra.mxu0 0.0
  %9503 = vmatpush.msra.mxu0 0.0
  %9504 = vmatpush.msra.mxu0 0.0
  %9505 = vmatpush.msra.mxu0 0.0
  %v9506 = vand.u32 %v9177, 4294901760
  %9507 = vmatpush.msra.mxu0 %v9506
  %v9508 = vand.u32 %v9176, 4294901760
  %9509 = vmatpush.msra.mxu0 %v9508
  %v9510 = vand.u32 %v8779, 4294901760
  %v9511 = vsub.f32 %v8779, %v9510
  %v9512 = vand.u32 %v9511, 4294901760
  %v9513 = vsub.f32 %v9511, %v9512
  %v9514 = vand.u32 %v9513, 4294901760
  %9515 = vmatmul.f32.gmra.mxu0 %v9514
  %v9516 = vpop.f32.mrf.mxu0
  %v9517 = vadd.f32 %v8751, %v9516
  %v9518 = vand.u32 %v8782, 4294901760
  %v9519 = vsub.f32 %v8782, %v9518
  %v9520 = vand.u32 %v9519, 4294901760
  %v9521 = vsub.f32 %v9519, %v9520
  %v9522 = vand.u32 %v9521, 4294901760
  %9523 = vmatmul.f32.gmra.mxu0 %v9522
  %v9524 = vpop.f32.mrf.mxu0
  %v9525 = vadd.f32 %v8756, %v9524
  %v9526 = vand.u32 %v8785, 4294901760
  %v9527 = vsub.f32 %v8785, %v9526
  %v9528 = vand.u32 %v9527, 4294901760
  %v9529 = vsub.f32 %v9527, %v9528
  %v9530 = vand.u32 %v9529, 4294901760
  %9531 = vmatmul.f32.gmra.mxu0 %v9530
  %v9532 = vpop.f32.mrf.mxu0
  %v9533 = vadd.f32 %v8761, %v9532
  %v9534 = vand.u32 %v8788, 4294901760
  %v9535 = vsub.f32 %v8788, %v9534
  %v9536 = vand.u32 %v9535, 4294901760
  %v9537 = vsub.f32 %v9535, %v9536
  %v9538 = vand.u32 %v9537, 4294901760
  %9539 = vmatmul.f32.gmra.mxu0 %v9538
  %v9540 = vpop.f32.mrf.mxu0
  %v9541 = vadd.f32 %v8766, %v9540
  %v9542 = vand.u32 %v8791, 4294901760
  %v9543 = vsub.f32 %v8791, %v9542
  %v9544 = vand.u32 %v9543, 4294901760
  %v9545 = vsub.f32 %v9543, %v9544
  %v9546 = vand.u32 %v9545, 4294901760
  %9547 = vmatmul.f32.gmra.mxu0 %v9546
  %v9548 = vpop.f32.mrf.mxu0
  %v9549 = vadd.f32 %v8771, %v9548
  %v9550 = vand.u32 %v8794, 4294901760
  %v9551 = vsub.f32 %v8794, %v9550
  %v9552 = vand.u32 %v9551, 4294901760
  %v9553 = vsub.f32 %v9551, %v9552
  %v9554 = vand.u32 %v9553, 4294901760
  %9555 = vmatmul.f32.gmra.mxu0 %v9554
  %v9556 = vpop.f32.mrf.mxu0
  %v9557 = vadd.f32 %v8776, %v9556
  %9558 = vdwg.mxu0
  %9559 = vmatpush.msra.mxu0 0.0
  %9560 = vmatpush.msra.mxu0 0.0
  %9561 = vmatpush.msra.mxu0 0.0
  %9562 = vmatpush.msra.mxu0 0.0
  %9563 = vmatpush.msra.mxu0 0.0
  %9564 = vmatpush.msra.mxu0 0.0
  %9565 = vmatpush.msra.mxu0 0.0
  %9566 = vmatpush.msra.mxu0 0.0
  %9567 = vmatpush.msra.mxu0 0.0
  %9568 = vmatpush.msra.mxu0 0.0
  %9569 = vmatpush.msra.mxu0 0.0
  %9570 = vmatpush.msra.mxu0 0.0
  %9571 = vmatpush.msra.mxu0 0.0
  %9572 = vmatpush.msra.mxu0 0.0
  %v9573 = vand.u32 %v9177, 4294901760
  %v9574 = vsub.f32 %v9177, %v9573
  %v9575 = vand.u32 %v9574, 4294901760
  %v9576 = vsub.f32 %v9574, %v9575
  %v9577 = vand.u32 %v9576, 4294901760
  %9578 = vmatpush.msra.mxu0 %v9577
  %v9579 = vand.u32 %v9176, 4294901760
  %v9580 = vsub.f32 %v9176, %v9579
  %v9581 = vand.u32 %v9580, 4294901760
  %v9582 = vsub.f32 %v9580, %v9581
  %v9583 = vand.u32 %v9582, 4294901760
  %9584 = vmatpush.msra.mxu0 %v9583
  %v9585 = vand.u32 %v8779, 4294901760
  %9586 = vmatmul.f32.gmra.mxu0 %v9585
  %v9587 = vpop.f32.mrf.mxu0
  %v9588 = vadd.f32 %v9517, %v9587
  %v9589 = vand.u32 %v8782, 4294901760
  %9590 = vmatmul.f32.gmra.mxu0 %v9589
  %v9591 = vpop.f32.mrf.mxu0
  %v9592 = vadd.f32 %v9525, %v9591
  %v9593 = vand.u32 %v8785, 4294901760
  %9594 = vmatmul.f32.gmra.mxu0 %v9593
  %v9595 = vpop.f32.mrf.mxu0
  %v9596 = vadd.f32 %v9533, %v9595
  %v9597 = vand.u32 %v8788, 4294901760
  %9598 = vmatmul.f32.gmra.mxu0 %v9597
  %v9599 = vpop.f32.mrf.mxu0
  %v9600 = vadd.f32 %v9541, %v9599
  %v9601 = vand.u32 %v8791, 4294901760
  %9602 = vmatmul.f32.gmra.mxu0 %v9601
  %v9603 = vpop.f32.mrf.mxu0
  %v9604 = vadd.f32 %v9549, %v9603
  %v9605 = vand.u32 %v8794, 4294901760
  %9606 = vmatmul.f32.gmra.mxu0 %v9605
  %v9607 = vpop.f32.mrf.mxu0
  %v9608 = vadd.f32 %v9557, %v9607
  %9609 = vdwg.mxu0
  %9610 = vmatpush.msra.mxu0 0.0
  %9611 = vmatpush.msra.mxu0 0.0
  %9612 = vmatpush.msra.mxu0 0.0
  %9613 = vmatpush.msra.mxu0 0.0
  %9614 = vmatpush.msra.mxu0 0.0
  %9615 = vmatpush.msra.mxu0 0.0
  %9616 = vmatpush.msra.mxu0 0.0
  %9617 = vmatpush.msra.mxu0 0.0
  %9618 = vmatpush.msra.mxu0 0.0
  %9619 = vmatpush.msra.mxu0 0.0
  %9620 = vmatpush.msra.mxu0 0.0
  %9621 = vmatpush.msra.mxu0 0.0
  %9622 = vmatpush.msra.mxu0 0.0
  %9623 = vmatpush.msra.mxu0 0.0
  %v9624 = vand.u32 %v9177, 4294901760
  %v9625 = vsub.f32 %v9177, %v9624
  %9626 = vmatpush.msra.mxu0 %v9625
  %v9627 = vand.u32 %v9176, 4294901760
  %v9628 = vsub.f32 %v9176, %v9627
  %9629 = vmatpush.msra.mxu0 %v9628
  %v9630 = vand.u32 %v8779, 4294901760
  %v9631 = vsub.f32 %v8779, %v9630
  %9632 = vmatmul.f32.gmra.mxu0 %v9631
  %v9633 = vpop.f32.mrf.mxu0
  %v9634 = vadd.f32 %v9588, %v9633
  %v9635 = vand.u32 %v8782, 4294901760
  %v9636 = vsub.f32 %v8782, %v9635
  %9637 = vmatmul.f32.gmra.mxu0 %v9636
  %v9638 = vpop.f32.mrf.mxu0
  %v9639 = vadd.f32 %v9592, %v9638
  %v9640 = vand.u32 %v8785, 4294901760
  %v9641 = vsub.f32 %v8785, %v9640
  %9642 = vmatmul.f32.gmra.mxu0 %v9641
  %v9643 = vpop.f32.mrf.mxu0
  %v9644 = vadd.f32 %v9596, %v9643
  %v9645 = vand.u32 %v8788, 4294901760
  %v9646 = vsub.f32 %v8788, %v9645
  %9647 = vmatmul.f32.gmra.mxu0 %v9646
  %v9648 = vpop.f32.mrf.mxu0
  %v9649 = vadd.f32 %v9600, %v9648
  %v9650 = vand.u32 %v8791, 4294901760
  %v9651 = vsub.f32 %v8791, %v9650
  %9652 = vmatmul.f32.gmra.mxu0 %v9651
  %v9653 = vpop.f32.mrf.mxu0
  %v9654 = vadd.f32 %v9604, %v9653
  %v9655 = vand.u32 %v8794, 4294901760
  %v9656 = vsub.f32 %v8794, %v9655
  %9657 = vmatmul.f32.gmra.mxu0 %v9656
  %v9658 = vpop.f32.mrf.mxu0
  %v9659 = vadd.f32 %v9608, %v9658
  %9660 = vdwg.mxu0
  %9661 = vmatpush.msra.mxu0 0.0
  %9662 = vmatpush.msra.mxu0 0.0
  %9663 = vmatpush.msra.mxu0 0.0
  %9664 = vmatpush.msra.mxu0 0.0
  %9665 = vmatpush.msra.mxu0 0.0
  %9666 = vmatpush.msra.mxu0 0.0
  %9667 = vmatpush.msra.mxu0 0.0
  %9668 = vmatpush.msra.mxu0 0.0
  %9669 = vmatpush.msra.mxu0 0.0
  %9670 = vmatpush.msra.mxu0 0.0
  %9671 = vmatpush.msra.mxu0 0.0
  %9672 = vmatpush.msra.mxu0 0.0
  %9673 = vmatpush.msra.mxu0 0.0
  %9674 = vmatpush.msra.mxu0 0.0
  %v9675 = vand.u32 %v9177, 4294901760
  %9676 = vmatpush.msra.mxu0 %v9675
  %v9677 = vand.u32 %v9176, 4294901760
  %9678 = vmatpush.msra.mxu0 %v9677
  %v9679 = vand.u32 %v8779, 4294901760
  %v9680 = vsub.f32 %v8779, %v9679
  %v9681 = vand.u32 %v9680, 4294901760
  %9682 = vmatmul.f32.gmra.mxu0 %v9681
  %v9683 = vpop.f32.mrf.mxu0
  %v9684 = vadd.f32 %v9634, %v9683
  %v9685 = vand.u32 %v8782, 4294901760
  %v9686 = vsub.f32 %v8782, %v9685
  %v9687 = vand.u32 %v9686, 4294901760
  %9688 = vmatmul.f32.gmra.mxu0 %v9687
  %v9689 = vpop.f32.mrf.mxu0
  %v9690 = vadd.f32 %v9639, %v9689
  %v9691 = vand.u32 %v8785, 4294901760
  %v9692 = vsub.f32 %v8785, %v9691
  %v9693 = vand.u32 %v9692, 4294901760
  %9694 = vmatmul.f32.gmra.mxu0 %v9693
  %v9695 = vpop.f32.mrf.mxu0
  %v9696 = vadd.f32 %v9644, %v9695
  %v9697 = vand.u32 %v8788, 4294901760
  %v9698 = vsub.f32 %v8788, %v9697
  %v9699 = vand.u32 %v9698, 4294901760
  %9700 = vmatmul.f32.gmra.mxu0 %v9699
  %v9701 = vpop.f32.mrf.mxu0
  %v9702 = vadd.f32 %v9649, %v9701
  %v9703 = vand.u32 %v8791, 4294901760
  %v9704 = vsub.f32 %v8791, %v9703
  %v9705 = vand.u32 %v9704, 4294901760
  %9706 = vmatmul.f32.gmra.mxu0 %v9705
  %v9707 = vpop.f32.mrf.mxu0
  %v9708 = vadd.f32 %v9654, %v9707
  %v9709 = vand.u32 %v8794, 4294901760
  %v9710 = vsub.f32 %v8794, %v9709
  %v9711 = vand.u32 %v9710, 4294901760
  %9712 = vmatmul.f32.gmra.mxu0 %v9711
  %v9713 = vpop.f32.mrf.mxu0
  %v9714 = vadd.f32 %v9659, %v9713
  %9715 = vdwg.mxu0
  %9716 = vmatpush.msra.mxu0 0.0
  %9717 = vmatpush.msra.mxu0 0.0
  %9718 = vmatpush.msra.mxu0 0.0
  %9719 = vmatpush.msra.mxu0 0.0
  %9720 = vmatpush.msra.mxu0 0.0
  %9721 = vmatpush.msra.mxu0 0.0
  %9722 = vmatpush.msra.mxu0 0.0
  %9723 = vmatpush.msra.mxu0 0.0
  %9724 = vmatpush.msra.mxu0 0.0
  %9725 = vmatpush.msra.mxu0 0.0
  %9726 = vmatpush.msra.mxu0 0.0
  %9727 = vmatpush.msra.mxu0 0.0
  %9728 = vmatpush.msra.mxu0 0.0
  %9729 = vmatpush.msra.mxu0 0.0
  %v9730 = vand.u32 %v9177, 4294901760
  %v9731 = vsub.f32 %v9177, %v9730
  %v9732 = vand.u32 %v9731, 4294901760
  %9733 = vmatpush.msra.mxu0 %v9732
  %v9734 = vand.u32 %v9176, 4294901760
  %v9735 = vsub.f32 %v9176, %v9734
  %v9736 = vand.u32 %v9735, 4294901760
  %9737 = vmatpush.msra.mxu0 %v9736
  %v9738 = vand.u32 %v8779, 4294901760
  %9739 = vmatmul.f32.gmra.mxu0 %v9738
  %v9740 = vpop.f32.mrf.mxu0
  %v9741 = vadd.f32 %v9684, %v9740
  %v9742 = vand.u32 %v8782, 4294901760
  %9743 = vmatmul.f32.gmra.mxu0 %v9742
  %v9744 = vpop.f32.mrf.mxu0
  %v9745 = vadd.f32 %v9690, %v9744
  %v9746 = vand.u32 %v8785, 4294901760
  %9747 = vmatmul.f32.gmra.mxu0 %v9746
  %v9748 = vpop.f32.mrf.mxu0
  %v9749 = vadd.f32 %v9696, %v9748
  %v9750 = vand.u32 %v8788, 4294901760
  %9751 = vmatmul.f32.gmra.mxu0 %v9750
  %v9752 = vpop.f32.mrf.mxu0
  %v9753 = vadd.f32 %v9702, %v9752
  %v9754 = vand.u32 %v8791, 4294901760
  %9755 = vmatmul.f32.gmra.mxu0 %v9754
  %v9756 = vpop.f32.mrf.mxu0
  %v9757 = vadd.f32 %v9708, %v9756
  %v9758 = vand.u32 %v8794, 4294901760
  %9759 = vmatmul.f32.gmra.mxu0 %v9758
  %v9760 = vpop.f32.mrf.mxu0
  %v9761 = vadd.f32 %v9714, %v9760
  %9762 = vdwg.mxu0
  %9763 = vmatpush.msra.mxu0 0.0
  %9764 = vmatpush.msra.mxu0 0.0
  %9765 = vmatpush.msra.mxu0 0.0
  %9766 = vmatpush.msra.mxu0 0.0
  %9767 = vmatpush.msra.mxu0 0.0
  %9768 = vmatpush.msra.mxu0 0.0
  %9769 = vmatpush.msra.mxu0 0.0
  %9770 = vmatpush.msra.mxu0 0.0
  %9771 = vmatpush.msra.mxu0 0.0
  %9772 = vmatpush.msra.mxu0 0.0
  %9773 = vmatpush.msra.mxu0 0.0
  %9774 = vmatpush.msra.mxu0 0.0
  %9775 = vmatpush.msra.mxu0 0.0
  %9776 = vmatpush.msra.mxu0 0.0
  %v9777 = vand.u32 %v9177, 4294901760
  %9778 = vmatpush.msra.mxu0 %v9777
  %v9779 = vand.u32 %v9176, 4294901760
  %9780 = vmatpush.msra.mxu0 %v9779
  %v9781 = vand.u32 %v8779, 4294901760
  %9782 = vmatmul.f32.gmra.mxu0 %v9781
  %v9783 = vpop.f32.mrf.mxu0
  %v9784 = vadd.f32 %v9741, %v9783
  %v9785 = vand.u32 %v8782, 4294901760
  %9786 = vmatmul.f32.gmra.mxu0 %v9785
  %v9787 = vpop.f32.mrf.mxu0
  %v9788 = vadd.f32 %v9745, %v9787
  %v9789 = vand.u32 %v8785, 4294901760
  %9790 = vmatmul.f32.gmra.mxu0 %v9789
  %v9791 = vpop.f32.mrf.mxu0
  %v9792 = vadd.f32 %v9749, %v9791
  %v9793 = vand.u32 %v8788, 4294901760
  %9794 = vmatmul.f32.gmra.mxu0 %v9793
  %v9795 = vpop.f32.mrf.mxu0
  %v9796 = vadd.f32 %v9753, %v9795
  %v9797 = vand.u32 %v8791, 4294901760
  %9798 = vmatmul.f32.gmra.mxu0 %v9797
  %v9799 = vpop.f32.mrf.mxu0
  %v9800 = vadd.f32 %v9757, %v9799
  %v9801 = vand.u32 %v8794, 4294901760
  %9802 = vmatmul.f32.gmra.mxu0 %v9801
  %v9803 = vpop.f32.mrf.mxu0
  %v9804 = vadd.f32 %v9761, %v9803
  %9805 = vdwg.mxu0
  %v9806 = vadd.f32 %v9470, %v9784
  %v9807 = vadd.f32 %v9474, %v9788
  %v9808 = vxor.u32 %v9806, 2147483648
  %v9809 = vxor.u32 %v9807, 2147483648
  %v9810 = vmul.f32 %v9808, 1.442695
  %v9811 = vpow.pop %v9810
  %v9812 = vmul.f32 %v9809, 1.442695
  %v9813 = vpow.pop %v9812
  %v9814 = vadd.f32 %v9811, 1.0
  %v9815 = vadd.f32 %v9813, 1.0
  %v9816 = vrcp.pop %v9814
  %v9817 = vmul.f32 %v9814, %v9816
  %v9818 = vsub.f32 1.0, %v9817
  %v9819 = vmul.f32 %v9816, %v9818
  %v9820 = vadd.f32 %v9816, %v9819
  %vm9821 = vweird.f32 %v9814
  %vm9822 = vweird.f32 %v9816
  %vm9823 = vmor %vm9821, %vm9822
  %v9824 = vsel %vm9823, %v9816, %v9820
  %v9825 = vand.u32 2147483647, %v9814
  %vm9826 = vcmp.eq.f32.partialorder %v9825, 8.507059e+37
  %v9827 = vand.u32 %v9814, 2147483648
  %v9828 = vor.u32 1.1754944e-38, %v9827
  %v9829 = vsel %vm9826, %v9828, %v9824
  %v9830 = vmul.f32 1.0, %v9829
  %v9831 = vrcp.pop %v9815
  %v9832 = vmul.f32 %v9815, %v9831
  %v9833 = vsub.f32 1.0, %v9832
  %v9834 = vmul.f32 %v9831, %v9833
  %v9835 = vadd.f32 %v9831, %v9834
  %vm9836 = vweird.f32 %v9815
  %vm9837 = vweird.f32 %v9831
  %vm9838 = vmor %vm9836, %vm9837
  %v9839 = vsel %vm9838, %v9831, %v9835
  %v9840 = vand.u32 2147483647, %v9815
  %vm9841 = vcmp.eq.f32.partialorder %v9840, 8.507059e+37
  %v9842 = vand.u32 %v9815, 2147483648
  %v9843 = vor.u32 1.1754944e-38, %v9842
  %v9844 = vsel %vm9841, %v9843, %v9839
  %v9845 = vmul.f32 1.0, %v9844
  %v9846 = vadd.f32 %v9478, %v9792
  %v9847 = vadd.f32 %v9482, %v9796
  %v9848 = vxor.u32 %v9846, 2147483648
  %v9849 = vxor.u32 %v9847, 2147483648
  %v9850 = vmul.f32 %v9848, 1.442695
  %v9851 = vpow.pop %v9850
  %v9852 = vmul.f32 %v9849, 1.442695
  %v9853 = vpow.pop %v9852
  %v9854 = vadd.f32 %v9851, 1.0
  %v9855 = vadd.f32 %v9853, 1.0
  %v9856 = vrcp.pop %v9854
  %v9857 = vmul.f32 %v9854, %v9856
  %v9858 = vsub.f32 1.0, %v9857
  %v9859 = vmul.f32 %v9856, %v9858
  %v9860 = vadd.f32 %v9856, %v9859
  %vm9861 = vweird.f32 %v9854
  %vm9862 = vweird.f32 %v9856
  %vm9863 = vmor %vm9861, %vm9862
  %v9864 = vsel %vm9863, %v9856, %v9860
  %v9865 = vand.u32 2147483647, %v9854
  %vm9866 = vcmp.eq.f32.partialorder %v9865, 8.507059e+37
  %v9867 = vand.u32 %v9854, 2147483648
  %v9868 = vor.u32 1.1754944e-38, %v9867
  %v9869 = vsel %vm9866, %v9868, %v9864
  %v9870 = vmul.f32 1.0, %v9869
  %v9871 = vrcp.pop %v9855
  %v9872 = vmul.f32 %v9855, %v9871
  %v9873 = vsub.f32 1.0, %v9872
  %v9874 = vmul.f32 %v9871, %v9873
  %v9875 = vadd.f32 %v9871, %v9874
  %vm9876 = vweird.f32 %v9855
  %vm9877 = vweird.f32 %v9871
  %vm9878 = vmor %vm9876, %vm9877
  %v9879 = vsel %vm9878, %v9871, %v9875
  %v9880 = vand.u32 2147483647, %v9855
  %vm9881 = vcmp.eq.f32.partialorder %v9880, 8.507059e+37
  %v9882 = vand.u32 %v9855, 2147483648
  %v9883 = vor.u32 1.1754944e-38, %v9882
  %v9884 = vsel %vm9881, %v9883, %v9879
  %v9885 = vmul.f32 1.0, %v9884
  %v9886 = vmul.f32 %v9830, %v9800
  %v9887 = vmul.f32 %v9845, %v9804
  %v9888 = vadd.f32 %v9486, %v9886
  %v9889 = vadd.f32 %v9490, %v9887
  %v9890 = vtanh.pop %v9888
  %v9891 = vtanh.pop %v9889
  %v9892 = vsub.f32 1.0, %v9870
  %v9893 = vsub.f32 1.0, %v9885
  %v9894 = vmul.f32 %v9892, %v9890
  %v9895 = vmul.f32 %v9893, %v9891
  %v9896 = vmul.f32 %v9870, %v9176
  %v9897 = vmul.f32 %v9885, %v9177
  %v9898 = vadd.f32 %v9894, %v9896
  %v9899 = vadd.f32 %v9895, %v9897
  %v9900 = vld [vmem:[%s17] sm:$0xff]
  %v9901 = vld [vmem:[%s17 + $0x8] sm:$0xff]
  %v9902 = vld [vmem:[%s17 + $0x10] sm:$0xff]
  %v9903 = vld [vmem:[%s17 + $0x18] sm:$0xff]
  %v9904 = vld [vmem:[%s17 + $0x20] sm:$0xff]
  %v9905 = vld [vmem:[%s17 + $0x28] sm:$0xff]
  %v9906 = vld [vmem:[%s17 + $0x30] sm:$0xff]
  %v9907 = vld [vmem:[%s17 + $0x38] sm:$0xff]
  %v9908 = vld [vmem:[%s17 + $0x40] sm:$0xff]
  %v9909 = vld [vmem:[%s17 + $0x48] sm:$0xff]
  %v9910 = vld [vmem:[%s17 + $0x50] sm:$0xff]
  %v9911 = vld [vmem:[%s17 + $0x58] sm:$0xff]
  %v9912 = vld [vmem:[%s17 + $0x60] sm:$0xff]
  %v9913 = vld [vmem:[%s17 + $0x68] sm:$0xff]
  %v9914 = vld [vmem:[%s17 + $0x70] sm:$0xff]
  %v9915 = vld [vmem:[%s17 + $0x78] sm:$0xff]
  %v9916 = vld [vmem:[%s18] sm:$0xff]
  %v9917 = vld [vmem:[%s18 + $0x8] sm:$0xff]
  %v9918 = vld [vmem:[%s18 + $0x10] sm:$0xff]
  %v9919 = vld [vmem:[%s18 + $0x18] sm:$0xff]
  %v9920 = vld [vmem:[%s18 + $0x20] sm:$0xff]
  %v9921 = vld [vmem:[%s18 + $0x28] sm:$0xff]
  %v9922 = vld [vmem:[%s18 + $0x30] sm:$0xff]
  %v9923 = vld [vmem:[%s18 + $0x38] sm:$0xff]
  %v9924 = vld [vmem:[%s18 + $0x40] sm:$0xff]
  %v9925 = vld [vmem:[%s18 + $0x48] sm:$0xff]
  %v9926 = vld [vmem:[%s18 + $0x50] sm:$0xff]
  %v9927 = vld [vmem:[%s18 + $0x58] sm:$0xff]
  %v9928 = vld [vmem:[%s18 + $0x60] sm:$0xff]
  %v9929 = vld [vmem:[%s18 + $0x68] sm:$0xff]
  %v9930 = vld [vmem:[%s18 + $0x70] sm:$0xff]
  %v9931 = vld [vmem:[%s18 + $0x78] sm:$0xff]
  %9933 = vset.pattern.permute.xlu0 0
  %9934 = vperm.xlu0 %9933, %v9916
  %v9935 = vpop.permute.xlu0 %9934
  %9938 = vset.pattern.permute.xlu0 0
  %9939 = vperm.xlu0 %9938, %v9917
  %v9940 = vpop.permute.xlu0 %9939
  %9943 = vset.pattern.permute.xlu0 0
  %9944 = vperm.xlu0 %9943, %v9918
  %v9945 = vpop.permute.xlu0 %9944
  %9948 = vset.pattern.permute.xlu0 0
  %9949 = vperm.xlu0 %9948, %v9919
  %v9950 = vpop.permute.xlu0 %9949
  %9953 = vset.pattern.permute.xlu0 0
  %9954 = vperm.xlu0 %9953, %v9920
  %v9955 = vpop.permute.xlu0 %9954
  %9958 = vset.pattern.permute.xlu0 0
  %9959 = vperm.xlu0 %9958, %v9921
  %v9960 = vpop.permute.xlu0 %9959
  %9963 = vset.pattern.permute.xlu0 0
  %9964 = vperm.xlu0 %9963, %v9922
  %v9965 = vpop.permute.xlu0 %9964
  %9968 = vset.pattern.permute.xlu0 0
  %9969 = vperm.xlu0 %9968, %v9923
  %v9970 = vpop.permute.xlu0 %9969
  %9973 = vset.pattern.permute.xlu0 0
  %9974 = vperm.xlu0 %9973, %v9924
  %v9975 = vpop.permute.xlu0 %9974
  %9978 = vset.pattern.permute.xlu0 0
  %9979 = vperm.xlu0 %9978, %v9925
  %v9980 = vpop.permute.xlu0 %9979
  %9983 = vset.pattern.permute.xlu0 0
  %9984 = vperm.xlu0 %9983, %v9926
  %v9985 = vpop.permute.xlu0 %9984
  %9988 = vset.pattern.permute.xlu0 0
  %9989 = vperm.xlu0 %9988, %v9927
  %v9990 = vpop.permute.xlu0 %9989
  %9993 = vset.pattern.permute.xlu0 0
  %9994 = vperm.xlu0 %9993, %v9928
  %v9995 = vpop.permute.xlu0 %9994
  %9998 = vset.pattern.permute.xlu0 0
  %9999 = vperm.xlu0 %9998, %v9929
  %v10000 = vpop.permute.xlu0 %9999
  %10003 = vset.pattern.permute.xlu0 0
  %10004 = vperm.xlu0 %10003, %v9930
  %v10005 = vpop.permute.xlu0 %10004
  %10008 = vset.pattern.permute.xlu0 0
  %10009 = vperm.xlu0 %10008, %v9931
  %v10010 = vpop.permute.xlu0 %10009
  %vm10012 = vcmask 523264
  %v10014 = vsel %vm10012, %v9900, 0
  %v10017 = vsel %vm10012, %v9901, 0
  %v10020 = vsel %vm10012, %v9902, 0
  %v10023 = vsel %vm10012, %v9903, 0
  %v10026 = vsel %vm10012, %v9904, 0
  %v10029 = vsel %vm10012, %v9905, 0
  %v10032 = vsel %vm10012, %v9906, 0
  %v10035 = vsel %vm10012, %v9907, 0
  %v10038 = vsel %vm10012, %v9908, 0
  %v10041 = vsel %vm10012, %v9909, 0
  %v10044 = vsel %vm10012, %v9910, 0
  %v10047 = vsel %vm10012, %v9911, 0
  %v10050 = vsel %vm10012, %v9912, 0
  %v10053 = vsel %vm10012, %v9913, 0
  %v10056 = vsel %vm10012, %v9914, 0
  %v10059 = vsel %vm10012, %v9915, 0
  %10061 = vmatpush.msra.mxu0 0.0
  %10062 = vmatpush.msra.mxu0 0.0
  %10063 = vmatpush.msra.mxu0 0.0
  %10064 = vmatpush.msra.mxu0 0.0
  %10065 = vmatpush.msra.mxu0 0.0
  %10066 = vmatpush.msra.mxu0 0.0
  %10067 = vmatpush.msra.mxu0 0.0
  %10068 = vmatpush.msra.mxu0 0.0
  %v10069 = vand.u32 %v9177, 4294901760
  %10070 = vmatpush.msra.mxu0 %v10069
  %v10071 = vand.u32 %v9176, 4294901760
  %10072 = vmatpush.msra.mxu0 %v10071
  %v10073 = vand.u32 %v8361, 4294901760
  %10074 = vmatpush.msra.mxu0 %v10073
  %v10075 = vand.u32 %v8360, 4294901760
  %10076 = vmatpush.msra.mxu0 %v10075
  %v10077 = vand.u32 %v9899, 4294901760
  %10078 = vmatpush.msra.mxu0 %v10077
  %v10079 = vand.u32 %v9898, 4294901760
  %10080 = vmatpush.msra.mxu0 %v10079
  %v10081 = vand.u32 %v7639, 4294901760
  %10082 = vmatpush.msra.mxu0 %v10081
  %v10083 = vand.u32 %v7638, 4294901760
  %10084 = vmatpush.msra.mxu0 %v10083
  %v10085 = vand.u32 %v10014, 4294901760
  %v10086 = vsub.f32 %v10014, %v10085
  %v10087 = vand.u32 %v10086, 4294901760
  %v10088 = vsub.f32 %v10086, %v10087
  %v10089 = vand.u32 %v10088, 4294901760
  %10090 = vmatmul.f32.gmra.mxu0 %v10089
  %v10091 = vpop.f32.mrf.mxu0
  %v10092 = vadd.f32 %v9935, %v10091
  %v10093 = vand.u32 %v10017, 4294901760
  %v10094 = vsub.f32 %v10017, %v10093
  %v10095 = vand.u32 %v10094, 4294901760
  %v10096 = vsub.f32 %v10094, %v10095
  %v10097 = vand.u32 %v10096, 4294901760
  %10098 = vmatmul.f32.gmra.mxu0 %v10097
  %v10099 = vpop.f32.mrf.mxu0
  %v10100 = vadd.f32 %v9940, %v10099
  %v10101 = vand.u32 %v10020, 4294901760
  %v10102 = vsub.f32 %v10020, %v10101
  %v10103 = vand.u32 %v10102, 4294901760
  %v10104 = vsub.f32 %v10102, %v10103
  %v10105 = vand.u32 %v10104, 4294901760
  %10106 = vmatmul.f32.gmra.mxu0 %v10105
  %v10107 = vpop.f32.mrf.mxu0
  %v10108 = vadd.f32 %v9945, %v10107
  %v10109 = vand.u32 %v10023, 4294901760
  %v10110 = vsub.f32 %v10023, %v10109
  %v10111 = vand.u32 %v10110, 4294901760
  %v10112 = vsub.f32 %v10110, %v10111
  %v10113 = vand.u32 %v10112, 4294901760
  %10114 = vmatmul.f32.gmra.mxu0 %v10113
  %v10115 = vpop.f32.mrf.mxu0
  %v10116 = vadd.f32 %v9950, %v10115
  %v10117 = vand.u32 %v10026, 4294901760
  %v10118 = vsub.f32 %v10026, %v10117
  %v10119 = vand.u32 %v10118, 4294901760
  %v10120 = vsub.f32 %v10118, %v10119
  %v10121 = vand.u32 %v10120, 4294901760
  %10122 = vmatmul.f32.gmra.mxu0 %v10121
  %v10123 = vpop.f32.mrf.mxu0
  %v10124 = vadd.f32 %v9955, %v10123
  %v10125 = vand.u32 %v10029, 4294901760
  %v10126 = vsub.f32 %v10029, %v10125
  %v10127 = vand.u32 %v10126, 4294901760
  %v10128 = vsub.f32 %v10126, %v10127
  %v10129 = vand.u32 %v10128, 4294901760
  %10130 = vmatmul.f32.gmra.mxu0 %v10129
  %v10131 = vpop.f32.mrf.mxu0
  %v10132 = vadd.f32 %v9960, %v10131
  %v10133 = vand.u32 %v10032, 4294901760
  %v10134 = vsub.f32 %v10032, %v10133
  %v10135 = vand.u32 %v10134, 4294901760
  %v10136 = vsub.f32 %v10134, %v10135
  %v10137 = vand.u32 %v10136, 4294901760
  %10138 = vmatmul.f32.gmra.mxu0 %v10137
  %v10139 = vpop.f32.mrf.mxu0
  %v10140 = vadd.f32 %v9965, %v10139
  %v10141 = vand.u32 %v10035, 4294901760
  %v10142 = vsub.f32 %v10035, %v10141
  %v10143 = vand.u32 %v10142, 4294901760
  %v10144 = vsub.f32 %v10142, %v10143
  %v10145 = vand.u32 %v10144, 4294901760
  %10146 = vmatmul.f32.gmra.mxu0 %v10145
  %v10147 = vpop.f32.mrf.mxu0
  %v10148 = vadd.f32 %v9970, %v10147
  %v10149 = vand.u32 %v10038, 4294901760
  %v10150 = vsub.f32 %v10038, %v10149
  %v10151 = vand.u32 %v10150, 4294901760
  %v10152 = vsub.f32 %v10150, %v10151
  %v10153 = vand.u32 %v10152, 4294901760
  %10154 = vmatmul.f32.gmra.mxu0 %v10153
  %v10155 = vpop.f32.mrf.mxu0
  %v10156 = vadd.f32 %v9975, %v10155
  %v10157 = vand.u32 %v10041, 4294901760
  %v10158 = vsub.f32 %v10041, %v10157
  %v10159 = vand.u32 %v10158, 4294901760
  %v10160 = vsub.f32 %v10158, %v10159
  %v10161 = vand.u32 %v10160, 4294901760
  %10162 = vmatmul.f32.gmra.mxu0 %v10161
  %v10163 = vpop.f32.mrf.mxu0
  %v10164 = vadd.f32 %v9980, %v10163
  %v10165 = vand.u32 %v10044, 4294901760
  %v10166 = vsub.f32 %v10044, %v10165
  %v10167 = vand.u32 %v10166, 4294901760
  %v10168 = vsub.f32 %v10166, %v10167
  %v10169 = vand.u32 %v10168, 4294901760
  %10170 = vmatmul.f32.gmra.mxu0 %v10169
  %v10171 = vpop.f32.mrf.mxu0
  %v10172 = vadd.f32 %v9985, %v10171
  %v10173 = vand.u32 %v10047, 4294901760
  %v10174 = vsub.f32 %v10047, %v10173
  %v10175 = vand.u32 %v10174, 4294901760
  %v10176 = vsub.f32 %v10174, %v10175
  %v10177 = vand.u32 %v10176, 4294901760
  %10178 = vmatmul.f32.gmra.mxu0 %v10177
  %v10179 = vpop.f32.mrf.mxu0
  %v10180 = vadd.f32 %v9990, %v10179
  %v10181 = vand.u32 %v10050, 4294901760
  %v10182 = vsub.f32 %v10050, %v10181
  %v10183 = vand.u32 %v10182, 4294901760
  %v10184 = vsub.f32 %v10182, %v10183
  %v10185 = vand.u32 %v10184, 4294901760
  %10186 = vmatmul.f32.gmra.mxu0 %v10185
  %v10187 = vpop.f32.mrf.mxu0
  %v10188 = vadd.f32 %v9995, %v10187
  %v10189 = vand.u32 %v10053, 4294901760
  %v10190 = vsub.f32 %v10053, %v10189
  %v10191 = vand.u32 %v10190, 4294901760
  %v10192 = vsub.f32 %v10190, %v10191
  %v10193 = vand.u32 %v10192, 4294901760
  %10194 = vmatmul.f32.gmra.mxu0 %v10193
  %v10195 = vpop.f32.mrf.mxu0
  %v10196 = vadd.f32 %v10000, %v10195
  %v10197 = vand.u32 %v10056, 4294901760
  %v10198 = vsub.f32 %v10056, %v10197
  %v10199 = vand.u32 %v10198, 4294901760
  %v10200 = vsub.f32 %v10198, %v10199
  %v10201 = vand.u32 %v10200, 4294901760
  %10202 = vmatmul.f32.gmra.mxu0 %v10201
  %v10203 = vpop.f32.mrf.mxu0
  %v10204 = vadd.f32 %v10005, %v10203
  %v10205 = vand.u32 %v10059, 4294901760
  %v10206 = vsub.f32 %v10059, %v10205
  %v10207 = vand.u32 %v10206, 4294901760
  %v10208 = vsub.f32 %v10206, %v10207
  %v10209 = vand.u32 %v10208, 4294901760
  %10210 = vmatmul.f32.gmra.mxu0 %v10209
  %v10211 = vpop.f32.mrf.mxu0
  %v10212 = vadd.f32 %v10010, %v10211
  %10213 = vdwg.mxu0
  %10214 = vmatpush.msra.mxu0 0.0
  %10215 = vmatpush.msra.mxu0 0.0
  %10216 = vmatpush.msra.mxu0 0.0
  %10217 = vmatpush.msra.mxu0 0.0
  %10218 = vmatpush.msra.mxu0 0.0
  %10219 = vmatpush.msra.mxu0 0.0
  %10220 = vmatpush.msra.mxu0 0.0
  %10221 = vmatpush.msra.mxu0 0.0
  %v10222 = vand.u32 %v9177, 4294901760
  %v10223 = vsub.f32 %v9177, %v10222
  %v10224 = vand.u32 %v10223, 4294901760
  %v10225 = vsub.f32 %v10223, %v10224
  %v10226 = vand.u32 %v10225, 4294901760
  %10227 = vmatpush.msra.mxu0 %v10226
  %v10228 = vand.u32 %v9176, 4294901760
  %v10229 = vsub.f32 %v9176, %v10228
  %v10230 = vand.u32 %v10229, 4294901760
  %v10231 = vsub.f32 %v10229, %v10230
  %v10232 = vand.u32 %v10231, 4294901760
  %10233 = vmatpush.msra.mxu0 %v10232
  %v10234 = vand.u32 %v8361, 4294901760
  %v10235 = vsub.f32 %v8361, %v10234
  %v10236 = vand.u32 %v10235, 4294901760
  %v10237 = vsub.f32 %v10235, %v10236
  %v10238 = vand.u32 %v10237, 4294901760
  %10239 = vmatpush.msra.mxu0 %v10238
  %v10240 = vand.u32 %v8360, 4294901760
  %v10241 = vsub.f32 %v8360, %v10240
  %v10242 = vand.u32 %v10241, 4294901760
  %v10243 = vsub.f32 %v10241, %v10242
  %v10244 = vand.u32 %v10243, 4294901760
  %10245 = vmatpush.msra.mxu0 %v10244
  %v10246 = vand.u32 %v9899, 4294901760
  %v10247 = vsub.f32 %v9899, %v10246
  %v10248 = vand.u32 %v10247, 4294901760
  %v10249 = vsub.f32 %v10247, %v10248
  %v10250 = vand.u32 %v10249, 4294901760
  %10251 = vmatpush.msra.mxu0 %v10250
  %v10252 = vand.u32 %v9898, 4294901760
  %v10253 = vsub.f32 %v9898, %v10252
  %v10254 = vand.u32 %v10253, 4294901760
  %v10255 = vsub.f32 %v10253, %v10254
  %v10256 = vand.u32 %v10255, 4294901760
  %10257 = vmatpush.msra.mxu0 %v10256
  %v10258 = vand.u32 %v7639, 4294901760
  %v10259 = vsub.f32 %v7639, %v10258
  %v10260 = vand.u32 %v10259, 4294901760
  %v10261 = vsub.f32 %v10259, %v10260
  %v10262 = vand.u32 %v10261, 4294901760
  %10263 = vmatpush.msra.mxu0 %v10262
  %v10264 = vand.u32 %v7638, 4294901760
  %v10265 = vsub.f32 %v7638, %v10264
  %v10266 = vand.u32 %v10265, 4294901760
  %v10267 = vsub.f32 %v10265, %v10266
  %v10268 = vand.u32 %v10267, 4294901760
  %10269 = vmatpush.msra.mxu0 %v10268
  %v10270 = vand.u32 %v10014, 4294901760
  %10271 = vmatmul.f32.gmra.mxu0 %v10270
  %v10272 = vpop.f32.mrf.mxu0
  %v10273 = vadd.f32 %v10092, %v10272
  %v10274 = vand.u32 %v10017, 4294901760
  %10275 = vmatmul.f32.gmra.mxu0 %v10274
  %v10276 = vpop.f32.mrf.mxu0
  %v10277 = vadd.f32 %v10100, %v10276
  %v10278 = vand.u32 %v10020, 4294901760
  %10279 = vmatmul.f32.gmra.mxu0 %v10278
  %v10280 = vpop.f32.mrf.mxu0
  %v10281 = vadd.f32 %v10108, %v10280
  %v10282 = vand.u32 %v10023, 4294901760
  %10283 = vmatmul.f32.gmra.mxu0 %v10282
  %v10284 = vpop.f32.mrf.mxu0
  %v10285 = vadd.f32 %v10116, %v10284
  %v10286 = vand.u32 %v10026, 4294901760
  %10287 = vmatmul.f32.gmra.mxu0 %v10286
  %v10288 = vpop.f32.mrf.mxu0
  %v10289 = vadd.f32 %v10124, %v10288
  %v10290 = vand.u32 %v10029, 4294901760
  %10291 = vmatmul.f32.gmra.mxu0 %v10290
  %v10292 = vpop.f32.mrf.mxu0
  %v10293 = vadd.f32 %v10132, %v10292
  %v10294 = vand.u32 %v10032, 4294901760
  %10295 = vmatmul.f32.gmra.mxu0 %v10294
  %v10296 = vpop.f32.mrf.mxu0
  %v10297 = vadd.f32 %v10140, %v10296
  %v10298 = vand.u32 %v10035, 4294901760
  %10299 = vmatmul.f32.gmra.mxu0 %v10298
  %v10300 = vpop.f32.mrf.mxu0
  %v10301 = vadd.f32 %v10148, %v10300
  %v10302 = vand.u32 %v10038, 4294901760
  %10303 = vmatmul.f32.gmra.mxu0 %v10302
  %v10304 = vpop.f32.mrf.mxu0
  %v10305 = vadd.f32 %v10156, %v10304
  %v10306 = vand.u32 %v10041, 4294901760
  %10307 = vmatmul.f32.gmra.mxu0 %v10306
  %v10308 = vpop.f32.mrf.mxu0
  %v10309 = vadd.f32 %v10164, %v10308
  %v10310 = vand.u32 %v10044, 4294901760
  %10311 = vmatmul.f32.gmra.mxu0 %v10310
  %v10312 = vpop.f32.mrf.mxu0
  %v10313 = vadd.f32 %v10172, %v10312
  %v10314 = vand.u32 %v10047, 4294901760
  %10315 = vmatmul.f32.gmra.mxu0 %v10314
  %v10316 = vpop.f32.mrf.mxu0
  %v10317 = vadd.f32 %v10180, %v10316
  %v10318 = vand.u32 %v10050, 4294901760
  %10319 = vmatmul.f32.gmra.mxu0 %v10318
  %v10320 = vpop.f32.mrf.mxu0
  %v10321 = vadd.f32 %v10188, %v10320
  %v10322 = vand.u32 %v10053, 4294901760
  %10323 = vmatmul.f32.gmra.mxu0 %v10322
  %v10324 = vpop.f32.mrf.mxu0
  %v10325 = vadd.f32 %v10196, %v10324
  %v10326 = vand.u32 %v10056, 4294901760
  %10327 = vmatmul.f32.gmra.mxu0 %v10326
  %v10328 = vpop.f32.mrf.mxu0
  %v10329 = vadd.f32 %v10204, %v10328
  %v10330 = vand.u32 %v10059, 4294901760
  %10331 = vmatmul.f32.gmra.mxu0 %v10330
  %v10332 = vpop.f32.mrf.mxu0
  %v10333 = vadd.f32 %v10212, %v10332
  %10334 = vdwg.mxu0
  %10335 = vmatpush.msra.mxu0 0.0
  %10336 = vmatpush.msra.mxu0 0.0
  %10337 = vmatpush.msra.mxu0 0.0
  %10338 = vmatpush.msra.mxu0 0.0
  %10339 = vmatpush.msra.mxu0 0.0
  %10340 = vmatpush.msra.mxu0 0.0
  %10341 = vmatpush.msra.mxu0 0.0
  %10342 = vmatpush.msra.mxu0 0.0
  %v10343 = vand.u32 %v9177, 4294901760
  %v10344 = vsub.f32 %v9177, %v10343
  %10345 = vmatpush.msra.mxu0 %v10344
  %v10346 = vand.u32 %v9176, 4294901760
  %v10347 = vsub.f32 %v9176, %v10346
  %10348 = vmatpush.msra.mxu0 %v10347
  %v10349 = vand.u32 %v8361, 4294901760
  %v10350 = vsub.f32 %v8361, %v10349
  %10351 = vmatpush.msra.mxu0 %v10350
  %v10352 = vand.u32 %v8360, 4294901760
  %v10353 = vsub.f32 %v8360, %v10352
  %10354 = vmatpush.msra.mxu0 %v10353
  %v10355 = vand.u32 %v9899, 4294901760
  %v10356 = vsub.f32 %v9899, %v10355
  %10357 = vmatpush.msra.mxu0 %v10356
  %v10358 = vand.u32 %v9898, 4294901760
  %v10359 = vsub.f32 %v9898, %v10358
  %10360 = vmatpush.msra.mxu0 %v10359
  %v10361 = vand.u32 %v7639, 4294901760
  %v10362 = vsub.f32 %v7639, %v10361
  %10363 = vmatpush.msra.mxu0 %v10362
  %v10364 = vand.u32 %v7638, 4294901760
  %v10365 = vsub.f32 %v7638, %v10364
  %10366 = vmatpush.msra.mxu0 %v10365
  %v10367 = vand.u32 %v10014, 4294901760
  %v10368 = vsub.f32 %v10014, %v10367
  %10369 = vmatmul.f32.gmra.mxu0 %v10368
  %v10370 = vpop.f32.mrf.mxu0
  %v10371 = vadd.f32 %v10273, %v10370
  %v10372 = vand.u32 %v10017, 4294901760
  %v10373 = vsub.f32 %v10017, %v10372
  %10374 = vmatmul.f32.gmra.mxu0 %v10373
  %v10375 = vpop.f32.mrf.mxu0
  %v10376 = vadd.f32 %v10277, %v10375
  %v10377 = vand.u32 %v10020, 4294901760
  %v10378 = vsub.f32 %v10020, %v10377
  %10379 = vmatmul.f32.gmra.mxu0 %v10378
  %v10380 = vpop.f32.mrf.mxu0
  %v10381 = vadd.f32 %v10281, %v10380
  %v10382 = vand.u32 %v10023, 4294901760
  %v10383 = vsub.f32 %v10023, %v10382
  %10384 = vmatmul.f32.gmra.mxu0 %v10383
  %v10385 = vpop.f32.mrf.mxu0
  %v10386 = vadd.f32 %v10285, %v10385
  %v10387 = vand.u32 %v10026, 4294901760
  %v10388 = vsub.f32 %v10026, %v10387
  %10389 = vmatmul.f32.gmra.mxu0 %v10388
  %v10390 = vpop.f32.mrf.mxu0
  %v10391 = vadd.f32 %v10289, %v10390
  %v10392 = vand.u32 %v10029, 4294901760
  %v10393 = vsub.f32 %v10029, %v10392
  %10394 = vmatmul.f32.gmra.mxu0 %v10393
  %v10395 = vpop.f32.mrf.mxu0
  %v10396 = vadd.f32 %v10293, %v10395
  %v10397 = vand.u32 %v10032, 4294901760
  %v10398 = vsub.f32 %v10032, %v10397
  %10399 = vmatmul.f32.gmra.mxu0 %v10398
  %v10400 = vpop.f32.mrf.mxu0
  %v10401 = vadd.f32 %v10297, %v10400
  %v10402 = vand.u32 %v10035, 4294901760
  %v10403 = vsub.f32 %v10035, %v10402
  %10404 = vmatmul.f32.gmra.mxu0 %v10403
  %v10405 = vpop.f32.mrf.mxu0
  %v10406 = vadd.f32 %v10301, %v10405
  %v10407 = vand.u32 %v10038, 4294901760
  %v10408 = vsub.f32 %v10038, %v10407
  %10409 = vmatmul.f32.gmra.mxu0 %v10408
  %v10410 = vpop.f32.mrf.mxu0
  %v10411 = vadd.f32 %v10305, %v10410
  %v10412 = vand.u32 %v10041, 4294901760
  %v10413 = vsub.f32 %v10041, %v10412
  %10414 = vmatmul.f32.gmra.mxu0 %v10413
  %v10415 = vpop.f32.mrf.mxu0
  %v10416 = vadd.f32 %v10309, %v10415
  %v10417 = vand.u32 %v10044, 4294901760
  %v10418 = vsub.f32 %v10044, %v10417
  %10419 = vmatmul.f32.gmra.mxu0 %v10418
  %v10420 = vpop.f32.mrf.mxu0
  %v10421 = vadd.f32 %v10313, %v10420
  %v10422 = vand.u32 %v10047, 4294901760
  %v10423 = vsub.f32 %v10047, %v10422
  %10424 = vmatmul.f32.gmra.mxu0 %v10423
  %v10425 = vpop.f32.mrf.mxu0
  %v10426 = vadd.f32 %v10317, %v10425
  %v10427 = vand.u32 %v10050, 4294901760
  %v10428 = vsub.f32 %v10050, %v10427
  %10429 = vmatmul.f32.gmra.mxu0 %v10428
  %v10430 = vpop.f32.mrf.mxu0
  %v10431 = vadd.f32 %v10321, %v10430
  %v10432 = vand.u32 %v10053, 4294901760
  %v10433 = vsub.f32 %v10053, %v10432
  %10434 = vmatmul.f32.gmra.mxu0 %v10433
  %v10435 = vpop.f32.mrf.mxu0
  %v10436 = vadd.f32 %v10325, %v10435
  %v10437 = vand.u32 %v10056, 4294901760
  %v10438 = vsub.f32 %v10056, %v10437
  %10439 = vmatmul.f32.gmra.mxu0 %v10438
  %v10440 = vpop.f32.mrf.mxu0
  %v10441 = vadd.f32 %v10329, %v10440
  %v10442 = vand.u32 %v10059, 4294901760
  %v10443 = vsub.f32 %v10059, %v10442
  %10444 = vmatmul.f32.gmra.mxu0 %v10443
  %v10445 = vpop.f32.mrf.mxu0
  %v10446 = vadd.f32 %v10333, %v10445
  %10447 = vdwg.mxu0
  %10448 = vmatpush.msra.mxu0 0.0
  %10449 = vmatpush.msra.mxu0 0.0
  %10450 = vmatpush.msra.mxu0 0.0
  %10451 = vmatpush.msra.mxu0 0.0
  %10452 = vmatpush.msra.mxu0 0.0
  %10453 = vmatpush.msra.mxu0 0.0
  %10454 = vmatpush.msra.mxu0 0.0
  %10455 = vmatpush.msra.mxu0 0.0
  %v10456 = vand.u32 %v9177, 4294901760
  %10457 = vmatpush.msra.mxu0 %v10456
  %v10458 = vand.u32 %v9176, 4294901760
  %10459 = vmatpush.msra.mxu0 %v10458
  %v10460 = vand.u32 %v8361, 4294901760
  %10461 = vmatpush.msra.mxu0 %v10460
  %v10462 = vand.u32 %v8360, 4294901760
  %10463 = vmatpush.msra.mxu0 %v10462
  %v10464 = vand.u32 %v9899, 4294901760
  %10465 = vmatpush.msra.mxu0 %v10464
  %v10466 = vand.u32 %v9898, 4294901760
  %10467 = vmatpush.msra.mxu0 %v10466
  %v10468 = vand.u32 %v7639, 4294901760
  %10469 = vmatpush.msra.mxu0 %v10468
  %v10470 = vand.u32 %v7638, 4294901760
  %10471 = vmatpush.msra.mxu0 %v10470
  %v10472 = vand.u32 %v10014, 4294901760
  %v10473 = vsub.f32 %v10014, %v10472
  %v10474 = vand.u32 %v10473, 4294901760
  %10475 = vmatmul.f32.gmra.mxu0 %v10474
  %v10476 = vpop.f32.mrf.mxu0
  %v10477 = vadd.f32 %v10371, %v10476
  %v10478 = vand.u32 %v10017, 4294901760
  %v10479 = vsub.f32 %v10017, %v10478
  %v10480 = vand.u32 %v10479, 4294901760
  %10481 = vmatmul.f32.gmra.mxu0 %v10480
  %v10482 = vpop.f32.mrf.mxu0
  %v10483 = vadd.f32 %v10376, %v10482
  %v10484 = vand.u32 %v10020, 4294901760
  %v10485 = vsub.f32 %v10020, %v10484
  %v10486 = vand.u32 %v10485, 4294901760
  %10487 = vmatmul.f32.gmra.mxu0 %v10486
  %v10488 = vpop.f32.mrf.mxu0
  %v10489 = vadd.f32 %v10381, %v10488
  %v10490 = vand.u32 %v10023, 4294901760
  %v10491 = vsub.f32 %v10023, %v10490
  %v10492 = vand.u32 %v10491, 4294901760
  %10493 = vmatmul.f32.gmra.mxu0 %v10492
  %v10494 = vpop.f32.mrf.mxu0
  %v10495 = vadd.f32 %v10386, %v10494
  %v10496 = vand.u32 %v10026, 4294901760
  %v10497 = vsub.f32 %v10026, %v10496
  %v10498 = vand.u32 %v10497, 4294901760
  %10499 = vmatmul.f32.gmra.mxu0 %v10498
  %v10500 = vpop.f32.mrf.mxu0
  %v10501 = vadd.f32 %v10391, %v10500
  %v10502 = vand.u32 %v10029, 4294901760
  %v10503 = vsub.f32 %v10029, %v10502
  %v10504 = vand.u32 %v10503, 4294901760
  %10505 = vmatmul.f32.gmra.mxu0 %v10504
  %v10506 = vpop.f32.mrf.mxu0
  %v10507 = vadd.f32 %v10396, %v10506
  %v10508 = vand.u32 %v10032, 4294901760
  %v10509 = vsub.f32 %v10032, %v10508
  %v10510 = vand.u32 %v10509, 4294901760
  %10511 = vmatmul.f32.gmra.mxu0 %v10510
  %v10512 = vpop.f32.mrf.mxu0
  %v10513 = vadd.f32 %v10401, %v10512
  %v10514 = vand.u32 %v10035, 4294901760
  %v10515 = vsub.f32 %v10035, %v10514
  %v10516 = vand.u32 %v10515, 4294901760
  %10517 = vmatmul.f32.gmra.mxu0 %v10516
  %v10518 = vpop.f32.mrf.mxu0
  %v10519 = vadd.f32 %v10406, %v10518
  %v10520 = vand.u32 %v10038, 4294901760
  %v10521 = vsub.f32 %v10038, %v10520
  %v10522 = vand.u32 %v10521, 4294901760
  %10523 = vmatmul.f32.gmra.mxu0 %v10522
  %v10524 = vpop.f32.mrf.mxu0
  %v10525 = vadd.f32 %v10411, %v10524
  %v10526 = vand.u32 %v10041, 4294901760
  %v10527 = vsub.f32 %v10041, %v10526
  %v10528 = vand.u32 %v10527, 4294901760
  %10529 = vmatmul.f32.gmra.mxu0 %v10528
  %v10530 = vpop.f32.mrf.mxu0
  %v10531 = vadd.f32 %v10416, %v10530
  %v10532 = vand.u32 %v10044, 4294901760
  %v10533 = vsub.f32 %v10044, %v10532
  %v10534 = vand.u32 %v10533, 4294901760
  %10535 = vmatmul.f32.gmra.mxu0 %v10534
  %v10536 = vpop.f32.mrf.mxu0
  %v10537 = vadd.f32 %v10421, %v10536
  %v10538 = vand.u32 %v10047, 4294901760
  %v10539 = vsub.f32 %v10047, %v10538
  %v10540 = vand.u32 %v10539, 4294901760
  %10541 = vmatmul.f32.gmra.mxu0 %v10540
  %v10542 = vpop.f32.mrf.mxu0
  %v10543 = vadd.f32 %v10426, %v10542
  %v10544 = vand.u32 %v10050, 4294901760
  %v10545 = vsub.f32 %v10050, %v10544
  %v10546 = vand.u32 %v10545, 4294901760
  %10547 = vmatmul.f32.gmra.mxu0 %v10546
  %v10548 = vpop.f32.mrf.mxu0
  %v10549 = vadd.f32 %v10431, %v10548
  %v10550 = vand.u32 %v10053, 4294901760
  %v10551 = vsub.f32 %v10053, %v10550
  %v10552 = vand.u32 %v10551, 4294901760
  %10553 = vmatmul.f32.gmra.mxu0 %v10552
  %v10554 = vpop.f32.mrf.mxu0
  %v10555 = vadd.f32 %v10436, %v10554
  %v10556 = vand.u32 %v10056, 4294901760
  %v10557 = vsub.f32 %v10056, %v10556
  %v10558 = vand.u32 %v10557, 4294901760
  %10559 = vmatmul.f32.gmra.mxu0 %v10558
  %v10560 = vpop.f32.mrf.mxu0
  %v10561 = vadd.f32 %v10441, %v10560
  %v10562 = vand.u32 %v10059, 4294901760
  %v10563 = vsub.f32 %v10059, %v10562
  %v10564 = vand.u32 %v10563, 4294901760
  %10565 = vmatmul.f32.gmra.mxu0 %v10564
  %v10566 = vpop.f32.mrf.mxu0
  %v10567 = vadd.f32 %v10446, %v10566
  %10568 = vdwg.mxu0
  %10569 = vmatpush.msra.mxu0 0.0
  %10570 = vmatpush.msra.mxu0 0.0
  %10571 = vmatpush.msra.mxu0 0.0
  %10572 = vmatpush.msra.mxu0 0.0
  %10573 = vmatpush.msra.mxu0 0.0
  %10574 = vmatpush.msra.mxu0 0.0
  %10575 = vmatpush.msra.mxu0 0.0
  %10576 = vmatpush.msra.mxu0 0.0
  %v10577 = vand.u32 %v9177, 4294901760
  %v10578 = vsub.f32 %v9177, %v10577
  %v10579 = vand.u32 %v10578, 4294901760
  %10580 = vmatpush.msra.mxu0 %v10579
  %v10581 = vand.u32 %v9176, 4294901760
  %v10582 = vsub.f32 %v9176, %v10581
  %v10583 = vand.u32 %v10582, 4294901760
  %10584 = vmatpush.msra.mxu0 %v10583
  %v10585 = vand.u32 %v8361, 4294901760
  %v10586 = vsub.f32 %v8361, %v10585
  %v10587 = vand.u32 %v10586, 4294901760
  %10588 = vmatpush.msra.mxu0 %v10587
  %v10589 = vand.u32 %v8360, 4294901760
  %v10590 = vsub.f32 %v8360, %v10589
  %v10591 = vand.u32 %v10590, 4294901760
  %10592 = vmatpush.msra.mxu0 %v10591
  %v10593 = vand.u32 %v9899, 4294901760
  %v10594 = vsub.f32 %v9899, %v10593
  %v10595 = vand.u32 %v10594, 4294901760
  %10596 = vmatpush.msra.mxu0 %v10595
  %v10597 = vand.u32 %v9898, 4294901760
  %v10598 = vsub.f32 %v9898, %v10597
  %v10599 = vand.u32 %v10598, 4294901760
  %10600 = vmatpush.msra.mxu0 %v10599
  %v10601 = vand.u32 %v7639, 4294901760
  %v10602 = vsub.f32 %v7639, %v10601
  %v10603 = vand.u32 %v10602, 4294901760
  %10604 = vmatpush.msra.mxu0 %v10603
  %v10605 = vand.u32 %v7638, 4294901760
  %v10606 = vsub.f32 %v7638, %v10605
  %v10607 = vand.u32 %v10606, 4294901760
  %10608 = vmatpush.msra.mxu0 %v10607
  %v10609 = vand.u32 %v10014, 4294901760
  %10610 = vmatmul.f32.gmra.mxu0 %v10609
  %v10611 = vpop.f32.mrf.mxu0
  %v10612 = vadd.f32 %v10477, %v10611
  %v10613 = vand.u32 %v10017, 4294901760
  %10614 = vmatmul.f32.gmra.mxu0 %v10613
  %v10615 = vpop.f32.mrf.mxu0
  %v10616 = vadd.f32 %v10483, %v10615
  %v10617 = vand.u32 %v10020, 4294901760
  %10618 = vmatmul.f32.gmra.mxu0 %v10617
  %v10619 = vpop.f32.mrf.mxu0
  %v10620 = vadd.f32 %v10489, %v10619
  %v10621 = vand.u32 %v10023, 4294901760
  %10622 = vmatmul.f32.gmra.mxu0 %v10621
  %v10623 = vpop.f32.mrf.mxu0
  %v10624 = vadd.f32 %v10495, %v10623
  %v10625 = vand.u32 %v10026, 4294901760
  %10626 = vmatmul.f32.gmra.mxu0 %v10625
  %v10627 = vpop.f32.mrf.mxu0
  %v10628 = vadd.f32 %v10501, %v10627
  %v10629 = vand.u32 %v10029, 4294901760
  %10630 = vmatmul.f32.gmra.mxu0 %v10629
  %v10631 = vpop.f32.mrf.mxu0
  %v10632 = vadd.f32 %v10507, %v10631
  %v10633 = vand.u32 %v10032, 4294901760
  %10634 = vmatmul.f32.gmra.mxu0 %v10633
  %v10635 = vpop.f32.mrf.mxu0
  %v10636 = vadd.f32 %v10513, %v10635
  %v10637 = vand.u32 %v10035, 4294901760
  %10638 = vmatmul.f32.gmra.mxu0 %v10637
  %v10639 = vpop.f32.mrf.mxu0
  %v10640 = vadd.f32 %v10519, %v10639
  %v10641 = vand.u32 %v10038, 4294901760
  %10642 = vmatmul.f32.gmra.mxu0 %v10641
  %v10643 = vpop.f32.mrf.mxu0
  %v10644 = vadd.f32 %v10525, %v10643
  %v10645 = vand.u32 %v10041, 4294901760
  %10646 = vmatmul.f32.gmra.mxu0 %v10645
  %v10647 = vpop.f32.mrf.mxu0
  %v10648 = vadd.f32 %v10531, %v10647
  %v10649 = vand.u32 %v10044, 4294901760
  %10650 = vmatmul.f32.gmra.mxu0 %v10649
  %v10651 = vpop.f32.mrf.mxu0
  %v10652 = vadd.f32 %v10537, %v10651
  %v10653 = vand.u32 %v10047, 4294901760
  %10654 = vmatmul.f32.gmra.mxu0 %v10653
  %v10655 = vpop.f32.mrf.mxu0
  %v10656 = vadd.f32 %v10543, %v10655
  %v10657 = vand.u32 %v10050, 4294901760
  %10658 = vmatmul.f32.gmra.mxu0 %v10657
  %v10659 = vpop.f32.mrf.mxu0
  %v10660 = vadd.f32 %v10549, %v10659
  %v10661 = vand.u32 %v10053, 4294901760
  %10662 = vmatmul.f32.gmra.mxu0 %v10661
  %v10663 = vpop.f32.mrf.mxu0
  %v10664 = vadd.f32 %v10555, %v10663
  %v10665 = vand.u32 %v10056, 4294901760
  %10666 = vmatmul.f32.gmra.mxu0 %v10665
  %v10667 = vpop.f32.mrf.mxu0
  %v10668 = vadd.f32 %v10561, %v10667
  %v10669 = vand.u32 %v10059, 4294901760
  %10670 = vmatmul.f32.gmra.mxu0 %v10669
  %v10671 = vpop.f32.mrf.mxu0
  %v10672 = vadd.f32 %v10567, %v10671
  %10673 = vdwg.mxu0
  %10674 = vmatpush.msra.mxu0 0.0
  %10675 = vmatpush.msra.mxu0 0.0
  %10676 = vmatpush.msra.mxu0 0.0
  %10677 = vmatpush.msra.mxu0 0.0
  %10678 = vmatpush.msra.mxu0 0.0
  %10679 = vmatpush.msra.mxu0 0.0
  %10680 = vmatpush.msra.mxu0 0.0
  %10681 = vmatpush.msra.mxu0 0.0
  %v10682 = vand.u32 %v9177, 4294901760
  %10683 = vmatpush.msra.mxu0 %v10682
  %v10684 = vand.u32 %v9176, 4294901760
  %10685 = vmatpush.msra.mxu0 %v10684
  %v10686 = vand.u32 %v8361, 4294901760
  %10687 = vmatpush.msra.mxu0 %v10686
  %v10688 = vand.u32 %v8360, 4294901760
  %10689 = vmatpush.msra.mxu0 %v10688
  %v10690 = vand.u32 %v9899, 4294901760
  %10691 = vmatpush.msra.mxu0 %v10690
  %v10692 = vand.u32 %v9898, 4294901760
  %10693 = vmatpush.msra.mxu0 %v10692
  %v10694 = vand.u32 %v7639, 4294901760
  %10695 = vmatpush.msra.mxu0 %v10694
  %v10696 = vand.u32 %v7638, 4294901760
  %10697 = vmatpush.msra.mxu0 %v10696
  %v10698 = vand.u32 %v10014, 4294901760
  %10699 = vmatmul.f32.gmra.mxu0 %v10698
  %v10700 = vpop.f32.mrf.mxu0
  %v10701 = vadd.f32 %v10612, %v10700
  %v10702 = vand.u32 %v10017, 4294901760
  %10703 = vmatmul.f32.gmra.mxu0 %v10702
  %v10704 = vpop.f32.mrf.mxu0
  %v10705 = vadd.f32 %v10616, %v10704
  %v10706 = vand.u32 %v10020, 4294901760
  %10707 = vmatmul.f32.gmra.mxu0 %v10706
  %v10708 = vpop.f32.mrf.mxu0
  %v10709 = vadd.f32 %v10620, %v10708
  %v10710 = vand.u32 %v10023, 4294901760
  %10711 = vmatmul.f32.gmra.mxu0 %v10710
  %v10712 = vpop.f32.mrf.mxu0
  %v10713 = vadd.f32 %v10624, %v10712
  %v10714 = vand.u32 %v10026, 4294901760
  %10715 = vmatmul.f32.gmra.mxu0 %v10714
  %v10716 = vpop.f32.mrf.mxu0
  %v10717 = vadd.f32 %v10628, %v10716
  %v10718 = vand.u32 %v10029, 4294901760
  %10719 = vmatmul.f32.gmra.mxu0 %v10718
  %v10720 = vpop.f32.mrf.mxu0
  %v10721 = vadd.f32 %v10632, %v10720
  %v10722 = vand.u32 %v10032, 4294901760
  %10723 = vmatmul.f32.gmra.mxu0 %v10722
  %v10724 = vpop.f32.mrf.mxu0
  %v10725 = vadd.f32 %v10636, %v10724
  %v10726 = vand.u32 %v10035, 4294901760
  %10727 = vmatmul.f32.gmra.mxu0 %v10726
  %v10728 = vpop.f32.mrf.mxu0
  %v10729 = vadd.f32 %v10640, %v10728
  %v10730 = vand.u32 %v10038, 4294901760
  %10731 = vmatmul.f32.gmra.mxu0 %v10730
  %v10732 = vpop.f32.mrf.mxu0
  %v10733 = vadd.f32 %v10644, %v10732
  %v10734 = vand.u32 %v10041, 4294901760
  %10735 = vmatmul.f32.gmra.mxu0 %v10734
  %v10736 = vpop.f32.mrf.mxu0
  %v10737 = vadd.f32 %v10648, %v10736
  %v10738 = vand.u32 %v10044, 4294901760
  %10739 = vmatmul.f32.gmra.mxu0 %v10738
  %v10740 = vpop.f32.mrf.mxu0
  %v10741 = vadd.f32 %v10652, %v10740
  %v10742 = vand.u32 %v10047, 4294901760
  %10743 = vmatmul.f32.gmra.mxu0 %v10742
  %v10744 = vpop.f32.mrf.mxu0
  %v10745 = vadd.f32 %v10656, %v10744
  %v10746 = vand.u32 %v10050, 4294901760
  %10747 = vmatmul.f32.gmra.mxu0 %v10746
  %v10748 = vpop.f32.mrf.mxu0
  %v10749 = vadd.f32 %v10660, %v10748
  %v10750 = vand.u32 %v10053, 4294901760
  %10751 = vmatmul.f32.gmra.mxu0 %v10750
  %v10752 = vpop.f32.mrf.mxu0
  %v10753 = vadd.f32 %v10664, %v10752
  %v10754 = vand.u32 %v10056, 4294901760
  %10755 = vmatmul.f32.gmra.mxu0 %v10754
  %v10756 = vpop.f32.mrf.mxu0
  %v10757 = vadd.f32 %v10668, %v10756
  %v10758 = vand.u32 %v10059, 4294901760
  %10759 = vmatmul.f32.gmra.mxu0 %v10758
  %v10760 = vpop.f32.mrf.mxu0
  %v10761 = vadd.f32 %v10672, %v10760
  %10762 = vdwg.mxu0
  %v10763 = vtanh.pop %v10701
  %v10764 = vtanh.pop %v10705
  %v10765 = vtanh.pop %v10709
  %v10766 = vtanh.pop %v10713
  %v10767 = vtanh.pop %v10717
  %v10768 = vtanh.pop %v10721
  %v10769 = vtanh.pop %v10725
  %v10770 = vtanh.pop %v10729
  %v10771 = vtanh.pop %v10733
  %v10772 = vtanh.pop %v10737
  %v10773 = vtanh.pop %v10741
  %v10774 = vtanh.pop %v10745
  %v10775 = vtanh.pop %v10749
  %v10776 = vtanh.pop %v10753
  %v10777 = vtanh.pop %v10757
  %v10778 = vtanh.pop %v10761
  %10779 = vst.msk [vmem:[%s19] sm:$0xff] %vm1662, %v10763
  %10780 = vst.msk [vmem:[%s19 + $0x8] sm:$0xff] %vm1662, %v10764
  %10781 = vst.msk [vmem:[%s19 + $0x10] sm:$0xff] %vm1662, %v10765
  %10782 = vst.msk [vmem:[%s19 + $0x18] sm:$0xff] %vm1662, %v10766
  %10783 = vst.msk [vmem:[%s19 + $0x20] sm:$0xff] %vm1662, %v10767
  %10784 = vst.msk [vmem:[%s19 + $0x28] sm:$0xff] %vm1662, %v10768
  %10785 = vst.msk [vmem:[%s19 + $0x30] sm:$0xff] %vm1662, %v10769
  %10786 = vst.msk [vmem:[%s19 + $0x38] sm:$0xff] %vm1662, %v10770
  %10787 = vst.msk [vmem:[%s19 + $0x40] sm:$0xff] %vm1662, %v10771
  %10788 = vst.msk [vmem:[%s19 + $0x48] sm:$0xff] %vm1662, %v10772
  %10789 = vst.msk [vmem:[%s19 + $0x50] sm:$0xff] %vm1662, %v10773
  %10790 = vst.msk [vmem:[%s19 + $0x58] sm:$0xff] %vm1662, %v10774
  %10791 = vst.msk [vmem:[%s19 + $0x60] sm:$0xff] %vm1662, %v10775
  %10792 = vst.msk [vmem:[%s19 + $0x68] sm:$0xff] %vm1662, %v10776
  %10793 = vst.msk [vmem:[%s19 + $0x70] sm:$0xff] %vm1662, %v10777
  %10794 = vst.msk [vmem:[%s19 + $0x78] sm:$0xff] %vm1662, %v10778
  // Predicated region
  $region85: #{tpu_custom_call.1} parent=0 // pred_check
    _
  $region86: #{tpu_custom_call.1} parent=0 // pred_check_branch
    %10796 = sbr.rel (0) target = $region88
  $region87: #{tpu_custom_call.1} parent=0 // pred_region
    _
  $region88: #{tpu_custom_call.1} parent=0 // pred_fallthru
    _
  // Predicated region
  $region89: #{tpu_custom_call.1} parent=0 // pred_check
    _
  $region90: #{tpu_custom_call.1} parent=0 // pred_check_branch
    %10798 = sbr.rel (0) target = $region92
  $region91: #{tpu_custom_call.1} parent=0 // pred_region
    _
  $region92: #{tpu_custom_call.1} parent=0 // pred_fallthru
    _

</llo_original>
